<compile_context>
chip_gen: v7x
topology: tpu7x:2x2x1
jax: 0.10.0
libtpu: 0.0.40
codegen_flags: <defaults>
</compile_context>

<pallas_src>
import functools

import jax
import jax.numpy as jnp
from jax import lax
from jax.experimental import pallas as pl
from jax.experimental.pallas import tpu as pltpu

NEG_SLOPE = 0.01
HIGHEST = jax.lax.Precision.HIGHEST

# Contraction dims, zero-padded to multiples of 128 (exact, padded with zeros).
K1, K1P = 11 * 5 * 5, 384     # conv1: 275 -> 384
K2, K2P = 32 * 5 * 5, 896     # conv2: 800 -> 896


def _round_up(n, m):
    return (n + m - 1) // m * m


def _num_tensorcores():
    """Best-effort TensorCore count of device 0 (v7x: 2, v5e/v6e: 1)."""
    try:
        n = int(getattr(jax.devices()[0], "num_cores", 1) or 1)
    except Exception:
        n = 1
    return 2 if n >= 2 else 1


# ----------------------------------------------------------------------------
# Pallas kernels
# ----------------------------------------------------------------------------
def conv_pool_lrelu_kernel(p_ref, w_ref, b_ref, o_ref):
    """Fused conv (one im2col matmul) + MaxPool2d(2,2) + bias + LeakyReLU.

    p_ref: (Kp, 4*Np) bf16 -- patches; lane block q*Np:(q+1)*Np holds pooling
                              offset q; each block is 128-lane aligned.
    w_ref: (Cb, Kp)   bf16 -- conv weight rows (output-channel block).
    b_ref: (Cb, 1)    f32  -- conv bias.
    o_ref: (Cb, Np)   bf16 -- pooled, activated output (channels x (b,y,x)).
    """
    np_ = o_ref.shape[1]
    acc = jnp.dot(w_ref[...], p_ref[...], preferred_element_type=jnp.float32)
    m = jnp.maximum(jnp.maximum(acc[:, 0 * np_:1 * np_], acc[:, 1 * np_:2 * np_]),
                    jnp.maximum(acc[:, 2 * np_:3 * np_], acc[:, 3 * np_:4 * np_]))
    m = m + b_ref[...]                      # bias shared across pool offsets
    m = jnp.maximum(m, NEG_SLOPE * m)       # LeakyReLU(0.01), f32 epilogue
    o_ref[...] = m.astype(o_ref.dtype)


def fc_fused_kernel(x_ref, w1_ref, b1_ref, w2_ref, b2_ref, o_ref, *, single_block):
    """fc1 block + LeakyReLU + fc2 partial (lane reduction) [+ fc2 bias].

    x_ref : (B, Din)    bf16    w1_ref: (Din, Dblk) bf16
    b1_ref: (1, Dblk)   f32     w2_ref: (1, Dblk)   f32     b2_ref: (1, 1) f32
    o_ref : (B, 1) f32 if single_block else (1, B, 1) f32 partial.
    """
    h = jnp.dot(x_ref[...], w1_ref[...], preferred_element_type=jnp.float32)
    h = h + b1_ref[...]
    h = jnp.maximum(h, NEG_SLOPE * h)
    r = jnp.sum(h * w2_ref[...], axis=-1, keepdims=True)       # (B, 1)
    if single_block:
        o_ref[...] = r + b2_ref[...]
    else:
        r = r + jnp.where(pl.program_id(0) == 0, b2_ref[...],
                          jnp.zeros_like(b2_ref[...]))
        o_ref[0] = r


# ----------------------------------------------------------------------------
# Pallas wrappers
# ----------------------------------------------------------------------------
def conv_pool_lrelu(patches, w2d, bias_col, npad, *, n_cout_blocks=1):
    kpad, n4 = patches.shape
    cout = w2d.shape[0]
    if cout % n_cout_blocks != 0 or (cout // n_cout_blocks) % 8 != 0:
        n_cout_blocks = 1
    cblk = cout // n_cout_blocks
    return pl.pallas_call(
        conv_pool_lrelu_kernel,
        out_shape=jax.ShapeDtypeStruct((cout, npad), jnp.bfloat16),
        grid_spec=pltpu.PrefetchScalarGridSpec(
            num_scalar_prefetch=0,
            grid=(n_cout_blocks,),
            in_specs=[
                pl.BlockSpec((kpad, n4), lambda i: (0, 0)),
                pl.BlockSpec((cblk, kpad), lambda i: (i, 0)),
                pl.BlockSpec((cblk, 1), lambda i: (i, 0)),
            ],
            out_specs=pl.BlockSpec((cblk, npad), lambda i: (i, 0)),
        ),
        compiler_params=pltpu.CompilerParams(
            dimension_semantics=("parallel",)),
    )(patches, w2d, bias_col)


def fc_fused(x_bf16, wfc1_t, bfc1_row, wfc2_row, bfc2, *, n_blocks=1):
    """Fused fc1 + LeakyReLU + fc2 (+ fc2 bias).  Returns (B, 1) f32."""
    B, Din = x_bf16.shape
    Dout = wfc1_t.shape[1]
    if Dout % n_blocks != 0:
        n_blocks = 1
    blk = Dout // n_blocks
    kern = functools.partial(fc_fused_kernel, single_block=(n_blocks == 1))
    if n_blocks == 1:
        out_shape = jax.ShapeDtypeStruct((B, 1), jnp.float32)
        out_specs = pl.BlockSpec((B, 1), lambda i: (0, 0))
    else:
        out_shape = jax.ShapeDtypeStruct((n_blocks, B, 1), jnp.float32)
        out_specs = pl.BlockSpec((1, B, 1), lambda i: (i, 0, 0))
    out = pl.pallas_call(
        kern,
        out_shape=out_shape,
        grid_spec=pltpu.PrefetchScalarGridSpec(
            num_scalar_prefetch=0,
            grid=(n_blocks,),
            in_specs=[
                pl.BlockSpec((B, Din), lambda i: (0, 0)),
                pl.BlockSpec((Din, blk), lambda i: (0, i)),
                pl.BlockSpec((1, blk), lambda i: (0, i)),
                pl.BlockSpec((1, blk), lambda i: (0, i)),
                pl.BlockSpec((1, 1), lambda i: (0, 0)),
            ],
            out_specs=out_specs,
        ),
        compiler_params=pltpu.CompilerParams(
            dimension_semantics=("parallel",)),
    )(x_bf16, wfc1_t, bfc1_row, wfc2_row, bfc2)
    if n_blocks == 1:
        return out
    return jnp.sum(out, axis=0)                               # (B, 1)


# ----------------------------------------------------------------------------
# Plain-JAX glue (layout only): embedding concat, patch extraction/arrangement
# ----------------------------------------------------------------------------
def _pooled_patch_matrix(act_cnhw, ksize, kpad):
    """act_cnhw: (C, B, H, W).  Returns ((kpad, 4*npad) patch matrix, npad,
    n_valid, Hp, Wp).  Lane block q = py*2+px holds, at lane b*Hp*Wp + y*Wp + x,
    the im2col patch for conv-output position (2y+py, 2x+px).  K ordering is
    (c, dy, dx) (c slowest) -- matches a PyTorch OIHW weight flatten."""
    C, B, H, W = act_cnhw.shape
    Hc, Wc = H - ksize + 1, W - ksize + 1
    Hp, Wp = Hc // 2, Wc // 2
    K = C * ksize * ksize
    n_valid = B * Hp * Wp
    npad = _round_up(n_valid, 128)
    p = lax.conv_general_dilated_patches(
        act_cnhw, (ksize, ksize), (1, 1), "VALID",
        dimension_numbers=("CNHW", "OIHW", "CNHW"))            # (K, B, Hc, Wc)
    p = p.reshape(K, B, Hp, 2, Wp, 2)
    p = jnp.transpose(p, (0, 3, 5, 1, 2, 4))                   # (K, py, px, B, Hp, Wp)
    p = p.reshape(K, 4, n_valid)
    p = jnp.pad(p, ((0, kpad - K), (0, 0), (0, npad - n_valid)))
    return p.reshape(kpad, 4 * npad), npad, n_valid, Hp, Wp


def conv_discriminator_forward(prep, x, labels, *, n_cores=1):
    """x: (B, 1, 28, 28) f32, labels: (B,) int32 in [0, 10).  Returns (B, 1) f32."""
    B, _, H, W = x.shape
    # label embedding -> broadcast over HxW -> channel concat, built channel-
    # first (C, B, H, W) so patch extraction needs no NCHW transpose later.
    c = prep["emb"][labels]                                    # (B, 10)
    c_cn = jnp.broadcast_to(c.T[:, :, None, None], (10, B, H, W))
    hc = jnp.concatenate([jnp.transpose(x, (1, 0, 2, 3)), c_cn], axis=0)
    hc = hc.astype(jnp.bfloat16)                               # (11, B, 28, 28)

    # conv1 (11->32, 5x5) + LeakyReLU + MaxPool(2,2): one lane-dense matmul.
    p1, np1, nv1, hp1, wp1 = _pooled_patch_matrix(hc, 5, K1P)
    o1 = conv_pool_lrelu(p1, prep["w1"], prep["b1"], np1, n_cout_blocks=n_cores)
    h1 = o1[:, :nv1].reshape(32, B, hp1, wp1)                  # channel-major handoff

    # conv2 (32->64, 5x5) + LeakyReLU + MaxPool(2,2)
    p2, np2, nv2, hp2, wp2 = _pooled_patch_matrix(h1, 5, K2P)
    o2 = conv_pool_lrelu(p2, prep["w2"], prep["b2"], np2, n_cout_blocks=n_cores)

    # flatten in PyTorch (c, y, x) order, then fused fc1 + LeakyReLU + fc2 (+bias).
    flat = o2[:, :nv2].reshape(64, B, hp2 * wp2)
    flat = jnp.transpose(flat, (1, 0, 2)).reshape(B, 64 * hp2 * wp2)
    n_blocks = 2 if n_cores >= 2 else 1
    return fc_fused(flat, prep["wfc1_t"], prep["bfc1"], prep["wfc2"],
                    prep["bfc2"], n_blocks=n_blocks)
    # TODO(synk): optional mega-fusion of conv2+fc into one pallas_call would
    # need an in-kernel (64, B*16)->(B,1024) relayout; kept as glue for robustness.


# ----------------------------------------------------------------------------
# One-time parameter prep (outside jit): reshape / transpose / pad / bf16 cast
# ----------------------------------------------------------------------------
def prepare_params(params):
    w1 = params["w1"].reshape(32, -1).astype(jnp.bfloat16)
    w1 = jnp.pad(w1, ((0, 0), (0, K1P - w1.shape[1])))         # (32, 384)
    w2 = params["w2"].reshape(64, -1).astype(jnp.bfloat16)
    w2 = jnp.pad(w2, ((0, 0), (0, K2P - w2.shape[1])))         # (64, 896)
    return {
        "emb":    params["emb"],
        "w1":     w1,
        "b1":     params["b1"][:, None].astype(jnp.float32),   # (32, 1)
        "w2":     w2,
        "b2":     params["b2"][:, None].astype(jnp.float32),   # (64, 1)
        "wfc1_t": params["wfc1"].T.astype(jnp.bfloat16),       # (1024, 1024)
        "bfc1":   params["bfc1"][None, :].astype(jnp.float32), # (1, 1024)
        "wfc2":   params["wfc2"].astype(jnp.float32),          # (1, 1024)
        "bfc2":   params["bfc2"][None, :].astype(jnp.float32), # (1, 1)
    }


# ----------------------------------------------------------------------------
# Pure-JAX reference (correctness check)
# ----------------------------------------------------------------------------
def reference_forward(params, x, labels):
    B = x.shape[0]
    c = params["emb"][labels]
    c = jnp.broadcast_to(c[:, :, None, None], (B, 10, x.shape[2], x.shape[3]))
    h = jnp.concatenate([x, c], axis=1)

    def conv(y, w, b):
        o = jax.lax.conv_general_dilated(
            y, w, (1, 1), "VALID",
            dimension_numbers=("NCHW", "OIHW", "NCHW"), precision=HIGHEST)
        return o + b[None, :, None, None]

    def lrelu(y):
        return jnp.where(y >= 0, y, NEG_SLOPE * y)

    def pool(y):
        b, ch, hh, ww = y.shape
        return jnp.max(y.reshape(b, ch, hh // 2, 2, ww // 2, 2), axis=(3, 5))

    h = pool(lrelu(conv(h, params["w1"], params["b1"])))
    h = pool(lrelu(conv(h, params["w2"], params["b2"])))
    h = h.reshape(B, -1)
    h = lrelu(jnp.matmul(h, params["wfc1"].T, precision=HIGHEST) + params["bfc1"])
    return jnp.matmul(h, params["wfc2"].T, precision=HIGHEST) + params["bfc2"]


# ----------------------------------------------------------------------------
# Deterministic parameter init (shapes from ConvDiscriminator.__init__)
# ----------------------------------------------------------------------------
def init_params(key):
    ks = jax.random.split(key, 9)

    def u(k, shape, fan_in):
        bound = 1.0 / float(fan_in) ** 0.5
        return jax.random.uniform(k, shape, jnp.float32, -bound, bound)

    return {
        "emb":  jax.random.normal(ks[0], (10, 10), jnp.float32),   # Embedding(10,10)
        "w1":   u(ks[1], (32, 11, 5, 5), 11 * 25),                 # Conv2d(11,32,5)
        "b1":   u(ks[2], (32,), 11 * 25),
        "w2":   u(ks[3], (64, 32, 5, 5), 32 * 25),                 # Conv2d(32,64,5)
        "b2":   u(ks[4], (64,), 32 * 25),
        "wfc1": u(ks[5], (1024, 1024), 1024),                      # Linear(1024,1024)
        "bfc1": u(ks[6], (1024,), 1024),
        "wfc2": u(ks[7], (1, 1024), 1024),                         # Linear(1024,1)
        "bfc2": u(ks[8], (1,), 1024),
    }


if __name__ == "__main__":
    key = jax.random.PRNGKey(0)
    kp, kx, kl = jax.random.split(key, 3)

    params = init_params(kp)
    prep = prepare_params(params)      # one-time layout / pad / bf16 prep

    # Spatial size must be 28x28 for the 64*4*4 flatten in the module.
    x = jax.random.normal(kx, (2, 1, 28, 28), jnp.float32)
    labels = jax.random.randint(kl, (2,), 0, 10)

    fwd = jax.jit(functools.partial(conv_discriminator_forward,
                                    n_cores=_num_tensorcores()))
    out = jax.block_until_ready(fwd(prep, x, labels))
    assert out.shape == (2, 1), out.shape

    ref = reference_forward(params, x, labels)
    err = float(jnp.max(jnp.abs(out - ref)))
    if err > 2e-2:
        raise AssertionError(f"mismatch vs reference, max abs err = {err}")

    print("KERNEL_OK")
</pallas_src>

<mosaic_0001>
module attributes {stable_mosaic.version = 11 : i64} {
  func.func @conv_pool_lrelu_kernel(%arg0: i32, %arg1: memref<384x1536xbf16, #tpu.memory_space<vmem>>, %arg2: memref<32x384xbf16, #tpu.memory_space<vmem>>, %arg3: memref<32x1xf32, #tpu.memory_space<vmem>>, %arg4: memref<32x384xbf16, #tpu.memory_space<vmem>>) attributes {dimension_semantics = [#tpu.dimension_semantics<parallel>], iteration_bounds = array<i64: 1>, scalar_prefetch = 0 : i64, scratch_operands = 0 : i64, tpu.core_type = #tpu.core_type<tc>, window_params = [{pipeline_mode = #tpu.pipeline_mode<synchronous>, transform_indices = @transform_0, window_bounds = array<i64: 384, 1536>}, {transform_indices = @transform_1, window_bounds = array<i64: 32, 384>}, {transform_indices = @transform_2, window_bounds = array<i64: 32, 1>}, {transform_indices = @transform_3, window_bounds = array<i64: 32, 384>}]} {
    %c0 = arith.constant 0 : index
    %c0_0 = arith.constant 0 : index
    %0 = vector.load %arg2[%c0, %c0_0] : memref<32x384xbf16, #tpu.memory_space<vmem>>, vector<32x384xbf16>
    %c0_1 = arith.constant 0 : index
    %c0_2 = arith.constant 0 : index
    %1 = vector.load %arg1[%c0_1, %c0_2] : memref<384x1536xbf16, #tpu.memory_space<vmem>>, vector<384x1536xbf16>
    %cst = arith.constant dense<0.000000e+00> : vector<32x1536xf32>
    %2 = tpu.matmul %0, %1, %cst {dimension_numbers = #tpu.dot_dimension_numbers<[1], [0], [0], [1], [0, 0, 1, 1], [], []>} : vector<32x384xbf16>, vector<384x1536xbf16>, vector<32x1536xf32> -> vector<32x1536xf32>
    %3 = vector.extract_strided_slice %2 {offsets = [0, 0], sizes = [32, 384], strides = [1, 1]} : vector<32x1536xf32> to vector<32x384xf32>
    %4 = vector.extract_strided_slice %2 {offsets = [0, 384], sizes = [32, 384], strides = [1, 1]} : vector<32x1536xf32> to vector<32x384xf32>
    %5 = arith.maximumf %3, %4 : vector<32x384xf32>
    %6 = vector.extract_strided_slice %2 {offsets = [0, 768], sizes = [32, 384], strides = [1, 1]} : vector<32x1536xf32> to vector<32x384xf32>
    %7 = vector.extract_strided_slice %2 {offsets = [0, 1152], sizes = [32, 384], strides = [1, 1]} : vector<32x1536xf32> to vector<32x384xf32>
    %8 = arith.maximumf %6, %7 : vector<32x384xf32>
    %9 = arith.maximumf %5, %8 : vector<32x384xf32>
    %c0_3 = arith.constant 0 : index
    %c0_4 = arith.constant 0 : index
    %10 = vector.load %arg3[%c0_3, %c0_4] : memref<32x1xf32, #tpu.memory_space<vmem>>, vector<32x1xf32>
    %11 = vector.broadcast %10 : vector<32x1xf32> to vector<32x384xf32>
    %12 = arith.addf %9, %11 : vector<32x384xf32>
    %cst_5 = arith.constant 0.00999999977 : f32
    %13 = vector.broadcast %cst_5 : f32 to vector<32x384xf32>
    %14 = arith.mulf %13, %12 : vector<32x384xf32>
    %15 = arith.maximumf %12, %14 : vector<32x384xf32>
    %16 = arith.truncf %15 : vector<32x384xf32> to vector<32x384xbf16>
    %c0_6 = arith.constant 0 : index
    %c0_7 = arith.constant 0 : index
    %17 = vector.load %arg4[%c0_6, %c0_7] : memref<32x384xbf16, #tpu.memory_space<vmem>>, vector<32x384xbf16>
    tpu.vector_store %arg4[%c0_6, %c0_7], %16 {strides = array<i32>} : memref<32x384xbf16, #tpu.memory_space<vmem>>, vector<32x384xbf16>,
    return
  }
  func.func @transform_0(%arg0: i32) -> (i32, i32) {
    %c0_i32 = arith.constant 0 : i32
    %c0_i32_0 = arith.constant 0 : i32
    %c0_i32_1 = arith.constant 0 : i32
    return %c0_i32, %c0_i32_0 : i32, i32
  }
  func.func @transform_1(%arg0: i32) -> (i32, i32) {
    %c0_i32 = arith.constant 0 : i32
    %c0_i32_0 = arith.constant 0 : i32
    return %arg0, %c0_i32 : i32, i32
  }
  func.func @transform_2(%arg0: i32) -> (i32, i32) {
    %c0_i32 = arith.constant 0 : i32
    %c0_i32_0 = arith.constant 0 : i32
    return %arg0, %c0_i32 : i32, i32
  }
  func.func @transform_3(%arg0: i32) -> (i32, i32) {
    %c0_i32 = arith.constant 0 : i32
    %c0_i32_0 = arith.constant 0 : i32
    return %arg0, %c0_i32 : i32, i32
  }
}

module attributes {stable_mosaic.version = 11 : i64} {
  func.func @conv_pool_lrelu_kernel(%arg0: i32, %arg1: memref<896x512xbf16, #tpu.memory_space<vmem>>, %arg2: memref<64x896xbf16, #tpu.memory_space<vmem>>, %arg3: memref<64x1xf32, #tpu.memory_space<vmem>>, %arg4: memref<64x128xbf16, #tpu.memory_space<vmem>>) attributes {dimension_semantics = [#tpu.dimension_semantics<parallel>], iteration_bounds = array<i64: 1>, scalar_prefetch = 0 : i64, scratch_operands = 0 : i64, tpu.core_type = #tpu.core_type<tc>, window_params = [{pipeline_mode = #tpu.pipeline_mode<synchronous>, transform_indices = @transform_0, window_bounds = array<i64: 896, 512>}, {transform_indices = @transform_1, window_bounds = array<i64: 64, 896>}, {transform_indices = @transform_2, window_bounds = array<i64: 64, 1>}, {transform_indices = @transform_3, window_bounds = array<i64: 64, 128>}]} {
    %c0 = arith.constant 0 : index
    %c0_0 = arith.constant 0 : index
    %0 = vector.load %arg2[%c0, %c0_0] : memref<64x896xbf16, #tpu.memory_space<vmem>>, vector<64x896xbf16>
    %c0_1 = arith.constant 0 : index
    %c0_2 = arith.constant 0 : index
    %1 = vector.load %arg1[%c0_1, %c0_2] : memref<896x512xbf16, #tpu.memory_space<vmem>>, vector<896x512xbf16>
    %cst = arith.constant dense<0.000000e+00> : vector<64x512xf32>
    %2 = tpu.matmul %0, %1, %cst {dimension_numbers = #tpu.dot_dimension_numbers<[1], [0], [0], [1], [0, 0, 1, 1], [], []>} : vector<64x896xbf16>, vector<896x512xbf16>, vector<64x512xf32> -> vector<64x512xf32>
    %3 = vector.extract_strided_slice %2 {offsets = [0, 0], sizes = [64, 128], strides = [1, 1]} : vector<64x512xf32> to vector<64x128xf32>
    %4 = vector.extract_strided_slice %2 {offsets = [0, 128], sizes = [64, 128], strides = [1, 1]} : vector<64x512xf32> to vector<64x128xf32>
    %5 = arith.maximumf %3, %4 : vector<64x128xf32>
    %6 = vector.extract_strided_slice %2 {offsets = [0, 256], sizes = [64, 128], strides = [1, 1]} : vector<64x512xf32> to vector<64x128xf32>
    %7 = vector.extract_strided_slice %2 {offsets = [0, 384], sizes = [64, 128], strides = [1, 1]} : vector<64x512xf32> to vector<64x128xf32>
    %8 = arith.maximumf %6, %7 : vector<64x128xf32>
    %9 = arith.maximumf %5, %8 : vector<64x128xf32>
    %c0_3 = arith.constant 0 : index
    %c0_4 = arith.constant 0 : index
    %10 = vector.load %arg3[%c0_3, %c0_4] : memref<64x1xf32, #tpu.memory_space<vmem>>, vector<64x1xf32>
    %11 = vector.broadcast %10 : vector<64x1xf32> to vector<64x128xf32>
    %12 = arith.addf %9, %11 : vector<64x128xf32>
    %cst_5 = arith.constant 0.00999999977 : f32
    %13 = vector.broadcast %cst_5 : f32 to vector<64x128xf32>
    %14 = arith.mulf %13, %12 : vector<64x128xf32>
    %15 = arith.maximumf %12, %14 : vector<64x128xf32>
    %16 = arith.truncf %15 : vector<64x128xf32> to vector<64x128xbf16>
    %c0_6 = arith.constant 0 : index
    %c0_7 = arith.constant 0 : index
    %17 = vector.load %arg4[%c0_6, %c0_7] : memref<64x128xbf16, #tpu.memory_space<vmem>>, vector<64x128xbf16>
    tpu.vector_store %arg4[%c0_6, %c0_7], %16 {strides = array<i32>} : memref<64x128xbf16, #tpu.memory_space<vmem>>, vector<64x128xbf16>,
    return
  }
  func.func @transform_0(%arg0: i32) -> (i32, i32) {
    %c0_i32 = arith.constant 0 : i32
    %c0_i32_0 = arith.constant 0 : i32
    %c0_i32_1 = arith.constant 0 : i32
    return %c0_i32, %c0_i32_0 : i32, i32
  }
  func.func @transform_1(%arg0: i32) -> (i32, i32) {
    %c0_i32 = arith.constant 0 : i32
    %c0_i32_0 = arith.constant 0 : i32
    return %arg0, %c0_i32 : i32, i32
  }
  func.func @transform_2(%arg0: i32) -> (i32, i32) {
    %c0_i32 = arith.constant 0 : i32
    %c0_i32_0 = arith.constant 0 : i32
    return %arg0, %c0_i32 : i32, i32
  }
  func.func @transform_3(%arg0: i32) -> (i32, i32) {
    %c0_i32 = arith.constant 0 : i32
    %c0_i32_0 = arith.constant 0 : i32
    return %arg0, %c0_i32 : i32, i32
  }
}

module attributes {stable_mosaic.version = 11 : i64} {
  func.func @fc_fused_kernel(%arg0: i32, %arg1: memref<2x1024xbf16, #tpu.memory_space<vmem>>, %arg2: memref<1024x1024xbf16, #tpu.memory_space<vmem>>, %arg3: memref<1x1024xf32, #tpu.memory_space<vmem>>, %arg4: memref<1x1024xf32, #tpu.memory_space<vmem>>, %arg5: memref<1x1xf32, #tpu.memory_space<vmem>>, %arg6: memref<2x1xf32, #tpu.memory_space<vmem>>) attributes {dimension_semantics = [#tpu.dimension_semantics<parallel>], iteration_bounds = array<i64: 1>, scalar_prefetch = 0 : i64, scratch_operands = 0 : i64, tpu.core_type = #tpu.core_type<tc>, window_params = [{pipeline_mode = #tpu.pipeline_mode<synchronous>, transform_indices = @transform_0, window_bounds = array<i64: 2, 1024>}, {transform_indices = @transform_1, window_bounds = array<i64: 1024, 1024>}, {transform_indices = @transform_2, window_bounds = array<i64: 1, 1024>}, {transform_indices = @transform_3, window_bounds = array<i64: 1, 1024>}, {pipeline_mode = #tpu.pipeline_mode<synchronous>, transform_indices = @transform_4, window_bounds = array<i64: 1, 1>}, {pipeline_mode = #tpu.pipeline_mode<synchronous>, transform_indices = @transform_5, window_bounds = array<i64: 2, 1>}]} {
    %c0 = arith.constant 0 : index
    %c0_0 = arith.constant 0 : index
    %0 = vector.load %arg1[%c0, %c0_0] : memref<2x1024xbf16, #tpu.memory_space<vmem>>, vector<2x1024xbf16>
    %c0_1 = arith.constant 0 : index
    %c0_2 = arith.constant 0 : index
    %1 = vector.load %arg2[%c0_1, %c0_2] : memref<1024x1024xbf16, #tpu.memory_space<vmem>>, vector<1024x1024xbf16>
    %cst = arith.constant dense<0.000000e+00> : vector<2x1024xf32>
    %2 = tpu.matmul %0, %1, %cst {dimension_numbers = #tpu.dot_dimension_numbers<[1], [0], [0], [1], [0, 0, 1, 1], [], []>} : vector<2x1024xbf16>, vector<1024x1024xbf16>, vector<2x1024xf32> -> vector<2x1024xf32>
    %c0_3 = arith.constant 0 : index
    %c0_4 = arith.constant 0 : index
    %3 = vector.load %arg3[%c0_3, %c0_4] : memref<1x1024xf32, #tpu.memory_space<vmem>>, vector<1x1024xf32>
    %4 = vector.broadcast %3 : vector<1x1024xf32> to vector<2x1024xf32>
    %5 = arith.addf %2, %4 : vector<2x1024xf32>
    %cst_5 = arith.constant 0.00999999977 : f32
    %6 = vector.broadcast %cst_5 : f32 to vector<2x1024xf32>
    %7 = arith.mulf %6, %5 : vector<2x1024xf32>
    %8 = arith.maximumf %5, %7 : vector<2x1024xf32>
    %c0_6 = arith.constant 0 : index
    %c0_7 = arith.constant 0 : index
    %9 = vector.load %arg4[%c0_6, %c0_7] : memref<1x1024xf32, #tpu.memory_space<vmem>>, vector<1x1024xf32>
    %10 = vector.broadcast %9 : vector<1x1024xf32> to vector<2x1024xf32>
    %11 = arith.mulf %8, %10 : vector<2x1024xf32>
    %cst_8 = arith.constant dense<0.000000e+00> : vector<2xf32>
    %12 = vector.multi_reduction <add>, %11, %cst_8 [1] : vector<2x1024xf32> to vector<2xf32>
    %13 = vector.shape_cast %12 : vector<2xf32> to vector<2x1xf32>
    %c0_9 = arith.constant 0 : index
    %c0_10 = arith.constant 0 : index
    %14 = vector.load %arg5[%c0_9, %c0_10] : memref<1x1xf32, #tpu.memory_space<vmem>>, vector<1x1xf32>
    %15 = vector.broadcast %14 : vector<1x1xf32> to vector<2x1xf32>
    %16 = arith.addf %13, %15 : vector<2x1xf32>
    %c0_11 = arith.constant 0 : index
    %c0_12 = arith.constant 0 : index
    %17 = vector.load %arg6[%c0_11, %c0_12] : memref<2x1xf32, #tpu.memory_space<vmem>>, vector<2x1xf32>
    tpu.vector_store %arg6[%c0_11, %c0_12], %16 {strides = array<i32>} : memref<2x1xf32, #tpu.memory_space<vmem>>, vector<2x1xf32>,
    return
  }
  func.func @transform_0(%arg0: i32) -> (i32, i32) {
    %c0_i32 = arith.constant 0 : i32
    %c0_i32_0 = arith.constant 0 : i32
    %c0_i32_1 = arith.constant 0 : i32
    return %c0_i32, %c0_i32_0 : i32, i32
  }
  func.func @transform_1(%arg0: i32) -> (i32, i32) {
    %c0_i32 = arith.constant 0 : i32
    %c0_i32_0 = arith.constant 0 : i32
    return %c0_i32, %arg0 : i32, i32
  }
  func.func @transform_2(%arg0: i32) -> (i32, i32) {
    %c0_i32 = arith.constant 0 : i32
    %c0_i32_0 = arith.constant 0 : i32
    return %c0_i32, %arg0 : i32, i32
  }
  func.func @transform_3(%arg0: i32) -> (i32, i32) {
    %c0_i32 = arith.constant 0 : i32
    %c0_i32_0 = arith.constant 0 : i32
    return %c0_i32, %arg0 : i32, i32
  }
  func.func @transform_4(%arg0: i32) -> (i32, i32) {
    %c0_i32 = arith.constant 0 : i32
    %c0_i32_0 = arith.constant 0 : i32
    %c0_i32_1 = arith.constant 0 : i32
    return %c0_i32, %c0_i32_0 : i32, i32
  }
  func.func @transform_5(%arg0: i32) -> (i32, i32) {
    %c0_i32 = arith.constant 0 : i32
    %c0_i32_0 = arith.constant 0 : i32
    %c0_i32_1 = arith.constant 0 : i32
    return %c0_i32, %c0_i32_0 : i32, i32
  }
}

</mosaic_0001>

<llo_original>
// kernel: conv_discriminator_forward.3
$region0: #{conv_discriminator_forward.3}
  #allocation0 [shape = 'u32[]', space=smem, size = 0x4, offset = 0x4, fixed_abs, tag = 'smem constant byte address 0x4 - core index']
  #allocation1 [shape = 'u32[144,128]{1,0:T(1,128)}', space=vmem, size = 0x12000, scoped, tag = 'internal scratch']
  %s0 = inlined_call_operand.vmem [shape: bf16[384,1536], index: 0, kind: input, shape index: {}]
  %s1 = inlined_call_operand.vmem [shape: bf16[32,384], index: 1, kind: input, shape index: {}]
  %s2 = inlined_call_operand.vmem [shape: f32[32,1], index: 2, kind: input, shape index: {}]
  %s3 = inlined_call_operand.vmem [shape: bf16[32,384], index: 3, kind: output, shape index: {}]
  %s4 = sld [smem:[#allocation0]]
  $region22: #{conv_discriminator_forward.3} parent=0
    _
  %s6 = ssub.s32 1, %s4
  %s7 = scalar_select 0, %s6, %s4
  // Predicated region
  $region2: #{conv_discriminator_forward.3} parent=0 // pred_check
    _
  $region3: #{conv_discriminator_forward.3} parent=0 // pred_check_branch
    %9 = sbr.rel (0) target = $region5
  $region4: #{conv_discriminator_forward.3} parent=0 // pred_region
    _
  $region5: #{conv_discriminator_forward.3} parent=0 // pred_fallthru
    _
  // Predicated region
  $region6: #{conv_discriminator_forward.3} parent=0 // pred_check
    _
  $region7: #{conv_discriminator_forward.3} parent=0 // pred_check_branch
    %11 = sbr.rel (0) target = $region9
  $region8: #{conv_discriminator_forward.3} parent=0 // pred_region
    _
  $region9: #{conv_discriminator_forward.3} parent=0 // pred_fallthru
    _
  // Predicated region
  $region10: #{conv_discriminator_forward.3} parent=0 // pred_check
    _
  $region11: #{conv_discriminator_forward.3} parent=0 // pred_check_branch
    %13 = sbr.rel (0) target = $region13
  $region12: #{conv_discriminator_forward.3} parent=0 // pred_region
    _
  $region13: #{conv_discriminator_forward.3} parent=0 // pred_fallthru
    _
  %v15 = vld [vmem:[%s1] sm:$0xff]
  %v16 = vld [vmem:[%s1 + $0x8] sm:$0xf]
  %v17 = vld [vmem:[%s1 + $0xc] sm:$0xff]
  %v18 = vld [vmem:[%s1 + $0x14] sm:$0xf]
  %v19 = vld [vmem:[%s1 + $0x18] sm:$0xff]
  %v20 = vld [vmem:[%s1 + $0x20] sm:$0xf]
  %v21 = vld [vmem:[%s1 + $0x24] sm:$0xff]
  %v22 = vld [vmem:[%s1 + $0x2c] sm:$0xf]
  %v23 = vld [vmem:[%s0] sm:$0xff]
  %v24 = vld [vmem:[%s0 + $0x8] sm:$0xff]
  %v25 = vld [vmem:[%s0 + $0x10] sm:$0xff]
  %v26 = vld [vmem:[%s0 + $0x18] sm:$0xff]
  %v27 = vld [vmem:[%s0 + $0x20] sm:$0xff]
  %v28 = vld [vmem:[%s0 + $0x28] sm:$0xff]
  %v29 = vld [vmem:[%s0 + $0x30] sm:$0xff]
  %v30 = vld [vmem:[%s0 + $0x38] sm:$0xff]
  %v31 = vld [vmem:[%s0 + $0x40] sm:$0xff]
  %v32 = vld [vmem:[%s0 + $0x48] sm:$0xff]
  %v33 = vld [vmem:[%s0 + $0x50] sm:$0xff]
  %v34 = vld [vmem:[%s0 + $0x58] sm:$0xff]
  %v35 = vld [vmem:[%s0 + $0x60] sm:$0xff]
  %v36 = vld [vmem:[%s0 + $0x68] sm:$0xff]
  %v37 = vld [vmem:[%s0 + $0x70] sm:$0xff]
  %v38 = vld [vmem:[%s0 + $0x78] sm:$0xff]
  %v39 = vld [vmem:[%s0 + $0x80] sm:$0xff]
  %v40 = vld [vmem:[%s0 + $0x88] sm:$0xff]
  %v41 = vld [vmem:[%s0 + $0x90] sm:$0xff]
  %v42 = vld [vmem:[%s0 + $0x98] sm:$0xff]
  %v43 = vld [vmem:[%s0 + $0xa0] sm:$0xff]
  %v44 = vld [vmem:[%s0 + $0xa8] sm:$0xff]
  %v45 = vld [vmem:[%s0 + $0xb0] sm:$0xff]
  %v46 = vld [vmem:[%s0 + $0xb8] sm:$0xff]
  %v47 = vld [vmem:[%s0 + $0xc0] sm:$0xff]
  %v48 = vld [vmem:[%s0 + $0xc8] sm:$0xff]
  %v49 = vld [vmem:[%s0 + $0xd0] sm:$0xff]
  %v50 = vld [vmem:[%s0 + $0xd8] sm:$0xff]
  %v51 = vld [vmem:[%s0 + $0xe0] sm:$0xff]
  %v52 = vld [vmem:[%s0 + $0xe8] sm:$0xff]
  %v53 = vld [vmem:[%s0 + $0xf0] sm:$0xff]
  %v54 = vld [vmem:[%s0 + $0xf8] sm:$0xff]
  %v55 = vld [vmem:[%s0 + $0x100] sm:$0xff]
  %v56 = vld [vmem:[%s0 + $0x108] sm:$0xff]
  %v57 = vld [vmem:[%s0 + $0x110] sm:$0xff]
  %v58 = vld [vmem:[%s0 + $0x118] sm:$0xff]
  %v59 = vld [vmem:[%s0 + $0x120] sm:$0xff]
  %v60 = vld [vmem:[%s0 + $0x128] sm:$0xff]
  %v61 = vld [vmem:[%s0 + $0x130] sm:$0xff]
  %v62 = vld [vmem:[%s0 + $0x138] sm:$0xff]
  %v63 = vld [vmem:[%s0 + $0x140] sm:$0xff]
  %v64 = vld [vmem:[%s0 + $0x148] sm:$0xff]
  %v65 = vld [vmem:[%s0 + $0x150] sm:$0xff]
  %v66 = vld [vmem:[%s0 + $0x158] sm:$0xff]
  %v67 = vld [vmem:[%s0 + $0x160] sm:$0xff]
  %v68 = vld [vmem:[%s0 + $0x168] sm:$0xff]
  %v69 = vld [vmem:[%s0 + $0x170] sm:$0xff]
  %v70 = vld [vmem:[%s0 + $0x178] sm:$0xff]
  %v71 = vld [vmem:[%s0 + $0x180] sm:$0xff]
  %v72 = vld [vmem:[%s0 + $0x188] sm:$0xff]
  %v73 = vld [vmem:[%s0 + $0x190] sm:$0xff]
  %v74 = vld [vmem:[%s0 + $0x198] sm:$0xff]
  %v75 = vld [vmem:[%s0 + $0x1a0] sm:$0xff]
  %v76 = vld [vmem:[%s0 + $0x1a8] sm:$0xff]
  %v77 = vld [vmem:[%s0 + $0x1b0] sm:$0xff]
  %v78 = vld [vmem:[%s0 + $0x1b8] sm:$0xff]
  %v79 = vld [vmem:[%s0 + $0x1c0] sm:$0xff]
  %v80 = vld [vmem:[%s0 + $0x1c8] sm:$0xff]
  %v81 = vld [vmem:[%s0 + $0x1d0] sm:$0xff]
  %v82 = vld [vmem:[%s0 + $0x1d8] sm:$0xff]
  %v83 = vld [vmem:[%s0 + $0x1e0] sm:$0xff]
  %v84 = vld [vmem:[%s0 + $0x1e8] sm:$0xff]
  %v85 = vld [vmem:[%s0 + $0x1f0] sm:$0xff]
  %v86 = vld [vmem:[%s0 + $0x1f8] sm:$0xff]
  %v87 = vld [vmem:[%s0 + $0x200] sm:$0xff]
  %v88 = vld [vmem:[%s0 + $0x208] sm:$0xff]
  %v89 = vld [vmem:[%s0 + $0x210] sm:$0xff]
  %v90 = vld [vmem:[%s0 + $0x218] sm:$0xff]
  %v91 = vld [vmem:[%s0 + $0x220] sm:$0xff]
  %v92 = vld [vmem:[%s0 + $0x228] sm:$0xff]
  %v93 = vld [vmem:[%s0 + $0x230] sm:$0xff]
  %v94 = vld [vmem:[%s0 + $0x238] sm:$0xff]
  %v95 = vld [vmem:[%s0 + $0x240] sm:$0xff]
  %v96 = vld [vmem:[%s0 + $0x248] sm:$0xff]
  %v97 = vld [vmem:[%s0 + $0x250] sm:$0xff]
  %v98 = vld [vmem:[%s0 + $0x258] sm:$0xff]
  %v99 = vld [vmem:[%s0 + $0x260] sm:$0xff]
  %v100 = vld [vmem:[%s0 + $0x268] sm:$0xff]
  %v101 = vld [vmem:[%s0 + $0x270] sm:$0xff]
  %v102 = vld [vmem:[%s0 + $0x278] sm:$0xff]
  %v103 = vld [vmem:[%s0 + $0x280] sm:$0xff]
  %v104 = vld [vmem:[%s0 + $0x288] sm:$0xff]
  %v105 = vld [vmem:[%s0 + $0x290] sm:$0xff]
  %v106 = vld [vmem:[%s0 + $0x298] sm:$0xff]
  %v107 = vld [vmem:[%s0 + $0x2a0] sm:$0xff]
  %v108 = vld [vmem:[%s0 + $0x2a8] sm:$0xff]
  %v109 = vld [vmem:[%s0 + $0x2b0] sm:$0xff]
  %v110 = vld [vmem:[%s0 + $0x2b8] sm:$0xff]
  %v111 = vld [vmem:[%s0 + $0x2c0] sm:$0xff]
  %v112 = vld [vmem:[%s0 + $0x2c8] sm:$0xff]
  %v113 = vld [vmem:[%s0 + $0x2d0] sm:$0xff]
  %v114 = vld [vmem:[%s0 + $0x2d8] sm:$0xff]
  %v115 = vld [vmem:[%s0 + $0x2e0] sm:$0xff]
  %v116 = vld [vmem:[%s0 + $0x2e8] sm:$0xff]
  %v117 = vld [vmem:[%s0 + $0x2f0] sm:$0xff]
  %v118 = vld [vmem:[%s0 + $0x2f8] sm:$0xff]
  %v119 = vld [vmem:[%s0 + $0x300] sm:$0xff]
  %v120 = vld [vmem:[%s0 + $0x308] sm:$0xff]
  %v121 = vld [vmem:[%s0 + $0x310] sm:$0xff]
  %v122 = vld [vmem:[%s0 + $0x318] sm:$0xff]
  %v123 = vld [vmem:[%s0 + $0x320] sm:$0xff]
  %v124 = vld [vmem:[%s0 + $0x328] sm:$0xff]
  %v125 = vld [vmem:[%s0 + $0x330] sm:$0xff]
  %v126 = vld [vmem:[%s0 + $0x338] sm:$0xff]
  %v127 = vld [vmem:[%s0 + $0x340] sm:$0xff]
  %v128 = vld [vmem:[%s0 + $0x348] sm:$0xff]
  %v129 = vld [vmem:[%s0 + $0x350] sm:$0xff]
  %v130 = vld [vmem:[%s0 + $0x358] sm:$0xff]
  %v131 = vld [vmem:[%s0 + $0x360] sm:$0xff]
  %v132 = vld [vmem:[%s0 + $0x368] sm:$0xff]
  %v133 = vld [vmem:[%s0 + $0x370] sm:$0xff]
  %v134 = vld [vmem:[%s0 + $0x378] sm:$0xff]
  %v135 = vld [vmem:[%s0 + $0x380] sm:$0xff]
  %v136 = vld [vmem:[%s0 + $0x388] sm:$0xff]
  %v137 = vld [vmem:[%s0 + $0x390] sm:$0xff]
  %v138 = vld [vmem:[%s0 + $0x398] sm:$0xff]
  %v139 = vld [vmem:[%s0 + $0x3a0] sm:$0xff]
  %v140 = vld [vmem:[%s0 + $0x3a8] sm:$0xff]
  %v141 = vld [vmem:[%s0 + $0x3b0] sm:$0xff]
  %v142 = vld [vmem:[%s0 + $0x3b8] sm:$0xff]
  %v143 = vld [vmem:[%s0 + $0x3c0] sm:$0xff]
  %v144 = vld [vmem:[%s0 + $0x3c8] sm:$0xff]
  %v145 = vld [vmem:[%s0 + $0x3d0] sm:$0xff]
  %v146 = vld [vmem:[%s0 + $0x3d8] sm:$0xff]
  %v147 = vld [vmem:[%s0 + $0x3e0] sm:$0xff]
  %v148 = vld [vmem:[%s0 + $0x3e8] sm:$0xff]
  %v149 = vld [vmem:[%s0 + $0x3f0] sm:$0xff]
  %v150 = vld [vmem:[%s0 + $0x3f8] sm:$0xff]
  %v151 = vld [vmem:[%s0 + $0x400] sm:$0xff]
  %v152 = vld [vmem:[%s0 + $0x408] sm:$0xff]
  %v153 = vld [vmem:[%s0 + $0x410] sm:$0xff]
  %v154 = vld [vmem:[%s0 + $0x418] sm:$0xff]
  %v155 = vld [vmem:[%s0 + $0x420] sm:$0xff]
  %v156 = vld [vmem:[%s0 + $0x428] sm:$0xff]
  %v157 = vld [vmem:[%s0 + $0x430] sm:$0xff]
  %v158 = vld [vmem:[%s0 + $0x438] sm:$0xff]
  %v159 = vld [vmem:[%s0 + $0x440] sm:$0xff]
  %v160 = vld [vmem:[%s0 + $0x448] sm:$0xff]
  %v161 = vld [vmem:[%s0 + $0x450] sm:$0xff]
  %v162 = vld [vmem:[%s0 + $0x458] sm:$0xff]
  %v163 = vld [vmem:[%s0 + $0x460] sm:$0xff]
  %v164 = vld [vmem:[%s0 + $0x468] sm:$0xff]
  %v165 = vld [vmem:[%s0 + $0x470] sm:$0xff]
  %v166 = vld [vmem:[%s0 + $0x478] sm:$0xff]
  %v167 = vld [vmem:[%s0 + $0x480] sm:$0xff]
  %v168 = vld [vmem:[%s0 + $0x488] sm:$0xff]
  %v169 = vld [vmem:[%s0 + $0x490] sm:$0xff]
  %v170 = vld [vmem:[%s0 + $0x498] sm:$0xff]
  %v171 = vld [vmem:[%s0 + $0x4a0] sm:$0xff]
  %v172 = vld [vmem:[%s0 + $0x4a8] sm:$0xff]
  %v173 = vld [vmem:[%s0 + $0x4b0] sm:$0xff]
  %v174 = vld [vmem:[%s0 + $0x4b8] sm:$0xff]
  %v175 = vld [vmem:[%s0 + $0x4c0] sm:$0xff]
  %v176 = vld [vmem:[%s0 + $0x4c8] sm:$0xff]
  %v177 = vld [vmem:[%s0 + $0x4d0] sm:$0xff]
  %v178 = vld [vmem:[%s0 + $0x4d8] sm:$0xff]
  %v179 = vld [vmem:[%s0 + $0x4e0] sm:$0xff]
  %v180 = vld [vmem:[%s0 + $0x4e8] sm:$0xff]
  %v181 = vld [vmem:[%s0 + $0x4f0] sm:$0xff]
  %v182 = vld [vmem:[%s0 + $0x4f8] sm:$0xff]
  %v183 = vld [vmem:[%s0 + $0x500] sm:$0xff]
  %v184 = vld [vmem:[%s0 + $0x508] sm:$0xff]
  %v185 = vld [vmem:[%s0 + $0x510] sm:$0xff]
  %v186 = vld [vmem:[%s0 + $0x518] sm:$0xff]
  %v187 = vld [vmem:[%s0 + $0x520] sm:$0xff]
  %v188 = vld [vmem:[%s0 + $0x528] sm:$0xff]
  %v189 = vld [vmem:[%s0 + $0x530] sm:$0xff]
  %v190 = vld [vmem:[%s0 + $0x538] sm:$0xff]
  %v191 = vld [vmem:[%s0 + $0x540] sm:$0xff]
  %v192 = vld [vmem:[%s0 + $0x548] sm:$0xff]
  %v193 = vld [vmem:[%s0 + $0x550] sm:$0xff]
  %v194 = vld [vmem:[%s0 + $0x558] sm:$0xff]
  %v195 = vld [vmem:[%s0 + $0x560] sm:$0xff]
  %v196 = vld [vmem:[%s0 + $0x568] sm:$0xff]
  %v197 = vld [vmem:[%s0 + $0x570] sm:$0xff]
  %v198 = vld [vmem:[%s0 + $0x578] sm:$0xff]
  %v199 = vld [vmem:[%s0 + $0x580] sm:$0xff]
  %v200 = vld [vmem:[%s0 + $0x588] sm:$0xff]
  %v201 = vld [vmem:[%s0 + $0x590] sm:$0xff]
  %v202 = vld [vmem:[%s0 + $0x598] sm:$0xff]
  %v203 = vld [vmem:[%s0 + $0x5a0] sm:$0xff]
  %v204 = vld [vmem:[%s0 + $0x5a8] sm:$0xff]
  %v205 = vld [vmem:[%s0 + $0x5b0] sm:$0xff]
  %v206 = vld [vmem:[%s0 + $0x5b8] sm:$0xff]
  %v207 = vld [vmem:[%s0 + $0x5c0] sm:$0xff]
  %v208 = vld [vmem:[%s0 + $0x5c8] sm:$0xff]
  %v209 = vld [vmem:[%s0 + $0x5d0] sm:$0xff]
  %v210 = vld [vmem:[%s0 + $0x5d8] sm:$0xff]
  %v211 = vld [vmem:[%s0 + $0x5e0] sm:$0xff]
  %v212 = vld [vmem:[%s0 + $0x5e8] sm:$0xff]
  %v213 = vld [vmem:[%s0 + $0x5f0] sm:$0xff]
  %v214 = vld [vmem:[%s0 + $0x5f8] sm:$0xff]
  %v215 = vld [vmem:[%s0 + $0x600] sm:$0xff]
  %v216 = vld [vmem:[%s0 + $0x608] sm:$0xff]
  %v217 = vld [vmem:[%s0 + $0x610] sm:$0xff]
  %v218 = vld [vmem:[%s0 + $0x618] sm:$0xff]
  %v219 = vld [vmem:[%s0 + $0x620] sm:$0xff]
  %v220 = vld [vmem:[%s0 + $0x628] sm:$0xff]
  %v221 = vld [vmem:[%s0 + $0x630] sm:$0xff]
  %v222 = vld [vmem:[%s0 + $0x638] sm:$0xff]
  %v223 = vld [vmem:[%s0 + $0x640] sm:$0xff]
  %v224 = vld [vmem:[%s0 + $0x648] sm:$0xff]
  %v225 = vld [vmem:[%s0 + $0x650] sm:$0xff]
  %v226 = vld [vmem:[%s0 + $0x658] sm:$0xff]
  %v227 = vld [vmem:[%s0 + $0x660] sm:$0xff]
  %v228 = vld [vmem:[%s0 + $0x668] sm:$0xff]
  %v229 = vld [vmem:[%s0 + $0x670] sm:$0xff]
  %v230 = vld [vmem:[%s0 + $0x678] sm:$0xff]
  %v231 = vld [vmem:[%s0 + $0x680] sm:$0xff]
  %v232 = vld [vmem:[%s0 + $0x688] sm:$0xff]
  %v233 = vld [vmem:[%s0 + $0x690] sm:$0xff]
  %v234 = vld [vmem:[%s0 + $0x698] sm:$0xff]
  %v235 = vld [vmem:[%s0 + $0x6a0] sm:$0xff]
  %v236 = vld [vmem:[%s0 + $0x6a8] sm:$0xff]
  %v237 = vld [vmem:[%s0 + $0x6b0] sm:$0xff]
  %v238 = vld [vmem:[%s0 + $0x6b8] sm:$0xff]
  %v239 = vld [vmem:[%s0 + $0x6c0] sm:$0xff]
  %v240 = vld [vmem:[%s0 + $0x6c8] sm:$0xff]
  %v241 = vld [vmem:[%s0 + $0x6d0] sm:$0xff]
  %v242 = vld [vmem:[%s0 + $0x6d8] sm:$0xff]
  %v243 = vld [vmem:[%s0 + $0x6e0] sm:$0xff]
  %v244 = vld [vmem:[%s0 + $0x6e8] sm:$0xff]
  %v245 = vld [vmem:[%s0 + $0x6f0] sm:$0xff]
  %v246 = vld [vmem:[%s0 + $0x6f8] sm:$0xff]
  %v247 = vld [vmem:[%s0 + $0x700] sm:$0xff]
  %v248 = vld [vmem:[%s0 + $0x708] sm:$0xff]
  %v249 = vld [vmem:[%s0 + $0x710] sm:$0xff]
  %v250 = vld [vmem:[%s0 + $0x718] sm:$0xff]
  %v251 = vld [vmem:[%s0 + $0x720] sm:$0xff]
  %v252 = vld [vmem:[%s0 + $0x728] sm:$0xff]
  %v253 = vld [vmem:[%s0 + $0x730] sm:$0xff]
  %v254 = vld [vmem:[%s0 + $0x738] sm:$0xff]
  %v255 = vld [vmem:[%s0 + $0x740] sm:$0xff]
  %v256 = vld [vmem:[%s0 + $0x748] sm:$0xff]
  %v257 = vld [vmem:[%s0 + $0x750] sm:$0xff]
  %v258 = vld [vmem:[%s0 + $0x758] sm:$0xff]
  %v259 = vld [vmem:[%s0 + $0x760] sm:$0xff]
  %v260 = vld [vmem:[%s0 + $0x768] sm:$0xff]
  %v261 = vld [vmem:[%s0 + $0x770] sm:$0xff]
  %v262 = vld [vmem:[%s0 + $0x778] sm:$0xff]
  %v263 = vld [vmem:[%s0 + $0x780] sm:$0xff]
  %v264 = vld [vmem:[%s0 + $0x788] sm:$0xff]
  %v265 = vld [vmem:[%s0 + $0x790] sm:$0xff]
  %v266 = vld [vmem:[%s0 + $0x798] sm:$0xff]
  %v267 = vld [vmem:[%s0 + $0x7a0] sm:$0xff]
  %v268 = vld [vmem:[%s0 + $0x7a8] sm:$0xff]
  %v269 = vld [vmem:[%s0 + $0x7b0] sm:$0xff]
  %v270 = vld [vmem:[%s0 + $0x7b8] sm:$0xff]
  %v271 = vld [vmem:[%s0 + $0x7c0] sm:$0xff]
  %v272 = vld [vmem:[%s0 + $0x7c8] sm:$0xff]
  %v273 = vld [vmem:[%s0 + $0x7d0] sm:$0xff]
  %v274 = vld [vmem:[%s0 + $0x7d8] sm:$0xff]
  %v275 = vld [vmem:[%s0 + $0x7e0] sm:$0xff]
  %v276 = vld [vmem:[%s0 + $0x7e8] sm:$0xff]
  %v277 = vld [vmem:[%s0 + $0x7f0] sm:$0xff]
  %v278 = vld [vmem:[%s0 + $0x7f8] sm:$0xff]
  %v279 = vld [vmem:[%s0 + $0x800] sm:$0xff]
  %v280 = vld [vmem:[%s0 + $0x808] sm:$0xff]
  %v281 = vld [vmem:[%s0 + $0x810] sm:$0xff]
  %v282 = vld [vmem:[%s0 + $0x818] sm:$0xff]
  %v283 = vld [vmem:[%s0 + $0x820] sm:$0xff]
  %v284 = vld [vmem:[%s0 + $0x828] sm:$0xff]
  %v285 = vld [vmem:[%s0 + $0x830] sm:$0xff]
  %v286 = vld [vmem:[%s0 + $0x838] sm:$0xff]
  %v287 = vld [vmem:[%s0 + $0x840] sm:$0xff]
  %v288 = vld [vmem:[%s0 + $0x848] sm:$0xff]
  %v289 = vld [vmem:[%s0 + $0x850] sm:$0xff]
  %v290 = vld [vmem:[%s0 + $0x858] sm:$0xff]
  %v291 = vld [vmem:[%s0 + $0x860] sm:$0xff]
  %v292 = vld [vmem:[%s0 + $0x868] sm:$0xff]
  %v293 = vld [vmem:[%s0 + $0x870] sm:$0xff]
  %v294 = vld [vmem:[%s0 + $0x878] sm:$0xff]
  %v295 = vld [vmem:[%s0 + $0x880] sm:$0xff]
  %v296 = vld [vmem:[%s0 + $0x888] sm:$0xff]
  %v297 = vld [vmem:[%s0 + $0x890] sm:$0xff]
  %v298 = vld [vmem:[%s0 + $0x898] sm:$0xff]
  %v299 = vld [vmem:[%s0 + $0x8a0] sm:$0xff]
  %v300 = vld [vmem:[%s0 + $0x8a8] sm:$0xff]
  %v301 = vld [vmem:[%s0 + $0x8b0] sm:$0xff]
  %v302 = vld [vmem:[%s0 + $0x8b8] sm:$0xff]
  %v303 = vld [vmem:[%s0 + $0x8c0] sm:$0xff]
  %v304 = vld [vmem:[%s0 + $0x8c8] sm:$0xff]
  %v305 = vld [vmem:[%s0 + $0x8d0] sm:$0xff]
  %v306 = vld [vmem:[%s0 + $0x8d8] sm:$0xff]
  %v307 = vld [vmem:[%s0 + $0x8e0] sm:$0xff]
  %v308 = vld [vmem:[%s0 + $0x8e8] sm:$0xff]
  %v309 = vld [vmem:[%s0 + $0x8f0] sm:$0xff]
  %v310 = vld [vmem:[%s0 + $0x8f8] sm:$0xff]
  %v319 = vunpack.c.l.b16 %v15
  %v320 = vunpack.c.h.b16 %v15
  %v321 = vunpack.c.l.b16 %v16
  %v322 = vunpack.c.l.b16 %v17
  %v323 = vunpack.c.h.b16 %v17
  %v324 = vunpack.c.l.b16 %v18
  %v325 = vunpack.c.l.b16 %v19
  %v326 = vunpack.c.h.b16 %v19
  %v327 = vunpack.c.l.b16 %v20
  %v328 = vunpack.c.l.b16 %v21
  %v329 = vunpack.c.h.b16 %v21
  %v330 = vunpack.c.l.b16 %v22
  %v331 = vpack.c.b16 %v322, %v319
  %v332 = vpack.c.b16 %v323, %v320
  %v333 = vpack.c.b16 %v324, %v321
  %v334 = vpack.c.b16 %v328, %v325
  %v335 = vpack.c.b16 %v329, %v326
  %v336 = vpack.c.b16 %v330, %v327
  %v631 = vunpack.c.l.b16 %v23
  %v632 = vunpack.c.h.b16 %v23
  %v633 = vunpack.c.l.b16 %v24
  %v634 = vunpack.c.h.b16 %v24
  %v635 = vunpack.c.l.b16 %v25
  %v636 = vunpack.c.h.b16 %v25
  %v637 = vunpack.c.l.b16 %v26
  %v638 = vunpack.c.h.b16 %v26
  %v639 = vunpack.c.l.b16 %v27
  %v640 = vunpack.c.h.b16 %v27
  %v641 = vunpack.c.l.b16 %v28
  %v642 = vunpack.c.h.b16 %v28
  %v643 = vunpack.c.l.b16 %v29
  %v644 = vunpack.c.h.b16 %v29
  %v645 = vunpack.c.l.b16 %v30
  %v646 = vunpack.c.h.b16 %v30
  %v647 = vunpack.c.l.b16 %v31
  %v648 = vunpack.c.h.b16 %v31
  %v649 = vunpack.c.l.b16 %v32
  %v650 = vunpack.c.h.b16 %v32
  %v651 = vunpack.c.l.b16 %v33
  %v652 = vunpack.c.h.b16 %v33
  %v653 = vunpack.c.l.b16 %v34
  %v654 = vunpack.c.h.b16 %v34
  %v655 = vunpack.c.l.b16 %v35
  %v656 = vunpack.c.h.b16 %v35
  %v657 = vunpack.c.l.b16 %v36
  %v658 = vunpack.c.h.b16 %v36
  %v659 = vunpack.c.l.b16 %v37
  %v660 = vunpack.c.h.b16 %v37
  %v661 = vunpack.c.l.b16 %v38
  %v662 = vunpack.c.h.b16 %v38
  %v663 = vunpack.c.l.b16 %v39
  %v664 = vunpack.c.h.b16 %v39
  %v665 = vunpack.c.l.b16 %v40
  %v666 = vunpack.c.h.b16 %v40
  %v667 = vunpack.c.l.b16 %v41
  %v668 = vunpack.c.h.b16 %v41
  %v669 = vunpack.c.l.b16 %v42
  %v670 = vunpack.c.h.b16 %v42
  %v671 = vunpack.c.l.b16 %v43
  %v672 = vunpack.c.h.b16 %v43
  %v673 = vunpack.c.l.b16 %v44
  %v674 = vunpack.c.h.b16 %v44
  %v675 = vunpack.c.l.b16 %v45
  %v676 = vunpack.c.h.b16 %v45
  %v677 = vunpack.c.l.b16 %v46
  %v678 = vunpack.c.h.b16 %v46
  %v679 = vunpack.c.l.b16 %v47
  %v680 = vunpack.c.h.b16 %v47
  %v681 = vunpack.c.l.b16 %v48
  %v682 = vunpack.c.h.b16 %v48
  %v683 = vunpack.c.l.b16 %v49
  %v684 = vunpack.c.h.b16 %v49
  %v685 = vunpack.c.l.b16 %v50
  %v686 = vunpack.c.h.b16 %v50
  %v687 = vunpack.c.l.b16 %v51
  %v688 = vunpack.c.h.b16 %v51
  %v689 = vunpack.c.l.b16 %v52
  %v690 = vunpack.c.h.b16 %v52
  %v691 = vunpack.c.l.b16 %v53
  %v692 = vunpack.c.h.b16 %v53
  %v693 = vunpack.c.l.b16 %v54
  %v694 = vunpack.c.h.b16 %v54
  %v695 = vunpack.c.l.b16 %v55
  %v696 = vunpack.c.h.b16 %v55
  %v697 = vunpack.c.l.b16 %v56
  %v698 = vunpack.c.h.b16 %v56
  %v699 = vunpack.c.l.b16 %v57
  %v700 = vunpack.c.h.b16 %v57
  %v701 = vunpack.c.l.b16 %v58
  %v702 = vunpack.c.h.b16 %v58
  %v703 = vunpack.c.l.b16 %v59
  %v704 = vunpack.c.h.b16 %v59
  %v705 = vunpack.c.l.b16 %v60
  %v706 = vunpack.c.h.b16 %v60
  %v707 = vunpack.c.l.b16 %v61
  %v708 = vunpack.c.h.b16 %v61
  %v709 = vunpack.c.l.b16 %v62
  %v710 = vunpack.c.h.b16 %v62
  %v711 = vunpack.c.l.b16 %v63
  %v712 = vunpack.c.h.b16 %v63
  %v713 = vunpack.c.l.b16 %v64
  %v714 = vunpack.c.h.b16 %v64
  %v715 = vunpack.c.l.b16 %v65
  %v716 = vunpack.c.h.b16 %v65
  %v717 = vunpack.c.l.b16 %v66
  %v718 = vunpack.c.h.b16 %v66
  %v719 = vunpack.c.l.b16 %v67
  %v720 = vunpack.c.h.b16 %v67
  %v721 = vunpack.c.l.b16 %v68
  %v722 = vunpack.c.h.b16 %v68
  %v723 = vunpack.c.l.b16 %v69
  %v724 = vunpack.c.h.b16 %v69
  %v725 = vunpack.c.l.b16 %v70
  %v726 = vunpack.c.h.b16 %v70
  %v727 = vunpack.c.l.b16 %v71
  %v728 = vunpack.c.h.b16 %v71
  %v729 = vunpack.c.l.b16 %v72
  %v730 = vunpack.c.h.b16 %v72
  %v731 = vunpack.c.l.b16 %v73
  %v732 = vunpack.c.h.b16 %v73
  %v733 = vunpack.c.l.b16 %v74
  %v734 = vunpack.c.h.b16 %v74
  %v735 = vunpack.c.l.b16 %v75
  %v736 = vunpack.c.h.b16 %v75
  %v737 = vunpack.c.l.b16 %v76
  %v738 = vunpack.c.h.b16 %v76
  %v739 = vunpack.c.l.b16 %v77
  %v740 = vunpack.c.h.b16 %v77
  %v741 = vunpack.c.l.b16 %v78
  %v742 = vunpack.c.h.b16 %v78
  %v743 = vunpack.c.l.b16 %v79
  %v744 = vunpack.c.h.b16 %v79
  %v745 = vunpack.c.l.b16 %v80
  %v746 = vunpack.c.h.b16 %v80
  %v747 = vunpack.c.l.b16 %v81
  %v748 = vunpack.c.h.b16 %v81
  %v749 = vunpack.c.l.b16 %v82
  %v750 = vunpack.c.h.b16 %v82
  %v751 = vunpack.c.l.b16 %v83
  %v752 = vunpack.c.h.b16 %v83
  %v753 = vunpack.c.l.b16 %v84
  %v754 = vunpack.c.h.b16 %v84
  %v755 = vunpack.c.l.b16 %v85
  %v756 = vunpack.c.h.b16 %v85
  %v757 = vunpack.c.l.b16 %v86
  %v758 = vunpack.c.h.b16 %v86
  %v759 = vunpack.c.l.b16 %v87
  %v760 = vunpack.c.h.b16 %v87
  %v761 = vunpack.c.l.b16 %v88
  %v762 = vunpack.c.h.b16 %v88
  %v763 = vunpack.c.l.b16 %v89
  %v764 = vunpack.c.h.b16 %v89
  %v765 = vunpack.c.l.b16 %v90
  %v766 = vunpack.c.h.b16 %v90
  %v767 = vunpack.c.l.b16 %v91
  %v768 = vunpack.c.h.b16 %v91
  %v769 = vunpack.c.l.b16 %v92
  %v770 = vunpack.c.h.b16 %v92
  %v771 = vunpack.c.l.b16 %v93
  %v772 = vunpack.c.h.b16 %v93
  %v773 = vunpack.c.l.b16 %v94
  %v774 = vunpack.c.h.b16 %v94
  %v775 = vunpack.c.l.b16 %v95
  %v776 = vunpack.c.h.b16 %v95
  %v777 = vunpack.c.l.b16 %v96
  %v778 = vunpack.c.h.b16 %v96
  %v779 = vunpack.c.l.b16 %v97
  %v780 = vunpack.c.h.b16 %v97
  %v781 = vunpack.c.l.b16 %v98
  %v782 = vunpack.c.h.b16 %v98
  %v783 = vunpack.c.l.b16 %v99
  %v784 = vunpack.c.h.b16 %v99
  %v785 = vunpack.c.l.b16 %v100
  %v786 = vunpack.c.h.b16 %v100
  %v787 = vunpack.c.l.b16 %v101
  %v788 = vunpack.c.h.b16 %v101
  %v789 = vunpack.c.l.b16 %v102
  %v790 = vunpack.c.h.b16 %v102
  %v791 = vunpack.c.l.b16 %v103
  %v792 = vunpack.c.h.b16 %v103
  %v793 = vunpack.c.l.b16 %v104
  %v794 = vunpack.c.h.b16 %v104
  %v795 = vunpack.c.l.b16 %v105
  %v796 = vunpack.c.h.b16 %v105
  %v797 = vunpack.c.l.b16 %v106
  %v798 = vunpack.c.h.b16 %v106
  %v799 = vunpack.c.l.b16 %v107
  %v800 = vunpack.c.h.b16 %v107
  %v801 = vunpack.c.l.b16 %v108
  %v802 = vunpack.c.h.b16 %v108
  %v803 = vunpack.c.l.b16 %v109
  %v804 = vunpack.c.h.b16 %v109
  %v805 = vunpack.c.l.b16 %v110
  %v806 = vunpack.c.h.b16 %v110
  %v807 = vunpack.c.l.b16 %v111
  %v808 = vunpack.c.h.b16 %v111
  %v809 = vunpack.c.l.b16 %v112
  %v810 = vunpack.c.h.b16 %v112
  %v811 = vunpack.c.l.b16 %v113
  %v812 = vunpack.c.h.b16 %v113
  %v813 = vunpack.c.l.b16 %v114
  %v814 = vunpack.c.h.b16 %v114
  %v815 = vunpack.c.l.b16 %v115
  %v816 = vunpack.c.h.b16 %v115
  %v817 = vunpack.c.l.b16 %v116
  %v818 = vunpack.c.h.b16 %v116
  %v819 = vunpack.c.l.b16 %v117
  %v820 = vunpack.c.h.b16 %v117
  %v821 = vunpack.c.l.b16 %v118
  %v822 = vunpack.c.h.b16 %v118
  %v823 = vunpack.c.l.b16 %v119
  %v824 = vunpack.c.h.b16 %v119
  %v825 = vunpack.c.l.b16 %v120
  %v826 = vunpack.c.h.b16 %v120
  %v827 = vunpack.c.l.b16 %v121
  %v828 = vunpack.c.h.b16 %v121
  %v829 = vunpack.c.l.b16 %v122
  %v830 = vunpack.c.h.b16 %v122
  %v831 = vunpack.c.l.b16 %v123
  %v832 = vunpack.c.h.b16 %v123
  %v833 = vunpack.c.l.b16 %v124
  %v834 = vunpack.c.h.b16 %v124
  %v835 = vunpack.c.l.b16 %v125
  %v836 = vunpack.c.h.b16 %v125
  %v837 = vunpack.c.l.b16 %v126
  %v838 = vunpack.c.h.b16 %v126
  %v839 = vunpack.c.l.b16 %v127
  %v840 = vunpack.c.h.b16 %v127
  %v841 = vunpack.c.l.b16 %v128
  %v842 = vunpack.c.h.b16 %v128
  %v843 = vunpack.c.l.b16 %v129
  %v844 = vunpack.c.h.b16 %v129
  %v845 = vunpack.c.l.b16 %v130
  %v846 = vunpack.c.h.b16 %v130
  %v847 = vunpack.c.l.b16 %v131
  %v848 = vunpack.c.h.b16 %v131
  %v849 = vunpack.c.l.b16 %v132
  %v850 = vunpack.c.h.b16 %v132
  %v851 = vunpack.c.l.b16 %v133
  %v852 = vunpack.c.h.b16 %v133
  %v853 = vunpack.c.l.b16 %v134
  %v854 = vunpack.c.h.b16 %v134
  %v855 = vunpack.c.l.b16 %v135
  %v856 = vunpack.c.h.b16 %v135
  %v857 = vunpack.c.l.b16 %v136
  %v858 = vunpack.c.h.b16 %v136
  %v859 = vunpack.c.l.b16 %v137
  %v860 = vunpack.c.h.b16 %v137
  %v861 = vunpack.c.l.b16 %v138
  %v862 = vunpack.c.h.b16 %v138
  %v863 = vunpack.c.l.b16 %v139
  %v864 = vunpack.c.h.b16 %v139
  %v865 = vunpack.c.l.b16 %v140
  %v866 = vunpack.c.h.b16 %v140
  %v867 = vunpack.c.l.b16 %v141
  %v868 = vunpack.c.h.b16 %v141
  %v869 = vunpack.c.l.b16 %v142
  %v870 = vunpack.c.h.b16 %v142
  %v871 = vunpack.c.l.b16 %v143
  %v872 = vunpack.c.h.b16 %v143
  %v873 = vunpack.c.l.b16 %v144
  %v874 = vunpack.c.h.b16 %v144
  %v875 = vunpack.c.l.b16 %v145
  %v876 = vunpack.c.h.b16 %v145
  %v877 = vunpack.c.l.b16 %v146
  %v878 = vunpack.c.h.b16 %v146
  %v879 = vunpack.c.l.b16 %v147
  %v880 = vunpack.c.h.b16 %v147
  %v881 = vunpack.c.l.b16 %v148
  %v882 = vunpack.c.h.b16 %v148
  %v883 = vunpack.c.l.b16 %v149
  %v884 = vunpack.c.h.b16 %v149
  %v885 = vunpack.c.l.b16 %v150
  %v886 = vunpack.c.h.b16 %v150
  %v887 = vunpack.c.l.b16 %v151
  %v888 = vunpack.c.h.b16 %v151
  %v889 = vunpack.c.l.b16 %v152
  %v890 = vunpack.c.h.b16 %v152
  %v891 = vunpack.c.l.b16 %v153
  %v892 = vunpack.c.h.b16 %v153
  %v893 = vunpack.c.l.b16 %v154
  %v894 = vunpack.c.h.b16 %v154
  %v895 = vunpack.c.l.b16 %v155
  %v896 = vunpack.c.h.b16 %v155
  %v897 = vunpack.c.l.b16 %v156
  %v898 = vunpack.c.h.b16 %v156
  %v899 = vunpack.c.l.b16 %v157
  %v900 = vunpack.c.h.b16 %v157
  %v901 = vunpack.c.l.b16 %v158
  %v902 = vunpack.c.h.b16 %v158
  %v903 = vunpack.c.l.b16 %v159
  %v904 = vunpack.c.h.b16 %v159
  %v905 = vunpack.c.l.b16 %v160
  %v906 = vunpack.c.h.b16 %v160
  %v907 = vunpack.c.l.b16 %v161
  %v908 = vunpack.c.h.b16 %v161
  %v909 = vunpack.c.l.b16 %v162
  %v910 = vunpack.c.h.b16 %v162
  %v911 = vunpack.c.l.b16 %v163
  %v912 = vunpack.c.h.b16 %v163
  %v913 = vunpack.c.l.b16 %v164
  %v914 = vunpack.c.h.b16 %v164
  %v915 = vunpack.c.l.b16 %v165
  %v916 = vunpack.c.h.b16 %v165
  %v917 = vunpack.c.l.b16 %v166
  %v918 = vunpack.c.h.b16 %v166
  %v919 = vunpack.c.l.b16 %v167
  %v920 = vunpack.c.h.b16 %v167
  %v921 = vunpack.c.l.b16 %v168
  %v922 = vunpack.c.h.b16 %v168
  %v923 = vunpack.c.l.b16 %v169
  %v924 = vunpack.c.h.b16 %v169
  %v925 = vunpack.c.l.b16 %v170
  %v926 = vunpack.c.h.b16 %v170
  %v927 = vunpack.c.l.b16 %v171
  %v928 = vunpack.c.h.b16 %v171
  %v929 = vunpack.c.l.b16 %v172
  %v930 = vunpack.c.h.b16 %v172
  %v931 = vunpack.c.l.b16 %v173
  %v932 = vunpack.c.h.b16 %v173
  %v933 = vunpack.c.l.b16 %v174
  %v934 = vunpack.c.h.b16 %v174
  %v935 = vunpack.c.l.b16 %v175
  %v936 = vunpack.c.h.b16 %v175
  %v937 = vunpack.c.l.b16 %v176
  %v938 = vunpack.c.h.b16 %v176
  %v939 = vunpack.c.l.b16 %v177
  %v940 = vunpack.c.h.b16 %v177
  %v941 = vunpack.c.l.b16 %v178
  %v942 = vunpack.c.h.b16 %v178
  %v943 = vunpack.c.l.b16 %v179
  %v944 = vunpack.c.h.b16 %v179
  %v945 = vunpack.c.l.b16 %v180
  %v946 = vunpack.c.h.b16 %v180
  %v947 = vunpack.c.l.b16 %v181
  %v948 = vunpack.c.h.b16 %v181
  %v949 = vunpack.c.l.b16 %v182
  %v950 = vunpack.c.h.b16 %v182
  %v951 = vunpack.c.l.b16 %v183
  %v952 = vunpack.c.h.b16 %v183
  %v953 = vunpack.c.l.b16 %v184
  %v954 = vunpack.c.h.b16 %v184
  %v955 = vunpack.c.l.b16 %v185
  %v956 = vunpack.c.h.b16 %v185
  %v957 = vunpack.c.l.b16 %v186
  %v958 = vunpack.c.h.b16 %v186
  %v959 = vunpack.c.l.b16 %v187
  %v960 = vunpack.c.h.b16 %v187
  %v961 = vunpack.c.l.b16 %v188
  %v962 = vunpack.c.h.b16 %v188
  %v963 = vunpack.c.l.b16 %v189
  %v964 = vunpack.c.h.b16 %v189
  %v965 = vunpack.c.l.b16 %v190
  %v966 = vunpack.c.h.b16 %v190
  %v967 = vunpack.c.l.b16 %v191
  %v968 = vunpack.c.h.b16 %v191
  %v969 = vunpack.c.l.b16 %v192
  %v970 = vunpack.c.h.b16 %v192
  %v971 = vunpack.c.l.b16 %v193
  %v972 = vunpack.c.h.b16 %v193
  %v973 = vunpack.c.l.b16 %v194
  %v974 = vunpack.c.h.b16 %v194
  %v975 = vunpack.c.l.b16 %v195
  %v976 = vunpack.c.h.b16 %v195
  %v977 = vunpack.c.l.b16 %v196
  %v978 = vunpack.c.h.b16 %v196
  %v979 = vunpack.c.l.b16 %v197
  %v980 = vunpack.c.h.b16 %v197
  %v981 = vunpack.c.l.b16 %v198
  %v982 = vunpack.c.h.b16 %v198
  %v983 = vunpack.c.l.b16 %v199
  %v984 = vunpack.c.h.b16 %v199
  %v985 = vunpack.c.l.b16 %v200
  %v986 = vunpack.c.h.b16 %v200
  %v987 = vunpack.c.l.b16 %v201
  %v988 = vunpack.c.h.b16 %v201
  %v989 = vunpack.c.l.b16 %v202
  %v990 = vunpack.c.h.b16 %v202
  %v991 = vunpack.c.l.b16 %v203
  %v992 = vunpack.c.h.b16 %v203
  %v993 = vunpack.c.l.b16 %v204
  %v994 = vunpack.c.h.b16 %v204
  %v995 = vunpack.c.l.b16 %v205
  %v996 = vunpack.c.h.b16 %v205
  %v997 = vunpack.c.l.b16 %v206
  %v998 = vunpack.c.h.b16 %v206
  %v999 = vunpack.c.l.b16 %v207
  %v1000 = vunpack.c.h.b16 %v207
  %v1001 = vunpack.c.l.b16 %v208
  %v1002 = vunpack.c.h.b16 %v208
  %v1003 = vunpack.c.l.b16 %v209
  %v1004 = vunpack.c.h.b16 %v209
  %v1005 = vunpack.c.l.b16 %v210
  %v1006 = vunpack.c.h.b16 %v210
  %v1007 = vunpack.c.l.b16 %v211
  %v1008 = vunpack.c.h.b16 %v211
  %v1009 = vunpack.c.l.b16 %v212
  %v1010 = vunpack.c.h.b16 %v212
  %v1011 = vunpack.c.l.b16 %v213
  %v1012 = vunpack.c.h.b16 %v213
  %v1013 = vunpack.c.l.b16 %v214
  %v1014 = vunpack.c.h.b16 %v214
  %v1015 = vunpack.c.l.b16 %v215
  %v1016 = vunpack.c.h.b16 %v215
  %v1017 = vunpack.c.l.b16 %v216
  %v1018 = vunpack.c.h.b16 %v216
  %v1019 = vunpack.c.l.b16 %v217
  %v1020 = vunpack.c.h.b16 %v217
  %v1021 = vunpack.c.l.b16 %v218
  %v1022 = vunpack.c.h.b16 %v218
  %v1023 = vunpack.c.l.b16 %v219
  %v1024 = vunpack.c.h.b16 %v219
  %v1025 = vunpack.c.l.b16 %v220
  %v1026 = vunpack.c.h.b16 %v220
  %v1027 = vunpack.c.l.b16 %v221
  %v1028 = vunpack.c.h.b16 %v221
  %v1029 = vunpack.c.l.b16 %v222
  %v1030 = vunpack.c.h.b16 %v222
  %v1031 = vunpack.c.l.b16 %v223
  %v1032 = vunpack.c.h.b16 %v223
  %v1033 = vunpack.c.l.b16 %v224
  %v1034 = vunpack.c.h.b16 %v224
  %v1035 = vunpack.c.l.b16 %v225
  %v1036 = vunpack.c.h.b16 %v225
  %v1037 = vunpack.c.l.b16 %v226
  %v1038 = vunpack.c.h.b16 %v226
  %v1039 = vunpack.c.l.b16 %v227
  %v1040 = vunpack.c.h.b16 %v227
  %v1041 = vunpack.c.l.b16 %v228
  %v1042 = vunpack.c.h.b16 %v228
  %v1043 = vunpack.c.l.b16 %v229
  %v1044 = vunpack.c.h.b16 %v229
  %v1045 = vunpack.c.l.b16 %v230
  %v1046 = vunpack.c.h.b16 %v230
  %v1047 = vunpack.c.l.b16 %v231
  %v1048 = vunpack.c.h.b16 %v231
  %v1049 = vunpack.c.l.b16 %v232
  %v1050 = vunpack.c.h.b16 %v232
  %v1051 = vunpack.c.l.b16 %v233
  %v1052 = vunpack.c.h.b16 %v233
  %v1053 = vunpack.c.l.b16 %v234
  %v1054 = vunpack.c.h.b16 %v234
  %v1055 = vunpack.c.l.b16 %v235
  %v1056 = vunpack.c.h.b16 %v235
  %v1057 = vunpack.c.l.b16 %v236
  %v1058 = vunpack.c.h.b16 %v236
  %v1059 = vunpack.c.l.b16 %v237
  %v1060 = vunpack.c.h.b16 %v237
  %v1061 = vunpack.c.l.b16 %v238
  %v1062 = vunpack.c.h.b16 %v238
  %v1063 = vunpack.c.l.b16 %v239
  %v1064 = vunpack.c.h.b16 %v239
  %v1065 = vunpack.c.l.b16 %v240
  %v1066 = vunpack.c.h.b16 %v240
  %v1067 = vunpack.c.l.b16 %v241
  %v1068 = vunpack.c.h.b16 %v241
  %v1069 = vunpack.c.l.b16 %v242
  %v1070 = vunpack.c.h.b16 %v242
  %v1071 = vunpack.c.l.b16 %v243
  %v1072 = vunpack.c.h.b16 %v243
  %v1073 = vunpack.c.l.b16 %v244
  %v1074 = vunpack.c.h.b16 %v244
  %v1075 = vunpack.c.l.b16 %v245
  %v1076 = vunpack.c.h.b16 %v245
  %v1077 = vunpack.c.l.b16 %v246
  %v1078 = vunpack.c.h.b16 %v246
  %v1079 = vunpack.c.l.b16 %v247
  %v1080 = vunpack.c.h.b16 %v247
  %v1081 = vunpack.c.l.b16 %v248
  %v1082 = vunpack.c.h.b16 %v248
  %v1083 = vunpack.c.l.b16 %v249
  %v1084 = vunpack.c.h.b16 %v249
  %v1085 = vunpack.c.l.b16 %v250
  %v1086 = vunpack.c.h.b16 %v250
  %v1087 = vunpack.c.l.b16 %v251
  %v1088 = vunpack.c.h.b16 %v251
  %v1089 = vunpack.c.l.b16 %v252
  %v1090 = vunpack.c.h.b16 %v252
  %v1091 = vunpack.c.l.b16 %v253
  %v1092 = vunpack.c.h.b16 %v253
  %v1093 = vunpack.c.l.b16 %v254
  %v1094 = vunpack.c.h.b16 %v254
  %v1095 = vunpack.c.l.b16 %v255
  %v1096 = vunpack.c.h.b16 %v255
  %v1097 = vunpack.c.l.b16 %v256
  %v1098 = vunpack.c.h.b16 %v256
  %v1099 = vunpack.c.l.b16 %v257
  %v1100 = vunpack.c.h.b16 %v257
  %v1101 = vunpack.c.l.b16 %v258
  %v1102 = vunpack.c.h.b16 %v258
  %v1103 = vunpack.c.l.b16 %v259
  %v1104 = vunpack.c.h.b16 %v259
  %v1105 = vunpack.c.l.b16 %v260
  %v1106 = vunpack.c.h.b16 %v260
  %v1107 = vunpack.c.l.b16 %v261
  %v1108 = vunpack.c.h.b16 %v261
  %v1109 = vunpack.c.l.b16 %v262
  %v1110 = vunpack.c.h.b16 %v262
  %v1111 = vunpack.c.l.b16 %v263
  %v1112 = vunpack.c.h.b16 %v263
  %v1113 = vunpack.c.l.b16 %v264
  %v1114 = vunpack.c.h.b16 %v264
  %v1115 = vunpack.c.l.b16 %v265
  %v1116 = vunpack.c.h.b16 %v265
  %v1117 = vunpack.c.l.b16 %v266
  %v1118 = vunpack.c.h.b16 %v266
  %v1119 = vunpack.c.l.b16 %v267
  %v1120 = vunpack.c.h.b16 %v267
  %v1121 = vunpack.c.l.b16 %v268
  %v1122 = vunpack.c.h.b16 %v268
  %v1123 = vunpack.c.l.b16 %v269
  %v1124 = vunpack.c.h.b16 %v269
  %v1125 = vunpack.c.l.b16 %v270
  %v1126 = vunpack.c.h.b16 %v270
  %v1127 = vunpack.c.l.b16 %v271
  %v1128 = vunpack.c.h.b16 %v271
  %v1129 = vunpack.c.l.b16 %v272
  %v1130 = vunpack.c.h.b16 %v272
  %v1131 = vunpack.c.l.b16 %v273
  %v1132 = vunpack.c.h.b16 %v273
  %v1133 = vunpack.c.l.b16 %v274
  %v1134 = vunpack.c.h.b16 %v274
  %v1135 = vunpack.c.l.b16 %v275
  %v1136 = vunpack.c.h.b16 %v275
  %v1137 = vunpack.c.l.b16 %v276
  %v1138 = vunpack.c.h.b16 %v276
  %v1139 = vunpack.c.l.b16 %v277
  %v1140 = vunpack.c.h.b16 %v277
  %v1141 = vunpack.c.l.b16 %v278
  %v1142 = vunpack.c.h.b16 %v278
  %v1143 = vunpack.c.l.b16 %v279
  %v1144 = vunpack.c.h.b16 %v279
  %v1145 = vunpack.c.l.b16 %v280
  %v1146 = vunpack.c.h.b16 %v280
  %v1147 = vunpack.c.l.b16 %v281
  %v1148 = vunpack.c.h.b16 %v281
  %v1149 = vunpack.c.l.b16 %v282
  %v1150 = vunpack.c.h.b16 %v282
  %v1151 = vunpack.c.l.b16 %v283
  %v1152 = vunpack.c.h.b16 %v283
  %v1153 = vunpack.c.l.b16 %v284
  %v1154 = vunpack.c.h.b16 %v284
  %v1155 = vunpack.c.l.b16 %v285
  %v1156 = vunpack.c.h.b16 %v285
  %v1157 = vunpack.c.l.b16 %v286
  %v1158 = vunpack.c.h.b16 %v286
  %v1159 = vunpack.c.l.b16 %v287
  %v1160 = vunpack.c.h.b16 %v287
  %v1161 = vunpack.c.l.b16 %v288
  %v1162 = vunpack.c.h.b16 %v288
  %v1163 = vunpack.c.l.b16 %v289
  %v1164 = vunpack.c.h.b16 %v289
  %v1165 = vunpack.c.l.b16 %v290
  %v1166 = vunpack.c.h.b16 %v290
  %v1167 = vunpack.c.l.b16 %v291
  %v1168 = vunpack.c.h.b16 %v291
  %v1169 = vunpack.c.l.b16 %v292
  %v1170 = vunpack.c.h.b16 %v292
  %v1171 = vunpack.c.l.b16 %v293
  %v1172 = vunpack.c.h.b16 %v293
  %v1173 = vunpack.c.l.b16 %v294
  %v1174 = vunpack.c.h.b16 %v294
  %v1175 = vunpack.c.l.b16 %v295
  %v1176 = vunpack.c.h.b16 %v295
  %v1177 = vunpack.c.l.b16 %v296
  %v1178 = vunpack.c.h.b16 %v296
  %v1179 = vunpack.c.l.b16 %v297
  %v1180 = vunpack.c.h.b16 %v297
  %v1181 = vunpack.c.l.b16 %v298
  %v1182 = vunpack.c.h.b16 %v298
  %v1183 = vunpack.c.l.b16 %v299
  %v1184 = vunpack.c.h.b16 %v299
  %v1185 = vunpack.c.l.b16 %v300
  %v1186 = vunpack.c.h.b16 %v300
  %v1187 = vunpack.c.l.b16 %v301
  %v1188 = vunpack.c.h.b16 %v301
  %v1189 = vunpack.c.l.b16 %v302
  %v1190 = vunpack.c.h.b16 %v302
  %v1191 = vunpack.c.l.b16 %v303
  %v1192 = vunpack.c.h.b16 %v303
  %v1193 = vunpack.c.l.b16 %v304
  %v1194 = vunpack.c.h.b16 %v304
  %v1195 = vunpack.c.l.b16 %v305
  %v1196 = vunpack.c.h.b16 %v305
  %v1197 = vunpack.c.l.b16 %v306
  %v1198 = vunpack.c.h.b16 %v306
  %v1199 = vunpack.c.l.b16 %v307
  %v1200 = vunpack.c.h.b16 %v307
  %v1201 = vunpack.c.l.b16 %v308
  %v1202 = vunpack.c.h.b16 %v308
  %v1203 = vunpack.c.l.b16 %v309
  %v1204 = vunpack.c.h.b16 %v309
  %v1205 = vunpack.c.l.b16 %v310
  %v1206 = vunpack.c.h.b16 %v310
  %v1207 = vpack.c.b16 %v643, %v631
  %v1208 = vpack.c.b16 %v644, %v632
  %v1209 = vpack.c.b16 %v645, %v633
  %v1210 = vpack.c.b16 %v646, %v634
  %v1211 = vpack.c.b16 %v647, %v635
  %v1212 = vpack.c.b16 %v648, %v636
  %v1213 = vpack.c.b16 %v649, %v637
  %v1214 = vpack.c.b16 %v650, %v638
  %v1215 = vpack.c.b16 %v651, %v639
  %v1216 = vpack.c.b16 %v652, %v640
  %v1217 = vpack.c.b16 %v653, %v641
  %v1218 = vpack.c.b16 %v654, %v642
  %v1219 = vpack.c.b16 %v667, %v655
  %v1220 = vpack.c.b16 %v668, %v656
  %v1221 = vpack.c.b16 %v669, %v657
  %v1222 = vpack.c.b16 %v670, %v658
  %v1223 = vpack.c.b16 %v671, %v659
  %v1224 = vpack.c.b16 %v672, %v660
  %v1225 = vpack.c.b16 %v673, %v661
  %v1226 = vpack.c.b16 %v674, %v662
  %v1227 = vpack.c.b16 %v675, %v663
  %v1228 = vpack.c.b16 %v676, %v664
  %v1229 = vpack.c.b16 %v677, %v665
  %v1230 = vpack.c.b16 %v678, %v666
  %v1231 = vpack.c.b16 %v691, %v679
  %v1232 = vpack.c.b16 %v692, %v680
  %v1233 = vpack.c.b16 %v693, %v681
  %v1234 = vpack.c.b16 %v694, %v682
  %v1235 = vpack.c.b16 %v695, %v683
  %v1236 = vpack.c.b16 %v696, %v684
  %v1237 = vpack.c.b16 %v697, %v685
  %v1238 = vpack.c.b16 %v698, %v686
  %v1239 = vpack.c.b16 %v699, %v687
  %v1240 = vpack.c.b16 %v700, %v688
  %v1241 = vpack.c.b16 %v701, %v689
  %v1242 = vpack.c.b16 %v702, %v690
  %v1243 = vpack.c.b16 %v715, %v703
  %v1244 = vpack.c.b16 %v716, %v704
  %v1245 = vpack.c.b16 %v717, %v705
  %v1246 = vpack.c.b16 %v718, %v706
  %v1247 = vpack.c.b16 %v719, %v707
  %v1248 = vpack.c.b16 %v720, %v708
  %v1249 = vpack.c.b16 %v721, %v709
  %v1250 = vpack.c.b16 %v722, %v710
  %v1251 = vpack.c.b16 %v723, %v711
  %v1252 = vpack.c.b16 %v724, %v712
  %v1253 = vpack.c.b16 %v725, %v713
  %v1254 = vpack.c.b16 %v726, %v714
  %v1255 = vpack.c.b16 %v739, %v727
  %v1256 = vpack.c.b16 %v740, %v728
  %v1257 = vpack.c.b16 %v741, %v729
  %v1258 = vpack.c.b16 %v742, %v730
  %v1259 = vpack.c.b16 %v743, %v731
  %v1260 = vpack.c.b16 %v744, %v732
  %v1261 = vpack.c.b16 %v745, %v733
  %v1262 = vpack.c.b16 %v746, %v734
  %v1263 = vpack.c.b16 %v747, %v735
  %v1264 = vpack.c.b16 %v748, %v736
  %v1265 = vpack.c.b16 %v749, %v737
  %v1266 = vpack.c.b16 %v750, %v738
  %v1267 = vpack.c.b16 %v763, %v751
  %v1268 = vpack.c.b16 %v764, %v752
  %v1269 = vpack.c.b16 %v765, %v753
  %v1270 = vpack.c.b16 %v766, %v754
  %v1271 = vpack.c.b16 %v767, %v755
  %v1272 = vpack.c.b16 %v768, %v756
  %v1273 = vpack.c.b16 %v769, %v757
  %v1274 = vpack.c.b16 %v770, %v758
  %v1275 = vpack.c.b16 %v771, %v759
  %v1276 = vpack.c.b16 %v772, %v760
  %v1277 = vpack.c.b16 %v773, %v761
  %v1278 = vpack.c.b16 %v774, %v762
  %v1279 = vpack.c.b16 %v787, %v775
  %v1280 = vpack.c.b16 %v788, %v776
  %v1281 = vpack.c.b16 %v789, %v777
  %v1282 = vpack.c.b16 %v790, %v778
  %v1283 = vpack.c.b16 %v791, %v779
  %v1284 = vpack.c.b16 %v792, %v780
  %v1285 = vpack.c.b16 %v793, %v781
  %v1286 = vpack.c.b16 %v794, %v782
  %v1287 = vpack.c.b16 %v795, %v783
  %v1288 = vpack.c.b16 %v796, %v784
  %v1289 = vpack.c.b16 %v797, %v785
  %v1290 = vpack.c.b16 %v798, %v786
  %v1291 = vpack.c.b16 %v811, %v799
  %v1292 = vpack.c.b16 %v812, %v800
  %v1293 = vpack.c.b16 %v813, %v801
  %v1294 = vpack.c.b16 %v814, %v802
  %v1295 = vpack.c.b16 %v815, %v803
  %v1296 = vpack.c.b16 %v816, %v804
  %v1297 = vpack.c.b16 %v817, %v805
  %v1298 = vpack.c.b16 %v818, %v806
  %v1299 = vpack.c.b16 %v819, %v807
  %v1300 = vpack.c.b16 %v820, %v808
  %v1301 = vpack.c.b16 %v821, %v809
  %v1302 = vpack.c.b16 %v822, %v810
  %v1303 = vpack.c.b16 %v835, %v823
  %v1304 = vpack.c.b16 %v836, %v824
  %v1305 = vpack.c.b16 %v837, %v825
  %v1306 = vpack.c.b16 %v838, %v826
  %v1307 = vpack.c.b16 %v839, %v827
  %v1308 = vpack.c.b16 %v840, %v828
  %v1309 = vpack.c.b16 %v841, %v829
  %v1310 = vpack.c.b16 %v842, %v830
  %v1311 = vpack.c.b16 %v843, %v831
  %v1312 = vpack.c.b16 %v844, %v832
  %v1313 = vpack.c.b16 %v845, %v833
  %v1314 = vpack.c.b16 %v846, %v834
  %v1315 = vpack.c.b16 %v859, %v847
  %v1316 = vpack.c.b16 %v860, %v848
  %v1317 = vpack.c.b16 %v861, %v849
  %v1318 = vpack.c.b16 %v862, %v850
  %v1319 = vpack.c.b16 %v863, %v851
  %v1320 = vpack.c.b16 %v864, %v852
  %v1321 = vpack.c.b16 %v865, %v853
  %v1322 = vpack.c.b16 %v866, %v854
  %v1323 = vpack.c.b16 %v867, %v855
  %v1324 = vpack.c.b16 %v868, %v856
  %v1325 = vpack.c.b16 %v869, %v857
  %v1326 = vpack.c.b16 %v870, %v858
  %v1327 = vpack.c.b16 %v883, %v871
  %v1328 = vpack.c.b16 %v884, %v872
  %v1329 = vpack.c.b16 %v885, %v873
  %v1330 = vpack.c.b16 %v886, %v874
  %v1331 = vpack.c.b16 %v887, %v875
  %v1332 = vpack.c.b16 %v888, %v876
  %v1333 = vpack.c.b16 %v889, %v877
  %v1334 = vpack.c.b16 %v890, %v878
  %v1335 = vpack.c.b16 %v891, %v879
  %v1336 = vpack.c.b16 %v892, %v880
  %v1337 = vpack.c.b16 %v893, %v881
  %v1338 = vpack.c.b16 %v894, %v882
  %v1339 = vpack.c.b16 %v907, %v895
  %v1340 = vpack.c.b16 %v908, %v896
  %v1341 = vpack.c.b16 %v909, %v897
  %v1342 = vpack.c.b16 %v910, %v898
  %v1343 = vpack.c.b16 %v911, %v899
  %v1344 = vpack.c.b16 %v912, %v900
  %v1345 = vpack.c.b16 %v913, %v901
  %v1346 = vpack.c.b16 %v914, %v902
  %v1347 = vpack.c.b16 %v915, %v903
  %v1348 = vpack.c.b16 %v916, %v904
  %v1349 = vpack.c.b16 %v917, %v905
  %v1350 = vpack.c.b16 %v918, %v906
  %v1351 = vpack.c.b16 %v931, %v919
  %v1352 = vpack.c.b16 %v932, %v920
  %v1353 = vpack.c.b16 %v933, %v921
  %v1354 = vpack.c.b16 %v934, %v922
  %v1355 = vpack.c.b16 %v935, %v923
  %v1356 = vpack.c.b16 %v936, %v924
  %v1357 = vpack.c.b16 %v937, %v925
  %v1358 = vpack.c.b16 %v938, %v926
  %v1359 = vpack.c.b16 %v939, %v927
  %v1360 = vpack.c.b16 %v940, %v928
  %v1361 = vpack.c.b16 %v941, %v929
  %v1362 = vpack.c.b16 %v942, %v930
  %v1363 = vpack.c.b16 %v955, %v943
  %v1364 = vpack.c.b16 %v956, %v944
  %v1365 = vpack.c.b16 %v957, %v945
  %v1366 = vpack.c.b16 %v958, %v946
  %v1367 = vpack.c.b16 %v959, %v947
  %v1368 = vpack.c.b16 %v960, %v948
  %v1369 = vpack.c.b16 %v961, %v949
  %v1370 = vpack.c.b16 %v962, %v950
  %v1371 = vpack.c.b16 %v963, %v951
  %v1372 = vpack.c.b16 %v964, %v952
  %v1373 = vpack.c.b16 %v965, %v953
  %v1374 = vpack.c.b16 %v966, %v954
  %v1375 = vpack.c.b16 %v979, %v967
  %v1376 = vpack.c.b16 %v980, %v968
  %v1377 = vpack.c.b16 %v981, %v969
  %v1378 = vpack.c.b16 %v982, %v970
  %v1379 = vpack.c.b16 %v983, %v971
  %v1380 = vpack.c.b16 %v984, %v972
  %v1381 = vpack.c.b16 %v985, %v973
  %v1382 = vpack.c.b16 %v986, %v974
  %v1383 = vpack.c.b16 %v987, %v975
  %v1384 = vpack.c.b16 %v988, %v976
  %v1385 = vpack.c.b16 %v989, %v977
  %v1386 = vpack.c.b16 %v990, %v978
  %v1387 = vpack.c.b16 %v1003, %v991
  %v1388 = vpack.c.b16 %v1004, %v992
  %v1389 = vpack.c.b16 %v1005, %v993
  %v1390 = vpack.c.b16 %v1006, %v994
  %v1391 = vpack.c.b16 %v1007, %v995
  %v1392 = vpack.c.b16 %v1008, %v996
  %v1393 = vpack.c.b16 %v1009, %v997
  %v1394 = vpack.c.b16 %v1010, %v998
  %v1395 = vpack.c.b16 %v1011, %v999
  %v1396 = vpack.c.b16 %v1012, %v1000
  %v1397 = vpack.c.b16 %v1013, %v1001
  %v1398 = vpack.c.b16 %v1014, %v1002
  %v1399 = vpack.c.b16 %v1027, %v1015
  %v1400 = vpack.c.b16 %v1028, %v1016
  %v1401 = vpack.c.b16 %v1029, %v1017
  %v1402 = vpack.c.b16 %v1030, %v1018
  %v1403 = vpack.c.b16 %v1031, %v1019
  %v1404 = vpack.c.b16 %v1032, %v1020
  %v1405 = vpack.c.b16 %v1033, %v1021
  %v1406 = vpack.c.b16 %v1034, %v1022
  %v1407 = vpack.c.b16 %v1035, %v1023
  %v1408 = vpack.c.b16 %v1036, %v1024
  %v1409 = vpack.c.b16 %v1037, %v1025
  %v1410 = vpack.c.b16 %v1038, %v1026
  %v1411 = vpack.c.b16 %v1051, %v1039
  %v1412 = vpack.c.b16 %v1052, %v1040
  %v1413 = vpack.c.b16 %v1053, %v1041
  %v1414 = vpack.c.b16 %v1054, %v1042
  %v1415 = vpack.c.b16 %v1055, %v1043
  %v1416 = vpack.c.b16 %v1056, %v1044
  %v1417 = vpack.c.b16 %v1057, %v1045
  %v1418 = vpack.c.b16 %v1058, %v1046
  %v1419 = vpack.c.b16 %v1059, %v1047
  %v1420 = vpack.c.b16 %v1060, %v1048
  %v1421 = vpack.c.b16 %v1061, %v1049
  %v1422 = vpack.c.b16 %v1062, %v1050
  %v1423 = vpack.c.b16 %v1075, %v1063
  %v1424 = vpack.c.b16 %v1076, %v1064
  %v1425 = vpack.c.b16 %v1077, %v1065
  %v1426 = vpack.c.b16 %v1078, %v1066
  %v1427 = vpack.c.b16 %v1079, %v1067
  %v1428 = vpack.c.b16 %v1080, %v1068
  %v1429 = vpack.c.b16 %v1081, %v1069
  %v1430 = vpack.c.b16 %v1082, %v1070
  %v1431 = vpack.c.b16 %v1083, %v1071
  %v1432 = vpack.c.b16 %v1084, %v1072
  %v1433 = vpack.c.b16 %v1085, %v1073
  %v1434 = vpack.c.b16 %v1086, %v1074
  %v1435 = vpack.c.b16 %v1099, %v1087
  %v1436 = vpack.c.b16 %v1100, %v1088
  %v1437 = vpack.c.b16 %v1101, %v1089
  %v1438 = vpack.c.b16 %v1102, %v1090
  %v1439 = vpack.c.b16 %v1103, %v1091
  %v1440 = vpack.c.b16 %v1104, %v1092
  %v1441 = vpack.c.b16 %v1105, %v1093
  %v1442 = vpack.c.b16 %v1106, %v1094
  %v1443 = vpack.c.b16 %v1107, %v1095
  %v1444 = vpack.c.b16 %v1108, %v1096
  %v1445 = vpack.c.b16 %v1109, %v1097
  %v1446 = vpack.c.b16 %v1110, %v1098
  %v1447 = vpack.c.b16 %v1123, %v1111
  %v1448 = vpack.c.b16 %v1124, %v1112
  %v1449 = vpack.c.b16 %v1125, %v1113
  %v1450 = vpack.c.b16 %v1126, %v1114
  %v1451 = vpack.c.b16 %v1127, %v1115
  %v1452 = vpack.c.b16 %v1128, %v1116
  %v1453 = vpack.c.b16 %v1129, %v1117
  %v1454 = vpack.c.b16 %v1130, %v1118
  %v1455 = vpack.c.b16 %v1131, %v1119
  %v1456 = vpack.c.b16 %v1132, %v1120
  %v1457 = vpack.c.b16 %v1133, %v1121
  %v1458 = vpack.c.b16 %v1134, %v1122
  %v1459 = vpack.c.b16 %v1147, %v1135
  %v1460 = vpack.c.b16 %v1148, %v1136
  %v1461 = vpack.c.b16 %v1149, %v1137
  %v1462 = vpack.c.b16 %v1150, %v1138
  %v1463 = vpack.c.b16 %v1151, %v1139
  %v1464 = vpack.c.b16 %v1152, %v1140
  %v1465 = vpack.c.b16 %v1153, %v1141
  %v1466 = vpack.c.b16 %v1154, %v1142
  %v1467 = vpack.c.b16 %v1155, %v1143
  %v1468 = vpack.c.b16 %v1156, %v1144
  %v1469 = vpack.c.b16 %v1157, %v1145
  %v1470 = vpack.c.b16 %v1158, %v1146
  %v1471 = vpack.c.b16 %v1171, %v1159
  %v1472 = vpack.c.b16 %v1172, %v1160
  %v1473 = vpack.c.b16 %v1173, %v1161
  %v1474 = vpack.c.b16 %v1174, %v1162
  %v1475 = vpack.c.b16 %v1175, %v1163
  %v1476 = vpack.c.b16 %v1176, %v1164
  %v1477 = vpack.c.b16 %v1177, %v1165
  %v1478 = vpack.c.b16 %v1178, %v1166
  %v1479 = vpack.c.b16 %v1179, %v1167
  %v1480 = vpack.c.b16 %v1180, %v1168
  %v1481 = vpack.c.b16 %v1181, %v1169
  %v1482 = vpack.c.b16 %v1182, %v1170
  %v1483 = vpack.c.b16 %v1195, %v1183
  %v1484 = vpack.c.b16 %v1196, %v1184
  %v1485 = vpack.c.b16 %v1197, %v1185
  %v1486 = vpack.c.b16 %v1198, %v1186
  %v1487 = vpack.c.b16 %v1199, %v1187
  %v1488 = vpack.c.b16 %v1200, %v1188
  %v1489 = vpack.c.b16 %v1201, %v1189
  %v1490 = vpack.c.b16 %v1202, %v1190
  %v1491 = vpack.c.b16 %v1203, %v1191
  %v1492 = vpack.c.b16 %v1204, %v1192
  %v1493 = vpack.c.b16 %v1205, %v1193
  %v1494 = vpack.c.b16 %v1206, %v1194
  %1783 = vmatprep.subr.bf16.mxu0 %v1208
  %1784 = vmatpush1.bf16.msra.mxu0 %v1207
  %1785 = vmatprep.subr.bf16.mxu0 %v1220
  %1786 = vmatpush1.bf16.msra.mxu0 %v1219
  %1787 = vmatprep.subr.bf16.mxu0 %v1232
  %1788 = vmatpush1.bf16.msra.mxu0 %v1231
  %1789 = vmatprep.subr.bf16.mxu0 %v1244
  %1790 = vmatpush1.bf16.msra.mxu0 %v1243
  %1791 = vmatprep.subr.bf16.mxu0 %v1256
  %1792 = vmatpush1.bf16.msra.mxu0 %v1255
  %1793 = vmatprep.subr.bf16.mxu0 %v1268
  %1794 = vmatpush1.bf16.msra.mxu0 %v1267
  %1795 = vmatprep.subr.bf16.mxu0 %v1280
  %1796 = vmatpush1.bf16.msra.mxu0 %v1279
  %1797 = vmatprep.subr.bf16.mxu0 %v1292
  %1798 = vmatpush1.bf16.msra.mxu0 %v1291
  %1799 = vmatprep.subr.bf16.mxu0 %v1304
  %1800 = vmatpush1.bf16.msra.mxu0 %v1303
  %1801 = vmatprep.subr.bf16.mxu0 %v1316
  %1802 = vmatpush1.bf16.msra.mxu0 %v1315
  %1803 = vmatprep.subr.bf16.mxu0 %v1328
  %1804 = vmatpush1.bf16.msra.mxu0 %v1327
  %1805 = vmatprep.subr.bf16.mxu0 %v1340
  %1806 = vmatpush1.bf16.msra.mxu0 %v1339
  %1807 = vmatprep.subr.bf16.mxu0 %v1352
  %1808 = vmatpush1.bf16.msra.mxu0 %v1351
  %1809 = vmatprep.subr.bf16.mxu0 %v1364
  %1810 = vmatpush1.bf16.msra.mxu0 %v1363
  %1811 = vmatprep.subr.bf16.mxu0 %v1376
  %1812 = vmatpush1.bf16.msra.mxu0 %v1375
  %1813 = vmatprep.subr.bf16.mxu0 %v1388
  %1814 = vmatpush1.bf16.msra.mxu0 %v1387
  %1815 = vmatprep.mubr.bf16.mxu0 %v332
  %1816 = vmatmul.mubr.bf16.gmra.mrb[0].mxu0 %v331
  %v1817 = vpop.f32.mrb[0].mxu0
  %v1818 = vadd.f32 0.0, %v1817
  %v1819 = vpop.f32.mrb[0].mxu0
  %v1820 = vadd.f32 0.0, %v1819
  %v1821 = vpop.f32.mrb[0].mxu0
  %v1822 = vadd.f32 0.0, %v1821
  %v1823 = vpop.f32.mrb[0].mxu0
  %v1824 = vadd.f32 0.0, %v1823
  %1825 = vmatprep.mubr.bf16.mxu0 %v335
  %1826 = vmatmul.mubr.bf16.gmra.mrb[0].mxu0 %v334
  %v1827 = vpop.f32.mrb[0].mxu0
  %v1828 = vadd.f32 0.0, %v1827
  %v1829 = vpop.f32.mrb[0].mxu0
  %v1830 = vadd.f32 0.0, %v1829
  %v1831 = vpop.f32.mrb[0].mxu0
  %v1832 = vadd.f32 0.0, %v1831
  %v1833 = vpop.f32.mrb[0].mxu0
  %v1834 = vadd.f32 0.0, %v1833
  %1835 = vdwg.mxu0
  %1836 = vmatprep.subr.bf16.mxu0 %v1400
  %1837 = vmatpush1.bf16.msra.mxu0 %v1399
  %1838 = vmatprep.subr.bf16.mxu0 %v1412
  %1839 = vmatpush1.bf16.msra.mxu0 %v1411
  %1840 = vmatprep.subr.bf16.mxu0 %v1424
  %1841 = vmatpush1.bf16.msra.mxu0 %v1423
  %1842 = vmatprep.subr.bf16.mxu0 %v1436
  %1843 = vmatpush1.bf16.msra.mxu0 %v1435
  %1844 = vmatprep.subr.bf16.mxu0 %v1448
  %1845 = vmatpush1.bf16.msra.mxu0 %v1447
  %1846 = vmatprep.subr.bf16.mxu0 %v1460
  %1847 = vmatpush1.bf16.msra.mxu0 %v1459
  %1848 = vmatprep.subr.bf16.mxu0 %v1472
  %1849 = vmatpush1.bf16.msra.mxu0 %v1471
  %1850 = vmatprep.subr.bf16.mxu0 %v1484
  %1851 = vmatpush1.bf16.msra.mxu0 %v1483
  %1852 = vmatprep.subr.bf16.mxu0 0
  %1853 = vmatpush1.bf16.msra.mxu0 0
  %1854 = vmatprep.subr.bf16.mxu0 0
  %1855 = vmatpush1.bf16.msra.mxu0 0
  %1856 = vmatprep.subr.bf16.mxu0 0
  %1857 = vmatpush1.bf16.msra.mxu0 0
  %1858 = vmatprep.subr.bf16.mxu0 0
  %1859 = vmatpush1.bf16.msra.mxu0 0
  %1860 = vmatprep.subr.bf16.mxu0 0
  %1861 = vmatpush1.bf16.msra.mxu0 0
  %1862 = vmatprep.subr.bf16.mxu0 0
  %1863 = vmatpush1.bf16.msra.mxu0 0
  %1864 = vmatprep.subr.bf16.mxu0 0
  %1865 = vmatpush1.bf16.msra.mxu0 0
  %1866 = vmatprep.subr.bf16.mxu0 0
  %1867 = vmatpush1.bf16.msra.mxu0 0
  %1868 = vmatprep.mubr.bf16.mxu0 0
  %1869 = vmatmul.mubr.bf16.gmra.mrb[0].mxu0 %v333
  %v1870 = vpop.f32.mrb[0].mxu0
  %v1871 = vadd.f32 %v1818, %v1870
  %v1872 = vpop.f32.mrb[0].mxu0
  %v1873 = vadd.f32 %v1820, %v1872
  %v1874 = vpop.f32.mrb[0].mxu0
  %v1875 = vadd.f32 %v1822, %v1874
  %v1876 = vpop.f32.mrb[0].mxu0
  %v1877 = vadd.f32 %v1824, %v1876
  %1878 = vmatprep.mubr.bf16.mxu0 0
  %1879 = vmatmul.mubr.bf16.gmra.mrb[0].mxu0 %v336
  %v1880 = vpop.f32.mrb[0].mxu0
  %v1881 = vadd.f32 %v1828, %v1880
  %v1882 = vpop.f32.mrb[0].mxu0
  %v1883 = vadd.f32 %v1830, %v1882
  %v1884 = vpop.f32.mrb[0].mxu0
  %v1885 = vadd.f32 %v1832, %v1884
  %v1886 = vpop.f32.mrb[0].mxu0
  %v1887 = vadd.f32 %v1834, %v1886
  %1888 = vdwg.mxu0
  %1889 = vmatprep.subr.bf16.mxu0 %v1210
  %1890 = vmatpush1.bf16.msra.mxu0 %v1209
  %1891 = vmatprep.subr.bf16.mxu0 %v1222
  %1892 = vmatpush1.bf16.msra.mxu0 %v1221
  %1893 = vmatprep.subr.bf16.mxu0 %v1234
  %1894 = vmatpush1.bf16.msra.mxu0 %v1233
  %1895 = vmatprep.subr.bf16.mxu0 %v1246
  %1896 = vmatpush1.bf16.msra.mxu0 %v1245
  %1897 = vmatprep.subr.bf16.mxu0 %v1258
  %1898 = vmatpush1.bf16.msra.mxu0 %v1257
  %1899 = vmatprep.subr.bf16.mxu0 %v1270
  %1900 = vmatpush1.bf16.msra.mxu0 %v1269
  %1901 = vmatprep.subr.bf16.mxu0 %v1282
  %1902 = vmatpush1.bf16.msra.mxu0 %v1281
  %1903 = vmatprep.subr.bf16.mxu0 %v1294
  %1904 = vmatpush1.bf16.msra.mxu0 %v1293
  %1905 = vmatprep.subr.bf16.mxu0 %v1306
  %1906 = vmatpush1.bf16.msra.mxu0 %v1305
  %1907 = vmatprep.subr.bf16.mxu0 %v1318
  %1908 = vmatpush1.bf16.msra.mxu0 %v1317
  %1909 = vmatprep.subr.bf16.mxu0 %v1330
  %1910 = vmatpush1.bf16.msra.mxu0 %v1329
  %1911 = vmatprep.subr.bf16.mxu0 %v1342
  %1912 = vmatpush1.bf16.msra.mxu0 %v1341
  %1913 = vmatprep.subr.bf16.mxu0 %v1354
  %1914 = vmatpush1.bf16.msra.mxu0 %v1353
  %1915 = vmatprep.subr.bf16.mxu0 %v1366
  %1916 = vmatpush1.bf16.msra.mxu0 %v1365
  %1917 = vmatprep.subr.bf16.mxu0 %v1378
  %1918 = vmatpush1.bf16.msra.mxu0 %v1377
  %1919 = vmatprep.subr.bf16.mxu0 %v1390
  %1920 = vmatpush1.bf16.msra.mxu0 %v1389
  %1921 = vmatprep.mubr.bf16.mxu0 %v332
  %1922 = vmatmul.mubr.bf16.gmra.mrb[0].mxu0 %v331
  %v1923 = vpop.f32.mrb[0].mxu0
  %v1924 = vadd.f32 0.0, %v1923
  %v1925 = vpop.f32.mrb[0].mxu0
  %v1926 = vadd.f32 0.0, %v1925
  %v1927 = vpop.f32.mrb[0].mxu0
  %v1928 = vadd.f32 0.0, %v1927
  %v1929 = vpop.f32.mrb[0].mxu0
  %v1930 = vadd.f32 0.0, %v1929
  %1931 = vmatprep.mubr.bf16.mxu0 %v335
  %1932 = vmatmul.mubr.bf16.gmra.mrb[0].mxu0 %v334
  %v1933 = vpop.f32.mrb[0].mxu0
  %v1934 = vadd.f32 0.0, %v1933
  %v1935 = vpop.f32.mrb[0].mxu0
  %v1936 = vadd.f32 0.0, %v1935
  %v1937 = vpop.f32.mrb[0].mxu0
  %v1938 = vadd.f32 0.0, %v1937
  %v1939 = vpop.f32.mrb[0].mxu0
  %v1940 = vadd.f32 0.0, %v1939
  %1941 = vdwg.mxu0
  %1942 = vmatprep.subr.bf16.mxu0 %v1402
  %1943 = vmatpush1.bf16.msra.mxu0 %v1401
  %1944 = vmatprep.subr.bf16.mxu0 %v1414
  %1945 = vmatpush1.bf16.msra.mxu0 %v1413
  %1946 = vmatprep.subr.bf16.mxu0 %v1426
  %1947 = vmatpush1.bf16.msra.mxu0 %v1425
  %1948 = vmatprep.subr.bf16.mxu0 %v1438
  %1949 = vmatpush1.bf16.msra.mxu0 %v1437
  %1950 = vmatprep.subr.bf16.mxu0 %v1450
  %1951 = vmatpush1.bf16.msra.mxu0 %v1449
  %1952 = vmatprep.subr.bf16.mxu0 %v1462
  %1953 = vmatpush1.bf16.msra.mxu0 %v1461
  %1954 = vmatprep.subr.bf16.mxu0 %v1474
  %1955 = vmatpush1.bf16.msra.mxu0 %v1473
  %1956 = vmatprep.subr.bf16.mxu0 %v1486
  %1957 = vmatpush1.bf16.msra.mxu0 %v1485
  %1958 = vmatprep.subr.bf16.mxu0 0
  %1959 = vmatpush1.bf16.msra.mxu0 0
  %1960 = vmatprep.subr.bf16.mxu0 0
  %1961 = vmatpush1.bf16.msra.mxu0 0
  %1962 = vmatprep.subr.bf16.mxu0 0
  %1963 = vmatpush1.bf16.msra.mxu0 0
  %1964 = vmatprep.subr.bf16.mxu0 0
  %1965 = vmatpush1.bf16.msra.mxu0 0
  %1966 = vmatprep.subr.bf16.mxu0 0
  %1967 = vmatpush1.bf16.msra.mxu0 0
  %1968 = vmatprep.subr.bf16.mxu0 0
  %1969 = vmatpush1.bf16.msra.mxu0 0
  %1970 = vmatprep.subr.bf16.mxu0 0
  %1971 = vmatpush1.bf16.msra.mxu0 0
  %1972 = vmatprep.subr.bf16.mxu0 0
  %1973 = vmatpush1.bf16.msra.mxu0 0
  %1974 = vmatprep.mubr.bf16.mxu0 0
  %1975 = vmatmul.mubr.bf16.gmra.mrb[0].mxu0 %v333
  %v1976 = vpop.f32.mrb[0].mxu0
  %v1977 = vadd.f32 %v1924, %v1976
  %v1978 = vpop.f32.mrb[0].mxu0
  %v1979 = vadd.f32 %v1926, %v1978
  %v1980 = vpop.f32.mrb[0].mxu0
  %v1981 = vadd.f32 %v1928, %v1980
  %v1982 = vpop.f32.mrb[0].mxu0
  %v1983 = vadd.f32 %v1930, %v1982
  %1984 = vmatprep.mubr.bf16.mxu0 0
  %1985 = vmatmul.mubr.bf16.gmra.mrb[0].mxu0 %v336
  %v1986 = vpop.f32.mrb[0].mxu0
  %v1987 = vadd.f32 %v1934, %v1986
  %v1988 = vpop.f32.mrb[0].mxu0
  %v1989 = vadd.f32 %v1936, %v1988
  %v1990 = vpop.f32.mrb[0].mxu0
  %v1991 = vadd.f32 %v1938, %v1990
  %v1992 = vpop.f32.mrb[0].mxu0
  %v1993 = vadd.f32 %v1940, %v1992
  %1994 = vdwg.mxu0
  %1995 = vmatprep.subr.bf16.mxu0 %v1212
  %1996 = vmatpush1.bf16.msra.mxu0 %v1211
  %1997 = vmatprep.subr.bf16.mxu0 %v1224
  %1998 = vmatpush1.bf16.msra.mxu0 %v1223
  %1999 = vmatprep.subr.bf16.mxu0 %v1236
  %2000 = vmatpush1.bf16.msra.mxu0 %v1235
  %2001 = vmatprep.subr.bf16.mxu0 %v1248
  %2002 = vmatpush1.bf16.msra.mxu0 %v1247
  %2003 = vmatprep.subr.bf16.mxu0 %v1260
  %2004 = vmatpush1.bf16.msra.mxu0 %v1259
  %2005 = vmatprep.subr.bf16.mxu0 %v1272
  %2006 = vmatpush1.bf16.msra.mxu0 %v1271
  %2007 = vmatprep.subr.bf16.mxu0 %v1284
  %2008 = vmatpush1.bf16.msra.mxu0 %v1283
  %2009 = vmatprep.subr.bf16.mxu0 %v1296
  %2010 = vmatpush1.bf16.msra.mxu0 %v1295
  %2011 = vmatprep.subr.bf16.mxu0 %v1308
  %2012 = vmatpush1.bf16.msra.mxu0 %v1307
  %2013 = vmatprep.subr.bf16.mxu0 %v1320
  %2014 = vmatpush1.bf16.msra.mxu0 %v1319
  %2015 = vmatprep.subr.bf16.mxu0 %v1332
  %2016 = vmatpush1.bf16.msra.mxu0 %v1331
  %2017 = vmatprep.subr.bf16.mxu0 %v1344
  %2018 = vmatpush1.bf16.msra.mxu0 %v1343
  %2019 = vmatprep.subr.bf16.mxu0 %v1356
  %2020 = vmatpush1.bf16.msra.mxu0 %v1355
  %2021 = vmatprep.subr.bf16.mxu0 %v1368
  %2022 = vmatpush1.bf16.msra.mxu0 %v1367
  %2023 = vmatprep.subr.bf16.mxu0 %v1380
  %2024 = vmatpush1.bf16.msra.mxu0 %v1379
  %2025 = vmatprep.subr.bf16.mxu0 %v1392
  %2026 = vmatpush1.bf16.msra.mxu0 %v1391
  %2027 = vmatprep.mubr.bf16.mxu0 %v332
  %2028 = vmatmul.mubr.bf16.gmra.mrb[0].mxu0 %v331
  %v2029 = vpop.f32.mrb[0].mxu0
  %v2030 = vadd.f32 0.0, %v2029
  %v2031 = vpop.f32.mrb[0].mxu0
  %v2032 = vadd.f32 0.0, %v2031
  %v2033 = vpop.f32.mrb[0].mxu0
  %v2034 = vadd.f32 0.0, %v2033
  %v2035 = vpop.f32.mrb[0].mxu0
  %v2036 = vadd.f32 0.0, %v2035
  %2037 = vmatprep.mubr.bf16.mxu0 %v335
  %2038 = vmatmul.mubr.bf16.gmra.mrb[0].mxu0 %v334
  %v2039 = vpop.f32.mrb[0].mxu0
  %v2040 = vadd.f32 0.0, %v2039
  %v2041 = vpop.f32.mrb[0].mxu0
  %v2042 = vadd.f32 0.0, %v2041
  %v2043 = vpop.f32.mrb[0].mxu0
  %v2044 = vadd.f32 0.0, %v2043
  %v2045 = vpop.f32.mrb[0].mxu0
  %v2046 = vadd.f32 0.0, %v2045
  %2047 = vdwg.mxu0
  %2048 = vmatprep.subr.bf16.mxu0 %v1404
  %2049 = vmatpush1.bf16.msra.mxu0 %v1403
  %2050 = vmatprep.subr.bf16.mxu0 %v1416
  %2051 = vmatpush1.bf16.msra.mxu0 %v1415
  %2052 = vmatprep.subr.bf16.mxu0 %v1428
  %2053 = vmatpush1.bf16.msra.mxu0 %v1427
  %2054 = vmatprep.subr.bf16.mxu0 %v1440
  %2055 = vmatpush1.bf16.msra.mxu0 %v1439
  %2056 = vmatprep.subr.bf16.mxu0 %v1452
  %2057 = vmatpush1.bf16.msra.mxu0 %v1451
  %2058 = vmatprep.subr.bf16.mxu0 %v1464
  %2059 = vmatpush1.bf16.msra.mxu0 %v1463
  %2060 = vmatprep.subr.bf16.mxu0 %v1476
  %2061 = vmatpush1.bf16.msra.mxu0 %v1475
  %2062 = vmatprep.subr.bf16.mxu0 %v1488
  %2063 = vmatpush1.bf16.msra.mxu0 %v1487
  %2064 = vmatprep.subr.bf16.mxu0 0
  %2065 = vmatpush1.bf16.msra.mxu0 0
  %2066 = vmatprep.subr.bf16.mxu0 0
  %2067 = vmatpush1.bf16.msra.mxu0 0
  %2068 = vmatprep.subr.bf16.mxu0 0
  %2069 = vmatpush1.bf16.msra.mxu0 0
  %2070 = vmatprep.subr.bf16.mxu0 0
  %2071 = vmatpush1.bf16.msra.mxu0 0
  %2072 = vmatprep.subr.bf16.mxu0 0
  %2073 = vmatpush1.bf16.msra.mxu0 0
  %2074 = vmatprep.subr.bf16.mxu0 0
  %2075 = vmatpush1.bf16.msra.mxu0 0
  %2076 = vmatprep.subr.bf16.mxu0 0
  %2077 = vmatpush1.bf16.msra.mxu0 0
  %2078 = vmatprep.subr.bf16.mxu0 0
  %2079 = vmatpush1.bf16.msra.mxu0 0
  %2080 = vmatprep.mubr.bf16.mxu0 0
  %2081 = vmatmul.mubr.bf16.gmra.mrb[0].mxu0 %v333
  %v2082 = vpop.f32.mrb[0].mxu0
  %v2083 = vadd.f32 %v2030, %v2082
  %v2084 = vpop.f32.mrb[0].mxu0
  %v2085 = vadd.f32 %v2032, %v2084
  %v2086 = vpop.f32.mrb[0].mxu0
  %v2087 = vadd.f32 %v2034, %v2086
  %v2088 = vpop.f32.mrb[0].mxu0
  %v2089 = vadd.f32 %v2036, %v2088
  %2090 = vmatprep.mubr.bf16.mxu0 0
  %2091 = vmatmul.mubr.bf16.gmra.mrb[0].mxu0 %v336
  %v2092 = vpop.f32.mrb[0].mxu0
  %v2093 = vadd.f32 %v2040, %v2092
  %v2094 = vpop.f32.mrb[0].mxu0
  %v2095 = vadd.f32 %v2042, %v2094
  %v2096 = vpop.f32.mrb[0].mxu0
  %v2097 = vadd.f32 %v2044, %v2096
  %v2098 = vpop.f32.mrb[0].mxu0
  %v2099 = vadd.f32 %v2046, %v2098
  %2100 = vdwg.mxu0
  %2101 = vmatprep.subr.bf16.mxu0 %v1214
  %2102 = vmatpush1.bf16.msra.mxu0 %v1213
  %2103 = vmatprep.subr.bf16.mxu0 %v1226
  %2104 = vmatpush1.bf16.msra.mxu0 %v1225
  %2105 = vmatprep.subr.bf16.mxu0 %v1238
  %2106 = vmatpush1.bf16.msra.mxu0 %v1237
  %2107 = vmatprep.subr.bf16.mxu0 %v1250
  %2108 = vmatpush1.bf16.msra.mxu0 %v1249
  %2109 = vmatprep.subr.bf16.mxu0 %v1262
  %2110 = vmatpush1.bf16.msra.mxu0 %v1261
  %2111 = vmatprep.subr.bf16.mxu0 %v1274
  %2112 = vmatpush1.bf16.msra.mxu0 %v1273
  %2113 = vmatprep.subr.bf16.mxu0 %v1286
  %2114 = vmatpush1.bf16.msra.mxu0 %v1285
  %2115 = vmatprep.subr.bf16.mxu0 %v1298
  %2116 = vmatpush1.bf16.msra.mxu0 %v1297
  %2117 = vmatprep.subr.bf16.mxu0 %v1310
  %2118 = vmatpush1.bf16.msra.mxu0 %v1309
  %2119 = vmatprep.subr.bf16.mxu0 %v1322
  %2120 = vmatpush1.bf16.msra.mxu0 %v1321
  %2121 = vmatprep.subr.bf16.mxu0 %v1334
  %2122 = vmatpush1.bf16.msra.mxu0 %v1333
  %2123 = vmatprep.subr.bf16.mxu0 %v1346
  %2124 = vmatpush1.bf16.msra.mxu0 %v1345
  %2125 = vmatprep.subr.bf16.mxu0 %v1358
  %2126 = vmatpush1.bf16.msra.mxu0 %v1357
  %2127 = vmatprep.subr.bf16.mxu0 %v1370
  %2128 = vmatpush1.bf16.msra.mxu0 %v1369
  %2129 = vmatprep.subr.bf16.mxu0 %v1382
  %2130 = vmatpush1.bf16.msra.mxu0 %v1381
  %2131 = vmatprep.subr.bf16.mxu0 %v1394
  %2132 = vmatpush1.bf16.msra.mxu0 %v1393
  %2133 = vmatprep.mubr.bf16.mxu0 %v332
  %2134 = vmatmul.mubr.bf16.gmra.mrb[0].mxu0 %v331
  %v2135 = vpop.f32.mrb[0].mxu0
  %v2136 = vadd.f32 0.0, %v2135
  %v2137 = vpop.f32.mrb[0].mxu0
  %v2138 = vadd.f32 0.0, %v2137
  %v2139 = vpop.f32.mrb[0].mxu0
  %v2140 = vadd.f32 0.0, %v2139
  %v2141 = vpop.f32.mrb[0].mxu0
  %v2142 = vadd.f32 0.0, %v2141
  %2143 = vmatprep.mubr.bf16.mxu0 %v335
  %2144 = vmatmul.mubr.bf16.gmra.mrb[0].mxu0 %v334
  %v2145 = vpop.f32.mrb[0].mxu0
  %v2146 = vadd.f32 0.0, %v2145
  %v2147 = vpop.f32.mrb[0].mxu0
  %v2148 = vadd.f32 0.0, %v2147
  %v2149 = vpop.f32.mrb[0].mxu0
  %v2150 = vadd.f32 0.0, %v2149
  %v2151 = vpop.f32.mrb[0].mxu0
  %v2152 = vadd.f32 0.0, %v2151
  %2153 = vdwg.mxu0
  %2154 = vmatprep.subr.bf16.mxu0 %v1406
  %2155 = vmatpush1.bf16.msra.mxu0 %v1405
  %2156 = vmatprep.subr.bf16.mxu0 %v1418
  %2157 = vmatpush1.bf16.msra.mxu0 %v1417
  %2158 = vmatprep.subr.bf16.mxu0 %v1430
  %2159 = vmatpush1.bf16.msra.mxu0 %v1429
  %2160 = vmatprep.subr.bf16.mxu0 %v1442
  %2161 = vmatpush1.bf16.msra.mxu0 %v1441
  %2162 = vmatprep.subr.bf16.mxu0 %v1454
  %2163 = vmatpush1.bf16.msra.mxu0 %v1453
  %2164 = vmatprep.subr.bf16.mxu0 %v1466
  %2165 = vmatpush1.bf16.msra.mxu0 %v1465
  %2166 = vmatprep.subr.bf16.mxu0 %v1478
  %2167 = vmatpush1.bf16.msra.mxu0 %v1477
  %2168 = vmatprep.subr.bf16.mxu0 %v1490
  %2169 = vmatpush1.bf16.msra.mxu0 %v1489
  %2170 = vmatprep.subr.bf16.mxu0 0
  %2171 = vmatpush1.bf16.msra.mxu0 0
  %2172 = vmatprep.subr.bf16.mxu0 0
  %2173 = vmatpush1.bf16.msra.mxu0 0
  %2174 = vmatprep.subr.bf16.mxu0 0
  %2175 = vmatpush1.bf16.msra.mxu0 0
  %2176 = vmatprep.subr.bf16.mxu0 0
  %2177 = vmatpush1.bf16.msra.mxu0 0
  %2178 = vmatprep.subr.bf16.mxu0 0
  %2179 = vmatpush1.bf16.msra.mxu0 0
  %2180 = vmatprep.subr.bf16.mxu0 0
  %2181 = vmatpush1.bf16.msra.mxu0 0
  %2182 = vmatprep.subr.bf16.mxu0 0
  %2183 = vmatpush1.bf16.msra.mxu0 0
  %2184 = vmatprep.subr.bf16.mxu0 0
  %2185 = vmatpush1.bf16.msra.mxu0 0
  %2186 = vmatprep.mubr.bf16.mxu0 0
  %2187 = vmatmul.mubr.bf16.gmra.mrb[0].mxu0 %v333
  %v2188 = vpop.f32.mrb[0].mxu0
  %v2189 = vadd.f32 %v2136, %v2188
  %v2190 = vpop.f32.mrb[0].mxu0
  %v2191 = vadd.f32 %v2138, %v2190
  %v2192 = vpop.f32.mrb[0].mxu0
  %v2193 = vadd.f32 %v2140, %v2192
  %v2194 = vpop.f32.mrb[0].mxu0
  %v2195 = vadd.f32 %v2142, %v2194
  %2196 = vmatprep.mubr.bf16.mxu0 0
  %2197 = vmatmul.mubr.bf16.gmra.mrb[0].mxu0 %v336
  %v2198 = vpop.f32.mrb[0].mxu0
  %v2199 = vadd.f32 %v2146, %v2198
  %v2200 = vpop.f32.mrb[0].mxu0
  %v2201 = vadd.f32 %v2148, %v2200
  %v2202 = vpop.f32.mrb[0].mxu0
  %v2203 = vadd.f32 %v2150, %v2202
  %v2204 = vpop.f32.mrb[0].mxu0
  %v2205 = vadd.f32 %v2152, %v2204
  %2206 = vdwg.mxu0
  %2207 = vmatprep.subr.bf16.mxu0 %v1216
  %2208 = vmatpush1.bf16.msra.mxu0 %v1215
  %2209 = vmatprep.subr.bf16.mxu0 %v1228
  %2210 = vmatpush1.bf16.msra.mxu0 %v1227
  %2211 = vmatprep.subr.bf16.mxu0 %v1240
  %2212 = vmatpush1.bf16.msra.mxu0 %v1239
  %2213 = vmatprep.subr.bf16.mxu0 %v1252
  %2214 = vmatpush1.bf16.msra.mxu0 %v1251
  %2215 = vmatprep.subr.bf16.mxu0 %v1264
  %2216 = vmatpush1.bf16.msra.mxu0 %v1263
  %2217 = vmatprep.subr.bf16.mxu0 %v1276
  %2218 = vmatpush1.bf16.msra.mxu0 %v1275
  %2219 = vmatprep.subr.bf16.mxu0 %v1288
  %2220 = vmatpush1.bf16.msra.mxu0 %v1287
  %2221 = vmatprep.subr.bf16.mxu0 %v1300
  %2222 = vmatpush1.bf16.msra.mxu0 %v1299
  %2223 = vmatprep.subr.bf16.mxu0 %v1312
  %2224 = vmatpush1.bf16.msra.mxu0 %v1311
  %2225 = vmatprep.subr.bf16.mxu0 %v1324
  %2226 = vmatpush1.bf16.msra.mxu0 %v1323
  %2227 = vmatprep.subr.bf16.mxu0 %v1336
  %2228 = vmatpush1.bf16.msra.mxu0 %v1335
  %2229 = vmatprep.subr.bf16.mxu0 %v1348
  %2230 = vmatpush1.bf16.msra.mxu0 %v1347
  %2231 = vmatprep.subr.bf16.mxu0 %v1360
  %2232 = vmatpush1.bf16.msra.mxu0 %v1359
  %2233 = vmatprep.subr.bf16.mxu0 %v1372
  %2234 = vmatpush1.bf16.msra.mxu0 %v1371
  %2235 = vmatprep.subr.bf16.mxu0 %v1384
  %2236 = vmatpush1.bf16.msra.mxu0 %v1383
  %2237 = vmatprep.subr.bf16.mxu0 %v1396
  %2238 = vmatpush1.bf16.msra.mxu0 %v1395
  %2239 = vmatprep.mubr.bf16.mxu0 %v332
  %2240 = vmatmul.mubr.bf16.gmra.mrb[0].mxu0 %v331
  %v2241 = vpop.f32.mrb[0].mxu0
  %v2242 = vadd.f32 0.0, %v2241
  %v2243 = vpop.f32.mrb[0].mxu0
  %v2244 = vadd.f32 0.0, %v2243
  %v2245 = vpop.f32.mrb[0].mxu0
  %v2246 = vadd.f32 0.0, %v2245
  %v2247 = vpop.f32.mrb[0].mxu0
  %v2248 = vadd.f32 0.0, %v2247
  %2249 = vmatprep.mubr.bf16.mxu0 %v335
  %2250 = vmatmul.mubr.bf16.gmra.mrb[0].mxu0 %v334
  %v2251 = vpop.f32.mrb[0].mxu0
  %v2252 = vadd.f32 0.0, %v2251
  %v2253 = vpop.f32.mrb[0].mxu0
  %v2254 = vadd.f32 0.0, %v2253
  %v2255 = vpop.f32.mrb[0].mxu0
  %v2256 = vadd.f32 0.0, %v2255
  %v2257 = vpop.f32.mrb[0].mxu0
  %v2258 = vadd.f32 0.0, %v2257
  %2259 = vdwg.mxu0
  %2260 = vmatprep.subr.bf16.mxu0 %v1408
  %2261 = vmatpush1.bf16.msra.mxu0 %v1407
  %2262 = vmatprep.subr.bf16.mxu0 %v1420
  %2263 = vmatpush1.bf16.msra.mxu0 %v1419
  %2264 = vmatprep.subr.bf16.mxu0 %v1432
  %2265 = vmatpush1.bf16.msra.mxu0 %v1431
  %2266 = vmatprep.subr.bf16.mxu0 %v1444
  %2267 = vmatpush1.bf16.msra.mxu0 %v1443
  %2268 = vmatprep.subr.bf16.mxu0 %v1456
  %2269 = vmatpush1.bf16.msra.mxu0 %v1455
  %2270 = vmatprep.subr.bf16.mxu0 %v1468
  %2271 = vmatpush1.bf16.msra.mxu0 %v1467
  %2272 = vmatprep.subr.bf16.mxu0 %v1480
  %2273 = vmatpush1.bf16.msra.mxu0 %v1479
  %2274 = vmatprep.subr.bf16.mxu0 %v1492
  %2275 = vmatpush1.bf16.msra.mxu0 %v1491
  %2276 = vmatprep.subr.bf16.mxu0 0
  %2277 = vmatpush1.bf16.msra.mxu0 0
  %2278 = vmatprep.subr.bf16.mxu0 0
  %2279 = vmatpush1.bf16.msra.mxu0 0
  %2280 = vmatprep.subr.bf16.mxu0 0
  %2281 = vmatpush1.bf16.msra.mxu0 0
  %2282 = vmatprep.subr.bf16.mxu0 0
  %2283 = vmatpush1.bf16.msra.mxu0 0
  %2284 = vmatprep.subr.bf16.mxu0 0
  %2285 = vmatpush1.bf16.msra.mxu0 0
  %2286 = vmatprep.subr.bf16.mxu0 0
  %2287 = vmatpush1.bf16.msra.mxu0 0
  %2288 = vmatprep.subr.bf16.mxu0 0
  %2289 = vmatpush1.bf16.msra.mxu0 0
  %2290 = vmatprep.subr.bf16.mxu0 0
  %2291 = vmatpush1.bf16.msra.mxu0 0
  %2292 = vmatprep.mubr.bf16.mxu0 0
  %2293 = vmatmul.mubr.bf16.gmra.mrb[0].mxu0 %v333
  %v2294 = vpop.f32.mrb[0].mxu0
  %v2295 = vadd.f32 %v2242, %v2294
  %v2296 = vpop.f32.mrb[0].mxu0
  %v2297 = vadd.f32 %v2244, %v2296
  %v2298 = vpop.f32.mrb[0].mxu0
  %v2299 = vadd.f32 %v2246, %v2298
  %v2300 = vpop.f32.mrb[0].mxu0
  %v2301 = vadd.f32 %v2248, %v2300
  %2302 = vmatprep.mubr.bf16.mxu0 0
  %2303 = vmatmul.mubr.bf16.gmra.mrb[0].mxu0 %v336
  %v2304 = vpop.f32.mrb[0].mxu0
  %v2305 = vadd.f32 %v2252, %v2304
  %v2306 = vpop.f32.mrb[0].mxu0
  %v2307 = vadd.f32 %v2254, %v2306
  %v2308 = vpop.f32.mrb[0].mxu0
  %v2309 = vadd.f32 %v2256, %v2308
  %v2310 = vpop.f32.mrb[0].mxu0
  %v2311 = vadd.f32 %v2258, %v2310
  %2312 = vdwg.mxu0
  %2313 = vmatprep.subr.bf16.mxu0 %v1218
  %2314 = vmatpush1.bf16.msra.mxu0 %v1217
  %2315 = vmatprep.subr.bf16.mxu0 %v1230
  %2316 = vmatpush1.bf16.msra.mxu0 %v1229
  %2317 = vmatprep.subr.bf16.mxu0 %v1242
  %2318 = vmatpush1.bf16.msra.mxu0 %v1241
  %2319 = vmatprep.subr.bf16.mxu0 %v1254
  %2320 = vmatpush1.bf16.msra.mxu0 %v1253
  %2321 = vmatprep.subr.bf16.mxu0 %v1266
  %2322 = vmatpush1.bf16.msra.mxu0 %v1265
  %2323 = vmatprep.subr.bf16.mxu0 %v1278
  %2324 = vmatpush1.bf16.msra.mxu0 %v1277
  %2325 = vmatprep.subr.bf16.mxu0 %v1290
  %2326 = vmatpush1.bf16.msra.mxu0 %v1289
  %2327 = vmatprep.subr.bf16.mxu0 %v1302
  %2328 = vmatpush1.bf16.msra.mxu0 %v1301
  %2329 = vmatprep.subr.bf16.mxu0 %v1314
  %2330 = vmatpush1.bf16.msra.mxu0 %v1313
  %2331 = vmatprep.subr.bf16.mxu0 %v1326
  %2332 = vmatpush1.bf16.msra.mxu0 %v1325
  %2333 = vmatprep.subr.bf16.mxu0 %v1338
  %2334 = vmatpush1.bf16.msra.mxu0 %v1337
  %2335 = vmatprep.subr.bf16.mxu0 %v1350
  %2336 = vmatpush1.bf16.msra.mxu0 %v1349
  %2337 = vmatprep.subr.bf16.mxu0 %v1362
  %2338 = vmatpush1.bf16.msra.mxu0 %v1361
  %2339 = vmatprep.subr.bf16.mxu0 %v1374
  %2340 = vmatpush1.bf16.msra.mxu0 %v1373
  %2341 = vmatprep.subr.bf16.mxu0 %v1386
  %2342 = vmatpush1.bf16.msra.mxu0 %v1385
  %2343 = vmatprep.subr.bf16.mxu0 %v1398
  %2344 = vmatpush1.bf16.msra.mxu0 %v1397
  %2345 = vmatprep.mubr.bf16.mxu0 %v332
  %2346 = vmatmul.mubr.bf16.gmra.mrb[0].mxu0 %v331
  %v2347 = vpop.f32.mrb[0].mxu0
  %v2348 = vadd.f32 0.0, %v2347
  %v2349 = vpop.f32.mrb[0].mxu0
  %v2350 = vadd.f32 0.0, %v2349
  %v2351 = vpop.f32.mrb[0].mxu0
  %v2352 = vadd.f32 0.0, %v2351
  %v2353 = vpop.f32.mrb[0].mxu0
  %v2354 = vadd.f32 0.0, %v2353
  %2355 = vmatprep.mubr.bf16.mxu0 %v335
  %2356 = vmatmul.mubr.bf16.gmra.mrb[0].mxu0 %v334
  %v2357 = vpop.f32.mrb[0].mxu0
  %v2358 = vadd.f32 0.0, %v2357
  %v2359 = vpop.f32.mrb[0].mxu0
  %v2360 = vadd.f32 0.0, %v2359
  %v2361 = vpop.f32.mrb[0].mxu0
  %v2362 = vadd.f32 0.0, %v2361
  %v2363 = vpop.f32.mrb[0].mxu0
  %v2364 = vadd.f32 0.0, %v2363
  %2365 = vdwg.mxu0
  %2366 = vmatprep.subr.bf16.mxu0 %v1410
  %2367 = vmatpush1.bf16.msra.mxu0 %v1409
  %2368 = vmatprep.subr.bf16.mxu0 %v1422
  %2369 = vmatpush1.bf16.msra.mxu0 %v1421
  %2370 = vmatprep.subr.bf16.mxu0 %v1434
  %2371 = vmatpush1.bf16.msra.mxu0 %v1433
  %2372 = vmatprep.subr.bf16.mxu0 %v1446
  %2373 = vmatpush1.bf16.msra.mxu0 %v1445
  %2374 = vmatprep.subr.bf16.mxu0 %v1458
  %2375 = vmatpush1.bf16.msra.mxu0 %v1457
  %2376 = vmatprep.subr.bf16.mxu0 %v1470
  %2377 = vmatpush1.bf16.msra.mxu0 %v1469
  %2378 = vmatprep.subr.bf16.mxu0 %v1482
  %2379 = vmatpush1.bf16.msra.mxu0 %v1481
  %2380 = vmatprep.subr.bf16.mxu0 %v1494
  %2381 = vmatpush1.bf16.msra.mxu0 %v1493
  %2382 = vmatprep.subr.bf16.mxu0 0
  %2383 = vmatpush1.bf16.msra.mxu0 0
  %2384 = vmatprep.subr.bf16.mxu0 0
  %2385 = vmatpush1.bf16.msra.mxu0 0
  %2386 = vmatprep.subr.bf16.mxu0 0
  %2387 = vmatpush1.bf16.msra.mxu0 0
  %2388 = vmatprep.subr.bf16.mxu0 0
  %2389 = vmatpush1.bf16.msra.mxu0 0
  %2390 = vmatprep.subr.bf16.mxu0 0
  %2391 = vmatpush1.bf16.msra.mxu0 0
  %2392 = vmatprep.subr.bf16.mxu0 0
  %2393 = vmatpush1.bf16.msra.mxu0 0
  %2394 = vmatprep.subr.bf16.mxu0 0
  %2395 = vmatpush1.bf16.msra.mxu0 0
  %2396 = vmatprep.subr.bf16.mxu0 0
  %2397 = vmatpush1.bf16.msra.mxu0 0
  %2398 = vmatprep.mubr.bf16.mxu0 0
  %2399 = vmatmul.mubr.bf16.gmra.mrb[0].mxu0 %v333
  %v2400 = vpop.f32.mrb[0].mxu0
  %v2401 = vadd.f32 %v2348, %v2400
  %v2402 = vpop.f32.mrb[0].mxu0
  %v2403 = vadd.f32 %v2350, %v2402
  %v2404 = vpop.f32.mrb[0].mxu0
  %v2405 = vadd.f32 %v2352, %v2404
  %v2406 = vpop.f32.mrb[0].mxu0
  %v2407 = vadd.f32 %v2354, %v2406
  %2408 = vmatprep.mubr.bf16.mxu0 0
  %2409 = vmatmul.mubr.bf16.gmra.mrb[0].mxu0 %v336
  %v2410 = vpop.f32.mrb[0].mxu0
  %v2411 = vadd.f32 %v2358, %v2410
  %v2412 = vpop.f32.mrb[0].mxu0
  %v2413 = vadd.f32 %v2360, %v2412
  %v2414 = vpop.f32.mrb[0].mxu0
  %v2415 = vadd.f32 %v2362, %v2414
  %v2416 = vpop.f32.mrb[0].mxu0
  %v2417 = vadd.f32 %v2364, %v2416
  %2418 = vdwg.mxu0
  %v2419 = vmax.f32 %v1871, %v1979
  %v2420 = vmax.f32 %v1873, %v2083
  %v2421 = vmax.f32 %v1977, %v2085
  %v2422 = vmax.f32 %v1875, %v1983
  %v2423 = vmax.f32 %v1877, %v2087
  %v2424 = vmax.f32 %v1981, %v2089
  %v2425 = vmax.f32 %v1881, %v1989
  %v2426 = vmax.f32 %v1883, %v2093
  %v2427 = vmax.f32 %v1987, %v2095
  %v2428 = vmax.f32 %v1885, %v1993
  %v2429 = vmax.f32 %v1887, %v2097
  %v2430 = vmax.f32 %v1991, %v2099
  %v2431 = vmax.f32 %v2189, %v2297
  %v2432 = vmax.f32 %v2191, %v2401
  %v2433 = vmax.f32 %v2295, %v2403
  %v2434 = vmax.f32 %v2193, %v2301
  %v2435 = vmax.f32 %v2195, %v2405
  %v2436 = vmax.f32 %v2299, %v2407
  %v2437 = vmax.f32 %v2199, %v2307
  %v2438 = vmax.f32 %v2201, %v2411
  %v2439 = vmax.f32 %v2305, %v2413
  %v2440 = vmax.f32 %v2203, %v2311
  %v2441 = vmax.f32 %v2205, %v2415
  %v2442 = vmax.f32 %v2309, %v2417
  %v2443 = vmax.f32 %v2419, %v2431
  %v2444 = vmax.f32 %v2420, %v2432
  %v2445 = vmax.f32 %v2421, %v2433
  %v2446 = vmax.f32 %v2422, %v2434
  %v2447 = vmax.f32 %v2423, %v2435
  %v2448 = vmax.f32 %v2424, %v2436
  %v2449 = vmax.f32 %v2425, %v2437
  %v2450 = vmax.f32 %v2426, %v2438
  %v2451 = vmax.f32 %v2427, %v2439
  %v2452 = vmax.f32 %v2428, %v2440
  %v2453 = vmax.f32 %v2429, %v2441
  %v2454 = vmax.f32 %v2430, %v2442
  %v2455 = vld [vmem:[%s2] sm:$0xff]
  %v2456 = vld [vmem:[%s2 + $0x8] sm:$0xff]
  %v2457 = vld [vmem:[%s2 + $0x10] sm:$0xff]
  %v2458 = vld [vmem:[%s2 + $0x18] sm:$0xff]
  %2460 = vset.pattern.permute.xlu0 0
  %2461 = vperm.xlu0 %2460, %v2455
  %v2462 = vpop.permute.xlu0 %2461
  %2465 = vset.pattern.permute.xlu0 0
  %2466 = vperm.xlu0 %2465, %v2456
  %v2467 = vpop.permute.xlu0 %2466
  %2470 = vset.pattern.permute.xlu0 0
  %2471 = vperm.xlu0 %2470, %v2457
  %v2472 = vpop.permute.xlu0 %2471
  %2475 = vset.pattern.permute.xlu0 0
  %2476 = vperm.xlu0 %2475, %v2458
  %v2477 = vpop.permute.xlu0 %2476
  %v2479 = vadd.f32 %v2443, %v2462
  %v2480 = vadd.f32 %v2444, %v2462
  %v2481 = vadd.f32 %v2445, %v2462
  %v2482 = vadd.f32 %v2446, %v2467
  %v2483 = vadd.f32 %v2447, %v2467
  %v2484 = vadd.f32 %v2448, %v2467
  %v2485 = vadd.f32 %v2449, %v2472
  %v2486 = vadd.f32 %v2450, %v2472
  %v2487 = vadd.f32 %v2451, %v2472
  %v2488 = vadd.f32 %v2452, %v2477
  %v2489 = vadd.f32 %v2453, %v2477
  %v2490 = vadd.f32 %v2454, %v2477
  %v2491 = vmul.f32 %v2479, 0.01
  %v2492 = vmul.f32 %v2480, 0.01
  %v2493 = vmul.f32 %v2481, 0.01
  %v2494 = vmul.f32 %v2482, 0.01
  %v2495 = vmul.f32 %v2483, 0.01
  %v2496 = vmul.f32 %v2484, 0.01
  %v2497 = vmul.f32 %v2485, 0.01
  %v2498 = vmul.f32 %v2486, 0.01
  %v2499 = vmul.f32 %v2487, 0.01
  %v2500 = vmul.f32 %v2488, 0.01
  %v2501 = vmul.f32 %v2489, 0.01
  %v2502 = vmul.f32 %v2490, 0.01
  %v2503 = vmax.f32 %v2479, %v2491
  %v2504 = vmax.f32 %v2480, %v2492
  %v2505 = vmax.f32 %v2481, %v2493
  %v2506 = vmax.f32 %v2482, %v2494
  %v2507 = vmax.f32 %v2483, %v2495
  %v2508 = vmax.f32 %v2484, %v2496
  %v2509 = vmax.f32 %v2485, %v2497
  %v2510 = vmax.f32 %v2486, %v2498
  %v2511 = vmax.f32 %v2487, %v2499
  %v2512 = vmax.f32 %v2488, %v2500
  %v2513 = vmax.f32 %v2489, %v2501
  %v2514 = vmax.f32 %v2490, %v2502
  %v2515 = vpack.c.bf16 %v2506, %v2503
  %v2516 = vpack.c.bf16 %v2507, %v2504
  %v2517 = vpack.c.bf16 %v2508, %v2505
  %v2518 = vpack.c.bf16 %v2512, %v2509
  %v2519 = vpack.c.bf16 %v2513, %v2510
  %v2520 = vpack.c.bf16 %v2514, %v2511
  %v2527 = vunpack.c.l.b16 %v2515
  %v2528 = vunpack.c.l.b16 %v2516
  %v2529 = vunpack.c.l.b16 %v2517
  %v2530 = vunpack.c.h.b16 %v2515
  %v2531 = vunpack.c.h.b16 %v2516
  %v2532 = vunpack.c.h.b16 %v2517
  %v2533 = vunpack.c.l.b16 %v2518
  %v2534 = vunpack.c.l.b16 %v2519
  %v2535 = vunpack.c.l.b16 %v2520
  %v2536 = vunpack.c.h.b16 %v2518
  %v2537 = vunpack.c.h.b16 %v2519
  %v2538 = vunpack.c.h.b16 %v2520
  %v2539 = vpack.c.b16 %v2528, %v2527
  %v2540 = vpack.c.b16 %v2529, %v2529
  %v2541 = vpack.c.b16 %v2531, %v2530
  %v2542 = vpack.c.b16 %v2532, %v2532
  %v2543 = vpack.c.b16 %v2534, %v2533
  %v2544 = vpack.c.b16 %v2535, %v2535
  %v2545 = vpack.c.b16 %v2537, %v2536
  %v2546 = vpack.c.b16 %v2538, %v2538
  %2555 = vst [vmem:[%s3] sm:$0xff] %v2539
  %2556 = vst [vmem:[%s3 + $0x8] sm:$0xf] %v2540
  %2557 = vst [vmem:[%s3 + $0xc] sm:$0xff] %v2541
  %2558 = vst [vmem:[%s3 + $0x14] sm:$0xf] %v2542
  %2559 = vst [vmem:[%s3 + $0x18] sm:$0xff] %v2543
  %2560 = vst [vmem:[%s3 + $0x20] sm:$0xf] %v2544
  %2561 = vst [vmem:[%s3 + $0x24] sm:$0xff] %v2545
  %2562 = vst [vmem:[%s3 + $0x2c] sm:$0xf] %v2546
  // Predicated region
  $region14: #{conv_discriminator_forward.3} parent=0 // pred_check
    _
  $region15: #{conv_discriminator_forward.3} parent=0 // pred_check_branch
    %2564 = sbr.rel (0) target = $region17
  $region16: #{conv_discriminator_forward.3} parent=0 // pred_region
    _
  $region17: #{conv_discriminator_forward.3} parent=0 // pred_fallthru
    _
  // Predicated region
  $region18: #{conv_discriminator_forward.3} parent=0 // pred_check
    _
  $region19: #{conv_discriminator_forward.3} parent=0 // pred_check_branch
    %2566 = sbr.rel (0) target = $region21
  $region20: #{conv_discriminator_forward.3} parent=0 // pred_region
    _
  $region21: #{conv_discriminator_forward.3} parent=0 // pred_fallthru
    _

// kernel: conv_discriminator_forward.4
$region0: #{conv_discriminator_forward.4}
  #allocation0 [shape = 'u32[]', space=smem, size = 0x4, offset = 0x4, fixed_abs, tag = 'smem constant byte address 0x4 - core index']
  #allocation1 [shape = 'u32[144,128]{1,0:T(1,128)}', space=vmem, size = 0x12000, scoped, tag = 'internal scratch']
  %s0 = inlined_call_operand.vmem [shape: bf16[896,512], index: 0, kind: input, shape index: {}]
  %s1 = inlined_call_operand.vmem [shape: bf16[64,896], index: 1, kind: input, shape index: {}]
  %s2 = inlined_call_operand.vmem [shape: f32[64,1], index: 2, kind: input, shape index: {}]
  %s3 = inlined_call_operand.vmem [shape: bf16[64,128], index: 3, kind: output, shape index: {}]
  %s4 = sld [smem:[#allocation0]]
  $region22: #{conv_discriminator_forward.4} parent=0
    _
  %s6 = ssub.s32 1, %s4
  %s7 = scalar_select 0, %s6, %s4
  // Predicated region
  $region2: #{conv_discriminator_forward.4} parent=0 // pred_check
    _
  $region3: #{conv_discriminator_forward.4} parent=0 // pred_check_branch
    %9 = sbr.rel (0) target = $region5
  $region4: #{conv_discriminator_forward.4} parent=0 // pred_region
    _
  $region5: #{conv_discriminator_forward.4} parent=0 // pred_fallthru
    _
  // Predicated region
  $region6: #{conv_discriminator_forward.4} parent=0 // pred_check
    _
  $region7: #{conv_discriminator_forward.4} parent=0 // pred_check_branch
    %11 = sbr.rel (0) target = $region9
  $region8: #{conv_discriminator_forward.4} parent=0 // pred_region
    _
  $region9: #{conv_discriminator_forward.4} parent=0 // pred_fallthru
    _
  // Predicated region
  $region10: #{conv_discriminator_forward.4} parent=0 // pred_check
    _
  $region11: #{conv_discriminator_forward.4} parent=0 // pred_check_branch
    %13 = sbr.rel (0) target = $region13
  $region12: #{conv_discriminator_forward.4} parent=0 // pred_region
    _
  $region13: #{conv_discriminator_forward.4} parent=0 // pred_fallthru
    _
  %v15 = vld [vmem:[%s1] sm:$0xff]
  %v16 = vld [vmem:[%s1 + $0x8] sm:$0xff]
  %v17 = vld [vmem:[%s1 + $0x10] sm:$0xff]
  %v18 = vld [vmem:[%s1 + $0x18] sm:$0xf]
  %v19 = vld [vmem:[%s1 + $0x1c] sm:$0xff]
  %v20 = vld [vmem:[%s1 + $0x24] sm:$0xff]
  %v21 = vld [vmem:[%s1 + $0x2c] sm:$0xff]
  %v22 = vld [vmem:[%s1 + $0x34] sm:$0xf]
  %v23 = vld [vmem:[%s1 + $0x38] sm:$0xff]
  %v24 = vld [vmem:[%s1 + $0x40] sm:$0xff]
  %v25 = vld [vmem:[%s1 + $0x48] sm:$0xff]
  %v26 = vld [vmem:[%s1 + $0x50] sm:$0xf]
  %v27 = vld [vmem:[%s1 + $0x54] sm:$0xff]
  %v28 = vld [vmem:[%s1 + $0x5c] sm:$0xff]
  %v29 = vld [vmem:[%s1 + $0x64] sm:$0xff]
  %v30 = vld [vmem:[%s1 + $0x6c] sm:$0xf]
  %v31 = vld [vmem:[%s1 + $0x70] sm:$0xff]
  %v32 = vld [vmem:[%s1 + $0x78] sm:$0xff]
  %v33 = vld [vmem:[%s1 + $0x80] sm:$0xff]
  %v34 = vld [vmem:[%s1 + $0x88] sm:$0xf]
  %v35 = vld [vmem:[%s1 + $0x8c] sm:$0xff]
  %v36 = vld [vmem:[%s1 + $0x94] sm:$0xff]
  %v37 = vld [vmem:[%s1 + $0x9c] sm:$0xff]
  %v38 = vld [vmem:[%s1 + $0xa4] sm:$0xf]
  %v39 = vld [vmem:[%s1 + $0xa8] sm:$0xff]
  %v40 = vld [vmem:[%s1 + $0xb0] sm:$0xff]
  %v41 = vld [vmem:[%s1 + $0xb8] sm:$0xff]
  %v42 = vld [vmem:[%s1 + $0xc0] sm:$0xf]
  %v43 = vld [vmem:[%s1 + $0xc4] sm:$0xff]
  %v44 = vld [vmem:[%s1 + $0xcc] sm:$0xff]
  %v45 = vld [vmem:[%s1 + $0xd4] sm:$0xff]
  %v46 = vld [vmem:[%s1 + $0xdc] sm:$0xf]
  %v47 = vld [vmem:[%s0] sm:$0xff]
  %v48 = vld [vmem:[%s0 + $0x8] sm:$0xff]
  %v49 = vld [vmem:[%s0 + $0x10] sm:$0xff]
  %v50 = vld [vmem:[%s0 + $0x18] sm:$0xff]
  %v51 = vld [vmem:[%s0 + $0x20] sm:$0xff]
  %v52 = vld [vmem:[%s0 + $0x28] sm:$0xff]
  %v53 = vld [vmem:[%s0 + $0x30] sm:$0xff]
  %v54 = vld [vmem:[%s0 + $0x38] sm:$0xff]
  %v55 = vld [vmem:[%s0 + $0x40] sm:$0xff]
  %v56 = vld [vmem:[%s0 + $0x48] sm:$0xff]
  %v57 = vld [vmem:[%s0 + $0x50] sm:$0xff]
  %v58 = vld [vmem:[%s0 + $0x58] sm:$0xff]
  %v59 = vld [vmem:[%s0 + $0x60] sm:$0xff]
  %v60 = vld [vmem:[%s0 + $0x68] sm:$0xff]
  %v61 = vld [vmem:[%s0 + $0x70] sm:$0xff]
  %v62 = vld [vmem:[%s0 + $0x78] sm:$0xff]
  %v63 = vld [vmem:[%s0 + $0x80] sm:$0xff]
  %v64 = vld [vmem:[%s0 + $0x88] sm:$0xff]
  %v65 = vld [vmem:[%s0 + $0x90] sm:$0xff]
  %v66 = vld [vmem:[%s0 + $0x98] sm:$0xff]
  %v67 = vld [vmem:[%s0 + $0xa0] sm:$0xff]
  %v68 = vld [vmem:[%s0 + $0xa8] sm:$0xff]
  %v69 = vld [vmem:[%s0 + $0xb0] sm:$0xff]
  %v70 = vld [vmem:[%s0 + $0xb8] sm:$0xff]
  %v71 = vld [vmem:[%s0 + $0xc0] sm:$0xff]
  %v72 = vld [vmem:[%s0 + $0xc8] sm:$0xff]
  %v73 = vld [vmem:[%s0 + $0xd0] sm:$0xff]
  %v74 = vld [vmem:[%s0 + $0xd8] sm:$0xff]
  %v75 = vld [vmem:[%s0 + $0xe0] sm:$0xff]
  %v76 = vld [vmem:[%s0 + $0xe8] sm:$0xff]
  %v77 = vld [vmem:[%s0 + $0xf0] sm:$0xff]
  %v78 = vld [vmem:[%s0 + $0xf8] sm:$0xff]
  %v79 = vld [vmem:[%s0 + $0x100] sm:$0xff]
  %v80 = vld [vmem:[%s0 + $0x108] sm:$0xff]
  %v81 = vld [vmem:[%s0 + $0x110] sm:$0xff]
  %v82 = vld [vmem:[%s0 + $0x118] sm:$0xff]
  %v83 = vld [vmem:[%s0 + $0x120] sm:$0xff]
  %v84 = vld [vmem:[%s0 + $0x128] sm:$0xff]
  %v85 = vld [vmem:[%s0 + $0x130] sm:$0xff]
  %v86 = vld [vmem:[%s0 + $0x138] sm:$0xff]
  %v87 = vld [vmem:[%s0 + $0x140] sm:$0xff]
  %v88 = vld [vmem:[%s0 + $0x148] sm:$0xff]
  %v89 = vld [vmem:[%s0 + $0x150] sm:$0xff]
  %v90 = vld [vmem:[%s0 + $0x158] sm:$0xff]
  %v91 = vld [vmem:[%s0 + $0x160] sm:$0xff]
  %v92 = vld [vmem:[%s0 + $0x168] sm:$0xff]
  %v93 = vld [vmem:[%s0 + $0x170] sm:$0xff]
  %v94 = vld [vmem:[%s0 + $0x178] sm:$0xff]
  %v95 = vld [vmem:[%s0 + $0x180] sm:$0xff]
  %v96 = vld [vmem:[%s0 + $0x188] sm:$0xff]
  %v97 = vld [vmem:[%s0 + $0x190] sm:$0xff]
  %v98 = vld [vmem:[%s0 + $0x198] sm:$0xff]
  %v99 = vld [vmem:[%s0 + $0x1a0] sm:$0xff]
  %v100 = vld [vmem:[%s0 + $0x1a8] sm:$0xff]
  %v101 = vld [vmem:[%s0 + $0x1b0] sm:$0xff]
  %v102 = vld [vmem:[%s0 + $0x1b8] sm:$0xff]
  %v103 = vld [vmem:[%s0 + $0x1c0] sm:$0xff]
  %v104 = vld [vmem:[%s0 + $0x1c8] sm:$0xff]
  %v105 = vld [vmem:[%s0 + $0x1d0] sm:$0xff]
  %v106 = vld [vmem:[%s0 + $0x1d8] sm:$0xff]
  %v107 = vld [vmem:[%s0 + $0x1e0] sm:$0xff]
  %v108 = vld [vmem:[%s0 + $0x1e8] sm:$0xff]
  %v109 = vld [vmem:[%s0 + $0x1f0] sm:$0xff]
  %v110 = vld [vmem:[%s0 + $0x1f8] sm:$0xff]
  %v111 = vld [vmem:[%s0 + $0x200] sm:$0xff]
  %v112 = vld [vmem:[%s0 + $0x208] sm:$0xff]
  %v113 = vld [vmem:[%s0 + $0x210] sm:$0xff]
  %v114 = vld [vmem:[%s0 + $0x218] sm:$0xff]
  %v115 = vld [vmem:[%s0 + $0x220] sm:$0xff]
  %v116 = vld [vmem:[%s0 + $0x228] sm:$0xff]
  %v117 = vld [vmem:[%s0 + $0x230] sm:$0xff]
  %v118 = vld [vmem:[%s0 + $0x238] sm:$0xff]
  %v119 = vld [vmem:[%s0 + $0x240] sm:$0xff]
  %v120 = vld [vmem:[%s0 + $0x248] sm:$0xff]
  %v121 = vld [vmem:[%s0 + $0x250] sm:$0xff]
  %v122 = vld [vmem:[%s0 + $0x258] sm:$0xff]
  %v123 = vld [vmem:[%s0 + $0x260] sm:$0xff]
  %v124 = vld [vmem:[%s0 + $0x268] sm:$0xff]
  %v125 = vld [vmem:[%s0 + $0x270] sm:$0xff]
  %v126 = vld [vmem:[%s0 + $0x278] sm:$0xff]
  %v127 = vld [vmem:[%s0 + $0x280] sm:$0xff]
  %v128 = vld [vmem:[%s0 + $0x288] sm:$0xff]
  %v129 = vld [vmem:[%s0 + $0x290] sm:$0xff]
  %v130 = vld [vmem:[%s0 + $0x298] sm:$0xff]
  %v131 = vld [vmem:[%s0 + $0x2a0] sm:$0xff]
  %v132 = vld [vmem:[%s0 + $0x2a8] sm:$0xff]
  %v133 = vld [vmem:[%s0 + $0x2b0] sm:$0xff]
  %v134 = vld [vmem:[%s0 + $0x2b8] sm:$0xff]
  %v135 = vld [vmem:[%s0 + $0x2c0] sm:$0xff]
  %v136 = vld [vmem:[%s0 + $0x2c8] sm:$0xff]
  %v137 = vld [vmem:[%s0 + $0x2d0] sm:$0xff]
  %v138 = vld [vmem:[%s0 + $0x2d8] sm:$0xff]
  %v139 = vld [vmem:[%s0 + $0x2e0] sm:$0xff]
  %v140 = vld [vmem:[%s0 + $0x2e8] sm:$0xff]
  %v141 = vld [vmem:[%s0 + $0x2f0] sm:$0xff]
  %v142 = vld [vmem:[%s0 + $0x2f8] sm:$0xff]
  %v143 = vld [vmem:[%s0 + $0x300] sm:$0xff]
  %v144 = vld [vmem:[%s0 + $0x308] sm:$0xff]
  %v145 = vld [vmem:[%s0 + $0x310] sm:$0xff]
  %v146 = vld [vmem:[%s0 + $0x318] sm:$0xff]
  %v147 = vld [vmem:[%s0 + $0x320] sm:$0xff]
  %v148 = vld [vmem:[%s0 + $0x328] sm:$0xff]
  %v149 = vld [vmem:[%s0 + $0x330] sm:$0xff]
  %v150 = vld [vmem:[%s0 + $0x338] sm:$0xff]
  %v151 = vld [vmem:[%s0 + $0x340] sm:$0xff]
  %v152 = vld [vmem:[%s0 + $0x348] sm:$0xff]
  %v153 = vld [vmem:[%s0 + $0x350] sm:$0xff]
  %v154 = vld [vmem:[%s0 + $0x358] sm:$0xff]
  %v155 = vld [vmem:[%s0 + $0x360] sm:$0xff]
  %v156 = vld [vmem:[%s0 + $0x368] sm:$0xff]
  %v157 = vld [vmem:[%s0 + $0x370] sm:$0xff]
  %v158 = vld [vmem:[%s0 + $0x378] sm:$0xff]
  %v159 = vld [vmem:[%s0 + $0x380] sm:$0xff]
  %v160 = vld [vmem:[%s0 + $0x388] sm:$0xff]
  %v161 = vld [vmem:[%s0 + $0x390] sm:$0xff]
  %v162 = vld [vmem:[%s0 + $0x398] sm:$0xff]
  %v163 = vld [vmem:[%s0 + $0x3a0] sm:$0xff]
  %v164 = vld [vmem:[%s0 + $0x3a8] sm:$0xff]
  %v165 = vld [vmem:[%s0 + $0x3b0] sm:$0xff]
  %v166 = vld [vmem:[%s0 + $0x3b8] sm:$0xff]
  %v167 = vld [vmem:[%s0 + $0x3c0] sm:$0xff]
  %v168 = vld [vmem:[%s0 + $0x3c8] sm:$0xff]
  %v169 = vld [vmem:[%s0 + $0x3d0] sm:$0xff]
  %v170 = vld [vmem:[%s0 + $0x3d8] sm:$0xff]
  %v171 = vld [vmem:[%s0 + $0x3e0] sm:$0xff]
  %v172 = vld [vmem:[%s0 + $0x3e8] sm:$0xff]
  %v173 = vld [vmem:[%s0 + $0x3f0] sm:$0xff]
  %v174 = vld [vmem:[%s0 + $0x3f8] sm:$0xff]
  %v175 = vld [vmem:[%s0 + $0x400] sm:$0xff]
  %v176 = vld [vmem:[%s0 + $0x408] sm:$0xff]
  %v177 = vld [vmem:[%s0 + $0x410] sm:$0xff]
  %v178 = vld [vmem:[%s0 + $0x418] sm:$0xff]
  %v179 = vld [vmem:[%s0 + $0x420] sm:$0xff]
  %v180 = vld [vmem:[%s0 + $0x428] sm:$0xff]
  %v181 = vld [vmem:[%s0 + $0x430] sm:$0xff]
  %v182 = vld [vmem:[%s0 + $0x438] sm:$0xff]
  %v183 = vld [vmem:[%s0 + $0x440] sm:$0xff]
  %v184 = vld [vmem:[%s0 + $0x448] sm:$0xff]
  %v185 = vld [vmem:[%s0 + $0x450] sm:$0xff]
  %v186 = vld [vmem:[%s0 + $0x458] sm:$0xff]
  %v187 = vld [vmem:[%s0 + $0x460] sm:$0xff]
  %v188 = vld [vmem:[%s0 + $0x468] sm:$0xff]
  %v189 = vld [vmem:[%s0 + $0x470] sm:$0xff]
  %v190 = vld [vmem:[%s0 + $0x478] sm:$0xff]
  %v191 = vld [vmem:[%s0 + $0x480] sm:$0xff]
  %v192 = vld [vmem:[%s0 + $0x488] sm:$0xff]
  %v193 = vld [vmem:[%s0 + $0x490] sm:$0xff]
  %v194 = vld [vmem:[%s0 + $0x498] sm:$0xff]
  %v195 = vld [vmem:[%s0 + $0x4a0] sm:$0xff]
  %v196 = vld [vmem:[%s0 + $0x4a8] sm:$0xff]
  %v197 = vld [vmem:[%s0 + $0x4b0] sm:$0xff]
  %v198 = vld [vmem:[%s0 + $0x4b8] sm:$0xff]
  %v199 = vld [vmem:[%s0 + $0x4c0] sm:$0xff]
  %v200 = vld [vmem:[%s0 + $0x4c8] sm:$0xff]
  %v201 = vld [vmem:[%s0 + $0x4d0] sm:$0xff]
  %v202 = vld [vmem:[%s0 + $0x4d8] sm:$0xff]
  %v203 = vld [vmem:[%s0 + $0x4e0] sm:$0xff]
  %v204 = vld [vmem:[%s0 + $0x4e8] sm:$0xff]
  %v205 = vld [vmem:[%s0 + $0x4f0] sm:$0xff]
  %v206 = vld [vmem:[%s0 + $0x4f8] sm:$0xff]
  %v207 = vld [vmem:[%s0 + $0x500] sm:$0xff]
  %v208 = vld [vmem:[%s0 + $0x508] sm:$0xff]
  %v209 = vld [vmem:[%s0 + $0x510] sm:$0xff]
  %v210 = vld [vmem:[%s0 + $0x518] sm:$0xff]
  %v211 = vld [vmem:[%s0 + $0x520] sm:$0xff]
  %v212 = vld [vmem:[%s0 + $0x528] sm:$0xff]
  %v213 = vld [vmem:[%s0 + $0x530] sm:$0xff]
  %v214 = vld [vmem:[%s0 + $0x538] sm:$0xff]
  %v215 = vld [vmem:[%s0 + $0x540] sm:$0xff]
  %v216 = vld [vmem:[%s0 + $0x548] sm:$0xff]
  %v217 = vld [vmem:[%s0 + $0x550] sm:$0xff]
  %v218 = vld [vmem:[%s0 + $0x558] sm:$0xff]
  %v219 = vld [vmem:[%s0 + $0x560] sm:$0xff]
  %v220 = vld [vmem:[%s0 + $0x568] sm:$0xff]
  %v221 = vld [vmem:[%s0 + $0x570] sm:$0xff]
  %v222 = vld [vmem:[%s0 + $0x578] sm:$0xff]
  %v223 = vld [vmem:[%s0 + $0x580] sm:$0xff]
  %v224 = vld [vmem:[%s0 + $0x588] sm:$0xff]
  %v225 = vld [vmem:[%s0 + $0x590] sm:$0xff]
  %v226 = vld [vmem:[%s0 + $0x598] sm:$0xff]
  %v227 = vld [vmem:[%s0 + $0x5a0] sm:$0xff]
  %v228 = vld [vmem:[%s0 + $0x5a8] sm:$0xff]
  %v229 = vld [vmem:[%s0 + $0x5b0] sm:$0xff]
  %v230 = vld [vmem:[%s0 + $0x5b8] sm:$0xff]
  %v231 = vld [vmem:[%s0 + $0x5c0] sm:$0xff]
  %v232 = vld [vmem:[%s0 + $0x5c8] sm:$0xff]
  %v233 = vld [vmem:[%s0 + $0x5d0] sm:$0xff]
  %v234 = vld [vmem:[%s0 + $0x5d8] sm:$0xff]
  %v235 = vld [vmem:[%s0 + $0x5e0] sm:$0xff]
  %v236 = vld [vmem:[%s0 + $0x5e8] sm:$0xff]
  %v237 = vld [vmem:[%s0 + $0x5f0] sm:$0xff]
  %v238 = vld [vmem:[%s0 + $0x5f8] sm:$0xff]
  %v239 = vld [vmem:[%s0 + $0x600] sm:$0xff]
  %v240 = vld [vmem:[%s0 + $0x608] sm:$0xff]
  %v241 = vld [vmem:[%s0 + $0x610] sm:$0xff]
  %v242 = vld [vmem:[%s0 + $0x618] sm:$0xff]
  %v243 = vld [vmem:[%s0 + $0x620] sm:$0xff]
  %v244 = vld [vmem:[%s0 + $0x628] sm:$0xff]
  %v245 = vld [vmem:[%s0 + $0x630] sm:$0xff]
  %v246 = vld [vmem:[%s0 + $0x638] sm:$0xff]
  %v247 = vld [vmem:[%s0 + $0x640] sm:$0xff]
  %v248 = vld [vmem:[%s0 + $0x648] sm:$0xff]
  %v249 = vld [vmem:[%s0 + $0x650] sm:$0xff]
  %v250 = vld [vmem:[%s0 + $0x658] sm:$0xff]
  %v251 = vld [vmem:[%s0 + $0x660] sm:$0xff]
  %v252 = vld [vmem:[%s0 + $0x668] sm:$0xff]
  %v253 = vld [vmem:[%s0 + $0x670] sm:$0xff]
  %v254 = vld [vmem:[%s0 + $0x678] sm:$0xff]
  %v255 = vld [vmem:[%s0 + $0x680] sm:$0xff]
  %v256 = vld [vmem:[%s0 + $0x688] sm:$0xff]
  %v257 = vld [vmem:[%s0 + $0x690] sm:$0xff]
  %v258 = vld [vmem:[%s0 + $0x698] sm:$0xff]
  %v259 = vld [vmem:[%s0 + $0x6a0] sm:$0xff]
  %v260 = vld [vmem:[%s0 + $0x6a8] sm:$0xff]
  %v261 = vld [vmem:[%s0 + $0x6b0] sm:$0xff]
  %v262 = vld [vmem:[%s0 + $0x6b8] sm:$0xff]
  %v263 = vld [vmem:[%s0 + $0x6c0] sm:$0xff]
  %v264 = vld [vmem:[%s0 + $0x6c8] sm:$0xff]
  %v265 = vld [vmem:[%s0 + $0x6d0] sm:$0xff]
  %v266 = vld [vmem:[%s0 + $0x6d8] sm:$0xff]
  %v267 = vld [vmem:[%s0 + $0x6e0] sm:$0xff]
  %v268 = vld [vmem:[%s0 + $0x6e8] sm:$0xff]
  %v269 = vld [vmem:[%s0 + $0x6f0] sm:$0xff]
  %v270 = vld [vmem:[%s0 + $0x6f8] sm:$0xff]
  %v303 = vunpack.c.l.b16 %v15
  %v304 = vunpack.c.h.b16 %v15
  %v305 = vunpack.c.l.b16 %v16
  %v306 = vunpack.c.h.b16 %v16
  %v307 = vunpack.c.l.b16 %v17
  %v308 = vunpack.c.h.b16 %v17
  %v309 = vunpack.c.l.b16 %v18
  %v310 = vunpack.c.l.b16 %v19
  %v311 = vunpack.c.h.b16 %v19
  %v312 = vunpack.c.l.b16 %v20
  %v313 = vunpack.c.h.b16 %v20
  %v314 = vunpack.c.l.b16 %v21
  %v315 = vunpack.c.h.b16 %v21
  %v316 = vunpack.c.l.b16 %v22
  %v317 = vunpack.c.l.b16 %v23
  %v318 = vunpack.c.h.b16 %v23
  %v319 = vunpack.c.l.b16 %v24
  %v320 = vunpack.c.h.b16 %v24
  %v321 = vunpack.c.l.b16 %v25
  %v322 = vunpack.c.h.b16 %v25
  %v323 = vunpack.c.l.b16 %v26
  %v324 = vunpack.c.l.b16 %v27
  %v325 = vunpack.c.h.b16 %v27
  %v326 = vunpack.c.l.b16 %v28
  %v327 = vunpack.c.h.b16 %v28
  %v328 = vunpack.c.l.b16 %v29
  %v329 = vunpack.c.h.b16 %v29
  %v330 = vunpack.c.l.b16 %v30
  %v331 = vunpack.c.l.b16 %v31
  %v332 = vunpack.c.h.b16 %v31
  %v333 = vunpack.c.l.b16 %v32
  %v334 = vunpack.c.h.b16 %v32
  %v335 = vunpack.c.l.b16 %v33
  %v336 = vunpack.c.h.b16 %v33
  %v337 = vunpack.c.l.b16 %v34
  %v338 = vunpack.c.l.b16 %v35
  %v339 = vunpack.c.h.b16 %v35
  %v340 = vunpack.c.l.b16 %v36
  %v341 = vunpack.c.h.b16 %v36
  %v342 = vunpack.c.l.b16 %v37
  %v343 = vunpack.c.h.b16 %v37
  %v344 = vunpack.c.l.b16 %v38
  %v345 = vunpack.c.l.b16 %v39
  %v346 = vunpack.c.h.b16 %v39
  %v347 = vunpack.c.l.b16 %v40
  %v348 = vunpack.c.h.b16 %v40
  %v349 = vunpack.c.l.b16 %v41
  %v350 = vunpack.c.h.b16 %v41
  %v351 = vunpack.c.l.b16 %v42
  %v352 = vunpack.c.l.b16 %v43
  %v353 = vunpack.c.h.b16 %v43
  %v354 = vunpack.c.l.b16 %v44
  %v355 = vunpack.c.h.b16 %v44
  %v356 = vunpack.c.l.b16 %v45
  %v357 = vunpack.c.h.b16 %v45
  %v358 = vunpack.c.l.b16 %v46
  %v359 = vpack.c.b16 %v310, %v303
  %v360 = vpack.c.b16 %v311, %v304
  %v361 = vpack.c.b16 %v312, %v305
  %v362 = vpack.c.b16 %v313, %v306
  %v363 = vpack.c.b16 %v314, %v307
  %v364 = vpack.c.b16 %v315, %v308
  %v365 = vpack.c.b16 %v316, %v309
  %v366 = vpack.c.b16 %v324, %v317
  %v367 = vpack.c.b16 %v325, %v318
  %v368 = vpack.c.b16 %v326, %v319
  %v369 = vpack.c.b16 %v327, %v320
  %v370 = vpack.c.b16 %v328, %v321
  %v371 = vpack.c.b16 %v329, %v322
  %v372 = vpack.c.b16 %v330, %v323
  %v373 = vpack.c.b16 %v338, %v331
  %v374 = vpack.c.b16 %v339, %v332
  %v375 = vpack.c.b16 %v340, %v333
  %v376 = vpack.c.b16 %v341, %v334
  %v377 = vpack.c.b16 %v342, %v335
  %v378 = vpack.c.b16 %v343, %v336
  %v379 = vpack.c.b16 %v344, %v337
  %v380 = vpack.c.b16 %v352, %v345
  %v381 = vpack.c.b16 %v353, %v346
  %v382 = vpack.c.b16 %v354, %v347
  %v383 = vpack.c.b16 %v355, %v348
  %v384 = vpack.c.b16 %v356, %v349
  %v385 = vpack.c.b16 %v357, %v350
  %v386 = vpack.c.b16 %v358, %v351
  %v639 = vunpack.c.l.b16 %v47
  %v640 = vunpack.c.h.b16 %v47
  %v641 = vunpack.c.l.b16 %v48
  %v642 = vunpack.c.h.b16 %v48
  %v643 = vunpack.c.l.b16 %v49
  %v644 = vunpack.c.h.b16 %v49
  %v645 = vunpack.c.l.b16 %v50
  %v646 = vunpack.c.h.b16 %v50
  %v647 = vunpack.c.l.b16 %v51
  %v648 = vunpack.c.h.b16 %v51
  %v649 = vunpack.c.l.b16 %v52
  %v650 = vunpack.c.h.b16 %v52
  %v651 = vunpack.c.l.b16 %v53
  %v652 = vunpack.c.h.b16 %v53
  %v653 = vunpack.c.l.b16 %v54
  %v654 = vunpack.c.h.b16 %v54
  %v655 = vunpack.c.l.b16 %v55
  %v656 = vunpack.c.h.b16 %v55
  %v657 = vunpack.c.l.b16 %v56
  %v658 = vunpack.c.h.b16 %v56
  %v659 = vunpack.c.l.b16 %v57
  %v660 = vunpack.c.h.b16 %v57
  %v661 = vunpack.c.l.b16 %v58
  %v662 = vunpack.c.h.b16 %v58
  %v663 = vunpack.c.l.b16 %v59
  %v664 = vunpack.c.h.b16 %v59
  %v665 = vunpack.c.l.b16 %v60
  %v666 = vunpack.c.h.b16 %v60
  %v667 = vunpack.c.l.b16 %v61
  %v668 = vunpack.c.h.b16 %v61
  %v669 = vunpack.c.l.b16 %v62
  %v670 = vunpack.c.h.b16 %v62
  %v671 = vunpack.c.l.b16 %v63
  %v672 = vunpack.c.h.b16 %v63
  %v673 = vunpack.c.l.b16 %v64
  %v674 = vunpack.c.h.b16 %v64
  %v675 = vunpack.c.l.b16 %v65
  %v676 = vunpack.c.h.b16 %v65
  %v677 = vunpack.c.l.b16 %v66
  %v678 = vunpack.c.h.b16 %v66
  %v679 = vunpack.c.l.b16 %v67
  %v680 = vunpack.c.h.b16 %v67
  %v681 = vunpack.c.l.b16 %v68
  %v682 = vunpack.c.h.b16 %v68
  %v683 = vunpack.c.l.b16 %v69
  %v684 = vunpack.c.h.b16 %v69
  %v685 = vunpack.c.l.b16 %v70
  %v686 = vunpack.c.h.b16 %v70
  %v687 = vunpack.c.l.b16 %v71
  %v688 = vunpack.c.h.b16 %v71
  %v689 = vunpack.c.l.b16 %v72
  %v690 = vunpack.c.h.b16 %v72
  %v691 = vunpack.c.l.b16 %v73
  %v692 = vunpack.c.h.b16 %v73
  %v693 = vunpack.c.l.b16 %v74
  %v694 = vunpack.c.h.b16 %v74
  %v695 = vunpack.c.l.b16 %v75
  %v696 = vunpack.c.h.b16 %v75
  %v697 = vunpack.c.l.b16 %v76
  %v698 = vunpack.c.h.b16 %v76
  %v699 = vunpack.c.l.b16 %v77
  %v700 = vunpack.c.h.b16 %v77
  %v701 = vunpack.c.l.b16 %v78
  %v702 = vunpack.c.h.b16 %v78
  %v703 = vunpack.c.l.b16 %v79
  %v704 = vunpack.c.h.b16 %v79
  %v705 = vunpack.c.l.b16 %v80
  %v706 = vunpack.c.h.b16 %v80
  %v707 = vunpack.c.l.b16 %v81
  %v708 = vunpack.c.h.b16 %v81
  %v709 = vunpack.c.l.b16 %v82
  %v710 = vunpack.c.h.b16 %v82
  %v711 = vunpack.c.l.b16 %v83
  %v712 = vunpack.c.h.b16 %v83
  %v713 = vunpack.c.l.b16 %v84
  %v714 = vunpack.c.h.b16 %v84
  %v715 = vunpack.c.l.b16 %v85
  %v716 = vunpack.c.h.b16 %v85
  %v717 = vunpack.c.l.b16 %v86
  %v718 = vunpack.c.h.b16 %v86
  %v719 = vunpack.c.l.b16 %v87
  %v720 = vunpack.c.h.b16 %v87
  %v721 = vunpack.c.l.b16 %v88
  %v722 = vunpack.c.h.b16 %v88
  %v723 = vunpack.c.l.b16 %v89
  %v724 = vunpack.c.h.b16 %v89
  %v725 = vunpack.c.l.b16 %v90
  %v726 = vunpack.c.h.b16 %v90
  %v727 = vunpack.c.l.b16 %v91
  %v728 = vunpack.c.h.b16 %v91
  %v729 = vunpack.c.l.b16 %v92
  %v730 = vunpack.c.h.b16 %v92
  %v731 = vunpack.c.l.b16 %v93
  %v732 = vunpack.c.h.b16 %v93
  %v733 = vunpack.c.l.b16 %v94
  %v734 = vunpack.c.h.b16 %v94
  %v735 = vunpack.c.l.b16 %v95
  %v736 = vunpack.c.h.b16 %v95
  %v737 = vunpack.c.l.b16 %v96
  %v738 = vunpack.c.h.b16 %v96
  %v739 = vunpack.c.l.b16 %v97
  %v740 = vunpack.c.h.b16 %v97
  %v741 = vunpack.c.l.b16 %v98
  %v742 = vunpack.c.h.b16 %v98
  %v743 = vunpack.c.l.b16 %v99
  %v744 = vunpack.c.h.b16 %v99
  %v745 = vunpack.c.l.b16 %v100
  %v746 = vunpack.c.h.b16 %v100
  %v747 = vunpack.c.l.b16 %v101
  %v748 = vunpack.c.h.b16 %v101
  %v749 = vunpack.c.l.b16 %v102
  %v750 = vunpack.c.h.b16 %v102
  %v751 = vunpack.c.l.b16 %v103
  %v752 = vunpack.c.h.b16 %v103
  %v753 = vunpack.c.l.b16 %v104
  %v754 = vunpack.c.h.b16 %v104
  %v755 = vunpack.c.l.b16 %v105
  %v756 = vunpack.c.h.b16 %v105
  %v757 = vunpack.c.l.b16 %v106
  %v758 = vunpack.c.h.b16 %v106
  %v759 = vunpack.c.l.b16 %v107
  %v760 = vunpack.c.h.b16 %v107
  %v761 = vunpack.c.l.b16 %v108
  %v762 = vunpack.c.h.b16 %v108
  %v763 = vunpack.c.l.b16 %v109
  %v764 = vunpack.c.h.b16 %v109
  %v765 = vunpack.c.l.b16 %v110
  %v766 = vunpack.c.h.b16 %v110
  %v767 = vunpack.c.l.b16 %v111
  %v768 = vunpack.c.h.b16 %v111
  %v769 = vunpack.c.l.b16 %v112
  %v770 = vunpack.c.h.b16 %v112
  %v771 = vunpack.c.l.b16 %v113
  %v772 = vunpack.c.h.b16 %v113
  %v773 = vunpack.c.l.b16 %v114
  %v774 = vunpack.c.h.b16 %v114
  %v775 = vunpack.c.l.b16 %v115
  %v776 = vunpack.c.h.b16 %v115
  %v777 = vunpack.c.l.b16 %v116
  %v778 = vunpack.c.h.b16 %v116
  %v779 = vunpack.c.l.b16 %v117
  %v780 = vunpack.c.h.b16 %v117
  %v781 = vunpack.c.l.b16 %v118
  %v782 = vunpack.c.h.b16 %v118
  %v783 = vunpack.c.l.b16 %v119
  %v784 = vunpack.c.h.b16 %v119
  %v785 = vunpack.c.l.b16 %v120
  %v786 = vunpack.c.h.b16 %v120
  %v787 = vunpack.c.l.b16 %v121
  %v788 = vunpack.c.h.b16 %v121
  %v789 = vunpack.c.l.b16 %v122
  %v790 = vunpack.c.h.b16 %v122
  %v791 = vunpack.c.l.b16 %v123
  %v792 = vunpack.c.h.b16 %v123
  %v793 = vunpack.c.l.b16 %v124
  %v794 = vunpack.c.h.b16 %v124
  %v795 = vunpack.c.l.b16 %v125
  %v796 = vunpack.c.h.b16 %v125
  %v797 = vunpack.c.l.b16 %v126
  %v798 = vunpack.c.h.b16 %v126
  %v799 = vunpack.c.l.b16 %v127
  %v800 = vunpack.c.h.b16 %v127
  %v801 = vunpack.c.l.b16 %v128
  %v802 = vunpack.c.h.b16 %v128
  %v803 = vunpack.c.l.b16 %v129
  %v804 = vunpack.c.h.b16 %v129
  %v805 = vunpack.c.l.b16 %v130
  %v806 = vunpack.c.h.b16 %v130
  %v807 = vunpack.c.l.b16 %v131
  %v808 = vunpack.c.h.b16 %v131
  %v809 = vunpack.c.l.b16 %v132
  %v810 = vunpack.c.h.b16 %v132
  %v811 = vunpack.c.l.b16 %v133
  %v812 = vunpack.c.h.b16 %v133
  %v813 = vunpack.c.l.b16 %v134
  %v814 = vunpack.c.h.b16 %v134
  %v815 = vunpack.c.l.b16 %v135
  %v816 = vunpack.c.h.b16 %v135
  %v817 = vunpack.c.l.b16 %v136
  %v818 = vunpack.c.h.b16 %v136
  %v819 = vunpack.c.l.b16 %v137
  %v820 = vunpack.c.h.b16 %v137
  %v821 = vunpack.c.l.b16 %v138
  %v822 = vunpack.c.h.b16 %v138
  %v823 = vunpack.c.l.b16 %v139
  %v824 = vunpack.c.h.b16 %v139
  %v825 = vunpack.c.l.b16 %v140
  %v826 = vunpack.c.h.b16 %v140
  %v827 = vunpack.c.l.b16 %v141
  %v828 = vunpack.c.h.b16 %v141
  %v829 = vunpack.c.l.b16 %v142
  %v830 = vunpack.c.h.b16 %v142
  %v831 = vunpack.c.l.b16 %v143
  %v832 = vunpack.c.h.b16 %v143
  %v833 = vunpack.c.l.b16 %v144
  %v834 = vunpack.c.h.b16 %v144
  %v835 = vunpack.c.l.b16 %v145
  %v836 = vunpack.c.h.b16 %v145
  %v837 = vunpack.c.l.b16 %v146
  %v838 = vunpack.c.h.b16 %v146
  %v839 = vunpack.c.l.b16 %v147
  %v840 = vunpack.c.h.b16 %v147
  %v841 = vunpack.c.l.b16 %v148
  %v842 = vunpack.c.h.b16 %v148
  %v843 = vunpack.c.l.b16 %v149
  %v844 = vunpack.c.h.b16 %v149
  %v845 = vunpack.c.l.b16 %v150
  %v846 = vunpack.c.h.b16 %v150
  %v847 = vunpack.c.l.b16 %v151
  %v848 = vunpack.c.h.b16 %v151
  %v849 = vunpack.c.l.b16 %v152
  %v850 = vunpack.c.h.b16 %v152
  %v851 = vunpack.c.l.b16 %v153
  %v852 = vunpack.c.h.b16 %v153
  %v853 = vunpack.c.l.b16 %v154
  %v854 = vunpack.c.h.b16 %v154
  %v855 = vunpack.c.l.b16 %v155
  %v856 = vunpack.c.h.b16 %v155
  %v857 = vunpack.c.l.b16 %v156
  %v858 = vunpack.c.h.b16 %v156
  %v859 = vunpack.c.l.b16 %v157
  %v860 = vunpack.c.h.b16 %v157
  %v861 = vunpack.c.l.b16 %v158
  %v862 = vunpack.c.h.b16 %v158
  %v863 = vunpack.c.l.b16 %v159
  %v864 = vunpack.c.h.b16 %v159
  %v865 = vunpack.c.l.b16 %v160
  %v866 = vunpack.c.h.b16 %v160
  %v867 = vunpack.c.l.b16 %v161
  %v868 = vunpack.c.h.b16 %v161
  %v869 = vunpack.c.l.b16 %v162
  %v870 = vunpack.c.h.b16 %v162
  %v871 = vunpack.c.l.b16 %v163
  %v872 = vunpack.c.h.b16 %v163
  %v873 = vunpack.c.l.b16 %v164
  %v874 = vunpack.c.h.b16 %v164
  %v875 = vunpack.c.l.b16 %v165
  %v876 = vunpack.c.h.b16 %v165
  %v877 = vunpack.c.l.b16 %v166
  %v878 = vunpack.c.h.b16 %v166
  %v879 = vunpack.c.l.b16 %v167
  %v880 = vunpack.c.h.b16 %v167
  %v881 = vunpack.c.l.b16 %v168
  %v882 = vunpack.c.h.b16 %v168
  %v883 = vunpack.c.l.b16 %v169
  %v884 = vunpack.c.h.b16 %v169
  %v885 = vunpack.c.l.b16 %v170
  %v886 = vunpack.c.h.b16 %v170
  %v887 = vunpack.c.l.b16 %v171
  %v888 = vunpack.c.h.b16 %v171
  %v889 = vunpack.c.l.b16 %v172
  %v890 = vunpack.c.h.b16 %v172
  %v891 = vunpack.c.l.b16 %v173
  %v892 = vunpack.c.h.b16 %v173
  %v893 = vunpack.c.l.b16 %v174
  %v894 = vunpack.c.h.b16 %v174
  %v895 = vunpack.c.l.b16 %v175
  %v896 = vunpack.c.h.b16 %v175
  %v897 = vunpack.c.l.b16 %v176
  %v898 = vunpack.c.h.b16 %v176
  %v899 = vunpack.c.l.b16 %v177
  %v900 = vunpack.c.h.b16 %v177
  %v901 = vunpack.c.l.b16 %v178
  %v902 = vunpack.c.h.b16 %v178
  %v903 = vunpack.c.l.b16 %v179
  %v904 = vunpack.c.h.b16 %v179
  %v905 = vunpack.c.l.b16 %v180
  %v906 = vunpack.c.h.b16 %v180
  %v907 = vunpack.c.l.b16 %v181
  %v908 = vunpack.c.h.b16 %v181
  %v909 = vunpack.c.l.b16 %v182
  %v910 = vunpack.c.h.b16 %v182
  %v911 = vunpack.c.l.b16 %v183
  %v912 = vunpack.c.h.b16 %v183
  %v913 = vunpack.c.l.b16 %v184
  %v914 = vunpack.c.h.b16 %v184
  %v915 = vunpack.c.l.b16 %v185
  %v916 = vunpack.c.h.b16 %v185
  %v917 = vunpack.c.l.b16 %v186
  %v918 = vunpack.c.h.b16 %v186
  %v919 = vunpack.c.l.b16 %v187
  %v920 = vunpack.c.h.b16 %v187
  %v921 = vunpack.c.l.b16 %v188
  %v922 = vunpack.c.h.b16 %v188
  %v923 = vunpack.c.l.b16 %v189
  %v924 = vunpack.c.h.b16 %v189
  %v925 = vunpack.c.l.b16 %v190
  %v926 = vunpack.c.h.b16 %v190
  %v927 = vunpack.c.l.b16 %v191
  %v928 = vunpack.c.h.b16 %v191
  %v929 = vunpack.c.l.b16 %v192
  %v930 = vunpack.c.h.b16 %v192
  %v931 = vunpack.c.l.b16 %v193
  %v932 = vunpack.c.h.b16 %v193
  %v933 = vunpack.c.l.b16 %v194
  %v934 = vunpack.c.h.b16 %v194
  %v935 = vunpack.c.l.b16 %v195
  %v936 = vunpack.c.h.b16 %v195
  %v937 = vunpack.c.l.b16 %v196
  %v938 = vunpack.c.h.b16 %v196
  %v939 = vunpack.c.l.b16 %v197
  %v940 = vunpack.c.h.b16 %v197
  %v941 = vunpack.c.l.b16 %v198
  %v942 = vunpack.c.h.b16 %v198
  %v943 = vunpack.c.l.b16 %v199
  %v944 = vunpack.c.h.b16 %v199
  %v945 = vunpack.c.l.b16 %v200
  %v946 = vunpack.c.h.b16 %v200
  %v947 = vunpack.c.l.b16 %v201
  %v948 = vunpack.c.h.b16 %v201
  %v949 = vunpack.c.l.b16 %v202
  %v950 = vunpack.c.h.b16 %v202
  %v951 = vunpack.c.l.b16 %v203
  %v952 = vunpack.c.h.b16 %v203
  %v953 = vunpack.c.l.b16 %v204
  %v954 = vunpack.c.h.b16 %v204
  %v955 = vunpack.c.l.b16 %v205
  %v956 = vunpack.c.h.b16 %v205
  %v957 = vunpack.c.l.b16 %v206
  %v958 = vunpack.c.h.b16 %v206
  %v959 = vunpack.c.l.b16 %v207
  %v960 = vunpack.c.h.b16 %v207
  %v961 = vunpack.c.l.b16 %v208
  %v962 = vunpack.c.h.b16 %v208
  %v963 = vunpack.c.l.b16 %v209
  %v964 = vunpack.c.h.b16 %v209
  %v965 = vunpack.c.l.b16 %v210
  %v966 = vunpack.c.h.b16 %v210
  %v967 = vunpack.c.l.b16 %v211
  %v968 = vunpack.c.h.b16 %v211
  %v969 = vunpack.c.l.b16 %v212
  %v970 = vunpack.c.h.b16 %v212
  %v971 = vunpack.c.l.b16 %v213
  %v972 = vunpack.c.h.b16 %v213
  %v973 = vunpack.c.l.b16 %v214
  %v974 = vunpack.c.h.b16 %v214
  %v975 = vunpack.c.l.b16 %v215
  %v976 = vunpack.c.h.b16 %v215
  %v977 = vunpack.c.l.b16 %v216
  %v978 = vunpack.c.h.b16 %v216
  %v979 = vunpack.c.l.b16 %v217
  %v980 = vunpack.c.h.b16 %v217
  %v981 = vunpack.c.l.b16 %v218
  %v982 = vunpack.c.h.b16 %v218
  %v983 = vunpack.c.l.b16 %v219
  %v984 = vunpack.c.h.b16 %v219
  %v985 = vunpack.c.l.b16 %v220
  %v986 = vunpack.c.h.b16 %v220
  %v987 = vunpack.c.l.b16 %v221
  %v988 = vunpack.c.h.b16 %v221
  %v989 = vunpack.c.l.b16 %v222
  %v990 = vunpack.c.h.b16 %v222
  %v991 = vunpack.c.l.b16 %v223
  %v992 = vunpack.c.h.b16 %v223
  %v993 = vunpack.c.l.b16 %v224
  %v994 = vunpack.c.h.b16 %v224
  %v995 = vunpack.c.l.b16 %v225
  %v996 = vunpack.c.h.b16 %v225
  %v997 = vunpack.c.l.b16 %v226
  %v998 = vunpack.c.h.b16 %v226
  %v999 = vunpack.c.l.b16 %v227
  %v1000 = vunpack.c.h.b16 %v227
  %v1001 = vunpack.c.l.b16 %v228
  %v1002 = vunpack.c.h.b16 %v228
  %v1003 = vunpack.c.l.b16 %v229
  %v1004 = vunpack.c.h.b16 %v229
  %v1005 = vunpack.c.l.b16 %v230
  %v1006 = vunpack.c.h.b16 %v230
  %v1007 = vunpack.c.l.b16 %v231
  %v1008 = vunpack.c.h.b16 %v231
  %v1009 = vunpack.c.l.b16 %v232
  %v1010 = vunpack.c.h.b16 %v232
  %v1011 = vunpack.c.l.b16 %v233
  %v1012 = vunpack.c.h.b16 %v233
  %v1013 = vunpack.c.l.b16 %v234
  %v1014 = vunpack.c.h.b16 %v234
  %v1015 = vunpack.c.l.b16 %v235
  %v1016 = vunpack.c.h.b16 %v235
  %v1017 = vunpack.c.l.b16 %v236
  %v1018 = vunpack.c.h.b16 %v236
  %v1019 = vunpack.c.l.b16 %v237
  %v1020 = vunpack.c.h.b16 %v237
  %v1021 = vunpack.c.l.b16 %v238
  %v1022 = vunpack.c.h.b16 %v238
  %v1023 = vunpack.c.l.b16 %v239
  %v1024 = vunpack.c.h.b16 %v239
  %v1025 = vunpack.c.l.b16 %v240
  %v1026 = vunpack.c.h.b16 %v240
  %v1027 = vunpack.c.l.b16 %v241
  %v1028 = vunpack.c.h.b16 %v241
  %v1029 = vunpack.c.l.b16 %v242
  %v1030 = vunpack.c.h.b16 %v242
  %v1031 = vunpack.c.l.b16 %v243
  %v1032 = vunpack.c.h.b16 %v243
  %v1033 = vunpack.c.l.b16 %v244
  %v1034 = vunpack.c.h.b16 %v244
  %v1035 = vunpack.c.l.b16 %v245
  %v1036 = vunpack.c.h.b16 %v245
  %v1037 = vunpack.c.l.b16 %v246
  %v1038 = vunpack.c.h.b16 %v246
  %v1039 = vunpack.c.l.b16 %v247
  %v1040 = vunpack.c.h.b16 %v247
  %v1041 = vunpack.c.l.b16 %v248
  %v1042 = vunpack.c.h.b16 %v248
  %v1043 = vunpack.c.l.b16 %v249
  %v1044 = vunpack.c.h.b16 %v249
  %v1045 = vunpack.c.l.b16 %v250
  %v1046 = vunpack.c.h.b16 %v250
  %v1047 = vunpack.c.l.b16 %v251
  %v1048 = vunpack.c.h.b16 %v251
  %v1049 = vunpack.c.l.b16 %v252
  %v1050 = vunpack.c.h.b16 %v252
  %v1051 = vunpack.c.l.b16 %v253
  %v1052 = vunpack.c.h.b16 %v253
  %v1053 = vunpack.c.l.b16 %v254
  %v1054 = vunpack.c.h.b16 %v254
  %v1055 = vunpack.c.l.b16 %v255
  %v1056 = vunpack.c.h.b16 %v255
  %v1057 = vunpack.c.l.b16 %v256
  %v1058 = vunpack.c.h.b16 %v256
  %v1059 = vunpack.c.l.b16 %v257
  %v1060 = vunpack.c.h.b16 %v257
  %v1061 = vunpack.c.l.b16 %v258
  %v1062 = vunpack.c.h.b16 %v258
  %v1063 = vunpack.c.l.b16 %v259
  %v1064 = vunpack.c.h.b16 %v259
  %v1065 = vunpack.c.l.b16 %v260
  %v1066 = vunpack.c.h.b16 %v260
  %v1067 = vunpack.c.l.b16 %v261
  %v1068 = vunpack.c.h.b16 %v261
  %v1069 = vunpack.c.l.b16 %v262
  %v1070 = vunpack.c.h.b16 %v262
  %v1071 = vunpack.c.l.b16 %v263
  %v1072 = vunpack.c.h.b16 %v263
  %v1073 = vunpack.c.l.b16 %v264
  %v1074 = vunpack.c.h.b16 %v264
  %v1075 = vunpack.c.l.b16 %v265
  %v1076 = vunpack.c.h.b16 %v265
  %v1077 = vunpack.c.l.b16 %v266
  %v1078 = vunpack.c.h.b16 %v266
  %v1079 = vunpack.c.l.b16 %v267
  %v1080 = vunpack.c.h.b16 %v267
  %v1081 = vunpack.c.l.b16 %v268
  %v1082 = vunpack.c.h.b16 %v268
  %v1083 = vunpack.c.l.b16 %v269
  %v1084 = vunpack.c.h.b16 %v269
  %v1085 = vunpack.c.l.b16 %v270
  %v1086 = vunpack.c.h.b16 %v270
  %v1087 = vpack.c.b16 %v643, %v639
  %v1088 = vpack.c.b16 %v644, %v640
  %v1089 = vpack.c.b16 %v645, %v641
  %v1090 = vpack.c.b16 %v646, %v642
  %v1091 = vpack.c.b16 %v651, %v647
  %v1092 = vpack.c.b16 %v652, %v648
  %v1093 = vpack.c.b16 %v653, %v649
  %v1094 = vpack.c.b16 %v654, %v650
  %v1095 = vpack.c.b16 %v659, %v655
  %v1096 = vpack.c.b16 %v660, %v656
  %v1097 = vpack.c.b16 %v661, %v657
  %v1098 = vpack.c.b16 %v662, %v658
  %v1099 = vpack.c.b16 %v667, %v663
  %v1100 = vpack.c.b16 %v668, %v664
  %v1101 = vpack.c.b16 %v669, %v665
  %v1102 = vpack.c.b16 %v670, %v666
  %v1103 = vpack.c.b16 %v675, %v671
  %v1104 = vpack.c.b16 %v676, %v672
  %v1105 = vpack.c.b16 %v677, %v673
  %v1106 = vpack.c.b16 %v678, %v674
  %v1107 = vpack.c.b16 %v683, %v679
  %v1108 = vpack.c.b16 %v684, %v680
  %v1109 = vpack.c.b16 %v685, %v681
  %v1110 = vpack.c.b16 %v686, %v682
  %v1111 = vpack.c.b16 %v691, %v687
  %v1112 = vpack.c.b16 %v692, %v688
  %v1113 = vpack.c.b16 %v693, %v689
  %v1114 = vpack.c.b16 %v694, %v690
  %v1115 = vpack.c.b16 %v699, %v695
  %v1116 = vpack.c.b16 %v700, %v696
  %v1117 = vpack.c.b16 %v701, %v697
  %v1118 = vpack.c.b16 %v702, %v698
  %v1119 = vpack.c.b16 %v707, %v703
  %v1120 = vpack.c.b16 %v708, %v704
  %v1121 = vpack.c.b16 %v709, %v705
  %v1122 = vpack.c.b16 %v710, %v706
  %v1123 = vpack.c.b16 %v715, %v711
  %v1124 = vpack.c.b16 %v716, %v712
  %v1125 = vpack.c.b16 %v717, %v713
  %v1126 = vpack.c.b16 %v718, %v714
  %v1127 = vpack.c.b16 %v723, %v719
  %v1128 = vpack.c.b16 %v724, %v720
  %v1129 = vpack.c.b16 %v725, %v721
  %v1130 = vpack.c.b16 %v726, %v722
  %v1131 = vpack.c.b16 %v731, %v727
  %v1132 = vpack.c.b16 %v732, %v728
  %v1133 = vpack.c.b16 %v733, %v729
  %v1134 = vpack.c.b16 %v734, %v730
  %v1135 = vpack.c.b16 %v739, %v735
  %v1136 = vpack.c.b16 %v740, %v736
  %v1137 = vpack.c.b16 %v741, %v737
  %v1138 = vpack.c.b16 %v742, %v738
  %v1139 = vpack.c.b16 %v747, %v743
  %v1140 = vpack.c.b16 %v748, %v744
  %v1141 = vpack.c.b16 %v749, %v745
  %v1142 = vpack.c.b16 %v750, %v746
  %v1143 = vpack.c.b16 %v755, %v751
  %v1144 = vpack.c.b16 %v756, %v752
  %v1145 = vpack.c.b16 %v757, %v753
  %v1146 = vpack.c.b16 %v758, %v754
  %v1147 = vpack.c.b16 %v763, %v759
  %v1148 = vpack.c.b16 %v764, %v760
  %v1149 = vpack.c.b16 %v765, %v761
  %v1150 = vpack.c.b16 %v766, %v762
  %v1151 = vpack.c.b16 %v771, %v767
  %v1152 = vpack.c.b16 %v772, %v768
  %v1153 = vpack.c.b16 %v773, %v769
  %v1154 = vpack.c.b16 %v774, %v770
  %v1155 = vpack.c.b16 %v779, %v775
  %v1156 = vpack.c.b16 %v780, %v776
  %v1157 = vpack.c.b16 %v781, %v777
  %v1158 = vpack.c.b16 %v782, %v778
  %v1159 = vpack.c.b16 %v787, %v783
  %v1160 = vpack.c.b16 %v788, %v784
  %v1161 = vpack.c.b16 %v789, %v785
  %v1162 = vpack.c.b16 %v790, %v786
  %v1163 = vpack.c.b16 %v795, %v791
  %v1164 = vpack.c.b16 %v796, %v792
  %v1165 = vpack.c.b16 %v797, %v793
  %v1166 = vpack.c.b16 %v798, %v794
  %v1167 = vpack.c.b16 %v803, %v799
  %v1168 = vpack.c.b16 %v804, %v800
  %v1169 = vpack.c.b16 %v805, %v801
  %v1170 = vpack.c.b16 %v806, %v802
  %v1171 = vpack.c.b16 %v811, %v807
  %v1172 = vpack.c.b16 %v812, %v808
  %v1173 = vpack.c.b16 %v813, %v809
  %v1174 = vpack.c.b16 %v814, %v810
  %v1175 = vpack.c.b16 %v819, %v815
  %v1176 = vpack.c.b16 %v820, %v816
  %v1177 = vpack.c.b16 %v821, %v817
  %v1178 = vpack.c.b16 %v822, %v818
  %v1179 = vpack.c.b16 %v827, %v823
  %v1180 = vpack.c.b16 %v828, %v824
  %v1181 = vpack.c.b16 %v829, %v825
  %v1182 = vpack.c.b16 %v830, %v826
  %v1183 = vpack.c.b16 %v835, %v831
  %v1184 = vpack.c.b16 %v836, %v832
  %v1185 = vpack.c.b16 %v837, %v833
  %v1186 = vpack.c.b16 %v838, %v834
  %v1187 = vpack.c.b16 %v843, %v839
  %v1188 = vpack.c.b16 %v844, %v840
  %v1189 = vpack.c.b16 %v845, %v841
  %v1190 = vpack.c.b16 %v846, %v842
  %v1191 = vpack.c.b16 %v851, %v847
  %v1192 = vpack.c.b16 %v852, %v848
  %v1193 = vpack.c.b16 %v853, %v849
  %v1194 = vpack.c.b16 %v854, %v850
  %v1195 = vpack.c.b16 %v859, %v855
  %v1196 = vpack.c.b16 %v860, %v856
  %v1197 = vpack.c.b16 %v861, %v857
  %v1198 = vpack.c.b16 %v862, %v858
  %v1199 = vpack.c.b16 %v867, %v863
  %v1200 = vpack.c.b16 %v868, %v864
  %v1201 = vpack.c.b16 %v869, %v865
  %v1202 = vpack.c.b16 %v870, %v866
  %v1203 = vpack.c.b16 %v875, %v871
  %v1204 = vpack.c.b16 %v876, %v872
  %v1205 = vpack.c.b16 %v877, %v873
  %v1206 = vpack.c.b16 %v878, %v874
  %v1207 = vpack.c.b16 %v883, %v879
  %v1208 = vpack.c.b16 %v884, %v880
  %v1209 = vpack.c.b16 %v885, %v881
  %v1210 = vpack.c.b16 %v886, %v882
  %v1211 = vpack.c.b16 %v891, %v887
  %v1212 = vpack.c.b16 %v892, %v888
  %v1213 = vpack.c.b16 %v893, %v889
  %v1214 = vpack.c.b16 %v894, %v890
  %v1215 = vpack.c.b16 %v899, %v895
  %v1216 = vpack.c.b16 %v900, %v896
  %v1217 = vpack.c.b16 %v901, %v897
  %v1218 = vpack.c.b16 %v902, %v898
  %v1219 = vpack.c.b16 %v907, %v903
  %v1220 = vpack.c.b16 %v908, %v904
  %v1221 = vpack.c.b16 %v909, %v905
  %v1222 = vpack.c.b16 %v910, %v906
  %v1223 = vpack.c.b16 %v915, %v911
  %v1224 = vpack.c.b16 %v916, %v912
  %v1225 = vpack.c.b16 %v917, %v913
  %v1226 = vpack.c.b16 %v918, %v914
  %v1227 = vpack.c.b16 %v923, %v919
  %v1228 = vpack.c.b16 %v924, %v920
  %v1229 = vpack.c.b16 %v925, %v921
  %v1230 = vpack.c.b16 %v926, %v922
  %v1231 = vpack.c.b16 %v931, %v927
  %v1232 = vpack.c.b16 %v932, %v928
  %v1233 = vpack.c.b16 %v933, %v929
  %v1234 = vpack.c.b16 %v934, %v930
  %v1235 = vpack.c.b16 %v939, %v935
  %v1236 = vpack.c.b16 %v940, %v936
  %v1237 = vpack.c.b16 %v941, %v937
  %v1238 = vpack.c.b16 %v942, %v938
  %v1239 = vpack.c.b16 %v947, %v943
  %v1240 = vpack.c.b16 %v948, %v944
  %v1241 = vpack.c.b16 %v949, %v945
  %v1242 = vpack.c.b16 %v950, %v946
  %v1243 = vpack.c.b16 %v955, %v951
  %v1244 = vpack.c.b16 %v956, %v952
  %v1245 = vpack.c.b16 %v957, %v953
  %v1246 = vpack.c.b16 %v958, %v954
  %v1247 = vpack.c.b16 %v963, %v959
  %v1248 = vpack.c.b16 %v964, %v960
  %v1249 = vpack.c.b16 %v965, %v961
  %v1250 = vpack.c.b16 %v966, %v962
  %v1251 = vpack.c.b16 %v971, %v967
  %v1252 = vpack.c.b16 %v972, %v968
  %v1253 = vpack.c.b16 %v973, %v969
  %v1254 = vpack.c.b16 %v974, %v970
  %v1255 = vpack.c.b16 %v979, %v975
  %v1256 = vpack.c.b16 %v980, %v976
  %v1257 = vpack.c.b16 %v981, %v977
  %v1258 = vpack.c.b16 %v982, %v978
  %v1259 = vpack.c.b16 %v987, %v983
  %v1260 = vpack.c.b16 %v988, %v984
  %v1261 = vpack.c.b16 %v989, %v985
  %v1262 = vpack.c.b16 %v990, %v986
  %v1263 = vpack.c.b16 %v995, %v991
  %v1264 = vpack.c.b16 %v996, %v992
  %v1265 = vpack.c.b16 %v997, %v993
  %v1266 = vpack.c.b16 %v998, %v994
  %v1267 = vpack.c.b16 %v1003, %v999
  %v1268 = vpack.c.b16 %v1004, %v1000
  %v1269 = vpack.c.b16 %v1005, %v1001
  %v1270 = vpack.c.b16 %v1006, %v1002
  %v1271 = vpack.c.b16 %v1011, %v1007
  %v1272 = vpack.c.b16 %v1012, %v1008
  %v1273 = vpack.c.b16 %v1013, %v1009
  %v1274 = vpack.c.b16 %v1014, %v1010
  %v1275 = vpack.c.b16 %v1019, %v1015
  %v1276 = vpack.c.b16 %v1020, %v1016
  %v1277 = vpack.c.b16 %v1021, %v1017
  %v1278 = vpack.c.b16 %v1022, %v1018
  %v1279 = vpack.c.b16 %v1027, %v1023
  %v1280 = vpack.c.b16 %v1028, %v1024
  %v1281 = vpack.c.b16 %v1029, %v1025
  %v1282 = vpack.c.b16 %v1030, %v1026
  %v1283 = vpack.c.b16 %v1035, %v1031
  %v1284 = vpack.c.b16 %v1036, %v1032
  %v1285 = vpack.c.b16 %v1037, %v1033
  %v1286 = vpack.c.b16 %v1038, %v1034
  %v1287 = vpack.c.b16 %v1043, %v1039
  %v1288 = vpack.c.b16 %v1044, %v1040
  %v1289 = vpack.c.b16 %v1045, %v1041
  %v1290 = vpack.c.b16 %v1046, %v1042
  %v1291 = vpack.c.b16 %v1051, %v1047
  %v1292 = vpack.c.b16 %v1052, %v1048
  %v1293 = vpack.c.b16 %v1053, %v1049
  %v1294 = vpack.c.b16 %v1054, %v1050
  %v1295 = vpack.c.b16 %v1059, %v1055
  %v1296 = vpack.c.b16 %v1060, %v1056
  %v1297 = vpack.c.b16 %v1061, %v1057
  %v1298 = vpack.c.b16 %v1062, %v1058
  %v1299 = vpack.c.b16 %v1067, %v1063
  %v1300 = vpack.c.b16 %v1068, %v1064
  %v1301 = vpack.c.b16 %v1069, %v1065
  %v1302 = vpack.c.b16 %v1070, %v1066
  %v1303 = vpack.c.b16 %v1075, %v1071
  %v1304 = vpack.c.b16 %v1076, %v1072
  %v1305 = vpack.c.b16 %v1077, %v1073
  %v1306 = vpack.c.b16 %v1078, %v1074
  %v1307 = vpack.c.b16 %v1083, %v1079
  %v1308 = vpack.c.b16 %v1084, %v1080
  %v1309 = vpack.c.b16 %v1085, %v1081
  %v1310 = vpack.c.b16 %v1086, %v1082
  %1535 = vmatprep.subr.bf16.mxu0 %v1088
  %1536 = vmatpush1.bf16.msra.mxu0 %v1087
  %1537 = vmatprep.subr.bf16.mxu0 %v1092
  %1538 = vmatpush1.bf16.msra.mxu0 %v1091
  %1539 = vmatprep.subr.bf16.mxu0 %v1096
  %1540 = vmatpush1.bf16.msra.mxu0 %v1095
  %1541 = vmatprep.subr.bf16.mxu0 %v1100
  %1542 = vmatpush1.bf16.msra.mxu0 %v1099
  %1543 = vmatprep.subr.bf16.mxu0 %v1104
  %1544 = vmatpush1.bf16.msra.mxu0 %v1103
  %1545 = vmatprep.subr.bf16.mxu0 %v1108
  %1546 = vmatpush1.bf16.msra.mxu0 %v1107
  %1547 = vmatprep.subr.bf16.mxu0 %v1112
  %1548 = vmatpush1.bf16.msra.mxu0 %v1111
  %1549 = vmatprep.subr.bf16.mxu0 %v1116
  %1550 = vmatpush1.bf16.msra.mxu0 %v1115
  %1551 = vmatprep.subr.bf16.mxu0 %v1120
  %1552 = vmatpush1.bf16.msra.mxu0 %v1119
  %1553 = vmatprep.subr.bf16.mxu0 %v1124
  %1554 = vmatpush1.bf16.msra.mxu0 %v1123
  %1555 = vmatprep.subr.bf16.mxu0 %v1128
  %1556 = vmatpush1.bf16.msra.mxu0 %v1127
  %1557 = vmatprep.subr.bf16.mxu0 %v1132
  %1558 = vmatpush1.bf16.msra.mxu0 %v1131
  %1559 = vmatprep.subr.bf16.mxu0 %v1136
  %1560 = vmatpush1.bf16.msra.mxu0 %v1135
  %1561 = vmatprep.subr.bf16.mxu0 %v1140
  %1562 = vmatpush1.bf16.msra.mxu0 %v1139
  %1563 = vmatprep.subr.bf16.mxu0 %v1144
  %1564 = vmatpush1.bf16.msra.mxu0 %v1143
  %1565 = vmatprep.subr.bf16.mxu0 %v1148
  %1566 = vmatpush1.bf16.msra.mxu0 %v1147
  %1567 = vmatprep.mubr.bf16.mxu0 %v360
  %1568 = vmatmul.mubr.bf16.gmra.mrb[0].mxu0 %v359
  %v1569 = vpop.f32.mrb[0].mxu0
  %v1570 = vadd.f32 0.0, %v1569
  %v1571 = vpop.f32.mrb[0].mxu0
  %v1572 = vadd.f32 0.0, %v1571
  %v1573 = vpop.f32.mrb[0].mxu0
  %v1574 = vadd.f32 0.0, %v1573
  %v1575 = vpop.f32.mrb[0].mxu0
  %v1576 = vadd.f32 0.0, %v1575
  %1577 = vmatprep.mubr.bf16.mxu0 %v367
  %1578 = vmatmul.mubr.bf16.gmra.mrb[0].mxu0 %v366
  %v1579 = vpop.f32.mrb[0].mxu0
  %v1580 = vadd.f32 0.0, %v1579
  %v1581 = vpop.f32.mrb[0].mxu0
  %v1582 = vadd.f32 0.0, %v1581
  %v1583 = vpop.f32.mrb[0].mxu0
  %v1584 = vadd.f32 0.0, %v1583
  %v1585 = vpop.f32.mrb[0].mxu0
  %v1586 = vadd.f32 0.0, %v1585
  %1587 = vmatprep.mubr.bf16.mxu0 %v374
  %1588 = vmatmul.mubr.bf16.gmra.mrb[0].mxu0 %v373
  %v1589 = vpop.f32.mrb[0].mxu0
  %v1590 = vadd.f32 0.0, %v1589
  %v1591 = vpop.f32.mrb[0].mxu0
  %v1592 = vadd.f32 0.0, %v1591
  %v1593 = vpop.f32.mrb[0].mxu0
  %v1594 = vadd.f32 0.0, %v1593
  %v1595 = vpop.f32.mrb[0].mxu0
  %v1596 = vadd.f32 0.0, %v1595
  %1597 = vmatprep.mubr.bf16.mxu0 %v381
  %1598 = vmatmul.mubr.bf16.gmra.mrb[0].mxu0 %v380
  %v1599 = vpop.f32.mrb[0].mxu0
  %v1600 = vadd.f32 0.0, %v1599
  %v1601 = vpop.f32.mrb[0].mxu0
  %v1602 = vadd.f32 0.0, %v1601
  %v1603 = vpop.f32.mrb[0].mxu0
  %v1604 = vadd.f32 0.0, %v1603
  %v1605 = vpop.f32.mrb[0].mxu0
  %v1606 = vadd.f32 0.0, %v1605
  %1607 = vdwg.mxu0
  %1608 = vmatprep.subr.bf16.mxu0 %v1152
  %1609 = vmatpush1.bf16.msra.mxu0 %v1151
  %1610 = vmatprep.subr.bf16.mxu0 %v1156
  %1611 = vmatpush1.bf16.msra.mxu0 %v1155
  %1612 = vmatprep.subr.bf16.mxu0 %v1160
  %1613 = vmatpush1.bf16.msra.mxu0 %v1159
  %1614 = vmatprep.subr.bf16.mxu0 %v1164
  %1615 = vmatpush1.bf16.msra.mxu0 %v1163
  %1616 = vmatprep.subr.bf16.mxu0 %v1168
  %1617 = vmatpush1.bf16.msra.mxu0 %v1167
  %1618 = vmatprep.subr.bf16.mxu0 %v1172
  %1619 = vmatpush1.bf16.msra.mxu0 %v1171
  %1620 = vmatprep.subr.bf16.mxu0 %v1176
  %1621 = vmatpush1.bf16.msra.mxu0 %v1175
  %1622 = vmatprep.subr.bf16.mxu0 %v1180
  %1623 = vmatpush1.bf16.msra.mxu0 %v1179
  %1624 = vmatprep.subr.bf16.mxu0 %v1184
  %1625 = vmatpush1.bf16.msra.mxu0 %v1183
  %1626 = vmatprep.subr.bf16.mxu0 %v1188
  %1627 = vmatpush1.bf16.msra.mxu0 %v1187
  %1628 = vmatprep.subr.bf16.mxu0 %v1192
  %1629 = vmatpush1.bf16.msra.mxu0 %v1191
  %1630 = vmatprep.subr.bf16.mxu0 %v1196
  %1631 = vmatpush1.bf16.msra.mxu0 %v1195
  %1632 = vmatprep.subr.bf16.mxu0 %v1200
  %1633 = vmatpush1.bf16.msra.mxu0 %v1199
  %1634 = vmatprep.subr.bf16.mxu0 %v1204
  %1635 = vmatpush1.bf16.msra.mxu0 %v1203
  %1636 = vmatprep.subr.bf16.mxu0 %v1208
  %1637 = vmatpush1.bf16.msra.mxu0 %v1207
  %1638 = vmatprep.subr.bf16.mxu0 %v1212
  %1639 = vmatpush1.bf16.msra.mxu0 %v1211
  %1640 = vmatprep.mubr.bf16.mxu0 %v362
  %1641 = vmatmul.mubr.bf16.gmra.mrb[0].mxu0 %v361
  %v1642 = vpop.f32.mrb[0].mxu0
  %v1643 = vadd.f32 %v1570, %v1642
  %v1644 = vpop.f32.mrb[0].mxu0
  %v1645 = vadd.f32 %v1572, %v1644
  %v1646 = vpop.f32.mrb[0].mxu0
  %v1647 = vadd.f32 %v1574, %v1646
  %v1648 = vpop.f32.mrb[0].mxu0
  %v1649 = vadd.f32 %v1576, %v1648
  %1650 = vmatprep.mubr.bf16.mxu0 %v369
  %1651 = vmatmul.mubr.bf16.gmra.mrb[0].mxu0 %v368
  %v1652 = vpop.f32.mrb[0].mxu0
  %v1653 = vadd.f32 %v1580, %v1652
  %v1654 = vpop.f32.mrb[0].mxu0
  %v1655 = vadd.f32 %v1582, %v1654
  %v1656 = vpop.f32.mrb[0].mxu0
  %v1657 = vadd.f32 %v1584, %v1656
  %v1658 = vpop.f32.mrb[0].mxu0
  %v1659 = vadd.f32 %v1586, %v1658
  %1660 = vmatprep.mubr.bf16.mxu0 %v376
  %1661 = vmatmul.mubr.bf16.gmra.mrb[0].mxu0 %v375
  %v1662 = vpop.f32.mrb[0].mxu0
  %v1663 = vadd.f32 %v1590, %v1662
  %v1664 = vpop.f32.mrb[0].mxu0
  %v1665 = vadd.f32 %v1592, %v1664
  %v1666 = vpop.f32.mrb[0].mxu0
  %v1667 = vadd.f32 %v1594, %v1666
  %v1668 = vpop.f32.mrb[0].mxu0
  %v1669 = vadd.f32 %v1596, %v1668
  %1670 = vmatprep.mubr.bf16.mxu0 %v383
  %1671 = vmatmul.mubr.bf16.gmra.mrb[0].mxu0 %v382
  %v1672 = vpop.f32.mrb[0].mxu0
  %v1673 = vadd.f32 %v1600, %v1672
  %v1674 = vpop.f32.mrb[0].mxu0
  %v1675 = vadd.f32 %v1602, %v1674
  %v1676 = vpop.f32.mrb[0].mxu0
  %v1677 = vadd.f32 %v1604, %v1676
  %v1678 = vpop.f32.mrb[0].mxu0
  %v1679 = vadd.f32 %v1606, %v1678
  %1680 = vdwg.mxu0
  %1681 = vmatprep.subr.bf16.mxu0 %v1216
  %1682 = vmatpush1.bf16.msra.mxu0 %v1215
  %1683 = vmatprep.subr.bf16.mxu0 %v1220
  %1684 = vmatpush1.bf16.msra.mxu0 %v1219
  %1685 = vmatprep.subr.bf16.mxu0 %v1224
  %1686 = vmatpush1.bf16.msra.mxu0 %v1223
  %1687 = vmatprep.subr.bf16.mxu0 %v1228
  %1688 = vmatpush1.bf16.msra.mxu0 %v1227
  %1689 = vmatprep.subr.bf16.mxu0 %v1232
  %1690 = vmatpush1.bf16.msra.mxu0 %v1231
  %1691 = vmatprep.subr.bf16.mxu0 %v1236
  %1692 = vmatpush1.bf16.msra.mxu0 %v1235
  %1693 = vmatprep.subr.bf16.mxu0 %v1240
  %1694 = vmatpush1.bf16.msra.mxu0 %v1239
  %1695 = vmatprep.subr.bf16.mxu0 %v1244
  %1696 = vmatpush1.bf16.msra.mxu0 %v1243
  %1697 = vmatprep.subr.bf16.mxu0 %v1248
  %1698 = vmatpush1.bf16.msra.mxu0 %v1247
  %1699 = vmatprep.subr.bf16.mxu0 %v1252
  %1700 = vmatpush1.bf16.msra.mxu0 %v1251
  %1701 = vmatprep.subr.bf16.mxu0 %v1256
  %1702 = vmatpush1.bf16.msra.mxu0 %v1255
  %1703 = vmatprep.subr.bf16.mxu0 %v1260
  %1704 = vmatpush1.bf16.msra.mxu0 %v1259
  %1705 = vmatprep.subr.bf16.mxu0 %v1264
  %1706 = vmatpush1.bf16.msra.mxu0 %v1263
  %1707 = vmatprep.subr.bf16.mxu0 %v1268
  %1708 = vmatpush1.bf16.msra.mxu0 %v1267
  %1709 = vmatprep.subr.bf16.mxu0 %v1272
  %1710 = vmatpush1.bf16.msra.mxu0 %v1271
  %1711 = vmatprep.subr.bf16.mxu0 %v1276
  %1712 = vmatpush1.bf16.msra.mxu0 %v1275
  %1713 = vmatprep.mubr.bf16.mxu0 %v364
  %1714 = vmatmul.mubr.bf16.gmra.mrb[0].mxu0 %v363
  %v1715 = vpop.f32.mrb[0].mxu0
  %v1716 = vadd.f32 %v1643, %v1715
  %v1717 = vpop.f32.mrb[0].mxu0
  %v1718 = vadd.f32 %v1645, %v1717
  %v1719 = vpop.f32.mrb[0].mxu0
  %v1720 = vadd.f32 %v1647, %v1719
  %v1721 = vpop.f32.mrb[0].mxu0
  %v1722 = vadd.f32 %v1649, %v1721
  %1723 = vmatprep.mubr.bf16.mxu0 %v371
  %1724 = vmatmul.mubr.bf16.gmra.mrb[0].mxu0 %v370
  %v1725 = vpop.f32.mrb[0].mxu0
  %v1726 = vadd.f32 %v1653, %v1725
  %v1727 = vpop.f32.mrb[0].mxu0
  %v1728 = vadd.f32 %v1655, %v1727
  %v1729 = vpop.f32.mrb[0].mxu0
  %v1730 = vadd.f32 %v1657, %v1729
  %v1731 = vpop.f32.mrb[0].mxu0
  %v1732 = vadd.f32 %v1659, %v1731
  %1733 = vmatprep.mubr.bf16.mxu0 %v378
  %1734 = vmatmul.mubr.bf16.gmra.mrb[0].mxu0 %v377
  %v1735 = vpop.f32.mrb[0].mxu0
  %v1736 = vadd.f32 %v1663, %v1735
  %v1737 = vpop.f32.mrb[0].mxu0
  %v1738 = vadd.f32 %v1665, %v1737
  %v1739 = vpop.f32.mrb[0].mxu0
  %v1740 = vadd.f32 %v1667, %v1739
  %v1741 = vpop.f32.mrb[0].mxu0
  %v1742 = vadd.f32 %v1669, %v1741
  %1743 = vmatprep.mubr.bf16.mxu0 %v385
  %1744 = vmatmul.mubr.bf16.gmra.mrb[0].mxu0 %v384
  %v1745 = vpop.f32.mrb[0].mxu0
  %v1746 = vadd.f32 %v1673, %v1745
  %v1747 = vpop.f32.mrb[0].mxu0
  %v1748 = vadd.f32 %v1675, %v1747
  %v1749 = vpop.f32.mrb[0].mxu0
  %v1750 = vadd.f32 %v1677, %v1749
  %v1751 = vpop.f32.mrb[0].mxu0
  %v1752 = vadd.f32 %v1679, %v1751
  %1753 = vdwg.mxu0
  %1754 = vmatprep.subr.bf16.mxu0 %v1280
  %1755 = vmatpush1.bf16.msra.mxu0 %v1279
  %1756 = vmatprep.subr.bf16.mxu0 %v1284
  %1757 = vmatpush1.bf16.msra.mxu0 %v1283
  %1758 = vmatprep.subr.bf16.mxu0 %v1288
  %1759 = vmatpush1.bf16.msra.mxu0 %v1287
  %1760 = vmatprep.subr.bf16.mxu0 %v1292
  %1761 = vmatpush1.bf16.msra.mxu0 %v1291
  %1762 = vmatprep.subr.bf16.mxu0 %v1296
  %1763 = vmatpush1.bf16.msra.mxu0 %v1295
  %1764 = vmatprep.subr.bf16.mxu0 %v1300
  %1765 = vmatpush1.bf16.msra.mxu0 %v1299
  %1766 = vmatprep.subr.bf16.mxu0 %v1304
  %1767 = vmatpush1.bf16.msra.mxu0 %v1303
  %1768 = vmatprep.subr.bf16.mxu0 %v1308
  %1769 = vmatpush1.bf16.msra.mxu0 %v1307
  %1770 = vmatprep.subr.bf16.mxu0 0
  %1771 = vmatpush1.bf16.msra.mxu0 0
  %1772 = vmatprep.subr.bf16.mxu0 0
  %1773 = vmatpush1.bf16.msra.mxu0 0
  %1774 = vmatprep.subr.bf16.mxu0 0
  %1775 = vmatpush1.bf16.msra.mxu0 0
  %1776 = vmatprep.subr.bf16.mxu0 0
  %1777 = vmatpush1.bf16.msra.mxu0 0
  %1778 = vmatprep.subr.bf16.mxu0 0
  %1779 = vmatpush1.bf16.msra.mxu0 0
  %1780 = vmatprep.subr.bf16.mxu0 0
  %1781 = vmatpush1.bf16.msra.mxu0 0
  %1782 = vmatprep.subr.bf16.mxu0 0
  %1783 = vmatpush1.bf16.msra.mxu0 0
  %1784 = vmatprep.subr.bf16.mxu0 0
  %1785 = vmatpush1.bf16.msra.mxu0 0
  %1786 = vmatprep.mubr.bf16.mxu0 0
  %1787 = vmatmul.mubr.bf16.gmra.mrb[0].mxu0 %v365
  %v1788 = vpop.f32.mrb[0].mxu0
  %v1789 = vadd.f32 %v1716, %v1788
  %v1790 = vpop.f32.mrb[0].mxu0
  %v1791 = vadd.f32 %v1718, %v1790
  %v1792 = vpop.f32.mrb[0].mxu0
  %v1793 = vadd.f32 %v1720, %v1792
  %v1794 = vpop.f32.mrb[0].mxu0
  %v1795 = vadd.f32 %v1722, %v1794
  %1796 = vmatprep.mubr.bf16.mxu0 0
  %1797 = vmatmul.mubr.bf16.gmra.mrb[0].mxu0 %v372
  %v1798 = vpop.f32.mrb[0].mxu0
  %v1799 = vadd.f32 %v1726, %v1798
  %v1800 = vpop.f32.mrb[0].mxu0
  %v1801 = vadd.f32 %v1728, %v1800
  %v1802 = vpop.f32.mrb[0].mxu0
  %v1803 = vadd.f32 %v1730, %v1802
  %v1804 = vpop.f32.mrb[0].mxu0
  %v1805 = vadd.f32 %v1732, %v1804
  %1806 = vmatprep.mubr.bf16.mxu0 0
  %1807 = vmatmul.mubr.bf16.gmra.mrb[0].mxu0 %v379
  %v1808 = vpop.f32.mrb[0].mxu0
  %v1809 = vadd.f32 %v1736, %v1808
  %v1810 = vpop.f32.mrb[0].mxu0
  %v1811 = vadd.f32 %v1738, %v1810
  %v1812 = vpop.f32.mrb[0].mxu0
  %v1813 = vadd.f32 %v1740, %v1812
  %v1814 = vpop.f32.mrb[0].mxu0
  %v1815 = vadd.f32 %v1742, %v1814
  %1816 = vmatprep.mubr.bf16.mxu0 0
  %1817 = vmatmul.mubr.bf16.gmra.mrb[0].mxu0 %v386
  %v1818 = vpop.f32.mrb[0].mxu0
  %v1819 = vadd.f32 %v1746, %v1818
  %v1820 = vpop.f32.mrb[0].mxu0
  %v1821 = vadd.f32 %v1748, %v1820
  %v1822 = vpop.f32.mrb[0].mxu0
  %v1823 = vadd.f32 %v1750, %v1822
  %v1824 = vpop.f32.mrb[0].mxu0
  %v1825 = vadd.f32 %v1752, %v1824
  %1826 = vdwg.mxu0
  %1827 = vmatprep.subr.bf16.mxu0 %v1090
  %1828 = vmatpush1.bf16.msra.mxu0 %v1089
  %1829 = vmatprep.subr.bf16.mxu0 %v1094
  %1830 = vmatpush1.bf16.msra.mxu0 %v1093
  %1831 = vmatprep.subr.bf16.mxu0 %v1098
  %1832 = vmatpush1.bf16.msra.mxu0 %v1097
  %1833 = vmatprep.subr.bf16.mxu0 %v1102
  %1834 = vmatpush1.bf16.msra.mxu0 %v1101
  %1835 = vmatprep.subr.bf16.mxu0 %v1106
  %1836 = vmatpush1.bf16.msra.mxu0 %v1105
  %1837 = vmatprep.subr.bf16.mxu0 %v1110
  %1838 = vmatpush1.bf16.msra.mxu0 %v1109
  %1839 = vmatprep.subr.bf16.mxu0 %v1114
  %1840 = vmatpush1.bf16.msra.mxu0 %v1113
  %1841 = vmatprep.subr.bf16.mxu0 %v1118
  %1842 = vmatpush1.bf16.msra.mxu0 %v1117
  %1843 = vmatprep.subr.bf16.mxu0 %v1122
  %1844 = vmatpush1.bf16.msra.mxu0 %v1121
  %1845 = vmatprep.subr.bf16.mxu0 %v1126
  %1846 = vmatpush1.bf16.msra.mxu0 %v1125
  %1847 = vmatprep.subr.bf16.mxu0 %v1130
  %1848 = vmatpush1.bf16.msra.mxu0 %v1129
  %1849 = vmatprep.subr.bf16.mxu0 %v1134
  %1850 = vmatpush1.bf16.msra.mxu0 %v1133
  %1851 = vmatprep.subr.bf16.mxu0 %v1138
  %1852 = vmatpush1.bf16.msra.mxu0 %v1137
  %1853 = vmatprep.subr.bf16.mxu0 %v1142
  %1854 = vmatpush1.bf16.msra.mxu0 %v1141
  %1855 = vmatprep.subr.bf16.mxu0 %v1146
  %1856 = vmatpush1.bf16.msra.mxu0 %v1145
  %1857 = vmatprep.subr.bf16.mxu0 %v1150
  %1858 = vmatpush1.bf16.msra.mxu0 %v1149
  %1859 = vmatprep.mubr.bf16.mxu0 %v360
  %1860 = vmatmul.mubr.bf16.gmra.mrb[0].mxu0 %v359
  %v1861 = vpop.f32.mrb[0].mxu0
  %v1862 = vadd.f32 0.0, %v1861
  %v1863 = vpop.f32.mrb[0].mxu0
  %v1864 = vadd.f32 0.0, %v1863
  %v1865 = vpop.f32.mrb[0].mxu0
  %v1866 = vadd.f32 0.0, %v1865
  %v1867 = vpop.f32.mrb[0].mxu0
  %v1868 = vadd.f32 0.0, %v1867
  %1869 = vmatprep.mubr.bf16.mxu0 %v367
  %1870 = vmatmul.mubr.bf16.gmra.mrb[0].mxu0 %v366
  %v1871 = vpop.f32.mrb[0].mxu0
  %v1872 = vadd.f32 0.0, %v1871
  %v1873 = vpop.f32.mrb[0].mxu0
  %v1874 = vadd.f32 0.0, %v1873
  %v1875 = vpop.f32.mrb[0].mxu0
  %v1876 = vadd.f32 0.0, %v1875
  %v1877 = vpop.f32.mrb[0].mxu0
  %v1878 = vadd.f32 0.0, %v1877
  %1879 = vmatprep.mubr.bf16.mxu0 %v374
  %1880 = vmatmul.mubr.bf16.gmra.mrb[0].mxu0 %v373
  %v1881 = vpop.f32.mrb[0].mxu0
  %v1882 = vadd.f32 0.0, %v1881
  %v1883 = vpop.f32.mrb[0].mxu0
  %v1884 = vadd.f32 0.0, %v1883
  %v1885 = vpop.f32.mrb[0].mxu0
  %v1886 = vadd.f32 0.0, %v1885
  %v1887 = vpop.f32.mrb[0].mxu0
  %v1888 = vadd.f32 0.0, %v1887
  %1889 = vmatprep.mubr.bf16.mxu0 %v381
  %1890 = vmatmul.mubr.bf16.gmra.mrb[0].mxu0 %v380
  %v1891 = vpop.f32.mrb[0].mxu0
  %v1892 = vadd.f32 0.0, %v1891
  %v1893 = vpop.f32.mrb[0].mxu0
  %v1894 = vadd.f32 0.0, %v1893
  %v1895 = vpop.f32.mrb[0].mxu0
  %v1896 = vadd.f32 0.0, %v1895
  %v1897 = vpop.f32.mrb[0].mxu0
  %v1898 = vadd.f32 0.0, %v1897
  %1899 = vdwg.mxu0
  %1900 = vmatprep.subr.bf16.mxu0 %v1154
  %1901 = vmatpush1.bf16.msra.mxu0 %v1153
  %1902 = vmatprep.subr.bf16.mxu0 %v1158
  %1903 = vmatpush1.bf16.msra.mxu0 %v1157
  %1904 = vmatprep.subr.bf16.mxu0 %v1162
  %1905 = vmatpush1.bf16.msra.mxu0 %v1161
  %1906 = vmatprep.subr.bf16.mxu0 %v1166
  %1907 = vmatpush1.bf16.msra.mxu0 %v1165
  %1908 = vmatprep.subr.bf16.mxu0 %v1170
  %1909 = vmatpush1.bf16.msra.mxu0 %v1169
  %1910 = vmatprep.subr.bf16.mxu0 %v1174
  %1911 = vmatpush1.bf16.msra.mxu0 %v1173
  %1912 = vmatprep.subr.bf16.mxu0 %v1178
  %1913 = vmatpush1.bf16.msra.mxu0 %v1177
  %1914 = vmatprep.subr.bf16.mxu0 %v1182
  %1915 = vmatpush1.bf16.msra.mxu0 %v1181
  %1916 = vmatprep.subr.bf16.mxu0 %v1186
  %1917 = vmatpush1.bf16.msra.mxu0 %v1185
  %1918 = vmatprep.subr.bf16.mxu0 %v1190
  %1919 = vmatpush1.bf16.msra.mxu0 %v1189
  %1920 = vmatprep.subr.bf16.mxu0 %v1194
  %1921 = vmatpush1.bf16.msra.mxu0 %v1193
  %1922 = vmatprep.subr.bf16.mxu0 %v1198
  %1923 = vmatpush1.bf16.msra.mxu0 %v1197
  %1924 = vmatprep.subr.bf16.mxu0 %v1202
  %1925 = vmatpush1.bf16.msra.mxu0 %v1201
  %1926 = vmatprep.subr.bf16.mxu0 %v1206
  %1927 = vmatpush1.bf16.msra.mxu0 %v1205
  %1928 = vmatprep.subr.bf16.mxu0 %v1210
  %1929 = vmatpush1.bf16.msra.mxu0 %v1209
  %1930 = vmatprep.subr.bf16.mxu0 %v1214
  %1931 = vmatpush1.bf16.msra.mxu0 %v1213
  %1932 = vmatprep.mubr.bf16.mxu0 %v362
  %1933 = vmatmul.mubr.bf16.gmra.mrb[0].mxu0 %v361
  %v1934 = vpop.f32.mrb[0].mxu0
  %v1935 = vadd.f32 %v1862, %v1934
  %v1936 = vpop.f32.mrb[0].mxu0
  %v1937 = vadd.f32 %v1864, %v1936
  %v1938 = vpop.f32.mrb[0].mxu0
  %v1939 = vadd.f32 %v1866, %v1938
  %v1940 = vpop.f32.mrb[0].mxu0
  %v1941 = vadd.f32 %v1868, %v1940
  %1942 = vmatprep.mubr.bf16.mxu0 %v369
  %1943 = vmatmul.mubr.bf16.gmra.mrb[0].mxu0 %v368
  %v1944 = vpop.f32.mrb[0].mxu0
  %v1945 = vadd.f32 %v1872, %v1944
  %v1946 = vpop.f32.mrb[0].mxu0
  %v1947 = vadd.f32 %v1874, %v1946
  %v1948 = vpop.f32.mrb[0].mxu0
  %v1949 = vadd.f32 %v1876, %v1948
  %v1950 = vpop.f32.mrb[0].mxu0
  %v1951 = vadd.f32 %v1878, %v1950
  %1952 = vmatprep.mubr.bf16.mxu0 %v376
  %1953 = vmatmul.mubr.bf16.gmra.mrb[0].mxu0 %v375
  %v1954 = vpop.f32.mrb[0].mxu0
  %v1955 = vadd.f32 %v1882, %v1954
  %v1956 = vpop.f32.mrb[0].mxu0
  %v1957 = vadd.f32 %v1884, %v1956
  %v1958 = vpop.f32.mrb[0].mxu0
  %v1959 = vadd.f32 %v1886, %v1958
  %v1960 = vpop.f32.mrb[0].mxu0
  %v1961 = vadd.f32 %v1888, %v1960
  %1962 = vmatprep.mubr.bf16.mxu0 %v383
  %1963 = vmatmul.mubr.bf16.gmra.mrb[0].mxu0 %v382
  %v1964 = vpop.f32.mrb[0].mxu0
  %v1965 = vadd.f32 %v1892, %v1964
  %v1966 = vpop.f32.mrb[0].mxu0
  %v1967 = vadd.f32 %v1894, %v1966
  %v1968 = vpop.f32.mrb[0].mxu0
  %v1969 = vadd.f32 %v1896, %v1968
  %v1970 = vpop.f32.mrb[0].mxu0
  %v1971 = vadd.f32 %v1898, %v1970
  %1972 = vdwg.mxu0
  %1973 = vmatprep.subr.bf16.mxu0 %v1218
  %1974 = vmatpush1.bf16.msra.mxu0 %v1217
  %1975 = vmatprep.subr.bf16.mxu0 %v1222
  %1976 = vmatpush1.bf16.msra.mxu0 %v1221
  %1977 = vmatprep.subr.bf16.mxu0 %v1226
  %1978 = vmatpush1.bf16.msra.mxu0 %v1225
  %1979 = vmatprep.subr.bf16.mxu0 %v1230
  %1980 = vmatpush1.bf16.msra.mxu0 %v1229
  %1981 = vmatprep.subr.bf16.mxu0 %v1234
  %1982 = vmatpush1.bf16.msra.mxu0 %v1233
  %1983 = vmatprep.subr.bf16.mxu0 %v1238
  %1984 = vmatpush1.bf16.msra.mxu0 %v1237
  %1985 = vmatprep.subr.bf16.mxu0 %v1242
  %1986 = vmatpush1.bf16.msra.mxu0 %v1241
  %1987 = vmatprep.subr.bf16.mxu0 %v1246
  %1988 = vmatpush1.bf16.msra.mxu0 %v1245
  %1989 = vmatprep.subr.bf16.mxu0 %v1250
  %1990 = vmatpush1.bf16.msra.mxu0 %v1249
  %1991 = vmatprep.subr.bf16.mxu0 %v1254
  %1992 = vmatpush1.bf16.msra.mxu0 %v1253
  %1993 = vmatprep.subr.bf16.mxu0 %v1258
  %1994 = vmatpush1.bf16.msra.mxu0 %v1257
  %1995 = vmatprep.subr.bf16.mxu0 %v1262
  %1996 = vmatpush1.bf16.msra.mxu0 %v1261
  %1997 = vmatprep.subr.bf16.mxu0 %v1266
  %1998 = vmatpush1.bf16.msra.mxu0 %v1265
  %1999 = vmatprep.subr.bf16.mxu0 %v1270
  %2000 = vmatpush1.bf16.msra.mxu0 %v1269
  %2001 = vmatprep.subr.bf16.mxu0 %v1274
  %2002 = vmatpush1.bf16.msra.mxu0 %v1273
  %2003 = vmatprep.subr.bf16.mxu0 %v1278
  %2004 = vmatpush1.bf16.msra.mxu0 %v1277
  %2005 = vmatprep.mubr.bf16.mxu0 %v364
  %2006 = vmatmul.mubr.bf16.gmra.mrb[0].mxu0 %v363
  %v2007 = vpop.f32.mrb[0].mxu0
  %v2008 = vadd.f32 %v1935, %v2007
  %v2009 = vpop.f32.mrb[0].mxu0
  %v2010 = vadd.f32 %v1937, %v2009
  %v2011 = vpop.f32.mrb[0].mxu0
  %v2012 = vadd.f32 %v1939, %v2011
  %v2013 = vpop.f32.mrb[0].mxu0
  %v2014 = vadd.f32 %v1941, %v2013
  %2015 = vmatprep.mubr.bf16.mxu0 %v371
  %2016 = vmatmul.mubr.bf16.gmra.mrb[0].mxu0 %v370
  %v2017 = vpop.f32.mrb[0].mxu0
  %v2018 = vadd.f32 %v1945, %v2017
  %v2019 = vpop.f32.mrb[0].mxu0
  %v2020 = vadd.f32 %v1947, %v2019
  %v2021 = vpop.f32.mrb[0].mxu0
  %v2022 = vadd.f32 %v1949, %v2021
  %v2023 = vpop.f32.mrb[0].mxu0
  %v2024 = vadd.f32 %v1951, %v2023
  %2025 = vmatprep.mubr.bf16.mxu0 %v378
  %2026 = vmatmul.mubr.bf16.gmra.mrb[0].mxu0 %v377
  %v2027 = vpop.f32.mrb[0].mxu0
  %v2028 = vadd.f32 %v1955, %v2027
  %v2029 = vpop.f32.mrb[0].mxu0
  %v2030 = vadd.f32 %v1957, %v2029
  %v2031 = vpop.f32.mrb[0].mxu0
  %v2032 = vadd.f32 %v1959, %v2031
  %v2033 = vpop.f32.mrb[0].mxu0
  %v2034 = vadd.f32 %v1961, %v2033
  %2035 = vmatprep.mubr.bf16.mxu0 %v385
  %2036 = vmatmul.mubr.bf16.gmra.mrb[0].mxu0 %v384
  %v2037 = vpop.f32.mrb[0].mxu0
  %v2038 = vadd.f32 %v1965, %v2037
  %v2039 = vpop.f32.mrb[0].mxu0
  %v2040 = vadd.f32 %v1967, %v2039
  %v2041 = vpop.f32.mrb[0].mxu0
  %v2042 = vadd.f32 %v1969, %v2041
  %v2043 = vpop.f32.mrb[0].mxu0
  %v2044 = vadd.f32 %v1971, %v2043
  %2045 = vdwg.mxu0
  %2046 = vmatprep.subr.bf16.mxu0 %v1282
  %2047 = vmatpush1.bf16.msra.mxu0 %v1281
  %2048 = vmatprep.subr.bf16.mxu0 %v1286
  %2049 = vmatpush1.bf16.msra.mxu0 %v1285
  %2050 = vmatprep.subr.bf16.mxu0 %v1290
  %2051 = vmatpush1.bf16.msra.mxu0 %v1289
  %2052 = vmatprep.subr.bf16.mxu0 %v1294
  %2053 = vmatpush1.bf16.msra.mxu0 %v1293
  %2054 = vmatprep.subr.bf16.mxu0 %v1298
  %2055 = vmatpush1.bf16.msra.mxu0 %v1297
  %2056 = vmatprep.subr.bf16.mxu0 %v1302
  %2057 = vmatpush1.bf16.msra.mxu0 %v1301
  %2058 = vmatprep.subr.bf16.mxu0 %v1306
  %2059 = vmatpush1.bf16.msra.mxu0 %v1305
  %2060 = vmatprep.subr.bf16.mxu0 %v1310
  %2061 = vmatpush1.bf16.msra.mxu0 %v1309
  %2062 = vmatprep.subr.bf16.mxu0 0
  %2063 = vmatpush1.bf16.msra.mxu0 0
  %2064 = vmatprep.subr.bf16.mxu0 0
  %2065 = vmatpush1.bf16.msra.mxu0 0
  %2066 = vmatprep.subr.bf16.mxu0 0
  %2067 = vmatpush1.bf16.msra.mxu0 0
  %2068 = vmatprep.subr.bf16.mxu0 0
  %2069 = vmatpush1.bf16.msra.mxu0 0
  %2070 = vmatprep.subr.bf16.mxu0 0
  %2071 = vmatpush1.bf16.msra.mxu0 0
  %2072 = vmatprep.subr.bf16.mxu0 0
  %2073 = vmatpush1.bf16.msra.mxu0 0
  %2074 = vmatprep.subr.bf16.mxu0 0
  %2075 = vmatpush1.bf16.msra.mxu0 0
  %2076 = vmatprep.subr.bf16.mxu0 0
  %2077 = vmatpush1.bf16.msra.mxu0 0
  %2078 = vmatprep.mubr.bf16.mxu0 0
  %2079 = vmatmul.mubr.bf16.gmra.mrb[0].mxu0 %v365
  %v2080 = vpop.f32.mrb[0].mxu0
  %v2081 = vadd.f32 %v2008, %v2080
  %v2082 = vpop.f32.mrb[0].mxu0
  %v2083 = vadd.f32 %v2010, %v2082
  %v2084 = vpop.f32.mrb[0].mxu0
  %v2085 = vadd.f32 %v2012, %v2084
  %v2086 = vpop.f32.mrb[0].mxu0
  %v2087 = vadd.f32 %v2014, %v2086
  %2088 = vmatprep.mubr.bf16.mxu0 0
  %2089 = vmatmul.mubr.bf16.gmra.mrb[0].mxu0 %v372
  %v2090 = vpop.f32.mrb[0].mxu0
  %v2091 = vadd.f32 %v2018, %v2090
  %v2092 = vpop.f32.mrb[0].mxu0
  %v2093 = vadd.f32 %v2020, %v2092
  %v2094 = vpop.f32.mrb[0].mxu0
  %v2095 = vadd.f32 %v2022, %v2094
  %v2096 = vpop.f32.mrb[0].mxu0
  %v2097 = vadd.f32 %v2024, %v2096
  %2098 = vmatprep.mubr.bf16.mxu0 0
  %2099 = vmatmul.mubr.bf16.gmra.mrb[0].mxu0 %v379
  %v2100 = vpop.f32.mrb[0].mxu0
  %v2101 = vadd.f32 %v2028, %v2100
  %v2102 = vpop.f32.mrb[0].mxu0
  %v2103 = vadd.f32 %v2030, %v2102
  %v2104 = vpop.f32.mrb[0].mxu0
  %v2105 = vadd.f32 %v2032, %v2104
  %v2106 = vpop.f32.mrb[0].mxu0
  %v2107 = vadd.f32 %v2034, %v2106
  %2108 = vmatprep.mubr.bf16.mxu0 0
  %2109 = vmatmul.mubr.bf16.gmra.mrb[0].mxu0 %v386
  %v2110 = vpop.f32.mrb[0].mxu0
  %v2111 = vadd.f32 %v2038, %v2110
  %v2112 = vpop.f32.mrb[0].mxu0
  %v2113 = vadd.f32 %v2040, %v2112
  %v2114 = vpop.f32.mrb[0].mxu0
  %v2115 = vadd.f32 %v2042, %v2114
  %v2116 = vpop.f32.mrb[0].mxu0
  %v2117 = vadd.f32 %v2044, %v2116
  %2118 = vdwg.mxu0
  %v2119 = vmax.f32 %v1789, %v1791
  %v2120 = vmax.f32 %v1793, %v1795
  %v2121 = vmax.f32 %v1799, %v1801
  %v2122 = vmax.f32 %v1803, %v1805
  %v2123 = vmax.f32 %v1809, %v1811
  %v2124 = vmax.f32 %v1813, %v1815
  %v2125 = vmax.f32 %v1819, %v1821
  %v2126 = vmax.f32 %v1823, %v1825
  %v2127 = vmax.f32 %v2081, %v2083
  %v2128 = vmax.f32 %v2085, %v2087
  %v2129 = vmax.f32 %v2091, %v2093
  %v2130 = vmax.f32 %v2095, %v2097
  %v2131 = vmax.f32 %v2101, %v2103
  %v2132 = vmax.f32 %v2105, %v2107
  %v2133 = vmax.f32 %v2111, %v2113
  %v2134 = vmax.f32 %v2115, %v2117
  %v2135 = vmax.f32 %v2119, %v2127
  %v2136 = vmax.f32 %v2120, %v2128
  %v2137 = vmax.f32 %v2121, %v2129
  %v2138 = vmax.f32 %v2122, %v2130
  %v2139 = vmax.f32 %v2123, %v2131
  %v2140 = vmax.f32 %v2124, %v2132
  %v2141 = vmax.f32 %v2125, %v2133
  %v2142 = vmax.f32 %v2126, %v2134
  %v2143 = vld [vmem:[%s2] sm:$0xff]
  %v2144 = vld [vmem:[%s2 + $0x8] sm:$0xff]
  %v2145 = vld [vmem:[%s2 + $0x10] sm:$0xff]
  %v2146 = vld [vmem:[%s2 + $0x18] sm:$0xff]
  %v2147 = vld [vmem:[%s2 + $0x20] sm:$0xff]
  %v2148 = vld [vmem:[%s2 + $0x28] sm:$0xff]
  %v2149 = vld [vmem:[%s2 + $0x30] sm:$0xff]
  %v2150 = vld [vmem:[%s2 + $0x38] sm:$0xff]
  %2152 = vset.pattern.permute.xlu0 0
  %2153 = vperm.xlu0 %2152, %v2143
  %v2154 = vpop.permute.xlu0 %2153
  %2157 = vset.pattern.permute.xlu0 0
  %2158 = vperm.xlu0 %2157, %v2144
  %v2159 = vpop.permute.xlu0 %2158
  %2162 = vset.pattern.permute.xlu0 0
  %2163 = vperm.xlu0 %2162, %v2145
  %v2164 = vpop.permute.xlu0 %2163
  %2167 = vset.pattern.permute.xlu0 0
  %2168 = vperm.xlu0 %2167, %v2146
  %v2169 = vpop.permute.xlu0 %2168
  %2172 = vset.pattern.permute.xlu0 0
  %2173 = vperm.xlu0 %2172, %v2147
  %v2174 = vpop.permute.xlu0 %2173
  %2177 = vset.pattern.permute.xlu0 0
  %2178 = vperm.xlu0 %2177, %v2148
  %v2179 = vpop.permute.xlu0 %2178
  %2182 = vset.pattern.permute.xlu0 0
  %2183 = vperm.xlu0 %2182, %v2149
  %v2184 = vpop.permute.xlu0 %2183
  %2187 = vset.pattern.permute.xlu0 0
  %2188 = vperm.xlu0 %2187, %v2150
  %v2189 = vpop.permute.xlu0 %2188
  %v2191 = vadd.f32 %v2135, %v2154
  %v2192 = vadd.f32 %v2136, %v2159
  %v2193 = vadd.f32 %v2137, %v2164
  %v2194 = vadd.f32 %v2138, %v2169
  %v2195 = vadd.f32 %v2139, %v2174
  %v2196 = vadd.f32 %v2140, %v2179
  %v2197 = vadd.f32 %v2141, %v2184
  %v2198 = vadd.f32 %v2142, %v2189
  %v2199 = vmul.f32 %v2191, 0.01
  %v2200 = vmul.f32 %v2192, 0.01
  %v2201 = vmul.f32 %v2193, 0.01
  %v2202 = vmul.f32 %v2194, 0.01
  %v2203 = vmul.f32 %v2195, 0.01
  %v2204 = vmul.f32 %v2196, 0.01
  %v2205 = vmul.f32 %v2197, 0.01
  %v2206 = vmul.f32 %v2198, 0.01
  %v2207 = vmax.f32 %v2191, %v2199
  %v2208 = vmax.f32 %v2192, %v2200
  %v2209 = vmax.f32 %v2193, %v2201
  %v2210 = vmax.f32 %v2194, %v2202
  %v2211 = vmax.f32 %v2195, %v2203
  %v2212 = vmax.f32 %v2196, %v2204
  %v2213 = vmax.f32 %v2197, %v2205
  %v2214 = vmax.f32 %v2198, %v2206
  %v2215 = vpack.c.bf16 %v2208, %v2207
  %v2216 = vpack.c.bf16 %v2210, %v2209
  %v2217 = vpack.c.bf16 %v2212, %v2211
  %v2218 = vpack.c.bf16 %v2214, %v2213
  %v2223 = vunpack.c.l.b16 %v2215
  %v2224 = vunpack.c.h.b16 %v2215
  %v2225 = vunpack.c.l.b16 %v2216
  %v2226 = vunpack.c.h.b16 %v2216
  %v2227 = vunpack.c.l.b16 %v2217
  %v2228 = vunpack.c.h.b16 %v2217
  %v2229 = vunpack.c.l.b16 %v2218
  %v2230 = vunpack.c.h.b16 %v2218
  %v2231 = vpack.c.b16 %v2223, %v2223
  %v2232 = vpack.c.b16 %v2224, %v2224
  %v2233 = vpack.c.b16 %v2225, %v2225
  %v2234 = vpack.c.b16 %v2226, %v2226
  %v2235 = vpack.c.b16 %v2227, %v2227
  %v2236 = vpack.c.b16 %v2228, %v2228
  %v2237 = vpack.c.b16 %v2229, %v2229
  %v2238 = vpack.c.b16 %v2230, %v2230
  %2247 = vst [vmem:[%s3] sm:$0xf] %v2231
  %2248 = vst [vmem:[%s3 + $0x4] sm:$0xf] %v2232
  %2249 = vst [vmem:[%s3 + $0x8] sm:$0xf] %v2233
  %2250 = vst [vmem:[%s3 + $0xc] sm:$0xf] %v2234
  %2251 = vst [vmem:[%s3 + $0x10] sm:$0xf] %v2235
  %2252 = vst [vmem:[%s3 + $0x14] sm:$0xf] %v2236
  %2253 = vst [vmem:[%s3 + $0x18] sm:$0xf] %v2237
  %2254 = vst [vmem:[%s3 + $0x1c] sm:$0xf] %v2238
  // Predicated region
  $region14: #{conv_discriminator_forward.4} parent=0 // pred_check
    _
  $region15: #{conv_discriminator_forward.4} parent=0 // pred_check_branch
    %2256 = sbr.rel (0) target = $region17
  $region16: #{conv_discriminator_forward.4} parent=0 // pred_region
    _
  $region17: #{conv_discriminator_forward.4} parent=0 // pred_fallthru
    _
  // Predicated region
  $region18: #{conv_discriminator_forward.4} parent=0 // pred_check
    _
  $region19: #{conv_discriminator_forward.4} parent=0 // pred_check_branch
    %2258 = sbr.rel (0) target = $region21
  $region20: #{conv_discriminator_forward.4} parent=0 // pred_region
    _
  $region21: #{conv_discriminator_forward.4} parent=0 // pred_fallthru
    _

// kernel: conv_discriminator_forward.5
$region0: #{conv_discriminator_forward.5}
  #allocation0 [shape = 'u32[]', space=smem, size = 0x4, offset = 0x4, fixed_abs, tag = 'smem constant byte address 0x4 - core index']
  #allocation1 [shape = 'u32[144,128]{1,0:T(1,128)}', space=vmem, size = 0x12000, scoped, tag = 'internal scratch']
  #allocation2 [shape = 'f32[1,1]{1,0:T(1,128)S(1)}', space=vmem, size = 0x200, scoped, tag = 'scoped memory for conv_discriminator_forward.5']
  %s0 = inlined_call_operand.vmem [shape: bf16[2,1024], index: 0, kind: input, shape index: {}]
  %s1 = inlined_call_operand.vmem [shape: bf16[1024,1024], index: 1, kind: input, shape index: {}]
  %s2 = inlined_call_operand.vmem [shape: f32[1,1024], index: 2, kind: input, shape index: {}]
  %s3 = inlined_call_operand.vmem [shape: f32[1,1024], index: 3, kind: input, shape index: {}]
  %s4 = inlined_call_operand.<no memory space> [shape: f32[1,1], index: 4, kind: input, shape index: {}]
  %s5 = inlined_call_operand.vmem [shape: f32[2,1], index: 5, kind: output, shape index: {}]
  %s6 = sld [smem:[#allocation0]]
  $region30: #{conv_discriminator_forward.5} parent=0
    _
  %s8 = ssub.s32 1, %s6
  %s9 = scalar_select 0, %s8, %s6
  %v10 = vstv %s4
  %11 = vst [vmem:[#allocation2] sm:$0x1] %v10
  // Predicated region
  $region2: #{conv_discriminator_forward.5} parent=0 // pred_check
    _
  $region3: #{conv_discriminator_forward.5} parent=0 // pred_check_branch
    %13 = sbr.rel (0) target = $region5
  $region4: #{conv_discriminator_forward.5} parent=0 // pred_region
    _
  $region5: #{conv_discriminator_forward.5} parent=0 // pred_fallthru
    _
  // Predicated region
  $region6: #{conv_discriminator_forward.5} parent=0 // pred_check
    _
  $region7: #{conv_discriminator_forward.5} parent=0 // pred_check_branch
    %15 = sbr.rel (0) target = $region9
  $region8: #{conv_discriminator_forward.5} parent=0 // pred_region
    _
  $region9: #{conv_discriminator_forward.5} parent=0 // pred_fallthru
    _
  // Predicated region
  $region10: #{conv_discriminator_forward.5} parent=0 // pred_check
    _
  $region11: #{conv_discriminator_forward.5} parent=0 // pred_check_branch
    %17 = sbr.rel (0) target = $region13
  $region12: #{conv_discriminator_forward.5} parent=0 // pred_region
    _
  $region13: #{conv_discriminator_forward.5} parent=0 // pred_fallthru
    _
  // Predicated region
  $region14: #{conv_discriminator_forward.5} parent=0 // pred_check
    _
  $region15: #{conv_discriminator_forward.5} parent=0 // pred_check_branch
    %19 = sbr.rel (0) target = $region17
  $region16: #{conv_discriminator_forward.5} parent=0 // pred_region
    _
  $region17: #{conv_discriminator_forward.5} parent=0 // pred_fallthru
    _
  // Predicated region
  $region18: #{conv_discriminator_forward.5} parent=0 // pred_check
    _
  $region19: #{conv_discriminator_forward.5} parent=0 // pred_check_branch
    %21 = sbr.rel (0) target = $region21
  $region20: #{conv_discriminator_forward.5} parent=0 // pred_region
    _
  $region21: #{conv_discriminator_forward.5} parent=0 // pred_fallthru
    _
  %v22 = vld [vmem:[%s0] sm:$0xff]
  %v23 = vld [vmem:[%s1] sm:$0xff]
  %v24 = vld [vmem:[%s1 + $0x8] sm:$0xff]
  %v25 = vld [vmem:[%s1 + $0x10] sm:$0xff]
  %v26 = vld [vmem:[%s1 + $0x18] sm:$0xff]
  %v27 = vld [vmem:[%s1 + $0x20] sm:$0xff]
  %v28 = vld [vmem:[%s1 + $0x28] sm:$0xff]
  %v29 = vld [vmem:[%s1 + $0x30] sm:$0xff]
  %v30 = vld [vmem:[%s1 + $0x38] sm:$0xff]
  %v31 = vld [vmem:[%s1 + $0x40] sm:$0xff]
  %v32 = vld [vmem:[%s1 + $0x48] sm:$0xff]
  %v33 = vld [vmem:[%s1 + $0x50] sm:$0xff]
  %v34 = vld [vmem:[%s1 + $0x58] sm:$0xff]
  %v35 = vld [vmem:[%s1 + $0x60] sm:$0xff]
  %v36 = vld [vmem:[%s1 + $0x68] sm:$0xff]
  %v37 = vld [vmem:[%s1 + $0x70] sm:$0xff]
  %v38 = vld [vmem:[%s1 + $0x78] sm:$0xff]
  %v39 = vld [vmem:[%s1 + $0x80] sm:$0xff]
  %v40 = vld [vmem:[%s1 + $0x88] sm:$0xff]
  %v41 = vld [vmem:[%s1 + $0x90] sm:$0xff]
  %v42 = vld [vmem:[%s1 + $0x98] sm:$0xff]
  %v43 = vld [vmem:[%s1 + $0xa0] sm:$0xff]
  %v44 = vld [vmem:[%s1 + $0xa8] sm:$0xff]
  %v45 = vld [vmem:[%s1 + $0xb0] sm:$0xff]
  %v46 = vld [vmem:[%s1 + $0xb8] sm:$0xff]
  %v47 = vld [vmem:[%s1 + $0xc0] sm:$0xff]
  %v48 = vld [vmem:[%s1 + $0xc8] sm:$0xff]
  %v49 = vld [vmem:[%s1 + $0xd0] sm:$0xff]
  %v50 = vld [vmem:[%s1 + $0xd8] sm:$0xff]
  %v51 = vld [vmem:[%s1 + $0xe0] sm:$0xff]
  %v52 = vld [vmem:[%s1 + $0xe8] sm:$0xff]
  %v53 = vld [vmem:[%s1 + $0xf0] sm:$0xff]
  %v54 = vld [vmem:[%s1 + $0xf8] sm:$0xff]
  %v55 = vld [vmem:[%s1 + $0x100] sm:$0xff]
  %v56 = vld [vmem:[%s1 + $0x108] sm:$0xff]
  %v57 = vld [vmem:[%s1 + $0x110] sm:$0xff]
  %v58 = vld [vmem:[%s1 + $0x118] sm:$0xff]
  %v59 = vld [vmem:[%s1 + $0x120] sm:$0xff]
  %v60 = vld [vmem:[%s1 + $0x128] sm:$0xff]
  %v61 = vld [vmem:[%s1 + $0x130] sm:$0xff]
  %v62 = vld [vmem:[%s1 + $0x138] sm:$0xff]
  %v63 = vld [vmem:[%s1 + $0x140] sm:$0xff]
  %v64 = vld [vmem:[%s1 + $0x148] sm:$0xff]
  %v65 = vld [vmem:[%s1 + $0x150] sm:$0xff]
  %v66 = vld [vmem:[%s1 + $0x158] sm:$0xff]
  %v67 = vld [vmem:[%s1 + $0x160] sm:$0xff]
  %v68 = vld [vmem:[%s1 + $0x168] sm:$0xff]
  %v69 = vld [vmem:[%s1 + $0x170] sm:$0xff]
  %v70 = vld [vmem:[%s1 + $0x178] sm:$0xff]
  %v71 = vld [vmem:[%s1 + $0x180] sm:$0xff]
  %v72 = vld [vmem:[%s1 + $0x188] sm:$0xff]
  %v73 = vld [vmem:[%s1 + $0x190] sm:$0xff]
  %v74 = vld [vmem:[%s1 + $0x198] sm:$0xff]
  %v75 = vld [vmem:[%s1 + $0x1a0] sm:$0xff]
  %v76 = vld [vmem:[%s1 + $0x1a8] sm:$0xff]
  %v77 = vld [vmem:[%s1 + $0x1b0] sm:$0xff]
  %v78 = vld [vmem:[%s1 + $0x1b8] sm:$0xff]
  %v79 = vld [vmem:[%s1 + $0x1c0] sm:$0xff]
  %v80 = vld [vmem:[%s1 + $0x1c8] sm:$0xff]
  %v81 = vld [vmem:[%s1 + $0x1d0] sm:$0xff]
  %v82 = vld [vmem:[%s1 + $0x1d8] sm:$0xff]
  %v83 = vld [vmem:[%s1 + $0x1e0] sm:$0xff]
  %v84 = vld [vmem:[%s1 + $0x1e8] sm:$0xff]
  %v85 = vld [vmem:[%s1 + $0x1f0] sm:$0xff]
  %v86 = vld [vmem:[%s1 + $0x1f8] sm:$0xff]
  %v87 = vld [vmem:[%s1 + $0x200] sm:$0xff]
  %v88 = vld [vmem:[%s1 + $0x208] sm:$0xff]
  %v89 = vld [vmem:[%s1 + $0x210] sm:$0xff]
  %v90 = vld [vmem:[%s1 + $0x218] sm:$0xff]
  %v91 = vld [vmem:[%s1 + $0x220] sm:$0xff]
  %v92 = vld [vmem:[%s1 + $0x228] sm:$0xff]
  %v93 = vld [vmem:[%s1 + $0x230] sm:$0xff]
  %v94 = vld [vmem:[%s1 + $0x238] sm:$0xff]
  %v95 = vld [vmem:[%s1 + $0x240] sm:$0xff]
  %v96 = vld [vmem:[%s1 + $0x248] sm:$0xff]
  %v97 = vld [vmem:[%s1 + $0x250] sm:$0xff]
  %v98 = vld [vmem:[%s1 + $0x258] sm:$0xff]
  %v99 = vld [vmem:[%s1 + $0x260] sm:$0xff]
  %v100 = vld [vmem:[%s1 + $0x268] sm:$0xff]
  %v101 = vld [vmem:[%s1 + $0x270] sm:$0xff]
  %v102 = vld [vmem:[%s1 + $0x278] sm:$0xff]
  %v103 = vld [vmem:[%s1 + $0x280] sm:$0xff]
  %v104 = vld [vmem:[%s1 + $0x288] sm:$0xff]
  %v105 = vld [vmem:[%s1 + $0x290] sm:$0xff]
  %v106 = vld [vmem:[%s1 + $0x298] sm:$0xff]
  %v107 = vld [vmem:[%s1 + $0x2a0] sm:$0xff]
  %v108 = vld [vmem:[%s1 + $0x2a8] sm:$0xff]
  %v109 = vld [vmem:[%s1 + $0x2b0] sm:$0xff]
  %v110 = vld [vmem:[%s1 + $0x2b8] sm:$0xff]
  %v111 = vld [vmem:[%s1 + $0x2c0] sm:$0xff]
  %v112 = vld [vmem:[%s1 + $0x2c8] sm:$0xff]
  %v113 = vld [vmem:[%s1 + $0x2d0] sm:$0xff]
  %v114 = vld [vmem:[%s1 + $0x2d8] sm:$0xff]
  %v115 = vld [vmem:[%s1 + $0x2e0] sm:$0xff]
  %v116 = vld [vmem:[%s1 + $0x2e8] sm:$0xff]
  %v117 = vld [vmem:[%s1 + $0x2f0] sm:$0xff]
  %v118 = vld [vmem:[%s1 + $0x2f8] sm:$0xff]
  %v119 = vld [vmem:[%s1 + $0x300] sm:$0xff]
  %v120 = vld [vmem:[%s1 + $0x308] sm:$0xff]
  %v121 = vld [vmem:[%s1 + $0x310] sm:$0xff]
  %v122 = vld [vmem:[%s1 + $0x318] sm:$0xff]
  %v123 = vld [vmem:[%s1 + $0x320] sm:$0xff]
  %v124 = vld [vmem:[%s1 + $0x328] sm:$0xff]
  %v125 = vld [vmem:[%s1 + $0x330] sm:$0xff]
  %v126 = vld [vmem:[%s1 + $0x338] sm:$0xff]
  %v127 = vld [vmem:[%s1 + $0x340] sm:$0xff]
  %v128 = vld [vmem:[%s1 + $0x348] sm:$0xff]
  %v129 = vld [vmem:[%s1 + $0x350] sm:$0xff]
  %v130 = vld [vmem:[%s1 + $0x358] sm:$0xff]
  %v131 = vld [vmem:[%s1 + $0x360] sm:$0xff]
  %v132 = vld [vmem:[%s1 + $0x368] sm:$0xff]
  %v133 = vld [vmem:[%s1 + $0x370] sm:$0xff]
  %v134 = vld [vmem:[%s1 + $0x378] sm:$0xff]
  %v135 = vld [vmem:[%s1 + $0x380] sm:$0xff]
  %v136 = vld [vmem:[%s1 + $0x388] sm:$0xff]
  %v137 = vld [vmem:[%s1 + $0x390] sm:$0xff]
  %v138 = vld [vmem:[%s1 + $0x398] sm:$0xff]
  %v139 = vld [vmem:[%s1 + $0x3a0] sm:$0xff]
  %v140 = vld [vmem:[%s1 + $0x3a8] sm:$0xff]
  %v141 = vld [vmem:[%s1 + $0x3b0] sm:$0xff]
  %v142 = vld [vmem:[%s1 + $0x3b8] sm:$0xff]
  %v143 = vld [vmem:[%s1 + $0x3c0] sm:$0xff]
  %v144 = vld [vmem:[%s1 + $0x3c8] sm:$0xff]
  %v145 = vld [vmem:[%s1 + $0x3d0] sm:$0xff]
  %v146 = vld [vmem:[%s1 + $0x3d8] sm:$0xff]
  %v147 = vld [vmem:[%s1 + $0x3e0] sm:$0xff]
  %v148 = vld [vmem:[%s1 + $0x3e8] sm:$0xff]
  %v149 = vld [vmem:[%s1 + $0x3f0] sm:$0xff]
  %v150 = vld [vmem:[%s1 + $0x3f8] sm:$0xff]
  %v151 = vld [vmem:[%s1 + $0x400] sm:$0xff]
  %v152 = vld [vmem:[%s1 + $0x408] sm:$0xff]
  %v153 = vld [vmem:[%s1 + $0x410] sm:$0xff]
  %v154 = vld [vmem:[%s1 + $0x418] sm:$0xff]
  %v155 = vld [vmem:[%s1 + $0x420] sm:$0xff]
  %v156 = vld [vmem:[%s1 + $0x428] sm:$0xff]
  %v157 = vld [vmem:[%s1 + $0x430] sm:$0xff]
  %v158 = vld [vmem:[%s1 + $0x438] sm:$0xff]
  %v159 = vld [vmem:[%s1 + $0x440] sm:$0xff]
  %v160 = vld [vmem:[%s1 + $0x448] sm:$0xff]
  %v161 = vld [vmem:[%s1 + $0x450] sm:$0xff]
  %v162 = vld [vmem:[%s1 + $0x458] sm:$0xff]
  %v163 = vld [vmem:[%s1 + $0x460] sm:$0xff]
  %v164 = vld [vmem:[%s1 + $0x468] sm:$0xff]
  %v165 = vld [vmem:[%s1 + $0x470] sm:$0xff]
  %v166 = vld [vmem:[%s1 + $0x478] sm:$0xff]
  %v167 = vld [vmem:[%s1 + $0x480] sm:$0xff]
  %v168 = vld [vmem:[%s1 + $0x488] sm:$0xff]
  %v169 = vld [vmem:[%s1 + $0x490] sm:$0xff]
  %v170 = vld [vmem:[%s1 + $0x498] sm:$0xff]
  %v171 = vld [vmem:[%s1 + $0x4a0] sm:$0xff]
  %v172 = vld [vmem:[%s1 + $0x4a8] sm:$0xff]
  %v173 = vld [vmem:[%s1 + $0x4b0] sm:$0xff]
  %v174 = vld [vmem:[%s1 + $0x4b8] sm:$0xff]
  %v175 = vld [vmem:[%s1 + $0x4c0] sm:$0xff]
  %v176 = vld [vmem:[%s1 + $0x4c8] sm:$0xff]
  %v177 = vld [vmem:[%s1 + $0x4d0] sm:$0xff]
  %v178 = vld [vmem:[%s1 + $0x4d8] sm:$0xff]
  %v179 = vld [vmem:[%s1 + $0x4e0] sm:$0xff]
  %v180 = vld [vmem:[%s1 + $0x4e8] sm:$0xff]
  %v181 = vld [vmem:[%s1 + $0x4f0] sm:$0xff]
  %v182 = vld [vmem:[%s1 + $0x4f8] sm:$0xff]
  %v183 = vld [vmem:[%s1 + $0x500] sm:$0xff]
  %v184 = vld [vmem:[%s1 + $0x508] sm:$0xff]
  %v185 = vld [vmem:[%s1 + $0x510] sm:$0xff]
  %v186 = vld [vmem:[%s1 + $0x518] sm:$0xff]
  %v187 = vld [vmem:[%s1 + $0x520] sm:$0xff]
  %v188 = vld [vmem:[%s1 + $0x528] sm:$0xff]
  %v189 = vld [vmem:[%s1 + $0x530] sm:$0xff]
  %v190 = vld [vmem:[%s1 + $0x538] sm:$0xff]
  %v191 = vld [vmem:[%s1 + $0x540] sm:$0xff]
  %v192 = vld [vmem:[%s1 + $0x548] sm:$0xff]
  %v193 = vld [vmem:[%s1 + $0x550] sm:$0xff]
  %v194 = vld [vmem:[%s1 + $0x558] sm:$0xff]
  %v195 = vld [vmem:[%s1 + $0x560] sm:$0xff]
  %v196 = vld [vmem:[%s1 + $0x568] sm:$0xff]
  %v197 = vld [vmem:[%s1 + $0x570] sm:$0xff]
  %v198 = vld [vmem:[%s1 + $0x578] sm:$0xff]
  %v199 = vld [vmem:[%s1 + $0x580] sm:$0xff]
  %v200 = vld [vmem:[%s1 + $0x588] sm:$0xff]
  %v201 = vld [vmem:[%s1 + $0x590] sm:$0xff]
  %v202 = vld [vmem:[%s1 + $0x598] sm:$0xff]
  %v203 = vld [vmem:[%s1 + $0x5a0] sm:$0xff]
  %v204 = vld [vmem:[%s1 + $0x5a8] sm:$0xff]
  %v205 = vld [vmem:[%s1 + $0x5b0] sm:$0xff]
  %v206 = vld [vmem:[%s1 + $0x5b8] sm:$0xff]
  %v207 = vld [vmem:[%s1 + $0x5c0] sm:$0xff]
  %v208 = vld [vmem:[%s1 + $0x5c8] sm:$0xff]
  %v209 = vld [vmem:[%s1 + $0x5d0] sm:$0xff]
  %v210 = vld [vmem:[%s1 + $0x5d8] sm:$0xff]
  %v211 = vld [vmem:[%s1 + $0x5e0] sm:$0xff]
  %v212 = vld [vmem:[%s1 + $0x5e8] sm:$0xff]
  %v213 = vld [vmem:[%s1 + $0x5f0] sm:$0xff]
  %v214 = vld [vmem:[%s1 + $0x5f8] sm:$0xff]
  %v215 = vld [vmem:[%s1 + $0x600] sm:$0xff]
  %v216 = vld [vmem:[%s1 + $0x608] sm:$0xff]
  %v217 = vld [vmem:[%s1 + $0x610] sm:$0xff]
  %v218 = vld [vmem:[%s1 + $0x618] sm:$0xff]
  %v219 = vld [vmem:[%s1 + $0x620] sm:$0xff]
  %v220 = vld [vmem:[%s1 + $0x628] sm:$0xff]
  %v221 = vld [vmem:[%s1 + $0x630] sm:$0xff]
  %v222 = vld [vmem:[%s1 + $0x638] sm:$0xff]
  %v223 = vld [vmem:[%s1 + $0x640] sm:$0xff]
  %v224 = vld [vmem:[%s1 + $0x648] sm:$0xff]
  %v225 = vld [vmem:[%s1 + $0x650] sm:$0xff]
  %v226 = vld [vmem:[%s1 + $0x658] sm:$0xff]
  %v227 = vld [vmem:[%s1 + $0x660] sm:$0xff]
  %v228 = vld [vmem:[%s1 + $0x668] sm:$0xff]
  %v229 = vld [vmem:[%s1 + $0x670] sm:$0xff]
  %v230 = vld [vmem:[%s1 + $0x678] sm:$0xff]
  %v231 = vld [vmem:[%s1 + $0x680] sm:$0xff]
  %v232 = vld [vmem:[%s1 + $0x688] sm:$0xff]
  %v233 = vld [vmem:[%s1 + $0x690] sm:$0xff]
  %v234 = vld [vmem:[%s1 + $0x698] sm:$0xff]
  %v235 = vld [vmem:[%s1 + $0x6a0] sm:$0xff]
  %v236 = vld [vmem:[%s1 + $0x6a8] sm:$0xff]
  %v237 = vld [vmem:[%s1 + $0x6b0] sm:$0xff]
  %v238 = vld [vmem:[%s1 + $0x6b8] sm:$0xff]
  %v239 = vld [vmem:[%s1 + $0x6c0] sm:$0xff]
  %v240 = vld [vmem:[%s1 + $0x6c8] sm:$0xff]
  %v241 = vld [vmem:[%s1 + $0x6d0] sm:$0xff]
  %v242 = vld [vmem:[%s1 + $0x6d8] sm:$0xff]
  %v243 = vld [vmem:[%s1 + $0x6e0] sm:$0xff]
  %v244 = vld [vmem:[%s1 + $0x6e8] sm:$0xff]
  %v245 = vld [vmem:[%s1 + $0x6f0] sm:$0xff]
  %v246 = vld [vmem:[%s1 + $0x6f8] sm:$0xff]
  %v247 = vld [vmem:[%s1 + $0x700] sm:$0xff]
  %v248 = vld [vmem:[%s1 + $0x708] sm:$0xff]
  %v249 = vld [vmem:[%s1 + $0x710] sm:$0xff]
  %v250 = vld [vmem:[%s1 + $0x718] sm:$0xff]
  %v251 = vld [vmem:[%s1 + $0x720] sm:$0xff]
  %v252 = vld [vmem:[%s1 + $0x728] sm:$0xff]
  %v253 = vld [vmem:[%s1 + $0x730] sm:$0xff]
  %v254 = vld [vmem:[%s1 + $0x738] sm:$0xff]
  %v255 = vld [vmem:[%s1 + $0x740] sm:$0xff]
  %v256 = vld [vmem:[%s1 + $0x748] sm:$0xff]
  %v257 = vld [vmem:[%s1 + $0x750] sm:$0xff]
  %v258 = vld [vmem:[%s1 + $0x758] sm:$0xff]
  %v259 = vld [vmem:[%s1 + $0x760] sm:$0xff]
  %v260 = vld [vmem:[%s1 + $0x768] sm:$0xff]
  %v261 = vld [vmem:[%s1 + $0x770] sm:$0xff]
  %v262 = vld [vmem:[%s1 + $0x778] sm:$0xff]
  %v263 = vld [vmem:[%s1 + $0x780] sm:$0xff]
  %v264 = vld [vmem:[%s1 + $0x788] sm:$0xff]
  %v265 = vld [vmem:[%s1 + $0x790] sm:$0xff]
  %v266 = vld [vmem:[%s1 + $0x798] sm:$0xff]
  %v267 = vld [vmem:[%s1 + $0x7a0] sm:$0xff]
  %v268 = vld [vmem:[%s1 + $0x7a8] sm:$0xff]
  %v269 = vld [vmem:[%s1 + $0x7b0] sm:$0xff]
  %v270 = vld [vmem:[%s1 + $0x7b8] sm:$0xff]
  %v271 = vld [vmem:[%s1 + $0x7c0] sm:$0xff]
  %v272 = vld [vmem:[%s1 + $0x7c8] sm:$0xff]
  %v273 = vld [vmem:[%s1 + $0x7d0] sm:$0xff]
  %v274 = vld [vmem:[%s1 + $0x7d8] sm:$0xff]
  %v275 = vld [vmem:[%s1 + $0x7e0] sm:$0xff]
  %v276 = vld [vmem:[%s1 + $0x7e8] sm:$0xff]
  %v277 = vld [vmem:[%s1 + $0x7f0] sm:$0xff]
  %v278 = vld [vmem:[%s1 + $0x7f8] sm:$0xff]
  %v279 = vld [vmem:[%s1 + $0x800] sm:$0xff]
  %v280 = vld [vmem:[%s1 + $0x808] sm:$0xff]
  %v281 = vld [vmem:[%s1 + $0x810] sm:$0xff]
  %v282 = vld [vmem:[%s1 + $0x818] sm:$0xff]
  %v283 = vld [vmem:[%s1 + $0x820] sm:$0xff]
  %v284 = vld [vmem:[%s1 + $0x828] sm:$0xff]
  %v285 = vld [vmem:[%s1 + $0x830] sm:$0xff]
  %v286 = vld [vmem:[%s1 + $0x838] sm:$0xff]
  %v287 = vld [vmem:[%s1 + $0x840] sm:$0xff]
  %v288 = vld [vmem:[%s1 + $0x848] sm:$0xff]
  %v289 = vld [vmem:[%s1 + $0x850] sm:$0xff]
  %v290 = vld [vmem:[%s1 + $0x858] sm:$0xff]
  %v291 = vld [vmem:[%s1 + $0x860] sm:$0xff]
  %v292 = vld [vmem:[%s1 + $0x868] sm:$0xff]
  %v293 = vld [vmem:[%s1 + $0x870] sm:$0xff]
  %v294 = vld [vmem:[%s1 + $0x878] sm:$0xff]
  %v295 = vld [vmem:[%s1 + $0x880] sm:$0xff]
  %v296 = vld [vmem:[%s1 + $0x888] sm:$0xff]
  %v297 = vld [vmem:[%s1 + $0x890] sm:$0xff]
  %v298 = vld [vmem:[%s1 + $0x898] sm:$0xff]
  %v299 = vld [vmem:[%s1 + $0x8a0] sm:$0xff]
  %v300 = vld [vmem:[%s1 + $0x8a8] sm:$0xff]
  %v301 = vld [vmem:[%s1 + $0x8b0] sm:$0xff]
  %v302 = vld [vmem:[%s1 + $0x8b8] sm:$0xff]
  %v303 = vld [vmem:[%s1 + $0x8c0] sm:$0xff]
  %v304 = vld [vmem:[%s1 + $0x8c8] sm:$0xff]
  %v305 = vld [vmem:[%s1 + $0x8d0] sm:$0xff]
  %v306 = vld [vmem:[%s1 + $0x8d8] sm:$0xff]
  %v307 = vld [vmem:[%s1 + $0x8e0] sm:$0xff]
  %v308 = vld [vmem:[%s1 + $0x8e8] sm:$0xff]
  %v309 = vld [vmem:[%s1 + $0x8f0] sm:$0xff]
  %v310 = vld [vmem:[%s1 + $0x8f8] sm:$0xff]
  %v311 = vld [vmem:[%s1 + $0x900] sm:$0xff]
  %v312 = vld [vmem:[%s1 + $0x908] sm:$0xff]
  %v313 = vld [vmem:[%s1 + $0x910] sm:$0xff]
  %v314 = vld [vmem:[%s1 + $0x918] sm:$0xff]
  %v315 = vld [vmem:[%s1 + $0x920] sm:$0xff]
  %v316 = vld [vmem:[%s1 + $0x928] sm:$0xff]
  %v317 = vld [vmem:[%s1 + $0x930] sm:$0xff]
  %v318 = vld [vmem:[%s1 + $0x938] sm:$0xff]
  %v319 = vld [vmem:[%s1 + $0x940] sm:$0xff]
  %v320 = vld [vmem:[%s1 + $0x948] sm:$0xff]
  %v321 = vld [vmem:[%s1 + $0x950] sm:$0xff]
  %v322 = vld [vmem:[%s1 + $0x958] sm:$0xff]
  %v323 = vld [vmem:[%s1 + $0x960] sm:$0xff]
  %v324 = vld [vmem:[%s1 + $0x968] sm:$0xff]
  %v325 = vld [vmem:[%s1 + $0x970] sm:$0xff]
  %v326 = vld [vmem:[%s1 + $0x978] sm:$0xff]
  %v327 = vld [vmem:[%s1 + $0x980] sm:$0xff]
  %v328 = vld [vmem:[%s1 + $0x988] sm:$0xff]
  %v329 = vld [vmem:[%s1 + $0x990] sm:$0xff]
  %v330 = vld [vmem:[%s1 + $0x998] sm:$0xff]
  %v331 = vld [vmem:[%s1 + $0x9a0] sm:$0xff]
  %v332 = vld [vmem:[%s1 + $0x9a8] sm:$0xff]
  %v333 = vld [vmem:[%s1 + $0x9b0] sm:$0xff]
  %v334 = vld [vmem:[%s1 + $0x9b8] sm:$0xff]
  %v335 = vld [vmem:[%s1 + $0x9c0] sm:$0xff]
  %v336 = vld [vmem:[%s1 + $0x9c8] sm:$0xff]
  %v337 = vld [vmem:[%s1 + $0x9d0] sm:$0xff]
  %v338 = vld [vmem:[%s1 + $0x9d8] sm:$0xff]
  %v339 = vld [vmem:[%s1 + $0x9e0] sm:$0xff]
  %v340 = vld [vmem:[%s1 + $0x9e8] sm:$0xff]
  %v341 = vld [vmem:[%s1 + $0x9f0] sm:$0xff]
  %v342 = vld [vmem:[%s1 + $0x9f8] sm:$0xff]
  %v343 = vld [vmem:[%s1 + $0xa00] sm:$0xff]
  %v344 = vld [vmem:[%s1 + $0xa08] sm:$0xff]
  %v345 = vld [vmem:[%s1 + $0xa10] sm:$0xff]
  %v346 = vld [vmem:[%s1 + $0xa18] sm:$0xff]
  %v347 = vld [vmem:[%s1 + $0xa20] sm:$0xff]
  %v348 = vld [vmem:[%s1 + $0xa28] sm:$0xff]
  %v349 = vld [vmem:[%s1 + $0xa30] sm:$0xff]
  %v350 = vld [vmem:[%s1 + $0xa38] sm:$0xff]
  %v351 = vld [vmem:[%s1 + $0xa40] sm:$0xff]
  %v352 = vld [vmem:[%s1 + $0xa48] sm:$0xff]
  %v353 = vld [vmem:[%s1 + $0xa50] sm:$0xff]
  %v354 = vld [vmem:[%s1 + $0xa58] sm:$0xff]
  %v355 = vld [vmem:[%s1 + $0xa60] sm:$0xff]
  %v356 = vld [vmem:[%s1 + $0xa68] sm:$0xff]
  %v357 = vld [vmem:[%s1 + $0xa70] sm:$0xff]
  %v358 = vld [vmem:[%s1 + $0xa78] sm:$0xff]
  %v359 = vld [vmem:[%s1 + $0xa80] sm:$0xff]
  %v360 = vld [vmem:[%s1 + $0xa88] sm:$0xff]
  %v361 = vld [vmem:[%s1 + $0xa90] sm:$0xff]
  %v362 = vld [vmem:[%s1 + $0xa98] sm:$0xff]
  %v363 = vld [vmem:[%s1 + $0xaa0] sm:$0xff]
  %v364 = vld [vmem:[%s1 + $0xaa8] sm:$0xff]
  %v365 = vld [vmem:[%s1 + $0xab0] sm:$0xff]
  %v366 = vld [vmem:[%s1 + $0xab8] sm:$0xff]
  %v367 = vld [vmem:[%s1 + $0xac0] sm:$0xff]
  %v368 = vld [vmem:[%s1 + $0xac8] sm:$0xff]
  %v369 = vld [vmem:[%s1 + $0xad0] sm:$0xff]
  %v370 = vld [vmem:[%s1 + $0xad8] sm:$0xff]
  %v371 = vld [vmem:[%s1 + $0xae0] sm:$0xff]
  %v372 = vld [vmem:[%s1 + $0xae8] sm:$0xff]
  %v373 = vld [vmem:[%s1 + $0xaf0] sm:$0xff]
  %v374 = vld [vmem:[%s1 + $0xaf8] sm:$0xff]
  %v375 = vld [vmem:[%s1 + $0xb00] sm:$0xff]
  %v376 = vld [vmem:[%s1 + $0xb08] sm:$0xff]
  %v377 = vld [vmem:[%s1 + $0xb10] sm:$0xff]
  %v378 = vld [vmem:[%s1 + $0xb18] sm:$0xff]
  %v379 = vld [vmem:[%s1 + $0xb20] sm:$0xff]
  %v380 = vld [vmem:[%s1 + $0xb28] sm:$0xff]
  %v381 = vld [vmem:[%s1 + $0xb30] sm:$0xff]
  %v382 = vld [vmem:[%s1 + $0xb38] sm:$0xff]
  %v383 = vld [vmem:[%s1 + $0xb40] sm:$0xff]
  %v384 = vld [vmem:[%s1 + $0xb48] sm:$0xff]
  %v385 = vld [vmem:[%s1 + $0xb50] sm:$0xff]
  %v386 = vld [vmem:[%s1 + $0xb58] sm:$0xff]
  %v387 = vld [vmem:[%s1 + $0xb60] sm:$0xff]
  %v388 = vld [vmem:[%s1 + $0xb68] sm:$0xff]
  %v389 = vld [vmem:[%s1 + $0xb70] sm:$0xff]
  %v390 = vld [vmem:[%s1 + $0xb78] sm:$0xff]
  %v391 = vld [vmem:[%s1 + $0xb80] sm:$0xff]
  %v392 = vld [vmem:[%s1 + $0xb88] sm:$0xff]
  %v393 = vld [vmem:[%s1 + $0xb90] sm:$0xff]
  %v394 = vld [vmem:[%s1 + $0xb98] sm:$0xff]
  %v395 = vld [vmem:[%s1 + $0xba0] sm:$0xff]
  %v396 = vld [vmem:[%s1 + $0xba8] sm:$0xff]
  %v397 = vld [vmem:[%s1 + $0xbb0] sm:$0xff]
  %v398 = vld [vmem:[%s1 + $0xbb8] sm:$0xff]
  %v399 = vld [vmem:[%s1 + $0xbc0] sm:$0xff]
  %v400 = vld [vmem:[%s1 + $0xbc8] sm:$0xff]
  %v401 = vld [vmem:[%s1 + $0xbd0] sm:$0xff]
  %v402 = vld [vmem:[%s1 + $0xbd8] sm:$0xff]
  %v403 = vld [vmem:[%s1 + $0xbe0] sm:$0xff]
  %v404 = vld [vmem:[%s1 + $0xbe8] sm:$0xff]
  %v405 = vld [vmem:[%s1 + $0xbf0] sm:$0xff]
  %v406 = vld [vmem:[%s1 + $0xbf8] sm:$0xff]
  %v407 = vld [vmem:[%s1 + $0xc00] sm:$0xff]
  %v408 = vld [vmem:[%s1 + $0xc08] sm:$0xff]
  %v409 = vld [vmem:[%s1 + $0xc10] sm:$0xff]
  %v410 = vld [vmem:[%s1 + $0xc18] sm:$0xff]
  %v411 = vld [vmem:[%s1 + $0xc20] sm:$0xff]
  %v412 = vld [vmem:[%s1 + $0xc28] sm:$0xff]
  %v413 = vld [vmem:[%s1 + $0xc30] sm:$0xff]
  %v414 = vld [vmem:[%s1 + $0xc38] sm:$0xff]
  %v415 = vld [vmem:[%s1 + $0xc40] sm:$0xff]
  %v416 = vld [vmem:[%s1 + $0xc48] sm:$0xff]
  %v417 = vld [vmem:[%s1 + $0xc50] sm:$0xff]
  %v418 = vld [vmem:[%s1 + $0xc58] sm:$0xff]
  %v419 = vld [vmem:[%s1 + $0xc60] sm:$0xff]
  %v420 = vld [vmem:[%s1 + $0xc68] sm:$0xff]
  %v421 = vld [vmem:[%s1 + $0xc70] sm:$0xff]
  %v422 = vld [vmem:[%s1 + $0xc78] sm:$0xff]
  %v423 = vld [vmem:[%s1 + $0xc80] sm:$0xff]
  %v424 = vld [vmem:[%s1 + $0xc88] sm:$0xff]
  %v425 = vld [vmem:[%s1 + $0xc90] sm:$0xff]
  %v426 = vld [vmem:[%s1 + $0xc98] sm:$0xff]
  %v427 = vld [vmem:[%s1 + $0xca0] sm:$0xff]
  %v428 = vld [vmem:[%s1 + $0xca8] sm:$0xff]
  %v429 = vld [vmem:[%s1 + $0xcb0] sm:$0xff]
  %v430 = vld [vmem:[%s1 + $0xcb8] sm:$0xff]
  %v431 = vld [vmem:[%s1 + $0xcc0] sm:$0xff]
  %v432 = vld [vmem:[%s1 + $0xcc8] sm:$0xff]
  %v433 = vld [vmem:[%s1 + $0xcd0] sm:$0xff]
  %v434 = vld [vmem:[%s1 + $0xcd8] sm:$0xff]
  %v435 = vld [vmem:[%s1 + $0xce0] sm:$0xff]
  %v436 = vld [vmem:[%s1 + $0xce8] sm:$0xff]
  %v437 = vld [vmem:[%s1 + $0xcf0] sm:$0xff]
  %v438 = vld [vmem:[%s1 + $0xcf8] sm:$0xff]
  %v439 = vld [vmem:[%s1 + $0xd00] sm:$0xff]
  %v440 = vld [vmem:[%s1 + $0xd08] sm:$0xff]
  %v441 = vld [vmem:[%s1 + $0xd10] sm:$0xff]
  %v442 = vld [vmem:[%s1 + $0xd18] sm:$0xff]
  %v443 = vld [vmem:[%s1 + $0xd20] sm:$0xff]
  %v444 = vld [vmem:[%s1 + $0xd28] sm:$0xff]
  %v445 = vld [vmem:[%s1 + $0xd30] sm:$0xff]
  %v446 = vld [vmem:[%s1 + $0xd38] sm:$0xff]
  %v447 = vld [vmem:[%s1 + $0xd40] sm:$0xff]
  %v448 = vld [vmem:[%s1 + $0xd48] sm:$0xff]
  %v449 = vld [vmem:[%s1 + $0xd50] sm:$0xff]
  %v450 = vld [vmem:[%s1 + $0xd58] sm:$0xff]
  %v451 = vld [vmem:[%s1 + $0xd60] sm:$0xff]
  %v452 = vld [vmem:[%s1 + $0xd68] sm:$0xff]
  %v453 = vld [vmem:[%s1 + $0xd70] sm:$0xff]
  %v454 = vld [vmem:[%s1 + $0xd78] sm:$0xff]
  %v455 = vld [vmem:[%s1 + $0xd80] sm:$0xff]
  %v456 = vld [vmem:[%s1 + $0xd88] sm:$0xff]
  %v457 = vld [vmem:[%s1 + $0xd90] sm:$0xff]
  %v458 = vld [vmem:[%s1 + $0xd98] sm:$0xff]
  %v459 = vld [vmem:[%s1 + $0xda0] sm:$0xff]
  %v460 = vld [vmem:[%s1 + $0xda8] sm:$0xff]
  %v461 = vld [vmem:[%s1 + $0xdb0] sm:$0xff]
  %v462 = vld [vmem:[%s1 + $0xdb8] sm:$0xff]
  %v463 = vld [vmem:[%s1 + $0xdc0] sm:$0xff]
  %v464 = vld [vmem:[%s1 + $0xdc8] sm:$0xff]
  %v465 = vld [vmem:[%s1 + $0xdd0] sm:$0xff]
  %v466 = vld [vmem:[%s1 + $0xdd8] sm:$0xff]
  %v467 = vld [vmem:[%s1 + $0xde0] sm:$0xff]
  %v468 = vld [vmem:[%s1 + $0xde8] sm:$0xff]
  %v469 = vld [vmem:[%s1 + $0xdf0] sm:$0xff]
  %v470 = vld [vmem:[%s1 + $0xdf8] sm:$0xff]
  %v471 = vld [vmem:[%s1 + $0xe00] sm:$0xff]
  %v472 = vld [vmem:[%s1 + $0xe08] sm:$0xff]
  %v473 = vld [vmem:[%s1 + $0xe10] sm:$0xff]
  %v474 = vld [vmem:[%s1 + $0xe18] sm:$0xff]
  %v475 = vld [vmem:[%s1 + $0xe20] sm:$0xff]
  %v476 = vld [vmem:[%s1 + $0xe28] sm:$0xff]
  %v477 = vld [vmem:[%s1 + $0xe30] sm:$0xff]
  %v478 = vld [vmem:[%s1 + $0xe38] sm:$0xff]
  %v479 = vld [vmem:[%s1 + $0xe40] sm:$0xff]
  %v480 = vld [vmem:[%s1 + $0xe48] sm:$0xff]
  %v481 = vld [vmem:[%s1 + $0xe50] sm:$0xff]
  %v482 = vld [vmem:[%s1 + $0xe58] sm:$0xff]
  %v483 = vld [vmem:[%s1 + $0xe60] sm:$0xff]
  %v484 = vld [vmem:[%s1 + $0xe68] sm:$0xff]
  %v485 = vld [vmem:[%s1 + $0xe70] sm:$0xff]
  %v486 = vld [vmem:[%s1 + $0xe78] sm:$0xff]
  %v487 = vld [vmem:[%s1 + $0xe80] sm:$0xff]
  %v488 = vld [vmem:[%s1 + $0xe88] sm:$0xff]
  %v489 = vld [vmem:[%s1 + $0xe90] sm:$0xff]
  %v490 = vld [vmem:[%s1 + $0xe98] sm:$0xff]
  %v491 = vld [vmem:[%s1 + $0xea0] sm:$0xff]
  %v492 = vld [vmem:[%s1 + $0xea8] sm:$0xff]
  %v493 = vld [vmem:[%s1 + $0xeb0] sm:$0xff]
  %v494 = vld [vmem:[%s1 + $0xeb8] sm:$0xff]
  %v495 = vld [vmem:[%s1 + $0xec0] sm:$0xff]
  %v496 = vld [vmem:[%s1 + $0xec8] sm:$0xff]
  %v497 = vld [vmem:[%s1 + $0xed0] sm:$0xff]
  %v498 = vld [vmem:[%s1 + $0xed8] sm:$0xff]
  %v499 = vld [vmem:[%s1 + $0xee0] sm:$0xff]
  %v500 = vld [vmem:[%s1 + $0xee8] sm:$0xff]
  %v501 = vld [vmem:[%s1 + $0xef0] sm:$0xff]
  %v502 = vld [vmem:[%s1 + $0xef8] sm:$0xff]
  %v503 = vld [vmem:[%s1 + $0xf00] sm:$0xff]
  %v504 = vld [vmem:[%s1 + $0xf08] sm:$0xff]
  %v505 = vld [vmem:[%s1 + $0xf10] sm:$0xff]
  %v506 = vld [vmem:[%s1 + $0xf18] sm:$0xff]
  %v507 = vld [vmem:[%s1 + $0xf20] sm:$0xff]
  %v508 = vld [vmem:[%s1 + $0xf28] sm:$0xff]
  %v509 = vld [vmem:[%s1 + $0xf30] sm:$0xff]
  %v510 = vld [vmem:[%s1 + $0xf38] sm:$0xff]
  %v511 = vld [vmem:[%s1 + $0xf40] sm:$0xff]
  %v512 = vld [vmem:[%s1 + $0xf48] sm:$0xff]
  %v513 = vld [vmem:[%s1 + $0xf50] sm:$0xff]
  %v514 = vld [vmem:[%s1 + $0xf58] sm:$0xff]
  %v515 = vld [vmem:[%s1 + $0xf60] sm:$0xff]
  %v516 = vld [vmem:[%s1 + $0xf68] sm:$0xff]
  %v517 = vld [vmem:[%s1 + $0xf70] sm:$0xff]
  %v518 = vld [vmem:[%s1 + $0xf78] sm:$0xff]
  %v519 = vld [vmem:[%s1 + $0xf80] sm:$0xff]
  %v520 = vld [vmem:[%s1 + $0xf88] sm:$0xff]
  %v521 = vld [vmem:[%s1 + $0xf90] sm:$0xff]
  %v522 = vld [vmem:[%s1 + $0xf98] sm:$0xff]
  %v523 = vld [vmem:[%s1 + $0xfa0] sm:$0xff]
  %v524 = vld [vmem:[%s1 + $0xfa8] sm:$0xff]
  %v525 = vld [vmem:[%s1 + $0xfb0] sm:$0xff]
  %v526 = vld [vmem:[%s1 + $0xfb8] sm:$0xff]
  %v527 = vld [vmem:[%s1 + $0xfc0] sm:$0xff]
  %v528 = vld [vmem:[%s1 + $0xfc8] sm:$0xff]
  %v529 = vld [vmem:[%s1 + $0xfd0] sm:$0xff]
  %v530 = vld [vmem:[%s1 + $0xfd8] sm:$0xff]
  %v531 = vld [vmem:[%s1 + $0xfe0] sm:$0xff]
  %v532 = vld [vmem:[%s1 + $0xfe8] sm:$0xff]
  %v533 = vld [vmem:[%s1 + $0xff0] sm:$0xff]
  %v534 = vld [vmem:[%s1 + $0xff8] sm:$0xff]
  %v535 = vld [vmem:[%s2] sm:$0xff]
  %v537 = vlaneseq
  %v538 = vshrl.u32 %v537, 7
  %v539 = vsub.s32 0, %v538
  %v540 = vrot.slane %v535, %v539
  %v541 = vlaneseq
  %v542 = vshrl.u32 %v541, 7
  %v543 = vsub.s32 1, %v542
  %v544 = vrot.slane %v535, %v543
  %v545 = vlaneseq
  %v546 = vshrl.u32 %v545, 7
  %v547 = vsub.s32 2, %v546
  %v548 = vrot.slane %v535, %v547
  %v549 = vlaneseq
  %v550 = vshrl.u32 %v549, 7
  %v551 = vsub.s32 3, %v550
  %v552 = vrot.slane %v535, %v551
  %v553 = vlaneseq
  %v554 = vshrl.u32 %v553, 7
  %v555 = vsub.s32 4, %v554
  %v556 = vrot.slane %v535, %v555
  %v557 = vlaneseq
  %v558 = vshrl.u32 %v557, 7
  %v559 = vsub.s32 5, %v558
  %v560 = vrot.slane %v535, %v559
  %v561 = vlaneseq
  %v562 = vshrl.u32 %v561, 7
  %v563 = vsub.s32 6, %v562
  %v564 = vrot.slane %v535, %v563
  %v565 = vlaneseq
  %v566 = vshrl.u32 %v565, 7
  %v567 = vsub.s32 7, %v566
  %v568 = vrot.slane %v535, %v567
  %v578 = vcombine.high %v22, %v22
  %v580 = vunpack.c.l.s4 1966171168
  %v581 = vunpack.c.0.s8 %v580
  %v582 = vlaneseq
  %v583 = vshrl.u32 %v582, 7
  %v584 = vsub.s32 %v581, %v583
  %v585 = vrot.slane %v22, %v584
  %v587 = vunpack.c.l.s4 1966171168
  %v588 = vunpack.c.0.s8 %v587
  %v589 = vlaneseq
  %v590 = vshrl.u32 %v589, 7
  %v591 = vsub.s32 %v588, %v590
  %v592 = vrot.slane %v578, %v591
  %v593 = vcombine.high %v585, %v585
  %v594 = vcombine.high %v592, %v592
  %v596 = vunpack.c.l.s4 1966171168
  %v597 = vunpack.c.0.s8 %v596
  %v598 = vlaneseq
  %v599 = vshrl.u32 %v598, 7
  %v600 = vsub.s32 %v597, %v599
  %v601 = vrot.slane %v585, %v600
  %v603 = vunpack.c.l.s4 1966171168
  %v604 = vunpack.c.0.s8 %v603
  %v605 = vlaneseq
  %v606 = vshrl.u32 %v605, 7
  %v607 = vsub.s32 %v604, %v606
  %v608 = vrot.slane %v592, %v607
  %v610 = vunpack.c.l.s4 1966171168
  %v611 = vunpack.c.0.s8 %v610
  %v612 = vlaneseq
  %v613 = vshrl.u32 %v612, 7
  %v614 = vsub.s32 %v611, %v613
  %v615 = vrot.slane %v593, %v614
  %v617 = vunpack.c.l.s4 1966171168
  %v618 = vunpack.c.0.s8 %v617
  %v619 = vlaneseq
  %v620 = vshrl.u32 %v619, 7
  %v621 = vsub.s32 %v618, %v620
  %v622 = vrot.slane %v594, %v621
  %v623 = vcombine.high %v601, %v601
  %v624 = vcombine.high %v608, %v608
  %v625 = vcombine.high %v615, %v615
  %v626 = vcombine.high %v622, %v622
  %v1147 = vunpack.c.l.b16 %v23
  %v1148 = vunpack.c.h.b16 %v23
  %v1149 = vunpack.c.l.b16 %v24
  %v1150 = vunpack.c.h.b16 %v24
  %v1151 = vunpack.c.l.b16 %v25
  %v1152 = vunpack.c.h.b16 %v25
  %v1153 = vunpack.c.l.b16 %v26
  %v1154 = vunpack.c.h.b16 %v26
  %v1155 = vunpack.c.l.b16 %v27
  %v1156 = vunpack.c.h.b16 %v27
  %v1157 = vunpack.c.l.b16 %v28
  %v1158 = vunpack.c.h.b16 %v28
  %v1159 = vunpack.c.l.b16 %v29
  %v1160 = vunpack.c.h.b16 %v29
  %v1161 = vunpack.c.l.b16 %v30
  %v1162 = vunpack.c.h.b16 %v30
  %v1163 = vunpack.c.l.b16 %v31
  %v1164 = vunpack.c.h.b16 %v31
  %v1165 = vunpack.c.l.b16 %v32
  %v1166 = vunpack.c.h.b16 %v32
  %v1167 = vunpack.c.l.b16 %v33
  %v1168 = vunpack.c.h.b16 %v33
  %v1169 = vunpack.c.l.b16 %v34
  %v1170 = vunpack.c.h.b16 %v34
  %v1171 = vunpack.c.l.b16 %v35
  %v1172 = vunpack.c.h.b16 %v35
  %v1173 = vunpack.c.l.b16 %v36
  %v1174 = vunpack.c.h.b16 %v36
  %v1175 = vunpack.c.l.b16 %v37
  %v1176 = vunpack.c.h.b16 %v37
  %v1177 = vunpack.c.l.b16 %v38
  %v1178 = vunpack.c.h.b16 %v38
  %v1179 = vunpack.c.l.b16 %v39
  %v1180 = vunpack.c.h.b16 %v39
  %v1181 = vunpack.c.l.b16 %v40
  %v1182 = vunpack.c.h.b16 %v40
  %v1183 = vunpack.c.l.b16 %v41
  %v1184 = vunpack.c.h.b16 %v41
  %v1185 = vunpack.c.l.b16 %v42
  %v1186 = vunpack.c.h.b16 %v42
  %v1187 = vunpack.c.l.b16 %v43
  %v1188 = vunpack.c.h.b16 %v43
  %v1189 = vunpack.c.l.b16 %v44
  %v1190 = vunpack.c.h.b16 %v44
  %v1191 = vunpack.c.l.b16 %v45
  %v1192 = vunpack.c.h.b16 %v45
  %v1193 = vunpack.c.l.b16 %v46
  %v1194 = vunpack.c.h.b16 %v46
  %v1195 = vunpack.c.l.b16 %v47
  %v1196 = vunpack.c.h.b16 %v47
  %v1197 = vunpack.c.l.b16 %v48
  %v1198 = vunpack.c.h.b16 %v48
  %v1199 = vunpack.c.l.b16 %v49
  %v1200 = vunpack.c.h.b16 %v49
  %v1201 = vunpack.c.l.b16 %v50
  %v1202 = vunpack.c.h.b16 %v50
  %v1203 = vunpack.c.l.b16 %v51
  %v1204 = vunpack.c.h.b16 %v51
  %v1205 = vunpack.c.l.b16 %v52
  %v1206 = vunpack.c.h.b16 %v52
  %v1207 = vunpack.c.l.b16 %v53
  %v1208 = vunpack.c.h.b16 %v53
  %v1209 = vunpack.c.l.b16 %v54
  %v1210 = vunpack.c.h.b16 %v54
  %v1211 = vunpack.c.l.b16 %v55
  %v1212 = vunpack.c.h.b16 %v55
  %v1213 = vunpack.c.l.b16 %v56
  %v1214 = vunpack.c.h.b16 %v56
  %v1215 = vunpack.c.l.b16 %v57
  %v1216 = vunpack.c.h.b16 %v57
  %v1217 = vunpack.c.l.b16 %v58
  %v1218 = vunpack.c.h.b16 %v58
  %v1219 = vunpack.c.l.b16 %v59
  %v1220 = vunpack.c.h.b16 %v59
  %v1221 = vunpack.c.l.b16 %v60
  %v1222 = vunpack.c.h.b16 %v60
  %v1223 = vunpack.c.l.b16 %v61
  %v1224 = vunpack.c.h.b16 %v61
  %v1225 = vunpack.c.l.b16 %v62
  %v1226 = vunpack.c.h.b16 %v62
  %v1227 = vunpack.c.l.b16 %v63
  %v1228 = vunpack.c.h.b16 %v63
  %v1229 = vunpack.c.l.b16 %v64
  %v1230 = vunpack.c.h.b16 %v64
  %v1231 = vunpack.c.l.b16 %v65
  %v1232 = vunpack.c.h.b16 %v65
  %v1233 = vunpack.c.l.b16 %v66
  %v1234 = vunpack.c.h.b16 %v66
  %v1235 = vunpack.c.l.b16 %v67
  %v1236 = vunpack.c.h.b16 %v67
  %v1237 = vunpack.c.l.b16 %v68
  %v1238 = vunpack.c.h.b16 %v68
  %v1239 = vunpack.c.l.b16 %v69
  %v1240 = vunpack.c.h.b16 %v69
  %v1241 = vunpack.c.l.b16 %v70
  %v1242 = vunpack.c.h.b16 %v70
  %v1243 = vunpack.c.l.b16 %v71
  %v1244 = vunpack.c.h.b16 %v71
  %v1245 = vunpack.c.l.b16 %v72
  %v1246 = vunpack.c.h.b16 %v72
  %v1247 = vunpack.c.l.b16 %v73
  %v1248 = vunpack.c.h.b16 %v73
  %v1249 = vunpack.c.l.b16 %v74
  %v1250 = vunpack.c.h.b16 %v74
  %v1251 = vunpack.c.l.b16 %v75
  %v1252 = vunpack.c.h.b16 %v75
  %v1253 = vunpack.c.l.b16 %v76
  %v1254 = vunpack.c.h.b16 %v76
  %v1255 = vunpack.c.l.b16 %v77
  %v1256 = vunpack.c.h.b16 %v77
  %v1257 = vunpack.c.l.b16 %v78
  %v1258 = vunpack.c.h.b16 %v78
  %v1259 = vunpack.c.l.b16 %v79
  %v1260 = vunpack.c.h.b16 %v79
  %v1261 = vunpack.c.l.b16 %v80
  %v1262 = vunpack.c.h.b16 %v80
  %v1263 = vunpack.c.l.b16 %v81
  %v1264 = vunpack.c.h.b16 %v81
  %v1265 = vunpack.c.l.b16 %v82
  %v1266 = vunpack.c.h.b16 %v82
  %v1267 = vunpack.c.l.b16 %v83
  %v1268 = vunpack.c.h.b16 %v83
  %v1269 = vunpack.c.l.b16 %v84
  %v1270 = vunpack.c.h.b16 %v84
  %v1271 = vunpack.c.l.b16 %v85
  %v1272 = vunpack.c.h.b16 %v85
  %v1273 = vunpack.c.l.b16 %v86
  %v1274 = vunpack.c.h.b16 %v86
  %v1275 = vunpack.c.l.b16 %v87
  %v1276 = vunpack.c.h.b16 %v87
  %v1277 = vunpack.c.l.b16 %v88
  %v1278 = vunpack.c.h.b16 %v88
  %v1279 = vunpack.c.l.b16 %v89
  %v1280 = vunpack.c.h.b16 %v89
  %v1281 = vunpack.c.l.b16 %v90
  %v1282 = vunpack.c.h.b16 %v90
  %v1283 = vunpack.c.l.b16 %v91
  %v1284 = vunpack.c.h.b16 %v91
  %v1285 = vunpack.c.l.b16 %v92
  %v1286 = vunpack.c.h.b16 %v92
  %v1287 = vunpack.c.l.b16 %v93
  %v1288 = vunpack.c.h.b16 %v93
  %v1289 = vunpack.c.l.b16 %v94
  %v1290 = vunpack.c.h.b16 %v94
  %v1291 = vunpack.c.l.b16 %v95
  %v1292 = vunpack.c.h.b16 %v95
  %v1293 = vunpack.c.l.b16 %v96
  %v1294 = vunpack.c.h.b16 %v96
  %v1295 = vunpack.c.l.b16 %v97
  %v1296 = vunpack.c.h.b16 %v97
  %v1297 = vunpack.c.l.b16 %v98
  %v1298 = vunpack.c.h.b16 %v98
  %v1299 = vunpack.c.l.b16 %v99
  %v1300 = vunpack.c.h.b16 %v99
  %v1301 = vunpack.c.l.b16 %v100
  %v1302 = vunpack.c.h.b16 %v100
  %v1303 = vunpack.c.l.b16 %v101
  %v1304 = vunpack.c.h.b16 %v101
  %v1305 = vunpack.c.l.b16 %v102
  %v1306 = vunpack.c.h.b16 %v102
  %v1307 = vunpack.c.l.b16 %v103
  %v1308 = vunpack.c.h.b16 %v103
  %v1309 = vunpack.c.l.b16 %v104
  %v1310 = vunpack.c.h.b16 %v104
  %v1311 = vunpack.c.l.b16 %v105
  %v1312 = vunpack.c.h.b16 %v105
  %v1313 = vunpack.c.l.b16 %v106
  %v1314 = vunpack.c.h.b16 %v106
  %v1315 = vunpack.c.l.b16 %v107
  %v1316 = vunpack.c.h.b16 %v107
  %v1317 = vunpack.c.l.b16 %v108
  %v1318 = vunpack.c.h.b16 %v108
  %v1319 = vunpack.c.l.b16 %v109
  %v1320 = vunpack.c.h.b16 %v109
  %v1321 = vunpack.c.l.b16 %v110
  %v1322 = vunpack.c.h.b16 %v110
  %v1323 = vunpack.c.l.b16 %v111
  %v1324 = vunpack.c.h.b16 %v111
  %v1325 = vunpack.c.l.b16 %v112
  %v1326 = vunpack.c.h.b16 %v112
  %v1327 = vunpack.c.l.b16 %v113
  %v1328 = vunpack.c.h.b16 %v113
  %v1329 = vunpack.c.l.b16 %v114
  %v1330 = vunpack.c.h.b16 %v114
  %v1331 = vunpack.c.l.b16 %v115
  %v1332 = vunpack.c.h.b16 %v115
  %v1333 = vunpack.c.l.b16 %v116
  %v1334 = vunpack.c.h.b16 %v116
  %v1335 = vunpack.c.l.b16 %v117
  %v1336 = vunpack.c.h.b16 %v117
  %v1337 = vunpack.c.l.b16 %v118
  %v1338 = vunpack.c.h.b16 %v118
  %v1339 = vunpack.c.l.b16 %v119
  %v1340 = vunpack.c.h.b16 %v119
  %v1341 = vunpack.c.l.b16 %v120
  %v1342 = vunpack.c.h.b16 %v120
  %v1343 = vunpack.c.l.b16 %v121
  %v1344 = vunpack.c.h.b16 %v121
  %v1345 = vunpack.c.l.b16 %v122
  %v1346 = vunpack.c.h.b16 %v122
  %v1347 = vunpack.c.l.b16 %v123
  %v1348 = vunpack.c.h.b16 %v123
  %v1349 = vunpack.c.l.b16 %v124
  %v1350 = vunpack.c.h.b16 %v124
  %v1351 = vunpack.c.l.b16 %v125
  %v1352 = vunpack.c.h.b16 %v125
  %v1353 = vunpack.c.l.b16 %v126
  %v1354 = vunpack.c.h.b16 %v126
  %v1355 = vunpack.c.l.b16 %v127
  %v1356 = vunpack.c.h.b16 %v127
  %v1357 = vunpack.c.l.b16 %v128
  %v1358 = vunpack.c.h.b16 %v128
  %v1359 = vunpack.c.l.b16 %v129
  %v1360 = vunpack.c.h.b16 %v129
  %v1361 = vunpack.c.l.b16 %v130
  %v1362 = vunpack.c.h.b16 %v130
  %v1363 = vunpack.c.l.b16 %v131
  %v1364 = vunpack.c.h.b16 %v131
  %v1365 = vunpack.c.l.b16 %v132
  %v1366 = vunpack.c.h.b16 %v132
  %v1367 = vunpack.c.l.b16 %v133
  %v1368 = vunpack.c.h.b16 %v133
  %v1369 = vunpack.c.l.b16 %v134
  %v1370 = vunpack.c.h.b16 %v134
  %v1371 = vunpack.c.l.b16 %v135
  %v1372 = vunpack.c.h.b16 %v135
  %v1373 = vunpack.c.l.b16 %v136
  %v1374 = vunpack.c.h.b16 %v136
  %v1375 = vunpack.c.l.b16 %v137
  %v1376 = vunpack.c.h.b16 %v137
  %v1377 = vunpack.c.l.b16 %v138
  %v1378 = vunpack.c.h.b16 %v138
  %v1379 = vunpack.c.l.b16 %v139
  %v1380 = vunpack.c.h.b16 %v139
  %v1381 = vunpack.c.l.b16 %v140
  %v1382 = vunpack.c.h.b16 %v140
  %v1383 = vunpack.c.l.b16 %v141
  %v1384 = vunpack.c.h.b16 %v141
  %v1385 = vunpack.c.l.b16 %v142
  %v1386 = vunpack.c.h.b16 %v142
  %v1387 = vunpack.c.l.b16 %v143
  %v1388 = vunpack.c.h.b16 %v143
  %v1389 = vunpack.c.l.b16 %v144
  %v1390 = vunpack.c.h.b16 %v144
  %v1391 = vunpack.c.l.b16 %v145
  %v1392 = vunpack.c.h.b16 %v145
  %v1393 = vunpack.c.l.b16 %v146
  %v1394 = vunpack.c.h.b16 %v146
  %v1395 = vunpack.c.l.b16 %v147
  %v1396 = vunpack.c.h.b16 %v147
  %v1397 = vunpack.c.l.b16 %v148
  %v1398 = vunpack.c.h.b16 %v148
  %v1399 = vunpack.c.l.b16 %v149
  %v1400 = vunpack.c.h.b16 %v149
  %v1401 = vunpack.c.l.b16 %v150
  %v1402 = vunpack.c.h.b16 %v150
  %v1403 = vunpack.c.l.b16 %v151
  %v1404 = vunpack.c.h.b16 %v151
  %v1405 = vunpack.c.l.b16 %v152
  %v1406 = vunpack.c.h.b16 %v152
  %v1407 = vunpack.c.l.b16 %v153
  %v1408 = vunpack.c.h.b16 %v153
  %v1409 = vunpack.c.l.b16 %v154
  %v1410 = vunpack.c.h.b16 %v154
  %v1411 = vunpack.c.l.b16 %v155
  %v1412 = vunpack.c.h.b16 %v155
  %v1413 = vunpack.c.l.b16 %v156
  %v1414 = vunpack.c.h.b16 %v156
  %v1415 = vunpack.c.l.b16 %v157
  %v1416 = vunpack.c.h.b16 %v157
  %v1417 = vunpack.c.l.b16 %v158
  %v1418 = vunpack.c.h.b16 %v158
  %v1419 = vunpack.c.l.b16 %v159
  %v1420 = vunpack.c.h.b16 %v159
  %v1421 = vunpack.c.l.b16 %v160
  %v1422 = vunpack.c.h.b16 %v160
  %v1423 = vunpack.c.l.b16 %v161
  %v1424 = vunpack.c.h.b16 %v161
  %v1425 = vunpack.c.l.b16 %v162
  %v1426 = vunpack.c.h.b16 %v162
  %v1427 = vunpack.c.l.b16 %v163
  %v1428 = vunpack.c.h.b16 %v163
  %v1429 = vunpack.c.l.b16 %v164
  %v1430 = vunpack.c.h.b16 %v164
  %v1431 = vunpack.c.l.b16 %v165
  %v1432 = vunpack.c.h.b16 %v165
  %v1433 = vunpack.c.l.b16 %v166
  %v1434 = vunpack.c.h.b16 %v166
  %v1435 = vunpack.c.l.b16 %v167
  %v1436 = vunpack.c.h.b16 %v167
  %v1437 = vunpack.c.l.b16 %v168
  %v1438 = vunpack.c.h.b16 %v168
  %v1439 = vunpack.c.l.b16 %v169
  %v1440 = vunpack.c.h.b16 %v169
  %v1441 = vunpack.c.l.b16 %v170
  %v1442 = vunpack.c.h.b16 %v170
  %v1443 = vunpack.c.l.b16 %v171
  %v1444 = vunpack.c.h.b16 %v171
  %v1445 = vunpack.c.l.b16 %v172
  %v1446 = vunpack.c.h.b16 %v172
  %v1447 = vunpack.c.l.b16 %v173
  %v1448 = vunpack.c.h.b16 %v173
  %v1449 = vunpack.c.l.b16 %v174
  %v1450 = vunpack.c.h.b16 %v174
  %v1451 = vunpack.c.l.b16 %v175
  %v1452 = vunpack.c.h.b16 %v175
  %v1453 = vunpack.c.l.b16 %v176
  %v1454 = vunpack.c.h.b16 %v176
  %v1455 = vunpack.c.l.b16 %v177
  %v1456 = vunpack.c.h.b16 %v177
  %v1457 = vunpack.c.l.b16 %v178
  %v1458 = vunpack.c.h.b16 %v178
  %v1459 = vunpack.c.l.b16 %v179
  %v1460 = vunpack.c.h.b16 %v179
  %v1461 = vunpack.c.l.b16 %v180
  %v1462 = vunpack.c.h.b16 %v180
  %v1463 = vunpack.c.l.b16 %v181
  %v1464 = vunpack.c.h.b16 %v181
  %v1465 = vunpack.c.l.b16 %v182
  %v1466 = vunpack.c.h.b16 %v182
  %v1467 = vunpack.c.l.b16 %v183
  %v1468 = vunpack.c.h.b16 %v183
  %v1469 = vunpack.c.l.b16 %v184
  %v1470 = vunpack.c.h.b16 %v184
  %v1471 = vunpack.c.l.b16 %v185
  %v1472 = vunpack.c.h.b16 %v185
  %v1473 = vunpack.c.l.b16 %v186
  %v1474 = vunpack.c.h.b16 %v186
  %v1475 = vunpack.c.l.b16 %v187
  %v1476 = vunpack.c.h.b16 %v187
  %v1477 = vunpack.c.l.b16 %v188
  %v1478 = vunpack.c.h.b16 %v188
  %v1479 = vunpack.c.l.b16 %v189
  %v1480 = vunpack.c.h.b16 %v189
  %v1481 = vunpack.c.l.b16 %v190
  %v1482 = vunpack.c.h.b16 %v190
  %v1483 = vunpack.c.l.b16 %v191
  %v1484 = vunpack.c.h.b16 %v191
  %v1485 = vunpack.c.l.b16 %v192
  %v1486 = vunpack.c.h.b16 %v192
  %v1487 = vunpack.c.l.b16 %v193
  %v1488 = vunpack.c.h.b16 %v193
  %v1489 = vunpack.c.l.b16 %v194
  %v1490 = vunpack.c.h.b16 %v194
  %v1491 = vunpack.c.l.b16 %v195
  %v1492 = vunpack.c.h.b16 %v195
  %v1493 = vunpack.c.l.b16 %v196
  %v1494 = vunpack.c.h.b16 %v196
  %v1495 = vunpack.c.l.b16 %v197
  %v1496 = vunpack.c.h.b16 %v197
  %v1497 = vunpack.c.l.b16 %v198
  %v1498 = vunpack.c.h.b16 %v198
  %v1499 = vunpack.c.l.b16 %v199
  %v1500 = vunpack.c.h.b16 %v199
  %v1501 = vunpack.c.l.b16 %v200
  %v1502 = vunpack.c.h.b16 %v200
  %v1503 = vunpack.c.l.b16 %v201
  %v1504 = vunpack.c.h.b16 %v201
  %v1505 = vunpack.c.l.b16 %v202
  %v1506 = vunpack.c.h.b16 %v202
  %v1507 = vunpack.c.l.b16 %v203
  %v1508 = vunpack.c.h.b16 %v203
  %v1509 = vunpack.c.l.b16 %v204
  %v1510 = vunpack.c.h.b16 %v204
  %v1511 = vunpack.c.l.b16 %v205
  %v1512 = vunpack.c.h.b16 %v205
  %v1513 = vunpack.c.l.b16 %v206
  %v1514 = vunpack.c.h.b16 %v206
  %v1515 = vunpack.c.l.b16 %v207
  %v1516 = vunpack.c.h.b16 %v207
  %v1517 = vunpack.c.l.b16 %v208
  %v1518 = vunpack.c.h.b16 %v208
  %v1519 = vunpack.c.l.b16 %v209
  %v1520 = vunpack.c.h.b16 %v209
  %v1521 = vunpack.c.l.b16 %v210
  %v1522 = vunpack.c.h.b16 %v210
  %v1523 = vunpack.c.l.b16 %v211
  %v1524 = vunpack.c.h.b16 %v211
  %v1525 = vunpack.c.l.b16 %v212
  %v1526 = vunpack.c.h.b16 %v212
  %v1527 = vunpack.c.l.b16 %v213
  %v1528 = vunpack.c.h.b16 %v213
  %v1529 = vunpack.c.l.b16 %v214
  %v1530 = vunpack.c.h.b16 %v214
  %v1531 = vunpack.c.l.b16 %v215
  %v1532 = vunpack.c.h.b16 %v215
  %v1533 = vunpack.c.l.b16 %v216
  %v1534 = vunpack.c.h.b16 %v216
  %v1535 = vunpack.c.l.b16 %v217
  %v1536 = vunpack.c.h.b16 %v217
  %v1537 = vunpack.c.l.b16 %v218
  %v1538 = vunpack.c.h.b16 %v218
  %v1539 = vunpack.c.l.b16 %v219
  %v1540 = vunpack.c.h.b16 %v219
  %v1541 = vunpack.c.l.b16 %v220
  %v1542 = vunpack.c.h.b16 %v220
  %v1543 = vunpack.c.l.b16 %v221
  %v1544 = vunpack.c.h.b16 %v221
  %v1545 = vunpack.c.l.b16 %v222
  %v1546 = vunpack.c.h.b16 %v222
  %v1547 = vunpack.c.l.b16 %v223
  %v1548 = vunpack.c.h.b16 %v223
  %v1549 = vunpack.c.l.b16 %v224
  %v1550 = vunpack.c.h.b16 %v224
  %v1551 = vunpack.c.l.b16 %v225
  %v1552 = vunpack.c.h.b16 %v225
  %v1553 = vunpack.c.l.b16 %v226
  %v1554 = vunpack.c.h.b16 %v226
  %v1555 = vunpack.c.l.b16 %v227
  %v1556 = vunpack.c.h.b16 %v227
  %v1557 = vunpack.c.l.b16 %v228
  %v1558 = vunpack.c.h.b16 %v228
  %v1559 = vunpack.c.l.b16 %v229
  %v1560 = vunpack.c.h.b16 %v229
  %v1561 = vunpack.c.l.b16 %v230
  %v1562 = vunpack.c.h.b16 %v230
  %v1563 = vunpack.c.l.b16 %v231
  %v1564 = vunpack.c.h.b16 %v231
  %v1565 = vunpack.c.l.b16 %v232
  %v1566 = vunpack.c.h.b16 %v232
  %v1567 = vunpack.c.l.b16 %v233
  %v1568 = vunpack.c.h.b16 %v233
  %v1569 = vunpack.c.l.b16 %v234
  %v1570 = vunpack.c.h.b16 %v234
  %v1571 = vunpack.c.l.b16 %v235
  %v1572 = vunpack.c.h.b16 %v235
  %v1573 = vunpack.c.l.b16 %v236
  %v1574 = vunpack.c.h.b16 %v236
  %v1575 = vunpack.c.l.b16 %v237
  %v1576 = vunpack.c.h.b16 %v237
  %v1577 = vunpack.c.l.b16 %v238
  %v1578 = vunpack.c.h.b16 %v238
  %v1579 = vunpack.c.l.b16 %v239
  %v1580 = vunpack.c.h.b16 %v239
  %v1581 = vunpack.c.l.b16 %v240
  %v1582 = vunpack.c.h.b16 %v240
  %v1583 = vunpack.c.l.b16 %v241
  %v1584 = vunpack.c.h.b16 %v241
  %v1585 = vunpack.c.l.b16 %v242
  %v1586 = vunpack.c.h.b16 %v242
  %v1587 = vunpack.c.l.b16 %v243
  %v1588 = vunpack.c.h.b16 %v243
  %v1589 = vunpack.c.l.b16 %v244
  %v1590 = vunpack.c.h.b16 %v244
  %v1591 = vunpack.c.l.b16 %v245
  %v1592 = vunpack.c.h.b16 %v245
  %v1593 = vunpack.c.l.b16 %v246
  %v1594 = vunpack.c.h.b16 %v246
  %v1595 = vunpack.c.l.b16 %v247
  %v1596 = vunpack.c.h.b16 %v247
  %v1597 = vunpack.c.l.b16 %v248
  %v1598 = vunpack.c.h.b16 %v248
  %v1599 = vunpack.c.l.b16 %v249
  %v1600 = vunpack.c.h.b16 %v249
  %v1601 = vunpack.c.l.b16 %v250
  %v1602 = vunpack.c.h.b16 %v250
  %v1603 = vunpack.c.l.b16 %v251
  %v1604 = vunpack.c.h.b16 %v251
  %v1605 = vunpack.c.l.b16 %v252
  %v1606 = vunpack.c.h.b16 %v252
  %v1607 = vunpack.c.l.b16 %v253
  %v1608 = vunpack.c.h.b16 %v253
  %v1609 = vunpack.c.l.b16 %v254
  %v1610 = vunpack.c.h.b16 %v254
  %v1611 = vunpack.c.l.b16 %v255
  %v1612 = vunpack.c.h.b16 %v255
  %v1613 = vunpack.c.l.b16 %v256
  %v1614 = vunpack.c.h.b16 %v256
  %v1615 = vunpack.c.l.b16 %v257
  %v1616 = vunpack.c.h.b16 %v257
  %v1617 = vunpack.c.l.b16 %v258
  %v1618 = vunpack.c.h.b16 %v258
  %v1619 = vunpack.c.l.b16 %v259
  %v1620 = vunpack.c.h.b16 %v259
  %v1621 = vunpack.c.l.b16 %v260
  %v1622 = vunpack.c.h.b16 %v260
  %v1623 = vunpack.c.l.b16 %v261
  %v1624 = vunpack.c.h.b16 %v261
  %v1625 = vunpack.c.l.b16 %v262
  %v1626 = vunpack.c.h.b16 %v262
  %v1627 = vunpack.c.l.b16 %v263
  %v1628 = vunpack.c.h.b16 %v263
  %v1629 = vunpack.c.l.b16 %v264
  %v1630 = vunpack.c.h.b16 %v264
  %v1631 = vunpack.c.l.b16 %v265
  %v1632 = vunpack.c.h.b16 %v265
  %v1633 = vunpack.c.l.b16 %v266
  %v1634 = vunpack.c.h.b16 %v266
  %v1635 = vunpack.c.l.b16 %v267
  %v1636 = vunpack.c.h.b16 %v267
  %v1637 = vunpack.c.l.b16 %v268
  %v1638 = vunpack.c.h.b16 %v268
  %v1639 = vunpack.c.l.b16 %v269
  %v1640 = vunpack.c.h.b16 %v269
  %v1641 = vunpack.c.l.b16 %v270
  %v1642 = vunpack.c.h.b16 %v270
  %v1643 = vunpack.c.l.b16 %v271
  %v1644 = vunpack.c.h.b16 %v271
  %v1645 = vunpack.c.l.b16 %v272
  %v1646 = vunpack.c.h.b16 %v272
  %v1647 = vunpack.c.l.b16 %v273
  %v1648 = vunpack.c.h.b16 %v273
  %v1649 = vunpack.c.l.b16 %v274
  %v1650 = vunpack.c.h.b16 %v274
  %v1651 = vunpack.c.l.b16 %v275
  %v1652 = vunpack.c.h.b16 %v275
  %v1653 = vunpack.c.l.b16 %v276
  %v1654 = vunpack.c.h.b16 %v276
  %v1655 = vunpack.c.l.b16 %v277
  %v1656 = vunpack.c.h.b16 %v277
  %v1657 = vunpack.c.l.b16 %v278
  %v1658 = vunpack.c.h.b16 %v278
  %v1659 = vunpack.c.l.b16 %v279
  %v1660 = vunpack.c.h.b16 %v279
  %v1661 = vunpack.c.l.b16 %v280
  %v1662 = vunpack.c.h.b16 %v280
  %v1663 = vunpack.c.l.b16 %v281
  %v1664 = vunpack.c.h.b16 %v281
  %v1665 = vunpack.c.l.b16 %v282
  %v1666 = vunpack.c.h.b16 %v282
  %v1667 = vunpack.c.l.b16 %v283
  %v1668 = vunpack.c.h.b16 %v283
  %v1669 = vunpack.c.l.b16 %v284
  %v1670 = vunpack.c.h.b16 %v284
  %v1671 = vunpack.c.l.b16 %v285
  %v1672 = vunpack.c.h.b16 %v285
  %v1673 = vunpack.c.l.b16 %v286
  %v1674 = vunpack.c.h.b16 %v286
  %v1675 = vunpack.c.l.b16 %v287
  %v1676 = vunpack.c.h.b16 %v287
  %v1677 = vunpack.c.l.b16 %v288
  %v1678 = vunpack.c.h.b16 %v288
  %v1679 = vunpack.c.l.b16 %v289
  %v1680 = vunpack.c.h.b16 %v289
  %v1681 = vunpack.c.l.b16 %v290
  %v1682 = vunpack.c.h.b16 %v290
  %v1683 = vunpack.c.l.b16 %v291
  %v1684 = vunpack.c.h.b16 %v291
  %v1685 = vunpack.c.l.b16 %v292
  %v1686 = vunpack.c.h.b16 %v292
  %v1687 = vunpack.c.l.b16 %v293
  %v1688 = vunpack.c.h.b16 %v293
  %v1689 = vunpack.c.l.b16 %v294
  %v1690 = vunpack.c.h.b16 %v294
  %v1691 = vunpack.c.l.b16 %v295
  %v1692 = vunpack.c.h.b16 %v295
  %v1693 = vunpack.c.l.b16 %v296
  %v1694 = vunpack.c.h.b16 %v296
  %v1695 = vunpack.c.l.b16 %v297
  %v1696 = vunpack.c.h.b16 %v297
  %v1697 = vunpack.c.l.b16 %v298
  %v1698 = vunpack.c.h.b16 %v298
  %v1699 = vunpack.c.l.b16 %v299
  %v1700 = vunpack.c.h.b16 %v299
  %v1701 = vunpack.c.l.b16 %v300
  %v1702 = vunpack.c.h.b16 %v300
  %v1703 = vunpack.c.l.b16 %v301
  %v1704 = vunpack.c.h.b16 %v301
  %v1705 = vunpack.c.l.b16 %v302
  %v1706 = vunpack.c.h.b16 %v302
  %v1707 = vunpack.c.l.b16 %v303
  %v1708 = vunpack.c.h.b16 %v303
  %v1709 = vunpack.c.l.b16 %v304
  %v1710 = vunpack.c.h.b16 %v304
  %v1711 = vunpack.c.l.b16 %v305
  %v1712 = vunpack.c.h.b16 %v305
  %v1713 = vunpack.c.l.b16 %v306
  %v1714 = vunpack.c.h.b16 %v306
  %v1715 = vunpack.c.l.b16 %v307
  %v1716 = vunpack.c.h.b16 %v307
  %v1717 = vunpack.c.l.b16 %v308
  %v1718 = vunpack.c.h.b16 %v308
  %v1719 = vunpack.c.l.b16 %v309
  %v1720 = vunpack.c.h.b16 %v309
  %v1721 = vunpack.c.l.b16 %v310
  %v1722 = vunpack.c.h.b16 %v310
  %v1723 = vunpack.c.l.b16 %v311
  %v1724 = vunpack.c.h.b16 %v311
  %v1725 = vunpack.c.l.b16 %v312
  %v1726 = vunpack.c.h.b16 %v312
  %v1727 = vunpack.c.l.b16 %v313
  %v1728 = vunpack.c.h.b16 %v313
  %v1729 = vunpack.c.l.b16 %v314
  %v1730 = vunpack.c.h.b16 %v314
  %v1731 = vunpack.c.l.b16 %v315
  %v1732 = vunpack.c.h.b16 %v315
  %v1733 = vunpack.c.l.b16 %v316
  %v1734 = vunpack.c.h.b16 %v316
  %v1735 = vunpack.c.l.b16 %v317
  %v1736 = vunpack.c.h.b16 %v317
  %v1737 = vunpack.c.l.b16 %v318
  %v1738 = vunpack.c.h.b16 %v318
  %v1739 = vunpack.c.l.b16 %v319
  %v1740 = vunpack.c.h.b16 %v319
  %v1741 = vunpack.c.l.b16 %v320
  %v1742 = vunpack.c.h.b16 %v320
  %v1743 = vunpack.c.l.b16 %v321
  %v1744 = vunpack.c.h.b16 %v321
  %v1745 = vunpack.c.l.b16 %v322
  %v1746 = vunpack.c.h.b16 %v322
  %v1747 = vunpack.c.l.b16 %v323
  %v1748 = vunpack.c.h.b16 %v323
  %v1749 = vunpack.c.l.b16 %v324
  %v1750 = vunpack.c.h.b16 %v324
  %v1751 = vunpack.c.l.b16 %v325
  %v1752 = vunpack.c.h.b16 %v325
  %v1753 = vunpack.c.l.b16 %v326
  %v1754 = vunpack.c.h.b16 %v326
  %v1755 = vunpack.c.l.b16 %v327
  %v1756 = vunpack.c.h.b16 %v327
  %v1757 = vunpack.c.l.b16 %v328
  %v1758 = vunpack.c.h.b16 %v328
  %v1759 = vunpack.c.l.b16 %v329
  %v1760 = vunpack.c.h.b16 %v329
  %v1761 = vunpack.c.l.b16 %v330
  %v1762 = vunpack.c.h.b16 %v330
  %v1763 = vunpack.c.l.b16 %v331
  %v1764 = vunpack.c.h.b16 %v331
  %v1765 = vunpack.c.l.b16 %v332
  %v1766 = vunpack.c.h.b16 %v332
  %v1767 = vunpack.c.l.b16 %v333
  %v1768 = vunpack.c.h.b16 %v333
  %v1769 = vunpack.c.l.b16 %v334
  %v1770 = vunpack.c.h.b16 %v334
  %v1771 = vunpack.c.l.b16 %v335
  %v1772 = vunpack.c.h.b16 %v335
  %v1773 = vunpack.c.l.b16 %v336
  %v1774 = vunpack.c.h.b16 %v336
  %v1775 = vunpack.c.l.b16 %v337
  %v1776 = vunpack.c.h.b16 %v337
  %v1777 = vunpack.c.l.b16 %v338
  %v1778 = vunpack.c.h.b16 %v338
  %v1779 = vunpack.c.l.b16 %v339
  %v1780 = vunpack.c.h.b16 %v339
  %v1781 = vunpack.c.l.b16 %v340
  %v1782 = vunpack.c.h.b16 %v340
  %v1783 = vunpack.c.l.b16 %v341
  %v1784 = vunpack.c.h.b16 %v341
  %v1785 = vunpack.c.l.b16 %v342
  %v1786 = vunpack.c.h.b16 %v342
  %v1787 = vunpack.c.l.b16 %v343
  %v1788 = vunpack.c.h.b16 %v343
  %v1789 = vunpack.c.l.b16 %v344
  %v1790 = vunpack.c.h.b16 %v344
  %v1791 = vunpack.c.l.b16 %v345
  %v1792 = vunpack.c.h.b16 %v345
  %v1793 = vunpack.c.l.b16 %v346
  %v1794 = vunpack.c.h.b16 %v346
  %v1795 = vunpack.c.l.b16 %v347
  %v1796 = vunpack.c.h.b16 %v347
  %v1797 = vunpack.c.l.b16 %v348
  %v1798 = vunpack.c.h.b16 %v348
  %v1799 = vunpack.c.l.b16 %v349
  %v1800 = vunpack.c.h.b16 %v349
  %v1801 = vunpack.c.l.b16 %v350
  %v1802 = vunpack.c.h.b16 %v350
  %v1803 = vunpack.c.l.b16 %v351
  %v1804 = vunpack.c.h.b16 %v351
  %v1805 = vunpack.c.l.b16 %v352
  %v1806 = vunpack.c.h.b16 %v352
  %v1807 = vunpack.c.l.b16 %v353
  %v1808 = vunpack.c.h.b16 %v353
  %v1809 = vunpack.c.l.b16 %v354
  %v1810 = vunpack.c.h.b16 %v354
  %v1811 = vunpack.c.l.b16 %v355
  %v1812 = vunpack.c.h.b16 %v355
  %v1813 = vunpack.c.l.b16 %v356
  %v1814 = vunpack.c.h.b16 %v356
  %v1815 = vunpack.c.l.b16 %v357
  %v1816 = vunpack.c.h.b16 %v357
  %v1817 = vunpack.c.l.b16 %v358
  %v1818 = vunpack.c.h.b16 %v358
  %v1819 = vunpack.c.l.b16 %v359
  %v1820 = vunpack.c.h.b16 %v359
  %v1821 = vunpack.c.l.b16 %v360
  %v1822 = vunpack.c.h.b16 %v360
  %v1823 = vunpack.c.l.b16 %v361
  %v1824 = vunpack.c.h.b16 %v361
  %v1825 = vunpack.c.l.b16 %v362
  %v1826 = vunpack.c.h.b16 %v362
  %v1827 = vunpack.c.l.b16 %v363
  %v1828 = vunpack.c.h.b16 %v363
  %v1829 = vunpack.c.l.b16 %v364
  %v1830 = vunpack.c.h.b16 %v364
  %v1831 = vunpack.c.l.b16 %v365
  %v1832 = vunpack.c.h.b16 %v365
  %v1833 = vunpack.c.l.b16 %v366
  %v1834 = vunpack.c.h.b16 %v366
  %v1835 = vunpack.c.l.b16 %v367
  %v1836 = vunpack.c.h.b16 %v367
  %v1837 = vunpack.c.l.b16 %v368
  %v1838 = vunpack.c.h.b16 %v368
  %v1839 = vunpack.c.l.b16 %v369
  %v1840 = vunpack.c.h.b16 %v369
  %v1841 = vunpack.c.l.b16 %v370
  %v1842 = vunpack.c.h.b16 %v370
  %v1843 = vunpack.c.l.b16 %v371
  %v1844 = vunpack.c.h.b16 %v371
  %v1845 = vunpack.c.l.b16 %v372
  %v1846 = vunpack.c.h.b16 %v372
  %v1847 = vunpack.c.l.b16 %v373
  %v1848 = vunpack.c.h.b16 %v373
  %v1849 = vunpack.c.l.b16 %v374
  %v1850 = vunpack.c.h.b16 %v374
  %v1851 = vunpack.c.l.b16 %v375
  %v1852 = vunpack.c.h.b16 %v375
  %v1853 = vunpack.c.l.b16 %v376
  %v1854 = vunpack.c.h.b16 %v376
  %v1855 = vunpack.c.l.b16 %v377
  %v1856 = vunpack.c.h.b16 %v377
  %v1857 = vunpack.c.l.b16 %v378
  %v1858 = vunpack.c.h.b16 %v378
  %v1859 = vunpack.c.l.b16 %v379
  %v1860 = vunpack.c.h.b16 %v379
  %v1861 = vunpack.c.l.b16 %v380
  %v1862 = vunpack.c.h.b16 %v380
  %v1863 = vunpack.c.l.b16 %v381
  %v1864 = vunpack.c.h.b16 %v381
  %v1865 = vunpack.c.l.b16 %v382
  %v1866 = vunpack.c.h.b16 %v382
  %v1867 = vunpack.c.l.b16 %v383
  %v1868 = vunpack.c.h.b16 %v383
  %v1869 = vunpack.c.l.b16 %v384
  %v1870 = vunpack.c.h.b16 %v384
  %v1871 = vunpack.c.l.b16 %v385
  %v1872 = vunpack.c.h.b16 %v385
  %v1873 = vunpack.c.l.b16 %v386
  %v1874 = vunpack.c.h.b16 %v386
  %v1875 = vunpack.c.l.b16 %v387
  %v1876 = vunpack.c.h.b16 %v387
  %v1877 = vunpack.c.l.b16 %v388
  %v1878 = vunpack.c.h.b16 %v388
  %v1879 = vunpack.c.l.b16 %v389
  %v1880 = vunpack.c.h.b16 %v389
  %v1881 = vunpack.c.l.b16 %v390
  %v1882 = vunpack.c.h.b16 %v390
  %v1883 = vunpack.c.l.b16 %v391
  %v1884 = vunpack.c.h.b16 %v391
  %v1885 = vunpack.c.l.b16 %v392
  %v1886 = vunpack.c.h.b16 %v392
  %v1887 = vunpack.c.l.b16 %v393
  %v1888 = vunpack.c.h.b16 %v393
  %v1889 = vunpack.c.l.b16 %v394
  %v1890 = vunpack.c.h.b16 %v394
  %v1891 = vunpack.c.l.b16 %v395
  %v1892 = vunpack.c.h.b16 %v395
  %v1893 = vunpack.c.l.b16 %v396
  %v1894 = vunpack.c.h.b16 %v396
  %v1895 = vunpack.c.l.b16 %v397
  %v1896 = vunpack.c.h.b16 %v397
  %v1897 = vunpack.c.l.b16 %v398
  %v1898 = vunpack.c.h.b16 %v398
  %v1899 = vunpack.c.l.b16 %v399
  %v1900 = vunpack.c.h.b16 %v399
  %v1901 = vunpack.c.l.b16 %v400
  %v1902 = vunpack.c.h.b16 %v400
  %v1903 = vunpack.c.l.b16 %v401
  %v1904 = vunpack.c.h.b16 %v401
  %v1905 = vunpack.c.l.b16 %v402
  %v1906 = vunpack.c.h.b16 %v402
  %v1907 = vunpack.c.l.b16 %v403
  %v1908 = vunpack.c.h.b16 %v403
  %v1909 = vunpack.c.l.b16 %v404
  %v1910 = vunpack.c.h.b16 %v404
  %v1911 = vunpack.c.l.b16 %v405
  %v1912 = vunpack.c.h.b16 %v405
  %v1913 = vunpack.c.l.b16 %v406
  %v1914 = vunpack.c.h.b16 %v406
  %v1915 = vunpack.c.l.b16 %v407
  %v1916 = vunpack.c.h.b16 %v407
  %v1917 = vunpack.c.l.b16 %v408
  %v1918 = vunpack.c.h.b16 %v408
  %v1919 = vunpack.c.l.b16 %v409
  %v1920 = vunpack.c.h.b16 %v409
  %v1921 = vunpack.c.l.b16 %v410
  %v1922 = vunpack.c.h.b16 %v410
  %v1923 = vunpack.c.l.b16 %v411
  %v1924 = vunpack.c.h.b16 %v411
  %v1925 = vunpack.c.l.b16 %v412
  %v1926 = vunpack.c.h.b16 %v412
  %v1927 = vunpack.c.l.b16 %v413
  %v1928 = vunpack.c.h.b16 %v413
  %v1929 = vunpack.c.l.b16 %v414
  %v1930 = vunpack.c.h.b16 %v414
  %v1931 = vunpack.c.l.b16 %v415
  %v1932 = vunpack.c.h.b16 %v415
  %v1933 = vunpack.c.l.b16 %v416
  %v1934 = vunpack.c.h.b16 %v416
  %v1935 = vunpack.c.l.b16 %v417
  %v1936 = vunpack.c.h.b16 %v417
  %v1937 = vunpack.c.l.b16 %v418
  %v1938 = vunpack.c.h.b16 %v418
  %v1939 = vunpack.c.l.b16 %v419
  %v1940 = vunpack.c.h.b16 %v419
  %v1941 = vunpack.c.l.b16 %v420
  %v1942 = vunpack.c.h.b16 %v420
  %v1943 = vunpack.c.l.b16 %v421
  %v1944 = vunpack.c.h.b16 %v421
  %v1945 = vunpack.c.l.b16 %v422
  %v1946 = vunpack.c.h.b16 %v422
  %v1947 = vunpack.c.l.b16 %v423
  %v1948 = vunpack.c.h.b16 %v423
  %v1949 = vunpack.c.l.b16 %v424
  %v1950 = vunpack.c.h.b16 %v424
  %v1951 = vunpack.c.l.b16 %v425
  %v1952 = vunpack.c.h.b16 %v425
  %v1953 = vunpack.c.l.b16 %v426
  %v1954 = vunpack.c.h.b16 %v426
  %v1955 = vunpack.c.l.b16 %v427
  %v1956 = vunpack.c.h.b16 %v427
  %v1957 = vunpack.c.l.b16 %v428
  %v1958 = vunpack.c.h.b16 %v428
  %v1959 = vunpack.c.l.b16 %v429
  %v1960 = vunpack.c.h.b16 %v429
  %v1961 = vunpack.c.l.b16 %v430
  %v1962 = vunpack.c.h.b16 %v430
  %v1963 = vunpack.c.l.b16 %v431
  %v1964 = vunpack.c.h.b16 %v431
  %v1965 = vunpack.c.l.b16 %v432
  %v1966 = vunpack.c.h.b16 %v432
  %v1967 = vunpack.c.l.b16 %v433
  %v1968 = vunpack.c.h.b16 %v433
  %v1969 = vunpack.c.l.b16 %v434
  %v1970 = vunpack.c.h.b16 %v434
  %v1971 = vunpack.c.l.b16 %v435
  %v1972 = vunpack.c.h.b16 %v435
  %v1973 = vunpack.c.l.b16 %v436
  %v1974 = vunpack.c.h.b16 %v436
  %v1975 = vunpack.c.l.b16 %v437
  %v1976 = vunpack.c.h.b16 %v437
  %v1977 = vunpack.c.l.b16 %v438
  %v1978 = vunpack.c.h.b16 %v438
  %v1979 = vunpack.c.l.b16 %v439
  %v1980 = vunpack.c.h.b16 %v439
  %v1981 = vunpack.c.l.b16 %v440
  %v1982 = vunpack.c.h.b16 %v440
  %v1983 = vunpack.c.l.b16 %v441
  %v1984 = vunpack.c.h.b16 %v441
  %v1985 = vunpack.c.l.b16 %v442
  %v1986 = vunpack.c.h.b16 %v442
  %v1987 = vunpack.c.l.b16 %v443
  %v1988 = vunpack.c.h.b16 %v443
  %v1989 = vunpack.c.l.b16 %v444
  %v1990 = vunpack.c.h.b16 %v444
  %v1991 = vunpack.c.l.b16 %v445
  %v1992 = vunpack.c.h.b16 %v445
  %v1993 = vunpack.c.l.b16 %v446
  %v1994 = vunpack.c.h.b16 %v446
  %v1995 = vunpack.c.l.b16 %v447
  %v1996 = vunpack.c.h.b16 %v447
  %v1997 = vunpack.c.l.b16 %v448
  %v1998 = vunpack.c.h.b16 %v448
  %v1999 = vunpack.c.l.b16 %v449
  %v2000 = vunpack.c.h.b16 %v449
  %v2001 = vunpack.c.l.b16 %v450
  %v2002 = vunpack.c.h.b16 %v450
  %v2003 = vunpack.c.l.b16 %v451
  %v2004 = vunpack.c.h.b16 %v451
  %v2005 = vunpack.c.l.b16 %v452
  %v2006 = vunpack.c.h.b16 %v452
  %v2007 = vunpack.c.l.b16 %v453
  %v2008 = vunpack.c.h.b16 %v453
  %v2009 = vunpack.c.l.b16 %v454
  %v2010 = vunpack.c.h.b16 %v454
  %v2011 = vunpack.c.l.b16 %v455
  %v2012 = vunpack.c.h.b16 %v455
  %v2013 = vunpack.c.l.b16 %v456
  %v2014 = vunpack.c.h.b16 %v456
  %v2015 = vunpack.c.l.b16 %v457
  %v2016 = vunpack.c.h.b16 %v457
  %v2017 = vunpack.c.l.b16 %v458
  %v2018 = vunpack.c.h.b16 %v458
  %v2019 = vunpack.c.l.b16 %v459
  %v2020 = vunpack.c.h.b16 %v459
  %v2021 = vunpack.c.l.b16 %v460
  %v2022 = vunpack.c.h.b16 %v460
  %v2023 = vunpack.c.l.b16 %v461
  %v2024 = vunpack.c.h.b16 %v461
  %v2025 = vunpack.c.l.b16 %v462
  %v2026 = vunpack.c.h.b16 %v462
  %v2027 = vunpack.c.l.b16 %v463
  %v2028 = vunpack.c.h.b16 %v463
  %v2029 = vunpack.c.l.b16 %v464
  %v2030 = vunpack.c.h.b16 %v464
  %v2031 = vunpack.c.l.b16 %v465
  %v2032 = vunpack.c.h.b16 %v465
  %v2033 = vunpack.c.l.b16 %v466
  %v2034 = vunpack.c.h.b16 %v466
  %v2035 = vunpack.c.l.b16 %v467
  %v2036 = vunpack.c.h.b16 %v467
  %v2037 = vunpack.c.l.b16 %v468
  %v2038 = vunpack.c.h.b16 %v468
  %v2039 = vunpack.c.l.b16 %v469
  %v2040 = vunpack.c.h.b16 %v469
  %v2041 = vunpack.c.l.b16 %v470
  %v2042 = vunpack.c.h.b16 %v470
  %v2043 = vunpack.c.l.b16 %v471
  %v2044 = vunpack.c.h.b16 %v471
  %v2045 = vunpack.c.l.b16 %v472
  %v2046 = vunpack.c.h.b16 %v472
  %v2047 = vunpack.c.l.b16 %v473
  %v2048 = vunpack.c.h.b16 %v473
  %v2049 = vunpack.c.l.b16 %v474
  %v2050 = vunpack.c.h.b16 %v474
  %v2051 = vunpack.c.l.b16 %v475
  %v2052 = vunpack.c.h.b16 %v475
  %v2053 = vunpack.c.l.b16 %v476
  %v2054 = vunpack.c.h.b16 %v476
  %v2055 = vunpack.c.l.b16 %v477
  %v2056 = vunpack.c.h.b16 %v477
  %v2057 = vunpack.c.l.b16 %v478
  %v2058 = vunpack.c.h.b16 %v478
  %v2059 = vunpack.c.l.b16 %v479
  %v2060 = vunpack.c.h.b16 %v479
  %v2061 = vunpack.c.l.b16 %v480
  %v2062 = vunpack.c.h.b16 %v480
  %v2063 = vunpack.c.l.b16 %v481
  %v2064 = vunpack.c.h.b16 %v481
  %v2065 = vunpack.c.l.b16 %v482
  %v2066 = vunpack.c.h.b16 %v482
  %v2067 = vunpack.c.l.b16 %v483
  %v2068 = vunpack.c.h.b16 %v483
  %v2069 = vunpack.c.l.b16 %v484
  %v2070 = vunpack.c.h.b16 %v484
  %v2071 = vunpack.c.l.b16 %v485
  %v2072 = vunpack.c.h.b16 %v485
  %v2073 = vunpack.c.l.b16 %v486
  %v2074 = vunpack.c.h.b16 %v486
  %v2075 = vunpack.c.l.b16 %v487
  %v2076 = vunpack.c.h.b16 %v487
  %v2077 = vunpack.c.l.b16 %v488
  %v2078 = vunpack.c.h.b16 %v488
  %v2079 = vunpack.c.l.b16 %v489
  %v2080 = vunpack.c.h.b16 %v489
  %v2081 = vunpack.c.l.b16 %v490
  %v2082 = vunpack.c.h.b16 %v490
  %v2083 = vunpack.c.l.b16 %v491
  %v2084 = vunpack.c.h.b16 %v491
  %v2085 = vunpack.c.l.b16 %v492
  %v2086 = vunpack.c.h.b16 %v492
  %v2087 = vunpack.c.l.b16 %v493
  %v2088 = vunpack.c.h.b16 %v493
  %v2089 = vunpack.c.l.b16 %v494
  %v2090 = vunpack.c.h.b16 %v494
  %v2091 = vunpack.c.l.b16 %v495
  %v2092 = vunpack.c.h.b16 %v495
  %v2093 = vunpack.c.l.b16 %v496
  %v2094 = vunpack.c.h.b16 %v496
  %v2095 = vunpack.c.l.b16 %v497
  %v2096 = vunpack.c.h.b16 %v497
  %v2097 = vunpack.c.l.b16 %v498
  %v2098 = vunpack.c.h.b16 %v498
  %v2099 = vunpack.c.l.b16 %v499
  %v2100 = vunpack.c.h.b16 %v499
  %v2101 = vunpack.c.l.b16 %v500
  %v2102 = vunpack.c.h.b16 %v500
  %v2103 = vunpack.c.l.b16 %v501
  %v2104 = vunpack.c.h.b16 %v501
  %v2105 = vunpack.c.l.b16 %v502
  %v2106 = vunpack.c.h.b16 %v502
  %v2107 = vunpack.c.l.b16 %v503
  %v2108 = vunpack.c.h.b16 %v503
  %v2109 = vunpack.c.l.b16 %v504
  %v2110 = vunpack.c.h.b16 %v504
  %v2111 = vunpack.c.l.b16 %v505
  %v2112 = vunpack.c.h.b16 %v505
  %v2113 = vunpack.c.l.b16 %v506
  %v2114 = vunpack.c.h.b16 %v506
  %v2115 = vunpack.c.l.b16 %v507
  %v2116 = vunpack.c.h.b16 %v507
  %v2117 = vunpack.c.l.b16 %v508
  %v2118 = vunpack.c.h.b16 %v508
  %v2119 = vunpack.c.l.b16 %v509
  %v2120 = vunpack.c.h.b16 %v509
  %v2121 = vunpack.c.l.b16 %v510
  %v2122 = vunpack.c.h.b16 %v510
  %v2123 = vunpack.c.l.b16 %v511
  %v2124 = vunpack.c.h.b16 %v511
  %v2125 = vunpack.c.l.b16 %v512
  %v2126 = vunpack.c.h.b16 %v512
  %v2127 = vunpack.c.l.b16 %v513
  %v2128 = vunpack.c.h.b16 %v513
  %v2129 = vunpack.c.l.b16 %v514
  %v2130 = vunpack.c.h.b16 %v514
  %v2131 = vunpack.c.l.b16 %v515
  %v2132 = vunpack.c.h.b16 %v515
  %v2133 = vunpack.c.l.b16 %v516
  %v2134 = vunpack.c.h.b16 %v516
  %v2135 = vunpack.c.l.b16 %v517
  %v2136 = vunpack.c.h.b16 %v517
  %v2137 = vunpack.c.l.b16 %v518
  %v2138 = vunpack.c.h.b16 %v518
  %v2139 = vunpack.c.l.b16 %v519
  %v2140 = vunpack.c.h.b16 %v519
  %v2141 = vunpack.c.l.b16 %v520
  %v2142 = vunpack.c.h.b16 %v520
  %v2143 = vunpack.c.l.b16 %v521
  %v2144 = vunpack.c.h.b16 %v521
  %v2145 = vunpack.c.l.b16 %v522
  %v2146 = vunpack.c.h.b16 %v522
  %v2147 = vunpack.c.l.b16 %v523
  %v2148 = vunpack.c.h.b16 %v523
  %v2149 = vunpack.c.l.b16 %v524
  %v2150 = vunpack.c.h.b16 %v524
  %v2151 = vunpack.c.l.b16 %v525
  %v2152 = vunpack.c.h.b16 %v525
  %v2153 = vunpack.c.l.b16 %v526
  %v2154 = vunpack.c.h.b16 %v526
  %v2155 = vunpack.c.l.b16 %v527
  %v2156 = vunpack.c.h.b16 %v527
  %v2157 = vunpack.c.l.b16 %v528
  %v2158 = vunpack.c.h.b16 %v528
  %v2159 = vunpack.c.l.b16 %v529
  %v2160 = vunpack.c.h.b16 %v529
  %v2161 = vunpack.c.l.b16 %v530
  %v2162 = vunpack.c.h.b16 %v530
  %v2163 = vunpack.c.l.b16 %v531
  %v2164 = vunpack.c.h.b16 %v531
  %v2165 = vunpack.c.l.b16 %v532
  %v2166 = vunpack.c.h.b16 %v532
  %v2167 = vunpack.c.l.b16 %v533
  %v2168 = vunpack.c.h.b16 %v533
  %v2169 = vunpack.c.l.b16 %v534
  %v2170 = vunpack.c.h.b16 %v534
  %v2171 = vpack.c.b16 %v1155, %v1147
  %v2172 = vpack.c.b16 %v1156, %v1148
  %v2173 = vpack.c.b16 %v1157, %v1149
  %v2174 = vpack.c.b16 %v1158, %v1150
  %v2175 = vpack.c.b16 %v1159, %v1151
  %v2176 = vpack.c.b16 %v1160, %v1152
  %v2177 = vpack.c.b16 %v1161, %v1153
  %v2178 = vpack.c.b16 %v1162, %v1154
  %v2179 = vpack.c.b16 %v1171, %v1163
  %v2180 = vpack.c.b16 %v1172, %v1164
  %v2181 = vpack.c.b16 %v1173, %v1165
  %v2182 = vpack.c.b16 %v1174, %v1166
  %v2183 = vpack.c.b16 %v1175, %v1167
  %v2184 = vpack.c.b16 %v1176, %v1168
  %v2185 = vpack.c.b16 %v1177, %v1169
  %v2186 = vpack.c.b16 %v1178, %v1170
  %v2187 = vpack.c.b16 %v1187, %v1179
  %v2188 = vpack.c.b16 %v1188, %v1180
  %v2189 = vpack.c.b16 %v1189, %v1181
  %v2190 = vpack.c.b16 %v1190, %v1182
  %v2191 = vpack.c.b16 %v1191, %v1183
  %v2192 = vpack.c.b16 %v1192, %v1184
  %v2193 = vpack.c.b16 %v1193, %v1185
  %v2194 = vpack.c.b16 %v1194, %v1186
  %v2195 = vpack.c.b16 %v1203, %v1195
  %v2196 = vpack.c.b16 %v1204, %v1196
  %v2197 = vpack.c.b16 %v1205, %v1197
  %v2198 = vpack.c.b16 %v1206, %v1198
  %v2199 = vpack.c.b16 %v1207, %v1199
  %v2200 = vpack.c.b16 %v1208, %v1200
  %v2201 = vpack.c.b16 %v1209, %v1201
  %v2202 = vpack.c.b16 %v1210, %v1202
  %v2203 = vpack.c.b16 %v1219, %v1211
  %v2204 = vpack.c.b16 %v1220, %v1212
  %v2205 = vpack.c.b16 %v1221, %v1213
  %v2206 = vpack.c.b16 %v1222, %v1214
  %v2207 = vpack.c.b16 %v1223, %v1215
  %v2208 = vpack.c.b16 %v1224, %v1216
  %v2209 = vpack.c.b16 %v1225, %v1217
  %v2210 = vpack.c.b16 %v1226, %v1218
  %v2211 = vpack.c.b16 %v1235, %v1227
  %v2212 = vpack.c.b16 %v1236, %v1228
  %v2213 = vpack.c.b16 %v1237, %v1229
  %v2214 = vpack.c.b16 %v1238, %v1230
  %v2215 = vpack.c.b16 %v1239, %v1231
  %v2216 = vpack.c.b16 %v1240, %v1232
  %v2217 = vpack.c.b16 %v1241, %v1233
  %v2218 = vpack.c.b16 %v1242, %v1234
  %v2219 = vpack.c.b16 %v1251, %v1243
  %v2220 = vpack.c.b16 %v1252, %v1244
  %v2221 = vpack.c.b16 %v1253, %v1245
  %v2222 = vpack.c.b16 %v1254, %v1246
  %v2223 = vpack.c.b16 %v1255, %v1247
  %v2224 = vpack.c.b16 %v1256, %v1248
  %v2225 = vpack.c.b16 %v1257, %v1249
  %v2226 = vpack.c.b16 %v1258, %v1250
  %v2227 = vpack.c.b16 %v1267, %v1259
  %v2228 = vpack.c.b16 %v1268, %v1260
  %v2229 = vpack.c.b16 %v1269, %v1261
  %v2230 = vpack.c.b16 %v1270, %v1262
  %v2231 = vpack.c.b16 %v1271, %v1263
  %v2232 = vpack.c.b16 %v1272, %v1264
  %v2233 = vpack.c.b16 %v1273, %v1265
  %v2234 = vpack.c.b16 %v1274, %v1266
  %v2235 = vpack.c.b16 %v1283, %v1275
  %v2236 = vpack.c.b16 %v1284, %v1276
  %v2237 = vpack.c.b16 %v1285, %v1277
  %v2238 = vpack.c.b16 %v1286, %v1278
  %v2239 = vpack.c.b16 %v1287, %v1279
  %v2240 = vpack.c.b16 %v1288, %v1280
  %v2241 = vpack.c.b16 %v1289, %v1281
  %v2242 = vpack.c.b16 %v1290, %v1282
  %v2243 = vpack.c.b16 %v1299, %v1291
  %v2244 = vpack.c.b16 %v1300, %v1292
  %v2245 = vpack.c.b16 %v1301, %v1293
  %v2246 = vpack.c.b16 %v1302, %v1294
  %v2247 = vpack.c.b16 %v1303, %v1295
  %v2248 = vpack.c.b16 %v1304, %v1296
  %v2249 = vpack.c.b16 %v1305, %v1297
  %v2250 = vpack.c.b16 %v1306, %v1298
  %v2251 = vpack.c.b16 %v1315, %v1307
  %v2252 = vpack.c.b16 %v1316, %v1308
  %v2253 = vpack.c.b16 %v1317, %v1309
  %v2254 = vpack.c.b16 %v1318, %v1310
  %v2255 = vpack.c.b16 %v1319, %v1311
  %v2256 = vpack.c.b16 %v1320, %v1312
  %v2257 = vpack.c.b16 %v1321, %v1313
  %v2258 = vpack.c.b16 %v1322, %v1314
  %v2259 = vpack.c.b16 %v1331, %v1323
  %v2260 = vpack.c.b16 %v1332, %v1324
  %v2261 = vpack.c.b16 %v1333, %v1325
  %v2262 = vpack.c.b16 %v1334, %v1326
  %v2263 = vpack.c.b16 %v1335, %v1327
  %v2264 = vpack.c.b16 %v1336, %v1328
  %v2265 = vpack.c.b16 %v1337, %v1329
  %v2266 = vpack.c.b16 %v1338, %v1330
  %v2267 = vpack.c.b16 %v1347, %v1339
  %v2268 = vpack.c.b16 %v1348, %v1340
  %v2269 = vpack.c.b16 %v1349, %v1341
  %v2270 = vpack.c.b16 %v1350, %v1342
  %v2271 = vpack.c.b16 %v1351, %v1343
  %v2272 = vpack.c.b16 %v1352, %v1344
  %v2273 = vpack.c.b16 %v1353, %v1345
  %v2274 = vpack.c.b16 %v1354, %v1346
  %v2275 = vpack.c.b16 %v1363, %v1355
  %v2276 = vpack.c.b16 %v1364, %v1356
  %v2277 = vpack.c.b16 %v1365, %v1357
  %v2278 = vpack.c.b16 %v1366, %v1358
  %v2279 = vpack.c.b16 %v1367, %v1359
  %v2280 = vpack.c.b16 %v1368, %v1360
  %v2281 = vpack.c.b16 %v1369, %v1361
  %v2282 = vpack.c.b16 %v1370, %v1362
  %v2283 = vpack.c.b16 %v1379, %v1371
  %v2284 = vpack.c.b16 %v1380, %v1372
  %v2285 = vpack.c.b16 %v1381, %v1373
  %v2286 = vpack.c.b16 %v1382, %v1374
  %v2287 = vpack.c.b16 %v1383, %v1375
  %v2288 = vpack.c.b16 %v1384, %v1376
  %v2289 = vpack.c.b16 %v1385, %v1377
  %v2290 = vpack.c.b16 %v1386, %v1378
  %v2291 = vpack.c.b16 %v1395, %v1387
  %v2292 = vpack.c.b16 %v1396, %v1388
  %v2293 = vpack.c.b16 %v1397, %v1389
  %v2294 = vpack.c.b16 %v1398, %v1390
  %v2295 = vpack.c.b16 %v1399, %v1391
  %v2296 = vpack.c.b16 %v1400, %v1392
  %v2297 = vpack.c.b16 %v1401, %v1393
  %v2298 = vpack.c.b16 %v1402, %v1394
  %v2299 = vpack.c.b16 %v1411, %v1403
  %v2300 = vpack.c.b16 %v1412, %v1404
  %v2301 = vpack.c.b16 %v1413, %v1405
  %v2302 = vpack.c.b16 %v1414, %v1406
  %v2303 = vpack.c.b16 %v1415, %v1407
  %v2304 = vpack.c.b16 %v1416, %v1408
  %v2305 = vpack.c.b16 %v1417, %v1409
  %v2306 = vpack.c.b16 %v1418, %v1410
  %v2307 = vpack.c.b16 %v1427, %v1419
  %v2308 = vpack.c.b16 %v1428, %v1420
  %v2309 = vpack.c.b16 %v1429, %v1421
  %v2310 = vpack.c.b16 %v1430, %v1422
  %v2311 = vpack.c.b16 %v1431, %v1423
  %v2312 = vpack.c.b16 %v1432, %v1424
  %v2313 = vpack.c.b16 %v1433, %v1425
  %v2314 = vpack.c.b16 %v1434, %v1426
  %v2315 = vpack.c.b16 %v1443, %v1435
  %v2316 = vpack.c.b16 %v1444, %v1436
  %v2317 = vpack.c.b16 %v1445, %v1437
  %v2318 = vpack.c.b16 %v1446, %v1438
  %v2319 = vpack.c.b16 %v1447, %v1439
  %v2320 = vpack.c.b16 %v1448, %v1440
  %v2321 = vpack.c.b16 %v1449, %v1441
  %v2322 = vpack.c.b16 %v1450, %v1442
  %v2323 = vpack.c.b16 %v1459, %v1451
  %v2324 = vpack.c.b16 %v1460, %v1452
  %v2325 = vpack.c.b16 %v1461, %v1453
  %v2326 = vpack.c.b16 %v1462, %v1454
  %v2327 = vpack.c.b16 %v1463, %v1455
  %v2328 = vpack.c.b16 %v1464, %v1456
  %v2329 = vpack.c.b16 %v1465, %v1457
  %v2330 = vpack.c.b16 %v1466, %v1458
  %v2331 = vpack.c.b16 %v1475, %v1467
  %v2332 = vpack.c.b16 %v1476, %v1468
  %v2333 = vpack.c.b16 %v1477, %v1469
  %v2334 = vpack.c.b16 %v1478, %v1470
  %v2335 = vpack.c.b16 %v1479, %v1471
  %v2336 = vpack.c.b16 %v1480, %v1472
  %v2337 = vpack.c.b16 %v1481, %v1473
  %v2338 = vpack.c.b16 %v1482, %v1474
  %v2339 = vpack.c.b16 %v1491, %v1483
  %v2340 = vpack.c.b16 %v1492, %v1484
  %v2341 = vpack.c.b16 %v1493, %v1485
  %v2342 = vpack.c.b16 %v1494, %v1486
  %v2343 = vpack.c.b16 %v1495, %v1487
  %v2344 = vpack.c.b16 %v1496, %v1488
  %v2345 = vpack.c.b16 %v1497, %v1489
  %v2346 = vpack.c.b16 %v1498, %v1490
  %v2347 = vpack.c.b16 %v1507, %v1499
  %v2348 = vpack.c.b16 %v1508, %v1500
  %v2349 = vpack.c.b16 %v1509, %v1501
  %v2350 = vpack.c.b16 %v1510, %v1502
  %v2351 = vpack.c.b16 %v1511, %v1503
  %v2352 = vpack.c.b16 %v1512, %v1504
  %v2353 = vpack.c.b16 %v1513, %v1505
  %v2354 = vpack.c.b16 %v1514, %v1506
  %v2355 = vpack.c.b16 %v1523, %v1515
  %v2356 = vpack.c.b16 %v1524, %v1516
  %v2357 = vpack.c.b16 %v1525, %v1517
  %v2358 = vpack.c.b16 %v1526, %v1518
  %v2359 = vpack.c.b16 %v1527, %v1519
  %v2360 = vpack.c.b16 %v1528, %v1520
  %v2361 = vpack.c.b16 %v1529, %v1521
  %v2362 = vpack.c.b16 %v1530, %v1522
  %v2363 = vpack.c.b16 %v1539, %v1531
  %v2364 = vpack.c.b16 %v1540, %v1532
  %v2365 = vpack.c.b16 %v1541, %v1533
  %v2366 = vpack.c.b16 %v1542, %v1534
  %v2367 = vpack.c.b16 %v1543, %v1535
  %v2368 = vpack.c.b16 %v1544, %v1536
  %v2369 = vpack.c.b16 %v1545, %v1537
  %v2370 = vpack.c.b16 %v1546, %v1538
  %v2371 = vpack.c.b16 %v1555, %v1547
  %v2372 = vpack.c.b16 %v1556, %v1548
  %v2373 = vpack.c.b16 %v1557, %v1549
  %v2374 = vpack.c.b16 %v1558, %v1550
  %v2375 = vpack.c.b16 %v1559, %v1551
  %v2376 = vpack.c.b16 %v1560, %v1552
  %v2377 = vpack.c.b16 %v1561, %v1553
  %v2378 = vpack.c.b16 %v1562, %v1554
  %v2379 = vpack.c.b16 %v1571, %v1563
  %v2380 = vpack.c.b16 %v1572, %v1564
  %v2381 = vpack.c.b16 %v1573, %v1565
  %v2382 = vpack.c.b16 %v1574, %v1566
  %v2383 = vpack.c.b16 %v1575, %v1567
  %v2384 = vpack.c.b16 %v1576, %v1568
  %v2385 = vpack.c.b16 %v1577, %v1569
  %v2386 = vpack.c.b16 %v1578, %v1570
  %v2387 = vpack.c.b16 %v1587, %v1579
  %v2388 = vpack.c.b16 %v1588, %v1580
  %v2389 = vpack.c.b16 %v1589, %v1581
  %v2390 = vpack.c.b16 %v1590, %v1582
  %v2391 = vpack.c.b16 %v1591, %v1583
  %v2392 = vpack.c.b16 %v1592, %v1584
  %v2393 = vpack.c.b16 %v1593, %v1585
  %v2394 = vpack.c.b16 %v1594, %v1586
  %v2395 = vpack.c.b16 %v1603, %v1595
  %v2396 = vpack.c.b16 %v1604, %v1596
  %v2397 = vpack.c.b16 %v1605, %v1597
  %v2398 = vpack.c.b16 %v1606, %v1598
  %v2399 = vpack.c.b16 %v1607, %v1599
  %v2400 = vpack.c.b16 %v1608, %v1600
  %v2401 = vpack.c.b16 %v1609, %v1601
  %v2402 = vpack.c.b16 %v1610, %v1602
  %v2403 = vpack.c.b16 %v1619, %v1611
  %v2404 = vpack.c.b16 %v1620, %v1612
  %v2405 = vpack.c.b16 %v1621, %v1613
  %v2406 = vpack.c.b16 %v1622, %v1614
  %v2407 = vpack.c.b16 %v1623, %v1615
  %v2408 = vpack.c.b16 %v1624, %v1616
  %v2409 = vpack.c.b16 %v1625, %v1617
  %v2410 = vpack.c.b16 %v1626, %v1618
  %v2411 = vpack.c.b16 %v1635, %v1627
  %v2412 = vpack.c.b16 %v1636, %v1628
  %v2413 = vpack.c.b16 %v1637, %v1629
  %v2414 = vpack.c.b16 %v1638, %v1630
  %v2415 = vpack.c.b16 %v1639, %v1631
  %v2416 = vpack.c.b16 %v1640, %v1632
  %v2417 = vpack.c.b16 %v1641, %v1633
  %v2418 = vpack.c.b16 %v1642, %v1634
  %v2419 = vpack.c.b16 %v1651, %v1643
  %v2420 = vpack.c.b16 %v1652, %v1644
  %v2421 = vpack.c.b16 %v1653, %v1645
  %v2422 = vpack.c.b16 %v1654, %v1646
  %v2423 = vpack.c.b16 %v1655, %v1647
  %v2424 = vpack.c.b16 %v1656, %v1648
  %v2425 = vpack.c.b16 %v1657, %v1649
  %v2426 = vpack.c.b16 %v1658, %v1650
  %v2427 = vpack.c.b16 %v1667, %v1659
  %v2428 = vpack.c.b16 %v1668, %v1660
  %v2429 = vpack.c.b16 %v1669, %v1661
  %v2430 = vpack.c.b16 %v1670, %v1662
  %v2431 = vpack.c.b16 %v1671, %v1663
  %v2432 = vpack.c.b16 %v1672, %v1664
  %v2433 = vpack.c.b16 %v1673, %v1665
  %v2434 = vpack.c.b16 %v1674, %v1666
  %v2435 = vpack.c.b16 %v1683, %v1675
  %v2436 = vpack.c.b16 %v1684, %v1676
  %v2437 = vpack.c.b16 %v1685, %v1677
  %v2438 = vpack.c.b16 %v1686, %v1678
  %v2439 = vpack.c.b16 %v1687, %v1679
  %v2440 = vpack.c.b16 %v1688, %v1680
  %v2441 = vpack.c.b16 %v1689, %v1681
  %v2442 = vpack.c.b16 %v1690, %v1682
  %v2443 = vpack.c.b16 %v1699, %v1691
  %v2444 = vpack.c.b16 %v1700, %v1692
  %v2445 = vpack.c.b16 %v1701, %v1693
  %v2446 = vpack.c.b16 %v1702, %v1694
  %v2447 = vpack.c.b16 %v1703, %v1695
  %v2448 = vpack.c.b16 %v1704, %v1696
  %v2449 = vpack.c.b16 %v1705, %v1697
  %v2450 = vpack.c.b16 %v1706, %v1698
  %v2451 = vpack.c.b16 %v1715, %v1707
  %v2452 = vpack.c.b16 %v1716, %v1708
  %v2453 = vpack.c.b16 %v1717, %v1709
  %v2454 = vpack.c.b16 %v1718, %v1710
  %v2455 = vpack.c.b16 %v1719, %v1711
  %v2456 = vpack.c.b16 %v1720, %v1712
  %v2457 = vpack.c.b16 %v1721, %v1713
  %v2458 = vpack.c.b16 %v1722, %v1714
  %v2459 = vpack.c.b16 %v1731, %v1723
  %v2460 = vpack.c.b16 %v1732, %v1724
  %v2461 = vpack.c.b16 %v1733, %v1725
  %v2462 = vpack.c.b16 %v1734, %v1726
  %v2463 = vpack.c.b16 %v1735, %v1727
  %v2464 = vpack.c.b16 %v1736, %v1728
  %v2465 = vpack.c.b16 %v1737, %v1729
  %v2466 = vpack.c.b16 %v1738, %v1730
  %v2467 = vpack.c.b16 %v1747, %v1739
  %v2468 = vpack.c.b16 %v1748, %v1740
  %v2469 = vpack.c.b16 %v1749, %v1741
  %v2470 = vpack.c.b16 %v1750, %v1742
  %v2471 = vpack.c.b16 %v1751, %v1743
  %v2472 = vpack.c.b16 %v1752, %v1744
  %v2473 = vpack.c.b16 %v1753, %v1745
  %v2474 = vpack.c.b16 %v1754, %v1746
  %v2475 = vpack.c.b16 %v1763, %v1755
  %v2476 = vpack.c.b16 %v1764, %v1756
  %v2477 = vpack.c.b16 %v1765, %v1757
  %v2478 = vpack.c.b16 %v1766, %v1758
  %v2479 = vpack.c.b16 %v1767, %v1759
  %v2480 = vpack.c.b16 %v1768, %v1760
  %v2481 = vpack.c.b16 %v1769, %v1761
  %v2482 = vpack.c.b16 %v1770, %v1762
  %v2483 = vpack.c.b16 %v1779, %v1771
  %v2484 = vpack.c.b16 %v1780, %v1772
  %v2485 = vpack.c.b16 %v1781, %v1773
  %v2486 = vpack.c.b16 %v1782, %v1774
  %v2487 = vpack.c.b16 %v1783, %v1775
  %v2488 = vpack.c.b16 %v1784, %v1776
  %v2489 = vpack.c.b16 %v1785, %v1777
  %v2490 = vpack.c.b16 %v1786, %v1778
  %v2491 = vpack.c.b16 %v1795, %v1787
  %v2492 = vpack.c.b16 %v1796, %v1788
  %v2493 = vpack.c.b16 %v1797, %v1789
  %v2494 = vpack.c.b16 %v1798, %v1790
  %v2495 = vpack.c.b16 %v1799, %v1791
  %v2496 = vpack.c.b16 %v1800, %v1792
  %v2497 = vpack.c.b16 %v1801, %v1793
  %v2498 = vpack.c.b16 %v1802, %v1794
  %v2499 = vpack.c.b16 %v1811, %v1803
  %v2500 = vpack.c.b16 %v1812, %v1804
  %v2501 = vpack.c.b16 %v1813, %v1805
  %v2502 = vpack.c.b16 %v1814, %v1806
  %v2503 = vpack.c.b16 %v1815, %v1807
  %v2504 = vpack.c.b16 %v1816, %v1808
  %v2505 = vpack.c.b16 %v1817, %v1809
  %v2506 = vpack.c.b16 %v1818, %v1810
  %v2507 = vpack.c.b16 %v1827, %v1819
  %v2508 = vpack.c.b16 %v1828, %v1820
  %v2509 = vpack.c.b16 %v1829, %v1821
  %v2510 = vpack.c.b16 %v1830, %v1822
  %v2511 = vpack.c.b16 %v1831, %v1823
  %v2512 = vpack.c.b16 %v1832, %v1824
  %v2513 = vpack.c.b16 %v1833, %v1825
  %v2514 = vpack.c.b16 %v1834, %v1826
  %v2515 = vpack.c.b16 %v1843, %v1835
  %v2516 = vpack.c.b16 %v1844, %v1836
  %v2517 = vpack.c.b16 %v1845, %v1837
  %v2518 = vpack.c.b16 %v1846, %v1838
  %v2519 = vpack.c.b16 %v1847, %v1839
  %v2520 = vpack.c.b16 %v1848, %v1840
  %v2521 = vpack.c.b16 %v1849, %v1841
  %v2522 = vpack.c.b16 %v1850, %v1842
  %v2523 = vpack.c.b16 %v1859, %v1851
  %v2524 = vpack.c.b16 %v1860, %v1852
  %v2525 = vpack.c.b16 %v1861, %v1853
  %v2526 = vpack.c.b16 %v1862, %v1854
  %v2527 = vpack.c.b16 %v1863, %v1855
  %v2528 = vpack.c.b16 %v1864, %v1856
  %v2529 = vpack.c.b16 %v1865, %v1857
  %v2530 = vpack.c.b16 %v1866, %v1858
  %v2531 = vpack.c.b16 %v1875, %v1867
  %v2532 = vpack.c.b16 %v1876, %v1868
  %v2533 = vpack.c.b16 %v1877, %v1869
  %v2534 = vpack.c.b16 %v1878, %v1870
  %v2535 = vpack.c.b16 %v1879, %v1871
  %v2536 = vpack.c.b16 %v1880, %v1872
  %v2537 = vpack.c.b16 %v1881, %v1873
  %v2538 = vpack.c.b16 %v1882, %v1874
  %v2539 = vpack.c.b16 %v1891, %v1883
  %v2540 = vpack.c.b16 %v1892, %v1884
  %v2541 = vpack.c.b16 %v1893, %v1885
  %v2542 = vpack.c.b16 %v1894, %v1886
  %v2543 = vpack.c.b16 %v1895, %v1887
  %v2544 = vpack.c.b16 %v1896, %v1888
  %v2545 = vpack.c.b16 %v1897, %v1889
  %v2546 = vpack.c.b16 %v1898, %v1890
  %v2547 = vpack.c.b16 %v1907, %v1899
  %v2548 = vpack.c.b16 %v1908, %v1900
  %v2549 = vpack.c.b16 %v1909, %v1901
  %v2550 = vpack.c.b16 %v1910, %v1902
  %v2551 = vpack.c.b16 %v1911, %v1903
  %v2552 = vpack.c.b16 %v1912, %v1904
  %v2553 = vpack.c.b16 %v1913, %v1905
  %v2554 = vpack.c.b16 %v1914, %v1906
  %v2555 = vpack.c.b16 %v1923, %v1915
  %v2556 = vpack.c.b16 %v1924, %v1916
  %v2557 = vpack.c.b16 %v1925, %v1917
  %v2558 = vpack.c.b16 %v1926, %v1918
  %v2559 = vpack.c.b16 %v1927, %v1919
  %v2560 = vpack.c.b16 %v1928, %v1920
  %v2561 = vpack.c.b16 %v1929, %v1921
  %v2562 = vpack.c.b16 %v1930, %v1922
  %v2563 = vpack.c.b16 %v1939, %v1931
  %v2564 = vpack.c.b16 %v1940, %v1932
  %v2565 = vpack.c.b16 %v1941, %v1933
  %v2566 = vpack.c.b16 %v1942, %v1934
  %v2567 = vpack.c.b16 %v1943, %v1935
  %v2568 = vpack.c.b16 %v1944, %v1936
  %v2569 = vpack.c.b16 %v1945, %v1937
  %v2570 = vpack.c.b16 %v1946, %v1938
  %v2571 = vpack.c.b16 %v1955, %v1947
  %v2572 = vpack.c.b16 %v1956, %v1948
  %v2573 = vpack.c.b16 %v1957, %v1949
  %v2574 = vpack.c.b16 %v1958, %v1950
  %v2575 = vpack.c.b16 %v1959, %v1951
  %v2576 = vpack.c.b16 %v1960, %v1952
  %v2577 = vpack.c.b16 %v1961, %v1953
  %v2578 = vpack.c.b16 %v1962, %v1954
  %v2579 = vpack.c.b16 %v1971, %v1963
  %v2580 = vpack.c.b16 %v1972, %v1964
  %v2581 = vpack.c.b16 %v1973, %v1965
  %v2582 = vpack.c.b16 %v1974, %v1966
  %v2583 = vpack.c.b16 %v1975, %v1967
  %v2584 = vpack.c.b16 %v1976, %v1968
  %v2585 = vpack.c.b16 %v1977, %v1969
  %v2586 = vpack.c.b16 %v1978, %v1970
  %v2587 = vpack.c.b16 %v1987, %v1979
  %v2588 = vpack.c.b16 %v1988, %v1980
  %v2589 = vpack.c.b16 %v1989, %v1981
  %v2590 = vpack.c.b16 %v1990, %v1982
  %v2591 = vpack.c.b16 %v1991, %v1983
  %v2592 = vpack.c.b16 %v1992, %v1984
  %v2593 = vpack.c.b16 %v1993, %v1985
  %v2594 = vpack.c.b16 %v1994, %v1986
  %v2595 = vpack.c.b16 %v2003, %v1995
  %v2596 = vpack.c.b16 %v2004, %v1996
  %v2597 = vpack.c.b16 %v2005, %v1997
  %v2598 = vpack.c.b16 %v2006, %v1998
  %v2599 = vpack.c.b16 %v2007, %v1999
  %v2600 = vpack.c.b16 %v2008, %v2000
  %v2601 = vpack.c.b16 %v2009, %v2001
  %v2602 = vpack.c.b16 %v2010, %v2002
  %v2603 = vpack.c.b16 %v2019, %v2011
  %v2604 = vpack.c.b16 %v2020, %v2012
  %v2605 = vpack.c.b16 %v2021, %v2013
  %v2606 = vpack.c.b16 %v2022, %v2014
  %v2607 = vpack.c.b16 %v2023, %v2015
  %v2608 = vpack.c.b16 %v2024, %v2016
  %v2609 = vpack.c.b16 %v2025, %v2017
  %v2610 = vpack.c.b16 %v2026, %v2018
  %v2611 = vpack.c.b16 %v2035, %v2027
  %v2612 = vpack.c.b16 %v2036, %v2028
  %v2613 = vpack.c.b16 %v2037, %v2029
  %v2614 = vpack.c.b16 %v2038, %v2030
  %v2615 = vpack.c.b16 %v2039, %v2031
  %v2616 = vpack.c.b16 %v2040, %v2032
  %v2617 = vpack.c.b16 %v2041, %v2033
  %v2618 = vpack.c.b16 %v2042, %v2034
  %v2619 = vpack.c.b16 %v2051, %v2043
  %v2620 = vpack.c.b16 %v2052, %v2044
  %v2621 = vpack.c.b16 %v2053, %v2045
  %v2622 = vpack.c.b16 %v2054, %v2046
  %v2623 = vpack.c.b16 %v2055, %v2047
  %v2624 = vpack.c.b16 %v2056, %v2048
  %v2625 = vpack.c.b16 %v2057, %v2049
  %v2626 = vpack.c.b16 %v2058, %v2050
  %v2627 = vpack.c.b16 %v2067, %v2059
  %v2628 = vpack.c.b16 %v2068, %v2060
  %v2629 = vpack.c.b16 %v2069, %v2061
  %v2630 = vpack.c.b16 %v2070, %v2062
  %v2631 = vpack.c.b16 %v2071, %v2063
  %v2632 = vpack.c.b16 %v2072, %v2064
  %v2633 = vpack.c.b16 %v2073, %v2065
  %v2634 = vpack.c.b16 %v2074, %v2066
  %v2635 = vpack.c.b16 %v2083, %v2075
  %v2636 = vpack.c.b16 %v2084, %v2076
  %v2637 = vpack.c.b16 %v2085, %v2077
  %v2638 = vpack.c.b16 %v2086, %v2078
  %v2639 = vpack.c.b16 %v2087, %v2079
  %v2640 = vpack.c.b16 %v2088, %v2080
  %v2641 = vpack.c.b16 %v2089, %v2081
  %v2642 = vpack.c.b16 %v2090, %v2082
  %v2643 = vpack.c.b16 %v2099, %v2091
  %v2644 = vpack.c.b16 %v2100, %v2092
  %v2645 = vpack.c.b16 %v2101, %v2093
  %v2646 = vpack.c.b16 %v2102, %v2094
  %v2647 = vpack.c.b16 %v2103, %v2095
  %v2648 = vpack.c.b16 %v2104, %v2096
  %v2649 = vpack.c.b16 %v2105, %v2097
  %v2650 = vpack.c.b16 %v2106, %v2098
  %v2651 = vpack.c.b16 %v2115, %v2107
  %v2652 = vpack.c.b16 %v2116, %v2108
  %v2653 = vpack.c.b16 %v2117, %v2109
  %v2654 = vpack.c.b16 %v2118, %v2110
  %v2655 = vpack.c.b16 %v2119, %v2111
  %v2656 = vpack.c.b16 %v2120, %v2112
  %v2657 = vpack.c.b16 %v2121, %v2113
  %v2658 = vpack.c.b16 %v2122, %v2114
  %v2659 = vpack.c.b16 %v2131, %v2123
  %v2660 = vpack.c.b16 %v2132, %v2124
  %v2661 = vpack.c.b16 %v2133, %v2125
  %v2662 = vpack.c.b16 %v2134, %v2126
  %v2663 = vpack.c.b16 %v2135, %v2127
  %v2664 = vpack.c.b16 %v2136, %v2128
  %v2665 = vpack.c.b16 %v2137, %v2129
  %v2666 = vpack.c.b16 %v2138, %v2130
  %v2667 = vpack.c.b16 %v2147, %v2139
  %v2668 = vpack.c.b16 %v2148, %v2140
  %v2669 = vpack.c.b16 %v2149, %v2141
  %v2670 = vpack.c.b16 %v2150, %v2142
  %v2671 = vpack.c.b16 %v2151, %v2143
  %v2672 = vpack.c.b16 %v2152, %v2144
  %v2673 = vpack.c.b16 %v2153, %v2145
  %v2674 = vpack.c.b16 %v2154, %v2146
  %v2675 = vpack.c.b16 %v2163, %v2155
  %v2676 = vpack.c.b16 %v2164, %v2156
  %v2677 = vpack.c.b16 %v2165, %v2157
  %v2678 = vpack.c.b16 %v2166, %v2158
  %v2679 = vpack.c.b16 %v2167, %v2159
  %v2680 = vpack.c.b16 %v2168, %v2160
  %v2681 = vpack.c.b16 %v2169, %v2161
  %v2682 = vpack.c.b16 %v2170, %v2162
  %3195 = vmatprep.subr.bf16.mxu0 %v2172
  %3196 = vmatpush1.bf16.msra.mxu0 %v2171
  %3197 = vmatprep.subr.bf16.mxu0 %v2180
  %3198 = vmatpush1.bf16.msra.mxu0 %v2179
  %3199 = vmatprep.subr.bf16.mxu0 %v2188
  %3200 = vmatpush1.bf16.msra.mxu0 %v2187
  %3201 = vmatprep.subr.bf16.mxu0 %v2196
  %3202 = vmatpush1.bf16.msra.mxu0 %v2195
  %3203 = vmatprep.subr.bf16.mxu0 %v2204
  %3204 = vmatpush1.bf16.msra.mxu0 %v2203
  %3205 = vmatprep.subr.bf16.mxu0 %v2212
  %3206 = vmatpush1.bf16.msra.mxu0 %v2211
  %3207 = vmatprep.subr.bf16.mxu0 %v2220
  %3208 = vmatpush1.bf16.msra.mxu0 %v2219
  %3209 = vmatprep.subr.bf16.mxu0 %v2228
  %3210 = vmatpush1.bf16.msra.mxu0 %v2227
  %3211 = vmatprep.subr.bf16.mxu0 %v2236
  %3212 = vmatpush1.bf16.msra.mxu0 %v2235
  %3213 = vmatprep.subr.bf16.mxu0 %v2244
  %3214 = vmatpush1.bf16.msra.mxu0 %v2243
  %3215 = vmatprep.subr.bf16.mxu0 %v2252
  %3216 = vmatpush1.bf16.msra.mxu0 %v2251
  %3217 = vmatprep.subr.bf16.mxu0 %v2260
  %3218 = vmatpush1.bf16.msra.mxu0 %v2259
  %3219 = vmatprep.subr.bf16.mxu0 %v2268
  %3220 = vmatpush1.bf16.msra.mxu0 %v2267
  %3221 = vmatprep.subr.bf16.mxu0 %v2276
  %3222 = vmatpush1.bf16.msra.mxu0 %v2275
  %3223 = vmatprep.subr.bf16.mxu0 %v2284
  %3224 = vmatpush1.bf16.msra.mxu0 %v2283
  %3225 = vmatprep.subr.bf16.mxu0 %v2292
  %3226 = vmatpush1.bf16.msra.mxu0 %v2291
  %3227 = vmatprep.mubr.bf16.mxu0 %v615
  %3228 = vmatmul.mubr.bf16.gmra.mrb[0].mxu0 %v601
  %v3229 = vpop.f32.mrb[0].mxu0
  %v3230 = vadd.f32 %v540, %v3229
  %v3231 = vpop.f32.mrb[0].mxu0
  %v3232 = vadd.f32 %v544, %v3231
  %v3233 = vpop.f32.mrb[0].mxu0
  %v3234 = vpop.f32.mrb[0].mxu0
  %3235 = vdwg.mxu0
  %3236 = vmatprep.subr.bf16.mxu0 %v2300
  %3237 = vmatpush1.bf16.msra.mxu0 %v2299
  %3238 = vmatprep.subr.bf16.mxu0 %v2308
  %3239 = vmatpush1.bf16.msra.mxu0 %v2307
  %3240 = vmatprep.subr.bf16.mxu0 %v2316
  %3241 = vmatpush1.bf16.msra.mxu0 %v2315
  %3242 = vmatprep.subr.bf16.mxu0 %v2324
  %3243 = vmatpush1.bf16.msra.mxu0 %v2323
  %3244 = vmatprep.subr.bf16.mxu0 %v2332
  %3245 = vmatpush1.bf16.msra.mxu0 %v2331
  %3246 = vmatprep.subr.bf16.mxu0 %v2340
  %3247 = vmatpush1.bf16.msra.mxu0 %v2339
  %3248 = vmatprep.subr.bf16.mxu0 %v2348
  %3249 = vmatpush1.bf16.msra.mxu0 %v2347
  %3250 = vmatprep.subr.bf16.mxu0 %v2356
  %3251 = vmatpush1.bf16.msra.mxu0 %v2355
  %3252 = vmatprep.subr.bf16.mxu0 %v2364
  %3253 = vmatpush1.bf16.msra.mxu0 %v2363
  %3254 = vmatprep.subr.bf16.mxu0 %v2372
  %3255 = vmatpush1.bf16.msra.mxu0 %v2371
  %3256 = vmatprep.subr.bf16.mxu0 %v2380
  %3257 = vmatpush1.bf16.msra.mxu0 %v2379
  %3258 = vmatprep.subr.bf16.mxu0 %v2388
  %3259 = vmatpush1.bf16.msra.mxu0 %v2387
  %3260 = vmatprep.subr.bf16.mxu0 %v2396
  %3261 = vmatpush1.bf16.msra.mxu0 %v2395
  %3262 = vmatprep.subr.bf16.mxu0 %v2404
  %3263 = vmatpush1.bf16.msra.mxu0 %v2403
  %3264 = vmatprep.subr.bf16.mxu0 %v2412
  %3265 = vmatpush1.bf16.msra.mxu0 %v2411
  %3266 = vmatprep.subr.bf16.mxu0 %v2420
  %3267 = vmatpush1.bf16.msra.mxu0 %v2419
  %3268 = vmatprep.mubr.bf16.mxu0 %v625
  %3269 = vmatmul.mubr.bf16.gmra.mrb[0].mxu0 %v623
  %v3270 = vpop.f32.mrb[0].mxu0
  %v3271 = vadd.f32 %v3230, %v3270
  %v3272 = vpop.f32.mrb[0].mxu0
  %v3273 = vadd.f32 %v3232, %v3272
  %v3274 = vpop.f32.mrb[0].mxu0
  %v3275 = vpop.f32.mrb[0].mxu0
  %3276 = vdwg.mxu0
  %3277 = vmatprep.subr.bf16.mxu0 %v2428
  %3278 = vmatpush1.bf16.msra.mxu0 %v2427
  %3279 = vmatprep.subr.bf16.mxu0 %v2436
  %3280 = vmatpush1.bf16.msra.mxu0 %v2435
  %3281 = vmatprep.subr.bf16.mxu0 %v2444
  %3282 = vmatpush1.bf16.msra.mxu0 %v2443
  %3283 = vmatprep.subr.bf16.mxu0 %v2452
  %3284 = vmatpush1.bf16.msra.mxu0 %v2451
  %3285 = vmatprep.subr.bf16.mxu0 %v2460
  %3286 = vmatpush1.bf16.msra.mxu0 %v2459
  %3287 = vmatprep.subr.bf16.mxu0 %v2468
  %3288 = vmatpush1.bf16.msra.mxu0 %v2467
  %3289 = vmatprep.subr.bf16.mxu0 %v2476
  %3290 = vmatpush1.bf16.msra.mxu0 %v2475
  %3291 = vmatprep.subr.bf16.mxu0 %v2484
  %3292 = vmatpush1.bf16.msra.mxu0 %v2483
  %3293 = vmatprep.subr.bf16.mxu0 %v2492
  %3294 = vmatpush1.bf16.msra.mxu0 %v2491
  %3295 = vmatprep.subr.bf16.mxu0 %v2500
  %3296 = vmatpush1.bf16.msra.mxu0 %v2499
  %3297 = vmatprep.subr.bf16.mxu0 %v2508
  %3298 = vmatpush1.bf16.msra.mxu0 %v2507
  %3299 = vmatprep.subr.bf16.mxu0 %v2516
  %3300 = vmatpush1.bf16.msra.mxu0 %v2515
  %3301 = vmatprep.subr.bf16.mxu0 %v2524
  %3302 = vmatpush1.bf16.msra.mxu0 %v2523
  %3303 = vmatprep.subr.bf16.mxu0 %v2532
  %3304 = vmatpush1.bf16.msra.mxu0 %v2531
  %3305 = vmatprep.subr.bf16.mxu0 %v2540
  %3306 = vmatpush1.bf16.msra.mxu0 %v2539
  %3307 = vmatprep.subr.bf16.mxu0 %v2548
  %3308 = vmatpush1.bf16.msra.mxu0 %v2547
  %3309 = vmatprep.mubr.bf16.mxu0 %v622
  %3310 = vmatmul.mubr.bf16.gmra.mrb[0].mxu0 %v608
  %v3311 = vpop.f32.mrb[0].mxu0
  %v3312 = vadd.f32 %v3271, %v3311
  %v3313 = vpop.f32.mrb[0].mxu0
  %v3314 = vadd.f32 %v3273, %v3313
  %v3315 = vpop.f32.mrb[0].mxu0
  %v3316 = vpop.f32.mrb[0].mxu0
  %3317 = vdwg.mxu0
  %3318 = vmatprep.subr.bf16.mxu0 %v2556
  %3319 = vmatpush1.bf16.msra.mxu0 %v2555
  %3320 = vmatprep.subr.bf16.mxu0 %v2564
  %3321 = vmatpush1.bf16.msra.mxu0 %v2563
  %3322 = vmatprep.subr.bf16.mxu0 %v2572
  %3323 = vmatpush1.bf16.msra.mxu0 %v2571
  %3324 = vmatprep.subr.bf16.mxu0 %v2580
  %3325 = vmatpush1.bf16.msra.mxu0 %v2579
  %3326 = vmatprep.subr.bf16.mxu0 %v2588
  %3327 = vmatpush1.bf16.msra.mxu0 %v2587
  %3328 = vmatprep.subr.bf16.mxu0 %v2596
  %3329 = vmatpush1.bf16.msra.mxu0 %v2595
  %3330 = vmatprep.subr.bf16.mxu0 %v2604
  %3331 = vmatpush1.bf16.msra.mxu0 %v2603
  %3332 = vmatprep.subr.bf16.mxu0 %v2612
  %3333 = vmatpush1.bf16.msra.mxu0 %v2611
  %3334 = vmatprep.subr.bf16.mxu0 %v2620
  %3335 = vmatpush1.bf16.msra.mxu0 %v2619
  %3336 = vmatprep.subr.bf16.mxu0 %v2628
  %3337 = vmatpush1.bf16.msra.mxu0 %v2627
  %3338 = vmatprep.subr.bf16.mxu0 %v2636
  %3339 = vmatpush1.bf16.msra.mxu0 %v2635
  %3340 = vmatprep.subr.bf16.mxu0 %v2644
  %3341 = vmatpush1.bf16.msra.mxu0 %v2643
  %3342 = vmatprep.subr.bf16.mxu0 %v2652
  %3343 = vmatpush1.bf16.msra.mxu0 %v2651
  %3344 = vmatprep.subr.bf16.mxu0 %v2660
  %3345 = vmatpush1.bf16.msra.mxu0 %v2659
  %3346 = vmatprep.subr.bf16.mxu0 %v2668
  %3347 = vmatpush1.bf16.msra.mxu0 %v2667
  %3348 = vmatprep.subr.bf16.mxu0 %v2676
  %3349 = vmatpush1.bf16.msra.mxu0 %v2675
  %3350 = vmatprep.mubr.bf16.mxu0 %v626
  %3351 = vmatmul.mubr.bf16.gmra.mrb[0].mxu0 %v624
  %v3352 = vpop.f32.mrb[0].mxu0
  %v3353 = vadd.f32 %v3312, %v3352
  %v3354 = vpop.f32.mrb[0].mxu0
  %v3355 = vadd.f32 %v3314, %v3354
  %v3356 = vpop.f32.mrb[0].mxu0
  %v3357 = vpop.f32.mrb[0].mxu0
  %3358 = vdwg.mxu0
  %3359 = vmatprep.subr.bf16.mxu0 %v2174
  %3360 = vmatpush1.bf16.msra.mxu0 %v2173
  %3361 = vmatprep.subr.bf16.mxu0 %v2182
  %3362 = vmatpush1.bf16.msra.mxu0 %v2181
  %3363 = vmatprep.subr.bf16.mxu0 %v2190
  %3364 = vmatpush1.bf16.msra.mxu0 %v2189
  %3365 = vmatprep.subr.bf16.mxu0 %v2198
  %3366 = vmatpush1.bf16.msra.mxu0 %v2197
  %3367 = vmatprep.subr.bf16.mxu0 %v2206
  %3368 = vmatpush1.bf16.msra.mxu0 %v2205
  %3369 = vmatprep.subr.bf16.mxu0 %v2214
  %3370 = vmatpush1.bf16.msra.mxu0 %v2213
  %3371 = vmatprep.subr.bf16.mxu0 %v2222
  %3372 = vmatpush1.bf16.msra.mxu0 %v2221
  %3373 = vmatprep.subr.bf16.mxu0 %v2230
  %3374 = vmatpush1.bf16.msra.mxu0 %v2229
  %3375 = vmatprep.subr.bf16.mxu0 %v2238
  %3376 = vmatpush1.bf16.msra.mxu0 %v2237
  %3377 = vmatprep.subr.bf16.mxu0 %v2246
  %3378 = vmatpush1.bf16.msra.mxu0 %v2245
  %3379 = vmatprep.subr.bf16.mxu0 %v2254
  %3380 = vmatpush1.bf16.msra.mxu0 %v2253
  %3381 = vmatprep.subr.bf16.mxu0 %v2262
  %3382 = vmatpush1.bf16.msra.mxu0 %v2261
  %3383 = vmatprep.subr.bf16.mxu0 %v2270
  %3384 = vmatpush1.bf16.msra.mxu0 %v2269
  %3385 = vmatprep.subr.bf16.mxu0 %v2278
  %3386 = vmatpush1.bf16.msra.mxu0 %v2277
  %3387 = vmatprep.subr.bf16.mxu0 %v2286
  %3388 = vmatpush1.bf16.msra.mxu0 %v2285
  %3389 = vmatprep.subr.bf16.mxu0 %v2294
  %3390 = vmatpush1.bf16.msra.mxu0 %v2293
  %3391 = vmatprep.mubr.bf16.mxu0 %v615
  %3392 = vmatmul.mubr.bf16.gmra.mrb[0].mxu0 %v601
  %v3393 = vpop.f32.mrb[0].mxu0
  %v3394 = vadd.f32 %v548, %v3393
  %v3395 = vpop.f32.mrb[0].mxu0
  %v3396 = vadd.f32 %v552, %v3395
  %v3397 = vpop.f32.mrb[0].mxu0
  %v3398 = vpop.f32.mrb[0].mxu0
  %3399 = vdwg.mxu0
  %3400 = vmatprep.subr.bf16.mxu0 %v2302
  %3401 = vmatpush1.bf16.msra.mxu0 %v2301
  %3402 = vmatprep.subr.bf16.mxu0 %v2310
  %3403 = vmatpush1.bf16.msra.mxu0 %v2309
  %3404 = vmatprep.subr.bf16.mxu0 %v2318
  %3405 = vmatpush1.bf16.msra.mxu0 %v2317
  %3406 = vmatprep.subr.bf16.mxu0 %v2326
  %3407 = vmatpush1.bf16.msra.mxu0 %v2325
  %3408 = vmatprep.subr.bf16.mxu0 %v2334
  %3409 = vmatpush1.bf16.msra.mxu0 %v2333
  %3410 = vmatprep.subr.bf16.mxu0 %v2342
  %3411 = vmatpush1.bf16.msra.mxu0 %v2341
  %3412 = vmatprep.subr.bf16.mxu0 %v2350
  %3413 = vmatpush1.bf16.msra.mxu0 %v2349
  %3414 = vmatprep.subr.bf16.mxu0 %v2358
  %3415 = vmatpush1.bf16.msra.mxu0 %v2357
  %3416 = vmatprep.subr.bf16.mxu0 %v2366
  %3417 = vmatpush1.bf16.msra.mxu0 %v2365
  %3418 = vmatprep.subr.bf16.mxu0 %v2374
  %3419 = vmatpush1.bf16.msra.mxu0 %v2373
  %3420 = vmatprep.subr.bf16.mxu0 %v2382
  %3421 = vmatpush1.bf16.msra.mxu0 %v2381
  %3422 = vmatprep.subr.bf16.mxu0 %v2390
  %3423 = vmatpush1.bf16.msra.mxu0 %v2389
  %3424 = vmatprep.subr.bf16.mxu0 %v2398
  %3425 = vmatpush1.bf16.msra.mxu0 %v2397
  %3426 = vmatprep.subr.bf16.mxu0 %v2406
  %3427 = vmatpush1.bf16.msra.mxu0 %v2405
  %3428 = vmatprep.subr.bf16.mxu0 %v2414
  %3429 = vmatpush1.bf16.msra.mxu0 %v2413
  %3430 = vmatprep.subr.bf16.mxu0 %v2422
  %3431 = vmatpush1.bf16.msra.mxu0 %v2421
  %3432 = vmatprep.mubr.bf16.mxu0 %v625
  %3433 = vmatmul.mubr.bf16.gmra.mrb[0].mxu0 %v623
  %v3434 = vpop.f32.mrb[0].mxu0
  %v3435 = vadd.f32 %v3394, %v3434
  %v3436 = vpop.f32.mrb[0].mxu0
  %v3437 = vadd.f32 %v3396, %v3436
  %v3438 = vpop.f32.mrb[0].mxu0
  %v3439 = vpop.f32.mrb[0].mxu0
  %3440 = vdwg.mxu0
  %3441 = vmatprep.subr.bf16.mxu0 %v2430
  %3442 = vmatpush1.bf16.msra.mxu0 %v2429
  %3443 = vmatprep.subr.bf16.mxu0 %v2438
  %3444 = vmatpush1.bf16.msra.mxu0 %v2437
  %3445 = vmatprep.subr.bf16.mxu0 %v2446
  %3446 = vmatpush1.bf16.msra.mxu0 %v2445
  %3447 = vmatprep.subr.bf16.mxu0 %v2454
  %3448 = vmatpush1.bf16.msra.mxu0 %v2453
  %3449 = vmatprep.subr.bf16.mxu0 %v2462
  %3450 = vmatpush1.bf16.msra.mxu0 %v2461
  %3451 = vmatprep.subr.bf16.mxu0 %v2470
  %3452 = vmatpush1.bf16.msra.mxu0 %v2469
  %3453 = vmatprep.subr.bf16.mxu0 %v2478
  %3454 = vmatpush1.bf16.msra.mxu0 %v2477
  %3455 = vmatprep.subr.bf16.mxu0 %v2486
  %3456 = vmatpush1.bf16.msra.mxu0 %v2485
  %3457 = vmatprep.subr.bf16.mxu0 %v2494
  %3458 = vmatpush1.bf16.msra.mxu0 %v2493
  %3459 = vmatprep.subr.bf16.mxu0 %v2502
  %3460 = vmatpush1.bf16.msra.mxu0 %v2501
  %3461 = vmatprep.subr.bf16.mxu0 %v2510
  %3462 = vmatpush1.bf16.msra.mxu0 %v2509
  %3463 = vmatprep.subr.bf16.mxu0 %v2518
  %3464 = vmatpush1.bf16.msra.mxu0 %v2517
  %3465 = vmatprep.subr.bf16.mxu0 %v2526
  %3466 = vmatpush1.bf16.msra.mxu0 %v2525
  %3467 = vmatprep.subr.bf16.mxu0 %v2534
  %3468 = vmatpush1.bf16.msra.mxu0 %v2533
  %3469 = vmatprep.subr.bf16.mxu0 %v2542
  %3470 = vmatpush1.bf16.msra.mxu0 %v2541
  %3471 = vmatprep.subr.bf16.mxu0 %v2550
  %3472 = vmatpush1.bf16.msra.mxu0 %v2549
  %3473 = vmatprep.mubr.bf16.mxu0 %v622
  %3474 = vmatmul.mubr.bf16.gmra.mrb[0].mxu0 %v608
  %v3475 = vpop.f32.mrb[0].mxu0
  %v3476 = vadd.f32 %v3435, %v3475
  %v3477 = vpop.f32.mrb[0].mxu0
  %v3478 = vadd.f32 %v3437, %v3477
  %v3479 = vpop.f32.mrb[0].mxu0
  %v3480 = vpop.f32.mrb[0].mxu0
  %3481 = vdwg.mxu0
  %3482 = vmatprep.subr.bf16.mxu0 %v2558
  %3483 = vmatpush1.bf16.msra.mxu0 %v2557
  %3484 = vmatprep.subr.bf16.mxu0 %v2566
  %3485 = vmatpush1.bf16.msra.mxu0 %v2565
  %3486 = vmatprep.subr.bf16.mxu0 %v2574
  %3487 = vmatpush1.bf16.msra.mxu0 %v2573
  %3488 = vmatprep.subr.bf16.mxu0 %v2582
  %3489 = vmatpush1.bf16.msra.mxu0 %v2581
  %3490 = vmatprep.subr.bf16.mxu0 %v2590
  %3491 = vmatpush1.bf16.msra.mxu0 %v2589
  %3492 = vmatprep.subr.bf16.mxu0 %v2598
  %3493 = vmatpush1.bf16.msra.mxu0 %v2597
  %3494 = vmatprep.subr.bf16.mxu0 %v2606
  %3495 = vmatpush1.bf16.msra.mxu0 %v2605
  %3496 = vmatprep.subr.bf16.mxu0 %v2614
  %3497 = vmatpush1.bf16.msra.mxu0 %v2613
  %3498 = vmatprep.subr.bf16.mxu0 %v2622
  %3499 = vmatpush1.bf16.msra.mxu0 %v2621
  %3500 = vmatprep.subr.bf16.mxu0 %v2630
  %3501 = vmatpush1.bf16.msra.mxu0 %v2629
  %3502 = vmatprep.subr.bf16.mxu0 %v2638
  %3503 = vmatpush1.bf16.msra.mxu0 %v2637
  %3504 = vmatprep.subr.bf16.mxu0 %v2646
  %3505 = vmatpush1.bf16.msra.mxu0 %v2645
  %3506 = vmatprep.subr.bf16.mxu0 %v2654
  %3507 = vmatpush1.bf16.msra.mxu0 %v2653
  %3508 = vmatprep.subr.bf16.mxu0 %v2662
  %3509 = vmatpush1.bf16.msra.mxu0 %v2661
  %3510 = vmatprep.subr.bf16.mxu0 %v2670
  %3511 = vmatpush1.bf16.msra.mxu0 %v2669
  %3512 = vmatprep.subr.bf16.mxu0 %v2678
  %3513 = vmatpush1.bf16.msra.mxu0 %v2677
  %3514 = vmatprep.mubr.bf16.mxu0 %v626
  %3515 = vmatmul.mubr.bf16.gmra.mrb[0].mxu0 %v624
  %v3516 = vpop.f32.mrb[0].mxu0
  %v3517 = vadd.f32 %v3476, %v3516
  %v3518 = vpop.f32.mrb[0].mxu0
  %v3519 = vadd.f32 %v3478, %v3518
  %v3520 = vpop.f32.mrb[0].mxu0
  %v3521 = vpop.f32.mrb[0].mxu0
  %3522 = vdwg.mxu0
  %3523 = vmatprep.subr.bf16.mxu0 %v2176
  %3524 = vmatpush1.bf16.msra.mxu0 %v2175
  %3525 = vmatprep.subr.bf16.mxu0 %v2184
  %3526 = vmatpush1.bf16.msra.mxu0 %v2183
  %3527 = vmatprep.subr.bf16.mxu0 %v2192
  %3528 = vmatpush1.bf16.msra.mxu0 %v2191
  %3529 = vmatprep.subr.bf16.mxu0 %v2200
  %3530 = vmatpush1.bf16.msra.mxu0 %v2199
  %3531 = vmatprep.subr.bf16.mxu0 %v2208
  %3532 = vmatpush1.bf16.msra.mxu0 %v2207
  %3533 = vmatprep.subr.bf16.mxu0 %v2216
  %3534 = vmatpush1.bf16.msra.mxu0 %v2215
  %3535 = vmatprep.subr.bf16.mxu0 %v2224
  %3536 = vmatpush1.bf16.msra.mxu0 %v2223
  %3537 = vmatprep.subr.bf16.mxu0 %v2232
  %3538 = vmatpush1.bf16.msra.mxu0 %v2231
  %3539 = vmatprep.subr.bf16.mxu0 %v2240
  %3540 = vmatpush1.bf16.msra.mxu0 %v2239
  %3541 = vmatprep.subr.bf16.mxu0 %v2248
  %3542 = vmatpush1.bf16.msra.mxu0 %v2247
  %3543 = vmatprep.subr.bf16.mxu0 %v2256
  %3544 = vmatpush1.bf16.msra.mxu0 %v2255
  %3545 = vmatprep.subr.bf16.mxu0 %v2264
  %3546 = vmatpush1.bf16.msra.mxu0 %v2263
  %3547 = vmatprep.subr.bf16.mxu0 %v2272
  %3548 = vmatpush1.bf16.msra.mxu0 %v2271
  %3549 = vmatprep.subr.bf16.mxu0 %v2280
  %3550 = vmatpush1.bf16.msra.mxu0 %v2279
  %3551 = vmatprep.subr.bf16.mxu0 %v2288
  %3552 = vmatpush1.bf16.msra.mxu0 %v2287
  %3553 = vmatprep.subr.bf16.mxu0 %v2296
  %3554 = vmatpush1.bf16.msra.mxu0 %v2295
  %3555 = vmatprep.mubr.bf16.mxu0 %v615
  %3556 = vmatmul.mubr.bf16.gmra.mrb[0].mxu0 %v601
  %v3557 = vpop.f32.mrb[0].mxu0
  %v3558 = vadd.f32 %v556, %v3557
  %v3559 = vpop.f32.mrb[0].mxu0
  %v3560 = vadd.f32 %v560, %v3559
  %v3561 = vpop.f32.mrb[0].mxu0
  %v3562 = vpop.f32.mrb[0].mxu0
  %3563 = vdwg.mxu0
  %3564 = vmatprep.subr.bf16.mxu0 %v2304
  %3565 = vmatpush1.bf16.msra.mxu0 %v2303
  %3566 = vmatprep.subr.bf16.mxu0 %v2312
  %3567 = vmatpush1.bf16.msra.mxu0 %v2311
  %3568 = vmatprep.subr.bf16.mxu0 %v2320
  %3569 = vmatpush1.bf16.msra.mxu0 %v2319
  %3570 = vmatprep.subr.bf16.mxu0 %v2328
  %3571 = vmatpush1.bf16.msra.mxu0 %v2327
  %3572 = vmatprep.subr.bf16.mxu0 %v2336
  %3573 = vmatpush1.bf16.msra.mxu0 %v2335
  %3574 = vmatprep.subr.bf16.mxu0 %v2344
  %3575 = vmatpush1.bf16.msra.mxu0 %v2343
  %3576 = vmatprep.subr.bf16.mxu0 %v2352
  %3577 = vmatpush1.bf16.msra.mxu0 %v2351
  %3578 = vmatprep.subr.bf16.mxu0 %v2360
  %3579 = vmatpush1.bf16.msra.mxu0 %v2359
  %3580 = vmatprep.subr.bf16.mxu0 %v2368
  %3581 = vmatpush1.bf16.msra.mxu0 %v2367
  %3582 = vmatprep.subr.bf16.mxu0 %v2376
  %3583 = vmatpush1.bf16.msra.mxu0 %v2375
  %3584 = vmatprep.subr.bf16.mxu0 %v2384
  %3585 = vmatpush1.bf16.msra.mxu0 %v2383
  %3586 = vmatprep.subr.bf16.mxu0 %v2392
  %3587 = vmatpush1.bf16.msra.mxu0 %v2391
  %3588 = vmatprep.subr.bf16.mxu0 %v2400
  %3589 = vmatpush1.bf16.msra.mxu0 %v2399
  %3590 = vmatprep.subr.bf16.mxu0 %v2408
  %3591 = vmatpush1.bf16.msra.mxu0 %v2407
  %3592 = vmatprep.subr.bf16.mxu0 %v2416
  %3593 = vmatpush1.bf16.msra.mxu0 %v2415
  %3594 = vmatprep.subr.bf16.mxu0 %v2424
  %3595 = vmatpush1.bf16.msra.mxu0 %v2423
  %3596 = vmatprep.mubr.bf16.mxu0 %v625
  %3597 = vmatmul.mubr.bf16.gmra.mrb[0].mxu0 %v623
  %v3598 = vpop.f32.mrb[0].mxu0
  %v3599 = vadd.f32 %v3558, %v3598
  %v3600 = vpop.f32.mrb[0].mxu0
  %v3601 = vadd.f32 %v3560, %v3600
  %v3602 = vpop.f32.mrb[0].mxu0
  %v3603 = vpop.f32.mrb[0].mxu0
  %3604 = vdwg.mxu0
  %3605 = vmatprep.subr.bf16.mxu0 %v2432
  %3606 = vmatpush1.bf16.msra.mxu0 %v2431
  %3607 = vmatprep.subr.bf16.mxu0 %v2440
  %3608 = vmatpush1.bf16.msra.mxu0 %v2439
  %3609 = vmatprep.subr.bf16.mxu0 %v2448
  %3610 = vmatpush1.bf16.msra.mxu0 %v2447
  %3611 = vmatprep.subr.bf16.mxu0 %v2456
  %3612 = vmatpush1.bf16.msra.mxu0 %v2455
  %3613 = vmatprep.subr.bf16.mxu0 %v2464
  %3614 = vmatpush1.bf16.msra.mxu0 %v2463
  %3615 = vmatprep.subr.bf16.mxu0 %v2472
  %3616 = vmatpush1.bf16.msra.mxu0 %v2471
  %3617 = vmatprep.subr.bf16.mxu0 %v2480
  %3618 = vmatpush1.bf16.msra.mxu0 %v2479
  %3619 = vmatprep.subr.bf16.mxu0 %v2488
  %3620 = vmatpush1.bf16.msra.mxu0 %v2487
  %3621 = vmatprep.subr.bf16.mxu0 %v2496
  %3622 = vmatpush1.bf16.msra.mxu0 %v2495
  %3623 = vmatprep.subr.bf16.mxu0 %v2504
  %3624 = vmatpush1.bf16.msra.mxu0 %v2503
  %3625 = vmatprep.subr.bf16.mxu0 %v2512
  %3626 = vmatpush1.bf16.msra.mxu0 %v2511
  %3627 = vmatprep.subr.bf16.mxu0 %v2520
  %3628 = vmatpush1.bf16.msra.mxu0 %v2519
  %3629 = vmatprep.subr.bf16.mxu0 %v2528
  %3630 = vmatpush1.bf16.msra.mxu0 %v2527
  %3631 = vmatprep.subr.bf16.mxu0 %v2536
  %3632 = vmatpush1.bf16.msra.mxu0 %v2535
  %3633 = vmatprep.subr.bf16.mxu0 %v2544
  %3634 = vmatpush1.bf16.msra.mxu0 %v2543
  %3635 = vmatprep.subr.bf16.mxu0 %v2552
  %3636 = vmatpush1.bf16.msra.mxu0 %v2551
  %3637 = vmatprep.mubr.bf16.mxu0 %v622
  %3638 = vmatmul.mubr.bf16.gmra.mrb[0].mxu0 %v608
  %v3639 = vpop.f32.mrb[0].mxu0
  %v3640 = vadd.f32 %v3599, %v3639
  %v3641 = vpop.f32.mrb[0].mxu0
  %v3642 = vadd.f32 %v3601, %v3641
  %v3643 = vpop.f32.mrb[0].mxu0
  %v3644 = vpop.f32.mrb[0].mxu0
  %3645 = vdwg.mxu0
  %3646 = vmatprep.subr.bf16.mxu0 %v2560
  %3647 = vmatpush1.bf16.msra.mxu0 %v2559
  %3648 = vmatprep.subr.bf16.mxu0 %v2568
  %3649 = vmatpush1.bf16.msra.mxu0 %v2567
  %3650 = vmatprep.subr.bf16.mxu0 %v2576
  %3651 = vmatpush1.bf16.msra.mxu0 %v2575
  %3652 = vmatprep.subr.bf16.mxu0 %v2584
  %3653 = vmatpush1.bf16.msra.mxu0 %v2583
  %3654 = vmatprep.subr.bf16.mxu0 %v2592
  %3655 = vmatpush1.bf16.msra.mxu0 %v2591
  %3656 = vmatprep.subr.bf16.mxu0 %v2600
  %3657 = vmatpush1.bf16.msra.mxu0 %v2599
  %3658 = vmatprep.subr.bf16.mxu0 %v2608
  %3659 = vmatpush1.bf16.msra.mxu0 %v2607
  %3660 = vmatprep.subr.bf16.mxu0 %v2616
  %3661 = vmatpush1.bf16.msra.mxu0 %v2615
  %3662 = vmatprep.subr.bf16.mxu0 %v2624
  %3663 = vmatpush1.bf16.msra.mxu0 %v2623
  %3664 = vmatprep.subr.bf16.mxu0 %v2632
  %3665 = vmatpush1.bf16.msra.mxu0 %v2631
  %3666 = vmatprep.subr.bf16.mxu0 %v2640
  %3667 = vmatpush1.bf16.msra.mxu0 %v2639
  %3668 = vmatprep.subr.bf16.mxu0 %v2648
  %3669 = vmatpush1.bf16.msra.mxu0 %v2647
  %3670 = vmatprep.subr.bf16.mxu0 %v2656
  %3671 = vmatpush1.bf16.msra.mxu0 %v2655
  %3672 = vmatprep.subr.bf16.mxu0 %v2664
  %3673 = vmatpush1.bf16.msra.mxu0 %v2663
  %3674 = vmatprep.subr.bf16.mxu0 %v2672
  %3675 = vmatpush1.bf16.msra.mxu0 %v2671
  %3676 = vmatprep.subr.bf16.mxu0 %v2680
  %3677 = vmatpush1.bf16.msra.mxu0 %v2679
  %3678 = vmatprep.mubr.bf16.mxu0 %v626
  %3679 = vmatmul.mubr.bf16.gmra.mrb[0].mxu0 %v624
  %v3680 = vpop.f32.mrb[0].mxu0
  %v3681 = vadd.f32 %v3640, %v3680
  %v3682 = vpop.f32.mrb[0].mxu0
  %v3683 = vadd.f32 %v3642, %v3682
  %v3684 = vpop.f32.mrb[0].mxu0
  %v3685 = vpop.f32.mrb[0].mxu0
  %3686 = vdwg.mxu0
  %3687 = vmatprep.subr.bf16.mxu0 %v2178
  %3688 = vmatpush1.bf16.msra.mxu0 %v2177
  %3689 = vmatprep.subr.bf16.mxu0 %v2186
  %3690 = vmatpush1.bf16.msra.mxu0 %v2185
  %3691 = vmatprep.subr.bf16.mxu0 %v2194
  %3692 = vmatpush1.bf16.msra.mxu0 %v2193
  %3693 = vmatprep.subr.bf16.mxu0 %v2202
  %3694 = vmatpush1.bf16.msra.mxu0 %v2201
  %3695 = vmatprep.subr.bf16.mxu0 %v2210
  %3696 = vmatpush1.bf16.msra.mxu0 %v2209
  %3697 = vmatprep.subr.bf16.mxu0 %v2218
  %3698 = vmatpush1.bf16.msra.mxu0 %v2217
  %3699 = vmatprep.subr.bf16.mxu0 %v2226
  %3700 = vmatpush1.bf16.msra.mxu0 %v2225
  %3701 = vmatprep.subr.bf16.mxu0 %v2234
  %3702 = vmatpush1.bf16.msra.mxu0 %v2233
  %3703 = vmatprep.subr.bf16.mxu0 %v2242
  %3704 = vmatpush1.bf16.msra.mxu0 %v2241
  %3705 = vmatprep.subr.bf16.mxu0 %v2250
  %3706 = vmatpush1.bf16.msra.mxu0 %v2249
  %3707 = vmatprep.subr.bf16.mxu0 %v2258
  %3708 = vmatpush1.bf16.msra.mxu0 %v2257
  %3709 = vmatprep.subr.bf16.mxu0 %v2266
  %3710 = vmatpush1.bf16.msra.mxu0 %v2265
  %3711 = vmatprep.subr.bf16.mxu0 %v2274
  %3712 = vmatpush1.bf16.msra.mxu0 %v2273
  %3713 = vmatprep.subr.bf16.mxu0 %v2282
  %3714 = vmatpush1.bf16.msra.mxu0 %v2281
  %3715 = vmatprep.subr.bf16.mxu0 %v2290
  %3716 = vmatpush1.bf16.msra.mxu0 %v2289
  %3717 = vmatprep.subr.bf16.mxu0 %v2298
  %3718 = vmatpush1.bf16.msra.mxu0 %v2297
  %3719 = vmatprep.mubr.bf16.mxu0 %v615
  %3720 = vmatmul.mubr.bf16.gmra.mrb[0].mxu0 %v601
  %v3721 = vpop.f32.mrb[0].mxu0
  %v3722 = vadd.f32 %v564, %v3721
  %v3723 = vpop.f32.mrb[0].mxu0
  %v3724 = vadd.f32 %v568, %v3723
  %v3725 = vpop.f32.mrb[0].mxu0
  %v3726 = vpop.f32.mrb[0].mxu0
  %3727 = vdwg.mxu0
  %3728 = vmatprep.subr.bf16.mxu0 %v2306
  %3729 = vmatpush1.bf16.msra.mxu0 %v2305
  %3730 = vmatprep.subr.bf16.mxu0 %v2314
  %3731 = vmatpush1.bf16.msra.mxu0 %v2313
  %3732 = vmatprep.subr.bf16.mxu0 %v2322
  %3733 = vmatpush1.bf16.msra.mxu0 %v2321
  %3734 = vmatprep.subr.bf16.mxu0 %v2330
  %3735 = vmatpush1.bf16.msra.mxu0 %v2329
  %3736 = vmatprep.subr.bf16.mxu0 %v2338
  %3737 = vmatpush1.bf16.msra.mxu0 %v2337
  %3738 = vmatprep.subr.bf16.mxu0 %v2346
  %3739 = vmatpush1.bf16.msra.mxu0 %v2345
  %3740 = vmatprep.subr.bf16.mxu0 %v2354
  %3741 = vmatpush1.bf16.msra.mxu0 %v2353
  %3742 = vmatprep.subr.bf16.mxu0 %v2362
  %3743 = vmatpush1.bf16.msra.mxu0 %v2361
  %3744 = vmatprep.subr.bf16.mxu0 %v2370
  %3745 = vmatpush1.bf16.msra.mxu0 %v2369
  %3746 = vmatprep.subr.bf16.mxu0 %v2378
  %3747 = vmatpush1.bf16.msra.mxu0 %v2377
  %3748 = vmatprep.subr.bf16.mxu0 %v2386
  %3749 = vmatpush1.bf16.msra.mxu0 %v2385
  %3750 = vmatprep.subr.bf16.mxu0 %v2394
  %3751 = vmatpush1.bf16.msra.mxu0 %v2393
  %3752 = vmatprep.subr.bf16.mxu0 %v2402
  %3753 = vmatpush1.bf16.msra.mxu0 %v2401
  %3754 = vmatprep.subr.bf16.mxu0 %v2410
  %3755 = vmatpush1.bf16.msra.mxu0 %v2409
  %3756 = vmatprep.subr.bf16.mxu0 %v2418
  %3757 = vmatpush1.bf16.msra.mxu0 %v2417
  %3758 = vmatprep.subr.bf16.mxu0 %v2426
  %3759 = vmatpush1.bf16.msra.mxu0 %v2425
  %3760 = vmatprep.mubr.bf16.mxu0 %v625
  %3761 = vmatmul.mubr.bf16.gmra.mrb[0].mxu0 %v623
  %v3762 = vpop.f32.mrb[0].mxu0
  %v3763 = vadd.f32 %v3722, %v3762
  %v3764 = vpop.f32.mrb[0].mxu0
  %v3765 = vadd.f32 %v3724, %v3764
  %v3766 = vpop.f32.mrb[0].mxu0
  %v3767 = vpop.f32.mrb[0].mxu0
  %3768 = vdwg.mxu0
  %3769 = vmatprep.subr.bf16.mxu0 %v2434
  %3770 = vmatpush1.bf16.msra.mxu0 %v2433
  %3771 = vmatprep.subr.bf16.mxu0 %v2442
  %3772 = vmatpush1.bf16.msra.mxu0 %v2441
  %3773 = vmatprep.subr.bf16.mxu0 %v2450
  %3774 = vmatpush1.bf16.msra.mxu0 %v2449
  %3775 = vmatprep.subr.bf16.mxu0 %v2458
  %3776 = vmatpush1.bf16.msra.mxu0 %v2457
  %3777 = vmatprep.subr.bf16.mxu0 %v2466
  %3778 = vmatpush1.bf16.msra.mxu0 %v2465
  %3779 = vmatprep.subr.bf16.mxu0 %v2474
  %3780 = vmatpush1.bf16.msra.mxu0 %v2473
  %3781 = vmatprep.subr.bf16.mxu0 %v2482
  %3782 = vmatpush1.bf16.msra.mxu0 %v2481
  %3783 = vmatprep.subr.bf16.mxu0 %v2490
  %3784 = vmatpush1.bf16.msra.mxu0 %v2489
  %3785 = vmatprep.subr.bf16.mxu0 %v2498
  %3786 = vmatpush1.bf16.msra.mxu0 %v2497
  %3787 = vmatprep.subr.bf16.mxu0 %v2506
  %3788 = vmatpush1.bf16.msra.mxu0 %v2505
  %3789 = vmatprep.subr.bf16.mxu0 %v2514
  %3790 = vmatpush1.bf16.msra.mxu0 %v2513
  %3791 = vmatprep.subr.bf16.mxu0 %v2522
  %3792 = vmatpush1.bf16.msra.mxu0 %v2521
  %3793 = vmatprep.subr.bf16.mxu0 %v2530
  %3794 = vmatpush1.bf16.msra.mxu0 %v2529
  %3795 = vmatprep.subr.bf16.mxu0 %v2538
  %3796 = vmatpush1.bf16.msra.mxu0 %v2537
  %3797 = vmatprep.subr.bf16.mxu0 %v2546
  %3798 = vmatpush1.bf16.msra.mxu0 %v2545
  %3799 = vmatprep.subr.bf16.mxu0 %v2554
  %3800 = vmatpush1.bf16.msra.mxu0 %v2553
  %3801 = vmatprep.mubr.bf16.mxu0 %v622
  %3802 = vmatmul.mubr.bf16.gmra.mrb[0].mxu0 %v608
  %v3803 = vpop.f32.mrb[0].mxu0
  %v3804 = vadd.f32 %v3763, %v3803
  %v3805 = vpop.f32.mrb[0].mxu0
  %v3806 = vadd.f32 %v3765, %v3805
  %v3807 = vpop.f32.mrb[0].mxu0
  %v3808 = vpop.f32.mrb[0].mxu0
  %3809 = vdwg.mxu0
  %3810 = vmatprep.subr.bf16.mxu0 %v2562
  %3811 = vmatpush1.bf16.msra.mxu0 %v2561
  %3812 = vmatprep.subr.bf16.mxu0 %v2570
  %3813 = vmatpush1.bf16.msra.mxu0 %v2569
  %3814 = vmatprep.subr.bf16.mxu0 %v2578
  %3815 = vmatpush1.bf16.msra.mxu0 %v2577
  %3816 = vmatprep.subr.bf16.mxu0 %v2586
  %3817 = vmatpush1.bf16.msra.mxu0 %v2585
  %3818 = vmatprep.subr.bf16.mxu0 %v2594
  %3819 = vmatpush1.bf16.msra.mxu0 %v2593
  %3820 = vmatprep.subr.bf16.mxu0 %v2602
  %3821 = vmatpush1.bf16.msra.mxu0 %v2601
  %3822 = vmatprep.subr.bf16.mxu0 %v2610
  %3823 = vmatpush1.bf16.msra.mxu0 %v2609
  %3824 = vmatprep.subr.bf16.mxu0 %v2618
  %3825 = vmatpush1.bf16.msra.mxu0 %v2617
  %3826 = vmatprep.subr.bf16.mxu0 %v2626
  %3827 = vmatpush1.bf16.msra.mxu0 %v2625
  %3828 = vmatprep.subr.bf16.mxu0 %v2634
  %3829 = vmatpush1.bf16.msra.mxu0 %v2633
  %3830 = vmatprep.subr.bf16.mxu0 %v2642
  %3831 = vmatpush1.bf16.msra.mxu0 %v2641
  %3832 = vmatprep.subr.bf16.mxu0 %v2650
  %3833 = vmatpush1.bf16.msra.mxu0 %v2649
  %3834 = vmatprep.subr.bf16.mxu0 %v2658
  %3835 = vmatpush1.bf16.msra.mxu0 %v2657
  %3836 = vmatprep.subr.bf16.mxu0 %v2666
  %3837 = vmatpush1.bf16.msra.mxu0 %v2665
  %3838 = vmatprep.subr.bf16.mxu0 %v2674
  %3839 = vmatpush1.bf16.msra.mxu0 %v2673
  %3840 = vmatprep.subr.bf16.mxu0 %v2682
  %3841 = vmatpush1.bf16.msra.mxu0 %v2681
  %3842 = vmatprep.mubr.bf16.mxu0 %v626
  %3843 = vmatmul.mubr.bf16.gmra.mrb[0].mxu0 %v624
  %v3844 = vpop.f32.mrb[0].mxu0
  %v3845 = vadd.f32 %v3804, %v3844
  %v3846 = vpop.f32.mrb[0].mxu0
  %v3847 = vadd.f32 %v3806, %v3846
  %v3848 = vpop.f32.mrb[0].mxu0
  %v3849 = vpop.f32.mrb[0].mxu0
  %3850 = vdwg.mxu0
  %v3851 = vmul.f32 %v3353, 0.01
  %v3852 = vmul.f32 %v3355, 0.01
  %v3853 = vmul.f32 %v3517, 0.01
  %v3854 = vmul.f32 %v3519, 0.01
  %v3855 = vmul.f32 %v3681, 0.01
  %v3856 = vmul.f32 %v3683, 0.01
  %v3857 = vmul.f32 %v3845, 0.01
  %v3858 = vmul.f32 %v3847, 0.01
  %v3859 = vmax.f32 %v3353, %v3851
  %v3860 = vmax.f32 %v3355, %v3852
  %v3861 = vmax.f32 %v3517, %v3853
  %v3862 = vmax.f32 %v3519, %v3854
  %v3863 = vmax.f32 %v3681, %v3855
  %v3864 = vmax.f32 %v3683, %v3856
  %v3865 = vmax.f32 %v3845, %v3857
  %v3866 = vmax.f32 %v3847, %v3858
  %v3867 = vld [vmem:[%s3] sm:$0xff]
  %v3869 = vlaneseq
  %v3870 = vshrl.u32 %v3869, 7
  %v3871 = vsub.s32 0, %v3870
  %v3872 = vrot.slane %v3867, %v3871
  %v3873 = vlaneseq
  %v3874 = vshrl.u32 %v3873, 7
  %v3875 = vsub.s32 1, %v3874
  %v3876 = vrot.slane %v3867, %v3875
  %v3877 = vlaneseq
  %v3878 = vshrl.u32 %v3877, 7
  %v3879 = vsub.s32 2, %v3878
  %v3880 = vrot.slane %v3867, %v3879
  %v3881 = vlaneseq
  %v3882 = vshrl.u32 %v3881, 7
  %v3883 = vsub.s32 3, %v3882
  %v3884 = vrot.slane %v3867, %v3883
  %v3885 = vlaneseq
  %v3886 = vshrl.u32 %v3885, 7
  %v3887 = vsub.s32 4, %v3886
  %v3888 = vrot.slane %v3867, %v3887
  %v3889 = vlaneseq
  %v3890 = vshrl.u32 %v3889, 7
  %v3891 = vsub.s32 5, %v3890
  %v3892 = vrot.slane %v3867, %v3891
  %v3893 = vlaneseq
  %v3894 = vshrl.u32 %v3893, 7
  %v3895 = vsub.s32 6, %v3894
  %v3896 = vrot.slane %v3867, %v3895
  %v3897 = vlaneseq
  %v3898 = vshrl.u32 %v3897, 7
  %v3899 = vsub.s32 7, %v3898
  %v3900 = vrot.slane %v3867, %v3899
  %v3909 = vmul.f32 %v3859, %v3872
  %v3910 = vmul.f32 %v3860, %v3876
  %v3911 = vmul.f32 %v3861, %v3880
  %v3912 = vmul.f32 %v3862, %v3884
  %v3913 = vmul.f32 %v3863, %v3888
  %v3914 = vmul.f32 %v3864, %v3892
  %v3915 = vmul.f32 %v3865, %v3896
  %v3916 = vmul.f32 %v3866, %v3900
  %vm3917 = vcmask 1041408
  %v3918 = vsel %vm3917, %v3909, 0.0
  %v3919 = vsel %vm3917, %v3910, 0.0
  %v3920 = vadd.f32 %v3918, %v3919
  %v3921 = vsel %vm3917, %v3911, 0.0
  %v3922 = vadd.f32 %v3920, %v3921
  %v3923 = vsel %vm3917, %v3912, 0.0
  %v3924 = vadd.f32 %v3922, %v3923
  %v3925 = vsel %vm3917, %v3913, 0.0
  %v3926 = vadd.f32 %v3924, %v3925
  %v3927 = vsel %vm3917, %v3914, 0.0
  %v3928 = vadd.f32 %v3926, %v3927
  %v3929 = vsel %vm3917, %v3915, 0.0
  %v3930 = vadd.f32 %v3928, %v3929
  %v3931 = vsel %vm3917, %v3916, 0.0
  %v3932 = vadd.f32 %v3930, %v3931
  %3933 = vadd.xlane.f32.xlu0 %v3932
  %v3934 = vpop.xlane.xlu0 %3933
  %v3935 = vld [vmem:[#allocation2] sm:$0x1]
  %v3937 = vlaneseq
  %v3938 = vshrl.u32 %v3937, 7
  %v3939 = vsub.s32 0, %v3938
  %v3940 = vrot.slane %v3935, %v3939
  %v3942 = vadd.f32 %v3934, %v3940
  %vm3943 = vcmask 1024
  %3944 = vst.msk [vmem:[%s5] sm:$0x3] %vm3943, %v3942
  // Predicated region
  $region22: #{conv_discriminator_forward.5} parent=0 // pred_check
    _
  $region23: #{conv_discriminator_forward.5} parent=0 // pred_check_branch
    %3946 = sbr.rel (0) target = $region25
  $region24: #{conv_discriminator_forward.5} parent=0 // pred_region
    _
  $region25: #{conv_discriminator_forward.5} parent=0 // pred_fallthru
    _
  // Predicated region
  $region26: #{conv_discriminator_forward.5} parent=0 // pred_check
    _
  $region27: #{conv_discriminator_forward.5} parent=0 // pred_check_branch
    %3948 = sbr.rel (0) target = $region29
  $region28: #{conv_discriminator_forward.5} parent=0 // pred_region
    _
  $region29: #{conv_discriminator_forward.5} parent=0 // pred_fallthru
    _

</llo_original>
